<compile_context>
chip_gen: v7x
topology: tpu7x:2x2x1
jax: 0.10.0
libtpu: 0.0.40
codegen_flags: <defaults>
</compile_context>

<pallas_src>
import functools

import jax
import jax.numpy as jnp
import numpy as np
from jax import lax
from jax.experimental import pallas as pl
from jax.experimental.pallas import tpu as pltpu

LANE = 128


def _round_up(x, m):
    return (x + m - 1) // m * m


def _vmem_limit_bytes():
    """Generation-aware VMEM cap: ~75% of physical (v7x only has 64 MiB/TC)."""
    try:
        cap = int(pltpu.get_tpu_info().vmem_capacity_bytes)
        return min(cap * 3 // 4, 100 * 1024 * 1024)
    except Exception:  # query unavailable -> conservative default
        return 48 * 1024 * 1024


VMEM_LIMIT = int(_vmem_limit_bytes())


# --------------------------- fused stride-1 kernel -------------------------- #

def _fused_bottleneck_kernel(x_mid, x_top, x_bot, w1, s1, b1, w2, s2, b2,
                             w3, s3, b3, *rest, tho, width, slab_rows, has_proj):
    """Whole Bottleneck for one (batch, row-tile) grid step.

    x_mid : (1, tho, W, Cin_pad)  bf16   tile rows of the input
    x_top : (1, 1, W, Cin_pad)    bf16   row above the tile (masked at image top)
    x_bot : (1, 1, W, Cin_pad)    bf16   row below the tile (masked at image bottom)
    w2    : (9, Cp, Cp)           bf16   one (Cin_pad, Cout_pad) matrix per 3x3 tap
    rest  : [ws, ss, bs]?, o_ref, slab_scratch, acc_scratch
    """
    if has_proj:
        ws, ss, bs, o_ref, slab, acc = rest
    else:
        o_ref, slab, acc = rest

    t = pl.program_id(1)
    n_t = pl.num_programs(1)
    cdt = slab.dtype
    wp = width + 2                      # padded row pitch of the conv1 slab
    cinp = x_mid.shape[-1]
    pp = w1.shape[-1]
    coutp = w3.shape[-1]
    m_rows = tho * wp                   # conv2/conv3 working rows (incl. border cols)

    def conv1(x2d):                     # 1x1 conv + bn1 + relu (f32 epilogue)
        y = jnp.dot(x2d, w1[...], preferred_element_type=jnp.float32)
        return jnp.maximum(y * s1[...] + b1[...], 0.0).astype(cdt)

    # ---- Build the zero-bordered conv1 slab in VMEM scratch. ----------------
    # Flat slab row q*wp + cc  <->  padded-out1[row t*tho + q - 1, col cc - 1].
    x2d = x_mid[...].reshape(tho * width, cinp)
    y1 = conv1(x2d).reshape(tho, width, pp)
    zc = jnp.zeros((tho, 1, pp), cdt)
    slab[pl.ds(wp, tho * wp), :] = jnp.concatenate([zc, y1, zc], axis=1) \
                                      .reshape(tho * wp, pp)

    z1 = jnp.zeros((1, pp), cdt)
    y1t = conv1(x_top[...].reshape(width, cinp))
    y1t = jnp.where(t > 0, y1t, jnp.zeros_like(y1t))            # zero at image top
    slab[pl.ds(0, wp), :] = jnp.concatenate([z1, y1t, z1], axis=0)

    y1b = conv1(x_bot[...].reshape(width, cinp))
    y1b = jnp.where(t < n_t - 1, y1b, jnp.zeros_like(y1b))      # zero at image bottom
    slab[pl.ds((tho + 1) * wp, wp), :] = jnp.concatenate([z1, y1b, z1], axis=0)

    n_pad = slab_rows - (tho + 2) * wp                          # tail rows read by
    slab[pl.ds((tho + 2) * wp, n_pad), :] = jnp.zeros((n_pad, pp), cdt)  # last taps

    # ---- conv2: 9 MXU matmuls (K = Cin_pad) into the f32 scratch accumulator.
    # Tap (dr, dc)'s LHS is the flat slab shifted by dr*wp + dc rows: no im2col
    # copy; wrap-around only lands in the 2 discarded border columns.
    for k in range(9):
        a = slab[pl.ds((k // 3) * wp + (k % 3), m_rows), :]
        part = jnp.dot(a, w2[k], preferred_element_type=jnp.float32)
        if k == 0:
            acc[...] = part
        else:
            acc[...] += part

    # ---- Epilogue: bn2+relu, conv3+bn3, shortcut, residual add, relu. -------
    y2 = jnp.maximum(acc[...] * s2[...] + b2[...], 0.0).astype(cdt)
    y3 = jnp.dot(y2, w3[...], preferred_element_type=jnp.float32)
    y3 = y3 * s3[...] + b3[...]
    y3 = y3.reshape(tho, wp, coutp)[:, :width, :]               # drop border cols

    if has_proj:
        sc = jnp.dot(x2d, ws[...], preferred_element_type=jnp.float32)
        sc = sc * ss[...] + bs[...]
    else:                                                        # identity shortcut
        sc = x2d.astype(jnp.float32)
    sc = sc.reshape(tho, width, coutp)

    out = jnp.maximum(y3 + sc, 0.0)
    o_ref[...] = out.reshape(1, tho, width, coutp).astype(o_ref.dtype)


def _pick_row_tile(h, width, cinp, pp, coutp, n_batch, *, budget, target_px=2048):
    """Largest divisor of H whose per-step VMEM footprint fits the budget,
    preferring tilings that give >= 2 grid steps (v7x has 2 TensorCores)."""
    w_bytes = 2 * 2 * (cinp * pp + 9 * pp * pp + pp * coutp + cinp * coutp)

    def est(d):
        px, pxp = d * width, d * (width + 2)
        slab_rows = _round_up((d + 2) * (width + 2) + 2, 8)
        b = w_bytes
        b += 2 * 2 * (px + 2 * width) * cinp           # x blocks, double-buffered bf16
        b += 2 * 2 * px * coutp                        # output block, double-buffered
        b += 2 * slab_rows * pp                        # conv1 slab scratch (bf16)
        b += 4 * pxp * pp                              # conv2 f32 accumulator
        b += 4 * pxp * (pp + coutp)                    # y2 / conv3 f32 temporaries
        b += 4 * px * coutp                            # shortcut f32 temporary
        return b

    cands = [d for d in range(1, h + 1)
             if h % d == 0 and d * width <= target_px and est(d) <= budget]
    if not cands:
        return 1
    multi = [d for d in cands if n_batch * (h // d) >= 2]
    return max(multi) if multi else max(cands)


def fused_bottleneck_stride1(x, params):
    """x: (N, H, W, Cin_pad) compute-dtype.  Returns (N, H, W, Cout_pad)."""
    n, h, width, cinp = x.shape
    pp, coutp = params["pp"], params["coutp"]
    has_proj = "ws" in params
    if not has_proj:
        assert cinp == coutp, "identity shortcut needs in_planes == 4*planes"

    tho = _pick_row_tile(h, width, cinp, pp, coutp, n, budget=VMEM_LIMIT // 2)
    n_t = h // tho
    wp = width + 2
    slab_rows = _round_up((tho + 2) * wp + 2, 8)

    kernel = functools.partial(_fused_bottleneck_kernel, tho=tho, width=width,
                               slab_rows=slab_rows, has_proj=has_proj)

    def vec(c):
        return pl.BlockSpec((1, c), lambda b, t: (0, 0))

    in_specs = [
        pl.BlockSpec((1, tho, width, cinp), lambda b, t: (b, t, 0, 0)),      # x_mid
        pl.BlockSpec((1, 1, width, cinp),                                     # x_top
                     lambda b, t: (b, jnp.maximum(t * tho - 1, 0), 0, 0)),
        pl.BlockSpec((1, 1, width, cinp),                                     # x_bot
                     lambda b, t: (b, jnp.minimum((t + 1) * tho, h - 1), 0, 0)),
        pl.BlockSpec((cinp, pp), lambda b, t: (0, 0)),                        # w1
        vec(pp), vec(pp),                                                     # s1 b1
        pl.BlockSpec((9, pp, pp), lambda b, t: (0, 0, 0)),                    # w2
        vec(pp), vec(pp),                                                     # s2 b2
        pl.BlockSpec((pp, coutp), lambda b, t: (0, 0)),                       # w3
        vec(coutp), vec(coutp),                                               # s3 b3
    ]
    args = [x, x, x,
            params["w1"], params["s1"], params["b1"],
            params["w2"], params["s2"], params["b2"],
            params["w3"], params["s3"], params["b3"]]
    if has_proj:
        in_specs += [pl.BlockSpec((cinp, coutp), lambda b, t: (0, 0)),
                     vec(coutp), vec(coutp)]
        args += [params["ws"], params["ss"], params["bs"]]

    return pl.pallas_call(
        kernel,
        out_shape=jax.ShapeDtypeStruct((n, h, width, coutp), x.dtype),
        grid=(n, n_t),
        in_specs=in_specs,
        out_specs=pl.BlockSpec((1, tho, width, coutp), lambda b, t: (b, t, 0, 0)),
        scratch_shapes=[pltpu.VMEM((slab_rows, pp), x.dtype),
                        pltpu.VMEM((tho * wp, pp), jnp.float32)],
        compiler_params=pltpu.CompilerParams(
            dimension_semantics=("parallel", "parallel"),
            vmem_limit_bytes=VMEM_LIMIT),
    )(*args)


# -------------------- pointwise kernels (stride != 1 fallback) --------------- #

def _pw_bn_relu_kernel(x_ref, w_ref, s_ref, b_ref, o_ref):
    y = jnp.dot(x_ref[...], w_ref[...], preferred_element_type=jnp.float32)
    o_ref[...] = jnp.maximum(y * s_ref[...] + b_ref[...], 0.0).astype(o_ref.dtype)


def _pw_bn_add_proj_kernel(x_ref, w_ref, s_ref, b_ref,
                           xs_ref, ws_ref, ss_ref, bs_ref, o_ref):
    y = jnp.dot(x_ref[...], w_ref[...], preferred_element_type=jnp.float32)
    y = y * s_ref[...] + b_ref[...]
    sc = jnp.dot(xs_ref[...], ws_ref[...], preferred_element_type=jnp.float32)
    sc = sc * ss_ref[...] + bs_ref[...]
    o_ref[...] = jnp.maximum(y + sc, 0.0).astype(o_ref.dtype)


def _row_tile(p, target=1024):
    return min(_round_up(p, 8), target)


def pointwise_bn_relu(x2d, w, scale, shift, *, out_dtype):
    p, cin = x2d.shape
    cout = w.shape[1]
    tile = _row_tile(p)
    prows = _round_up(p, tile)
    if prows != p:
        x2d = jnp.pad(x2d, ((0, prows - p), (0, 0)))
    out = pl.pallas_call(
        _pw_bn_relu_kernel,
        out_shape=jax.ShapeDtypeStruct((prows, cout), out_dtype),
        grid=(prows // tile,),
        in_specs=[pl.BlockSpec((tile, cin), lambda i: (i, 0)),
                  pl.BlockSpec((cin, cout), lambda i: (0, 0)),
                  pl.BlockSpec((1, cout), lambda i: (0, 0)),
                  pl.BlockSpec((1, cout), lambda i: (0, 0))],
        out_specs=pl.BlockSpec((tile, cout), lambda i: (i, 0)),
        compiler_params=pltpu.CompilerParams(
            dimension_semantics=("parallel",), vmem_limit_bytes=VMEM_LIMIT),
    )(x2d, w, scale, shift)
    return out[:p]


def pointwise_bn_add_proj(x2d, w, s, b, xs, ws, ss, bs, *, out_dtype):
    p, cin = x2d.shape
    cout = w.shape[1]
    cin_sc = xs.shape[1]
    tile = _row_tile(p)
    prows = _round_up(p, tile)
    if prows != p:
        x2d = jnp.pad(x2d, ((0, prows - p), (0, 0)))
        xs = jnp.pad(xs, ((0, prows - p), (0, 0)))
    out = pl.pallas_call(
        _pw_bn_add_proj_kernel,
        out_shape=jax.ShapeDtypeStruct((prows, cout), out_dtype),
        grid=(prows // tile,),
        in_specs=[pl.BlockSpec((tile, cin), lambda i: (i, 0)),
                  pl.BlockSpec((cin, cout), lambda i: (0, 0)),
                  pl.BlockSpec((1, cout), lambda i: (0, 0)),
                  pl.BlockSpec((1, cout), lambda i: (0, 0)),
                  pl.BlockSpec((tile, cin_sc), lambda i: (i, 0)),
                  pl.BlockSpec((cin_sc, cout), lambda i: (0, 0)),
                  pl.BlockSpec((1, cout), lambda i: (0, 0)),
                  pl.BlockSpec((1, cout), lambda i: (0, 0))],
        out_specs=pl.BlockSpec((tile, cout), lambda i: (i, 0)),
        compiler_params=pltpu.CompilerParams(
            dimension_semantics=("parallel",), vmem_limit_bytes=VMEM_LIMIT),
    )(x2d, w, s, b, xs, ws, ss, bs)
    return out[:p]


def _bottleneck_strided_fallback(x, params, stride):
    # TODO(synk): replace with a strided-halo fused kernel; this path round-trips
    # a 9x-wide im2col temp through HBM for the few downsampling blocks.
    n, h, width, cinp = x.shape
    pp, coutp = params["pp"], params["coutp"]
    out1 = pointwise_bn_relu(x.reshape(n * h * width, cinp),
                             params["w1"], params["s1"], params["b1"],
                             out_dtype=x.dtype).reshape(n, h, width, pp)
    ho = (h + 2 - 3) // stride + 1
    wo = (width + 2 - 3) // stride + 1
    x2p = jnp.pad(out1, ((0, 0), (1, 1), (1, 1), (0, 0)))
    taps = [x2p[:, r:r + stride * (ho - 1) + 1:stride,
                 c:c + stride * (wo - 1) + 1:stride, :]
            for r in range(3) for c in range(3)]
    im2col = jnp.concatenate(taps, axis=-1).reshape(n * ho * wo, 9 * pp)
    w2f = params["w2"].reshape(9 * pp, pp)
    out2 = pointwise_bn_relu(im2col, w2f, params["s2"], params["b2"],
                             out_dtype=x.dtype)
    xs = x[:, ::stride, ::stride, :].reshape(n * ho * wo, cinp)
    out = pointwise_bn_add_proj(out2, params["w3"], params["s3"], params["b3"],
                                xs, params["ws"], params["ss"], params["bs"],
                                out_dtype=x.dtype)
    return out.reshape(n, ho, wo, coutp)


# --------------------------------- forward ----------------------------------- #

def bottleneck_forward(x_nchw, params, *, stride=1, compute_dtype=jnp.bfloat16):
    """Full Bottleneck forward.  Input/output are NCHW (PyTorch convention)."""
    n, cin, h, width = x_nchw.shape
    assert cin == params["cin"], (cin, params["cin"])
    cinp, coutp, cout = params["cinp"], params["coutp"], params["cout"]

    # TODO(synk): keep this padded-NHWC bf16 layout between chained blocks so the
    # transpose / channel-pad / f32 cast only happens at network edges.
    x = jnp.transpose(x_nchw, (0, 2, 3, 1)).astype(compute_dtype)
    if cinp != cin:
        x = jnp.pad(x, ((0, 0), (0, 0), (0, 0), (0, cinp - cin)))

    if stride == 1:
        out = fused_bottleneck_stride1(x, params)            # (n, h, w, coutp)
    else:
        out = _bottleneck_strided_fallback(x, params, stride)

    out = out[..., :cout].astype(jnp.float32)
    return jnp.transpose(out, (0, 3, 1, 2))                   # back to NCHW


# ----------------------------- parameter helpers ----------------------------- #

def init_raw_params(key, in_planes, planes, stride):
    expansion = 4
    ks = iter(jax.random.split(key, 32))

    def conv_w(shape):
        return 0.1 * jax.random.normal(next(ks), shape, jnp.float32)

    def bn(c):
        gamma = 0.5 + jax.random.uniform(next(ks), (c,), jnp.float32)
        beta = 0.1 * jax.random.normal(next(ks), (c,), jnp.float32)
        mean = 0.1 * jax.random.normal(next(ks), (c,), jnp.float32)
        var = 0.5 + jax.random.uniform(next(ks), (c,), jnp.float32)
        return (gamma, beta, mean, var)

    raw = {
        "conv1_w": conv_w((planes, in_planes, 1, 1)),
        "bn1": bn(planes),
        "conv2_w": conv_w((planes, planes, 3, 3)),
        "bn2": bn(planes),
        "conv3_w": conv_w((expansion * planes, planes, 1, 1)),
        "bn3": bn(expansion * planes),
    }
    if stride != 1 or in_planes != expansion * planes:
        raw["sc_w"] = conv_w((expansion * planes, in_planes, 1, 1))
        raw["bn_sc"] = bn(expansion * planes)
    return raw


def fold_params(raw, eps=1e-5, compute_dtype=jnp.bfloat16, lane=LANE):
    """Fold BN into scale/shift, transpose to (Cin, Cout), pad channels to 128."""
    def fold(gamma, beta, mean, var, cpad):
        s = gamma / jnp.sqrt(var + eps)
        b = beta - mean * s
        s = jnp.pad(s, (0, cpad - s.shape[0])).reshape(1, -1).astype(jnp.float32)
        b = jnp.pad(b, (0, cpad - b.shape[0])).reshape(1, -1).astype(jnp.float32)
        return s, b

    def pad_mat(m, rpad, cpad):   # m: (Cin, Cout)
        return jnp.pad(m, ((0, rpad - m.shape[0]),
                           (0, cpad - m.shape[1]))).astype(compute_dtype)

    planes, in_planes = raw["conv1_w"].shape[:2]
    cout = raw["conv3_w"].shape[0]
    cinp = _round_up(in_planes, lane)
    pp = _round_up(planes, lane)
    coutp = _round_up(cout, lane)

    p = {"cin": in_planes, "cout": cout, "cinp": cinp, "pp": pp, "coutp": coutp}
    p["w1"] = pad_mat(raw["conv1_w"][:, :, 0, 0].T, cinp, pp)
    p["s1"], p["b1"] = fold(*raw["bn1"], pp)

    w2 = raw["conv2_w"]                                        # (O, I, 3, 3)
    p["w2"] = jnp.stack([pad_mat(w2[:, :, dr, dc].T, pp, pp)   # (9, pp, pp)
                         for dr in range(3) for dc in range(3)], axis=0)
    p["s2"], p["b2"] = fold(*raw["bn2"], pp)

    p["w3"] = pad_mat(raw["conv3_w"][:, :, 0, 0].T, pp, coutp)
    p["s3"], p["b3"] = fold(*raw["bn3"], coutp)
    if "sc_w" in raw:
        p["ws"] = pad_mat(raw["sc_w"][:, :, 0, 0].T, cinp, coutp)
        p["ss"], p["bs"] = fold(*raw["bn_sc"], coutp)
    return p


# ----------------------------- pure-JAX reference ---------------------------- #

def reference_forward(x, raw, stride, eps=1e-5):
    def conv(x, w, s=1, p=0):
        return lax.conv_general_dilated(
            x, w, (s, s), [(p, p), (p, p)],
            dimension_numbers=("NCHW", "OIHW", "NCHW"))

    def bn(x, stats):
        g, b, m, v = stats
        sh = (1, -1, 1, 1)
        return (x - m.reshape(sh)) / jnp.sqrt(v.reshape(sh) + eps) * \
            g.reshape(sh) + b.reshape(sh)

    out = jax.nn.relu(bn(conv(x, raw["conv1_w"]), raw["bn1"]))
    out = jax.nn.relu(bn(conv(out, raw["conv2_w"], s=stride, p=1), raw["bn2"]))
    out = bn(conv(out, raw["conv3_w"]), raw["bn3"])
    if "sc_w" in raw:
        sc = bn(conv(x, raw["sc_w"], s=stride), raw["bn_sc"])
    else:
        sc = x
    return jax.nn.relu(out + sc)


# ----------------------------------- main ------------------------------------ #

if __name__ == "__main__":
    key = jax.random.PRNGKey(0)

    configs = [
        # (N, in_planes, planes, H, W, stride)
        (2, 8, 4, 16, 16, 1),    # projection shortcut (in_planes != 4*planes)
        (2, 16, 4, 16, 16, 1),   # identity shortcut  (in_planes == 4*planes)
    ]
    for i, (n, in_planes, planes, h, w, stride) in enumerate(configs):
        kx, kp = jax.random.split(jax.random.fold_in(key, i))
        x = jax.random.normal(kx, (n, in_planes, h, w), jnp.float32)   # NCHW

        raw = init_raw_params(kp, in_planes, planes, stride)
        params = fold_params(raw)

        fwd = jax.jit(lambda xx, _p=params, _s=stride:
                      bottleneck_forward(xx, _p, stride=_s))
        out = jax.block_until_ready(fwd(x))

        ref = reference_forward(x, raw, stride)
        assert out.shape == ref.shape == (n, 4 * planes, h, w), out.shape
        # Tolerance loosened vs pure-f32: activations/weights go through bf16 on
        # the MXU (accumulation and BN epilogues stay f32).
        np.testing.assert_allclose(np.asarray(out), np.asarray(ref),
                                   atol=5e-2, rtol=5e-2)
    print("KERNEL_OK")
</pallas_src>

<mosaic_0001>
module attributes {stable_mosaic.version = 11 : i64} {
  func.func @_fused_bottleneck_kernel(%arg0: i32, %arg1: i32, %arg2: memref<1x16x16x128xbf16, #tpu.memory_space<vmem>>, %arg3: memref<1x1x16x128xbf16, #tpu.memory_space<vmem>>, %arg4: memref<1x1x16x128xbf16, #tpu.memory_space<vmem>>, %arg5: memref<128x128xbf16, #tpu.memory_space<vmem>>, %arg6: memref<1x128xf32, #tpu.memory_space<vmem>>, %arg7: memref<1x128xf32, #tpu.memory_space<vmem>>, %arg8: memref<9x128x128xbf16, #tpu.memory_space<vmem>>, %arg9: memref<1x128xf32, #tpu.memory_space<vmem>>, %arg10: memref<1x128xf32, #tpu.memory_space<vmem>>, %arg11: memref<128x128xbf16, #tpu.memory_space<vmem>>, %arg12: memref<1x128xf32, #tpu.memory_space<vmem>>, %arg13: memref<1x128xf32, #tpu.memory_space<vmem>>, %arg14: memref<128x128xbf16, #tpu.memory_space<vmem>>, %arg15: memref<1x128xf32, #tpu.memory_space<vmem>>, %arg16: memref<1x128xf32, #tpu.memory_space<vmem>>, %arg17: memref<1x16x16x128xbf16, #tpu.memory_space<vmem>>, %arg18: memref<328x128xbf16, #tpu.memory_space<vmem>>, %arg19: memref<288x128xf32, #tpu.memory_space<vmem>>) attributes {dimension_semantics = [#tpu.dimension_semantics<parallel>, #tpu.dimension_semantics<parallel>], iteration_bounds = array<i64: 2, 1>, scalar_prefetch = 0 : i64, scratch_operands = 2 : i64, tpu.core_type = #tpu.core_type<tc>, window_params = [{transform_indices = @transform_0, window_bounds = array<i64: 1, 16, 16, 128>}, {transform_indices = @transform_1, window_bounds = array<i64: 1, 1, 16, 128>}, {transform_indices = @transform_2, window_bounds = array<i64: 1, 1, 16, 128>}, {pipeline_mode = #tpu.pipeline_mode<synchronous>, transform_indices = @transform_3, window_bounds = array<i64: 128, 128>}, {pipeline_mode = #tpu.pipeline_mode<synchronous>, transform_indices = @transform_4, window_bounds = array<i64: 1, 128>}, {pipeline_mode = #tpu.pipeline_mode<synchronous>, transform_indices = @transform_5, window_bounds = array<i64: 1, 128>}, {pipeline_mode = #tpu.pipeline_mode<synchronous>, transform_indices = @transform_6, window_bounds = array<i64: 9, 128, 128>}, {pipeline_mode = #tpu.pipeline_mode<synchronous>, transform_indices = @transform_7, window_bounds = array<i64: 1, 128>}, {pipeline_mode = #tpu.pipeline_mode<synchronous>, transform_indices = @transform_8, window_bounds = array<i64: 1, 128>}, {pipeline_mode = #tpu.pipeline_mode<synchronous>, transform_indices = @transform_9, window_bounds = array<i64: 128, 128>}, {pipeline_mode = #tpu.pipeline_mode<synchronous>, transform_indices = @transform_10, window_bounds = array<i64: 1, 128>}, {pipeline_mode = #tpu.pipeline_mode<synchronous>, transform_indices = @transform_11, window_bounds = array<i64: 1, 128>}, {pipeline_mode = #tpu.pipeline_mode<synchronous>, transform_indices = @transform_12, window_bounds = array<i64: 128, 128>}, {pipeline_mode = #tpu.pipeline_mode<synchronous>, transform_indices = @transform_13, window_bounds = array<i64: 1, 128>}, {pipeline_mode = #tpu.pipeline_mode<synchronous>, transform_indices = @transform_14, window_bounds = array<i64: 1, 128>}, {transform_indices = @transform_15, window_bounds = array<i64: 1, 16, 16, 128>}]} {
    %c0 = arith.constant 0 : index
    %c0_0 = arith.constant 0 : index
    %c0_1 = arith.constant 0 : index
    %c0_2 = arith.constant 0 : index
    %0 = vector.load %arg2[%c0, %c0_0, %c0_1, %c0_2] : memref<1x16x16x128xbf16, #tpu.memory_space<vmem>>, vector<1x16x16x128xbf16>
    %1 = vector.shape_cast %0 : vector<1x16x16x128xbf16> to vector<256x128xbf16>
    %c0_3 = arith.constant 0 : index
    %c0_4 = arith.constant 0 : index
    %2 = vector.load %arg5[%c0_3, %c0_4] : memref<128x128xbf16, #tpu.memory_space<vmem>>, vector<128x128xbf16>
    %cst = arith.constant dense<0.000000e+00> : vector<256x128xf32>
    %3 = tpu.matmul %1, %2, %cst {dimension_numbers = #tpu.dot_dimension_numbers<[1], [0], [0], [1], [0, 0, 1, 1], [], []>} : vector<256x128xbf16>, vector<128x128xbf16>, vector<256x128xf32> -> vector<256x128xf32>
    %c0_5 = arith.constant 0 : index
    %c0_6 = arith.constant 0 : index
    %4 = vector.load %arg6[%c0_5, %c0_6] : memref<1x128xf32, #tpu.memory_space<vmem>>, vector<1x128xf32>
    %5 = vector.broadcast %4 : vector<1x128xf32> to vector<256x128xf32>
    %6 = arith.mulf %3, %5 : vector<256x128xf32>
    %c0_7 = arith.constant 0 : index
    %c0_8 = arith.constant 0 : index
    %7 = vector.load %arg7[%c0_7, %c0_8] : memref<1x128xf32, #tpu.memory_space<vmem>>, vector<1x128xf32>
    %8 = vector.broadcast %7 : vector<1x128xf32> to vector<256x128xf32>
    %9 = arith.addf %6, %8 : vector<256x128xf32>
    %cst_9 = arith.constant 0.000000e+00 : f32
    %10 = vector.broadcast %cst_9 : f32 to vector<256x128xf32>
    %11 = arith.maximumf %9, %10 : vector<256x128xf32>
    %12 = arith.truncf %11 : vector<256x128xf32> to vector<256x128xbf16>
    %13 = vector.shape_cast %12 : vector<256x128xbf16> to vector<16x16x128xbf16>
    %cst_10 = arith.constant 0.000000e+00 : bf16
    %14 = vector.broadcast %cst_10 : bf16 to vector<16x1x128xbf16>
    %15 = tpu.concatenate %14, %13, %14 in 1 : vector<16x1x128xbf16>, vector<16x16x128xbf16>, vector<16x1x128xbf16> -> vector<16x18x128xbf16>
    %16 = vector.shape_cast %15 : vector<16x18x128xbf16> to vector<288x128xbf16>
    %c18 = arith.constant 18 : index
    %c0_11 = arith.constant 0 : index
    %17 = vector.load %arg18[%c18, %c0_11] : memref<328x128xbf16, #tpu.memory_space<vmem>>, vector<288x128xbf16>
    tpu.vector_store %arg18[%c18, %c0_11], %16 {strides = array<i32>} : memref<328x128xbf16, #tpu.memory_space<vmem>>, vector<288x128xbf16>,
    %cst_12 = arith.constant 0.000000e+00 : bf16
    %18 = vector.broadcast %cst_12 : bf16 to vector<1x128xbf16>
    %c0_13 = arith.constant 0 : index
    %c0_14 = arith.constant 0 : index
    %c0_15 = arith.constant 0 : index
    %c0_16 = arith.constant 0 : index
    %19 = vector.load %arg3[%c0_13, %c0_14, %c0_15, %c0_16] : memref<1x1x16x128xbf16, #tpu.memory_space<vmem>>, vector<1x1x16x128xbf16>
    %20 = vector.shape_cast %19 : vector<1x1x16x128xbf16> to vector<16x128xbf16>
    %c0_17 = arith.constant 0 : index
    %c0_18 = arith.constant 0 : index
    %21 = vector.load %arg5[%c0_17, %c0_18] : memref<128x128xbf16, #tpu.memory_space<vmem>>, vector<128x128xbf16>
    %cst_19 = arith.constant dense<0.000000e+00> : vector<16x128xf32>
    %22 = tpu.matmul %20, %21, %cst_19 {dimension_numbers = #tpu.dot_dimension_numbers<[1], [0], [0], [1], [0, 0, 1, 1], [], []>} : vector<16x128xbf16>, vector<128x128xbf16>, vector<16x128xf32> -> vector<16x128xf32>
    %c0_20 = arith.constant 0 : index
    %c0_21 = arith.constant 0 : index
    %23 = vector.load %arg6[%c0_20, %c0_21] : memref<1x128xf32, #tpu.memory_space<vmem>>, vector<1x128xf32>
    %24 = vector.broadcast %23 : vector<1x128xf32> to vector<16x128xf32>
    %25 = arith.mulf %22, %24 : vector<16x128xf32>
    %c0_22 = arith.constant 0 : index
    %c0_23 = arith.constant 0 : index
    %26 = vector.load %arg7[%c0_22, %c0_23] : memref<1x128xf32, #tpu.memory_space<vmem>>, vector<1x128xf32>
    %27 = vector.broadcast %26 : vector<1x128xf32> to vector<16x128xf32>
    %28 = arith.addf %25, %27 : vector<16x128xf32>
    %cst_24 = arith.constant 0.000000e+00 : f32
    %29 = vector.broadcast %cst_24 : f32 to vector<16x128xf32>
    %30 = arith.maximumf %28, %29 : vector<16x128xf32>
    %31 = arith.truncf %30 : vector<16x128xf32> to vector<16x128xbf16>
    %c0_i32 = arith.constant 0 : i32
    %32 = arith.cmpi sgt, %arg1, %c0_i32 : i32
    %cst_25 = arith.constant 0.000000e+00 : bf16
    %33 = vector.broadcast %cst_25 : bf16 to vector<16x128xbf16>
    %34 = arith.select %32, %31, %33 : vector<16x128xbf16>
    %35 = tpu.concatenate %18, %34, %18 in 0 : vector<1x128xbf16>, vector<16x128xbf16>, vector<1x128xbf16> -> vector<18x128xbf16>
    %c0_26 = arith.constant 0 : index
    %c0_27 = arith.constant 0 : index
    %36 = vector.load %arg18[%c0_26, %c0_27] : memref<328x128xbf16, #tpu.memory_space<vmem>>, vector<18x128xbf16>
    tpu.vector_store %arg18[%c0_26, %c0_27], %35 {strides = array<i32>} : memref<328x128xbf16, #tpu.memory_space<vmem>>, vector<18x128xbf16>,
    %c0_28 = arith.constant 0 : index
    %c0_29 = arith.constant 0 : index
    %c0_30 = arith.constant 0 : index
    %c0_31 = arith.constant 0 : index
    %37 = vector.load %arg4[%c0_28, %c0_29, %c0_30, %c0_31] : memref<1x1x16x128xbf16, #tpu.memory_space<vmem>>, vector<1x1x16x128xbf16>
    %38 = vector.shape_cast %37 : vector<1x1x16x128xbf16> to vector<16x128xbf16>
    %c0_32 = arith.constant 0 : index
    %c0_33 = arith.constant 0 : index
    %39 = vector.load %arg5[%c0_32, %c0_33] : memref<128x128xbf16, #tpu.memory_space<vmem>>, vector<128x128xbf16>
    %cst_34 = arith.constant dense<0.000000e+00> : vector<16x128xf32>
    %40 = tpu.matmul %38, %39, %cst_34 {dimension_numbers = #tpu.dot_dimension_numbers<[1], [0], [0], [1], [0, 0, 1, 1], [], []>} : vector<16x128xbf16>, vector<128x128xbf16>, vector<16x128xf32> -> vector<16x128xf32>
    %c0_35 = arith.constant 0 : index
    %c0_36 = arith.constant 0 : index
    %41 = vector.load %arg6[%c0_35, %c0_36] : memref<1x128xf32, #tpu.memory_space<vmem>>, vector<1x128xf32>
    %42 = vector.broadcast %41 : vector<1x128xf32> to vector<16x128xf32>
    %43 = arith.mulf %40, %42 : vector<16x128xf32>
    %c0_37 = arith.constant 0 : index
    %c0_38 = arith.constant 0 : index
    %44 = vector.load %arg7[%c0_37, %c0_38] : memref<1x128xf32, #tpu.memory_space<vmem>>, vector<1x128xf32>
    %45 = vector.broadcast %44 : vector<1x128xf32> to vector<16x128xf32>
    %46 = arith.addf %43, %45 : vector<16x128xf32>
    %cst_39 = arith.constant 0.000000e+00 : f32
    %47 = vector.broadcast %cst_39 : f32 to vector<16x128xf32>
    %48 = arith.maximumf %46, %47 : vector<16x128xf32>
    %49 = arith.truncf %48 : vector<16x128xf32> to vector<16x128xbf16>
    %c0_i32_40 = arith.constant 0 : i32
    %50 = arith.cmpi slt, %arg1, %c0_i32_40 : i32
    %cst_41 = arith.constant 0.000000e+00 : bf16
    %51 = vector.broadcast %cst_41 : bf16 to vector<16x128xbf16>
    %52 = arith.select %50, %49, %51 : vector<16x128xbf16>
    %53 = tpu.concatenate %18, %52, %18 in 0 : vector<1x128xbf16>, vector<16x128xbf16>, vector<1x128xbf16> -> vector<18x128xbf16>
    %c306 = arith.constant 306 : index
    %c0_42 = arith.constant 0 : index
    %54 = vector.load %arg18[%c306, %c0_42] : memref<328x128xbf16, #tpu.memory_space<vmem>>, vector<18x128xbf16>
    tpu.vector_store %arg18[%c306, %c0_42], %53 {strides = array<i32>} : memref<328x128xbf16, #tpu.memory_space<vmem>>, vector<18x128xbf16>,
    %cst_43 = arith.constant 0.000000e+00 : bf16
    %55 = vector.broadcast %cst_43 : bf16 to vector<4x128xbf16>
    %c324 = arith.constant 324 : index
    %c0_44 = arith.constant 0 : index
    %56 = vector.load %arg18[%c324, %c0_44] : memref<328x128xbf16, #tpu.memory_space<vmem>>, vector<4x128xbf16>
    tpu.vector_store %arg18[%c324, %c0_44], %55 {strides = array<i32>} : memref<328x128xbf16, #tpu.memory_space<vmem>>, vector<4x128xbf16>,
    %c0_45 = arith.constant 0 : index
    %c0_46 = arith.constant 0 : index
    %57 = vector.load %arg18[%c0_45, %c0_46] : memref<328x128xbf16, #tpu.memory_space<vmem>>, vector<288x128xbf16>
    %c0_47 = arith.constant 0 : index
    %c0_48 = arith.constant 0 : index
    %c0_49 = arith.constant 0 : index
    %58 = vector.load %arg8[%c0_47, %c0_48, %c0_49] : memref<9x128x128xbf16, #tpu.memory_space<vmem>>, vector<1x128x128xbf16>
    %59 = vector.shape_cast %58 : vector<1x128x128xbf16> to vector<128x128xbf16>
    %cst_50 = arith.constant dense<0.000000e+00> : vector<288x128xf32>
    %60 = tpu.matmul %57, %59, %cst_50 {dimension_numbers = #tpu.dot_dimension_numbers<[1], [0], [0], [1], [0, 0, 1, 1], [], []>} : vector<288x128xbf16>, vector<128x128xbf16>, vector<288x128xf32> -> vector<288x128xf32>
    %c0_51 = arith.constant 0 : index
    %c0_52 = arith.constant 0 : index
    %61 = vector.load %arg19[%c0_51, %c0_52] : memref<288x128xf32, #tpu.memory_space<vmem>>, vector<288x128xf32>
    tpu.vector_store %arg19[%c0_51, %c0_52], %60 {strides = array<i32>} : memref<288x128xf32, #tpu.memory_space<vmem>>, vector<288x128xf32>,
    %c1 = arith.constant 1 : index
    %c0_53 = arith.constant 0 : index
    %62 = vector.load %arg18[%c1, %c0_53] : memref<328x128xbf16, #tpu.memory_space<vmem>>, vector<288x128xbf16>
    %c1_54 = arith.constant 1 : index
    %c0_55 = arith.constant 0 : index
    %c0_56 = arith.constant 0 : index
    %63 = vector.load %arg8[%c1_54, %c0_55, %c0_56] : memref<9x128x128xbf16, #tpu.memory_space<vmem>>, vector<1x128x128xbf16>
    %64 = vector.shape_cast %63 : vector<1x128x128xbf16> to vector<128x128xbf16>
    %cst_57 = arith.constant dense<0.000000e+00> : vector<288x128xf32>
    %65 = tpu.matmul %62, %64, %cst_57 {dimension_numbers = #tpu.dot_dimension_numbers<[1], [0], [0], [1], [0, 0, 1, 1], [], []>} : vector<288x128xbf16>, vector<128x128xbf16>, vector<288x128xf32> -> vector<288x128xf32>
    %c0_58 = arith.constant 0 : index
    %c0_59 = arith.constant 0 : index
    %66 = vector.load %arg19[%c0_58, %c0_59] : memref<288x128xf32, #tpu.memory_space<vmem>>, vector<288x128xf32>
    %67 = arith.addf %66, %65 : vector<288x128xf32>
    %c0_60 = arith.constant 0 : index
    %c0_61 = arith.constant 0 : index
    %68 = vector.load %arg19[%c0_60, %c0_61] : memref<288x128xf32, #tpu.memory_space<vmem>>, vector<288x128xf32>
    tpu.vector_store %arg19[%c0_60, %c0_61], %67 {strides = array<i32>} : memref<288x128xf32, #tpu.memory_space<vmem>>, vector<288x128xf32>,
    %c2 = arith.constant 2 : index
    %c0_62 = arith.constant 0 : index
    %69 = vector.load %arg18[%c2, %c0_62] : memref<328x128xbf16, #tpu.memory_space<vmem>>, vector<288x128xbf16>
    %c2_63 = arith.constant 2 : index
    %c0_64 = arith.constant 0 : index
    %c0_65 = arith.constant 0 : index
    %70 = vector.load %arg8[%c2_63, %c0_64, %c0_65] : memref<9x128x128xbf16, #tpu.memory_space<vmem>>, vector<1x128x128xbf16>
    %71 = vector.shape_cast %70 : vector<1x128x128xbf16> to vector<128x128xbf16>
    %cst_66 = arith.constant dense<0.000000e+00> : vector<288x128xf32>
    %72 = tpu.matmul %69, %71, %cst_66 {dimension_numbers = #tpu.dot_dimension_numbers<[1], [0], [0], [1], [0, 0, 1, 1], [], []>} : vector<288x128xbf16>, vector<128x128xbf16>, vector<288x128xf32> -> vector<288x128xf32>
    %c0_67 = arith.constant 0 : index
    %c0_68 = arith.constant 0 : index
    %73 = vector.load %arg19[%c0_67, %c0_68] : memref<288x128xf32, #tpu.memory_space<vmem>>, vector<288x128xf32>
    %74 = arith.addf %73, %72 : vector<288x128xf32>
    %c0_69 = arith.constant 0 : index
    %c0_70 = arith.constant 0 : index
    %75 = vector.load %arg19[%c0_69, %c0_70] : memref<288x128xf32, #tpu.memory_space<vmem>>, vector<288x128xf32>
    tpu.vector_store %arg19[%c0_69, %c0_70], %74 {strides = array<i32>} : memref<288x128xf32, #tpu.memory_space<vmem>>, vector<288x128xf32>,
    %c18_71 = arith.constant 18 : index
    %c0_72 = arith.constant 0 : index
    %76 = vector.load %arg18[%c18_71, %c0_72] : memref<328x128xbf16, #tpu.memory_space<vmem>>, vector<288x128xbf16>
    %c3 = arith.constant 3 : index
    %c0_73 = arith.constant 0 : index
    %c0_74 = arith.constant 0 : index
    %77 = vector.load %arg8[%c3, %c0_73, %c0_74] : memref<9x128x128xbf16, #tpu.memory_space<vmem>>, vector<1x128x128xbf16>
    %78 = vector.shape_cast %77 : vector<1x128x128xbf16> to vector<128x128xbf16>
    %cst_75 = arith.constant dense<0.000000e+00> : vector<288x128xf32>
    %79 = tpu.matmul %76, %78, %cst_75 {dimension_numbers = #tpu.dot_dimension_numbers<[1], [0], [0], [1], [0, 0, 1, 1], [], []>} : vector<288x128xbf16>, vector<128x128xbf16>, vector<288x128xf32> -> vector<288x128xf32>
    %c0_76 = arith.constant 0 : index
    %c0_77 = arith.constant 0 : index
    %80 = vector.load %arg19[%c0_76, %c0_77] : memref<288x128xf32, #tpu.memory_space<vmem>>, vector<288x128xf32>
    %81 = arith.addf %80, %79 : vector<288x128xf32>
    %c0_78 = arith.constant 0 : index
    %c0_79 = arith.constant 0 : index
    %82 = vector.load %arg19[%c0_78, %c0_79] : memref<288x128xf32, #tpu.memory_space<vmem>>, vector<288x128xf32>
    tpu.vector_store %arg19[%c0_78, %c0_79], %81 {strides = array<i32>} : memref<288x128xf32, #tpu.memory_space<vmem>>, vector<288x128xf32>,
    %c19 = arith.constant 19 : index
    %c0_80 = arith.constant 0 : index
    %83 = vector.load %arg18[%c19, %c0_80] : memref<328x128xbf16, #tpu.memory_space<vmem>>, vector<288x128xbf16>
    %c4 = arith.constant 4 : index
    %c0_81 = arith.constant 0 : index
    %c0_82 = arith.constant 0 : index
    %84 = vector.load %arg8[%c4, %c0_81, %c0_82] : memref<9x128x128xbf16, #tpu.memory_space<vmem>>, vector<1x128x128xbf16>
    %85 = vector.shape_cast %84 : vector<1x128x128xbf16> to vector<128x128xbf16>
    %cst_83 = arith.constant dense<0.000000e+00> : vector<288x128xf32>
    %86 = tpu.matmul %83, %85, %cst_83 {dimension_numbers = #tpu.dot_dimension_numbers<[1], [0], [0], [1], [0, 0, 1, 1], [], []>} : vector<288x128xbf16>, vector<128x128xbf16>, vector<288x128xf32> -> vector<288x128xf32>
    %c0_84 = arith.constant 0 : index
    %c0_85 = arith.constant 0 : index
    %87 = vector.load %arg19[%c0_84, %c0_85] : memref<288x128xf32, #tpu.memory_space<vmem>>, vector<288x128xf32>
    %88 = arith.addf %87, %86 : vector<288x128xf32>
    %c0_86 = arith.constant 0 : index
    %c0_87 = arith.constant 0 : index
    %89 = vector.load %arg19[%c0_86, %c0_87] : memref<288x128xf32, #tpu.memory_space<vmem>>, vector<288x128xf32>
    tpu.vector_store %arg19[%c0_86, %c0_87], %88 {strides = array<i32>} : memref<288x128xf32, #tpu.memory_space<vmem>>, vector<288x128xf32>,
    %c20 = arith.constant 20 : index
    %c0_88 = arith.constant 0 : index
    %90 = vector.load %arg18[%c20, %c0_88] : memref<328x128xbf16, #tpu.memory_space<vmem>>, vector<288x128xbf16>
    %c5 = arith.constant 5 : index
    %c0_89 = arith.constant 0 : index
    %c0_90 = arith.constant 0 : index
    %91 = vector.load %arg8[%c5, %c0_89, %c0_90] : memref<9x128x128xbf16, #tpu.memory_space<vmem>>, vector<1x128x128xbf16>
    %92 = vector.shape_cast %91 : vector<1x128x128xbf16> to vector<128x128xbf16>
    %cst_91 = arith.constant dense<0.000000e+00> : vector<288x128xf32>
    %93 = tpu.matmul %90, %92, %cst_91 {dimension_numbers = #tpu.dot_dimension_numbers<[1], [0], [0], [1], [0, 0, 1, 1], [], []>} : vector<288x128xbf16>, vector<128x128xbf16>, vector<288x128xf32> -> vector<288x128xf32>
    %c0_92 = arith.constant 0 : index
    %c0_93 = arith.constant 0 : index
    %94 = vector.load %arg19[%c0_92, %c0_93] : memref<288x128xf32, #tpu.memory_space<vmem>>, vector<288x128xf32>
    %95 = arith.addf %94, %93 : vector<288x128xf32>
    %c0_94 = arith.constant 0 : index
    %c0_95 = arith.constant 0 : index
    %96 = vector.load %arg19[%c0_94, %c0_95] : memref<288x128xf32, #tpu.memory_space<vmem>>, vector<288x128xf32>
    tpu.vector_store %arg19[%c0_94, %c0_95], %95 {strides = array<i32>} : memref<288x128xf32, #tpu.memory_space<vmem>>, vector<288x128xf32>,
    %c36 = arith.constant 36 : index
    %c0_96 = arith.constant 0 : index
    %97 = vector.load %arg18[%c36, %c0_96] : memref<328x128xbf16, #tpu.memory_space<vmem>>, vector<288x128xbf16>
    %c6 = arith.constant 6 : index
    %c0_97 = arith.constant 0 : index
    %c0_98 = arith.constant 0 : index
    %98 = vector.load %arg8[%c6, %c0_97, %c0_98] : memref<9x128x128xbf16, #tpu.memory_space<vmem>>, vector<1x128x128xbf16>
    %99 = vector.shape_cast %98 : vector<1x128x128xbf16> to vector<128x128xbf16>
    %cst_99 = arith.constant dense<0.000000e+00> : vector<288x128xf32>
    %100 = tpu.matmul %97, %99, %cst_99 {dimension_numbers = #tpu.dot_dimension_numbers<[1], [0], [0], [1], [0, 0, 1, 1], [], []>} : vector<288x128xbf16>, vector<128x128xbf16>, vector<288x128xf32> -> vector<288x128xf32>
    %c0_100 = arith.constant 0 : index
    %c0_101 = arith.constant 0 : index
    %101 = vector.load %arg19[%c0_100, %c0_101] : memref<288x128xf32, #tpu.memory_space<vmem>>, vector<288x128xf32>
    %102 = arith.addf %101, %100 : vector<288x128xf32>
    %c0_102 = arith.constant 0 : index
    %c0_103 = arith.constant 0 : index
    %103 = vector.load %arg19[%c0_102, %c0_103] : memref<288x128xf32, #tpu.memory_space<vmem>>, vector<288x128xf32>
    tpu.vector_store %arg19[%c0_102, %c0_103], %102 {strides = array<i32>} : memref<288x128xf32, #tpu.memory_space<vmem>>, vector<288x128xf32>,
    %c37 = arith.constant 37 : index
    %c0_104 = arith.constant 0 : index
    %104 = vector.load %arg18[%c37, %c0_104] : memref<328x128xbf16, #tpu.memory_space<vmem>>, vector<288x128xbf16>
    %c7 = arith.constant 7 : index
    %c0_105 = arith.constant 0 : index
    %c0_106 = arith.constant 0 : index
    %105 = vector.load %arg8[%c7, %c0_105, %c0_106] : memref<9x128x128xbf16, #tpu.memory_space<vmem>>, vector<1x128x128xbf16>
    %106 = vector.shape_cast %105 : vector<1x128x128xbf16> to vector<128x128xbf16>
    %cst_107 = arith.constant dense<0.000000e+00> : vector<288x128xf32>
    %107 = tpu.matmul %104, %106, %cst_107 {dimension_numbers = #tpu.dot_dimension_numbers<[1], [0], [0], [1], [0, 0, 1, 1], [], []>} : vector<288x128xbf16>, vector<128x128xbf16>, vector<288x128xf32> -> vector<288x128xf32>
    %c0_108 = arith.constant 0 : index
    %c0_109 = arith.constant 0 : index
    %108 = vector.load %arg19[%c0_108, %c0_109] : memref<288x128xf32, #tpu.memory_space<vmem>>, vector<288x128xf32>
    %109 = arith.addf %108, %107 : vector<288x128xf32>
    %c0_110 = arith.constant 0 : index
    %c0_111 = arith.constant 0 : index
    %110 = vector.load %arg19[%c0_110, %c0_111] : memref<288x128xf32, #tpu.memory_space<vmem>>, vector<288x128xf32>
    tpu.vector_store %arg19[%c0_110, %c0_111], %109 {strides = array<i32>} : memref<288x128xf32, #tpu.memory_space<vmem>>, vector<288x128xf32>,
    %c38 = arith.constant 38 : index
    %c0_112 = arith.constant 0 : index
    %111 = vector.load %arg18[%c38, %c0_112] : memref<328x128xbf16, #tpu.memory_space<vmem>>, vector<288x128xbf16>
    %c8 = arith.constant 8 : index
    %c0_113 = arith.constant 0 : index
    %c0_114 = arith.constant 0 : index
    %112 = vector.load %arg8[%c8, %c0_113, %c0_114] : memref<9x128x128xbf16, #tpu.memory_space<vmem>>, vector<1x128x128xbf16>
    %113 = vector.shape_cast %112 : vector<1x128x128xbf16> to vector<128x128xbf16>
    %cst_115 = arith.constant dense<0.000000e+00> : vector<288x128xf32>
    %114 = tpu.matmul %111, %113, %cst_115 {dimension_numbers = #tpu.dot_dimension_numbers<[1], [0], [0], [1], [0, 0, 1, 1], [], []>} : vector<288x128xbf16>, vector<128x128xbf16>, vector<288x128xf32> -> vector<288x128xf32>
    %c0_116 = arith.constant 0 : index
    %c0_117 = arith.constant 0 : index
    %115 = vector.load %arg19[%c0_116, %c0_117] : memref<288x128xf32, #tpu.memory_space<vmem>>, vector<288x128xf32>
    %116 = arith.addf %115, %114 : vector<288x128xf32>
    %c0_118 = arith.constant 0 : index
    %c0_119 = arith.constant 0 : index
    %117 = vector.load %arg19[%c0_118, %c0_119] : memref<288x128xf32, #tpu.memory_space<vmem>>, vector<288x128xf32>
    tpu.vector_store %arg19[%c0_118, %c0_119], %116 {strides = array<i32>} : memref<288x128xf32, #tpu.memory_space<vmem>>, vector<288x128xf32>,
    %c0_120 = arith.constant 0 : index
    %c0_121 = arith.constant 0 : index
    %118 = vector.load %arg19[%c0_120, %c0_121] : memref<288x128xf32, #tpu.memory_space<vmem>>, vector<288x128xf32>
    %c0_122 = arith.constant 0 : index
    %c0_123 = arith.constant 0 : index
    %119 = vector.load %arg9[%c0_122, %c0_123] : memref<1x128xf32, #tpu.memory_space<vmem>>, vector<1x128xf32>
    %120 = vector.broadcast %119 : vector<1x128xf32> to vector<288x128xf32>
    %121 = arith.mulf %118, %120 : vector<288x128xf32>
    %c0_124 = arith.constant 0 : index
    %c0_125 = arith.constant 0 : index
    %122 = vector.load %arg10[%c0_124, %c0_125] : memref<1x128xf32, #tpu.memory_space<vmem>>, vector<1x128xf32>
    %123 = vector.broadcast %122 : vector<1x128xf32> to vector<288x128xf32>
    %124 = arith.addf %121, %123 : vector<288x128xf32>
    %cst_126 = arith.constant 0.000000e+00 : f32
    %125 = vector.broadcast %cst_126 : f32 to vector<288x128xf32>
    %126 = arith.maximumf %124, %125 : vector<288x128xf32>
    %127 = arith.truncf %126 : vector<288x128xf32> to vector<288x128xbf16>
    %c0_127 = arith.constant 0 : index
    %c0_128 = arith.constant 0 : index
    %128 = vector.load %arg11[%c0_127, %c0_128] : memref<128x128xbf16, #tpu.memory_space<vmem>>, vector<128x128xbf16>
    %cst_129 = arith.constant dense<0.000000e+00> : vector<288x128xf32>
    %129 = tpu.matmul %127, %128, %cst_129 {dimension_numbers = #tpu.dot_dimension_numbers<[1], [0], [0], [1], [0, 0, 1, 1], [], []>} : vector<288x128xbf16>, vector<128x128xbf16>, vector<288x128xf32> -> vector<288x128xf32>
    %c0_130 = arith.constant 0 : index
    %c0_131 = arith.constant 0 : index
    %130 = vector.load %arg12[%c0_130, %c0_131] : memref<1x128xf32, #tpu.memory_space<vmem>>, vector<1x128xf32>
    %131 = vector.broadcast %130 : vector<1x128xf32> to vector<288x128xf32>
    %132 = arith.mulf %129, %131 : vector<288x128xf32>
    %c0_132 = arith.constant 0 : index
    %c0_133 = arith.constant 0 : index
    %133 = vector.load %arg13[%c0_132, %c0_133] : memref<1x128xf32, #tpu.memory_space<vmem>>, vector<1x128xf32>
    %134 = vector.broadcast %133 : vector<1x128xf32> to vector<288x128xf32>
    %135 = arith.addf %132, %134 : vector<288x128xf32>
    %136 = vector.shape_cast %135 : vector<288x128xf32> to vector<16x18x128xf32>
    %137 = vector.extract_strided_slice %136 {offsets = [0, 0, 0], sizes = [16, 16, 128], strides = [1, 1, 1]} : vector<16x18x128xf32> to vector<16x16x128xf32>
    %c0_134 = arith.constant 0 : index
    %c0_135 = arith.constant 0 : index
    %138 = vector.load %arg14[%c0_134, %c0_135] : memref<128x128xbf16, #tpu.memory_space<vmem>>, vector<128x128xbf16>
    %cst_136 = arith.constant dense<0.000000e+00> : vector<256x128xf32>
    %139 = tpu.matmul %1, %138, %cst_136 {dimension_numbers = #tpu.dot_dimension_numbers<[1], [0], [0], [1], [0, 0, 1, 1], [], []>} : vector<256x128xbf16>, vector<128x128xbf16>, vector<256x128xf32> -> vector<256x128xf32>
    %c0_137 = arith.constant 0 : index
    %c0_138 = arith.constant 0 : index
    %140 = vector.load %arg15[%c0_137, %c0_138] : memref<1x128xf32, #tpu.memory_space<vmem>>, vector<1x128xf32>
    %141 = vector.broadcast %140 : vector<1x128xf32> to vector<256x128xf32>
    %142 = arith.mulf %139, %141 : vector<256x128xf32>
    %c0_139 = arith.constant 0 : index
    %c0_140 = arith.constant 0 : index
    %143 = vector.load %arg16[%c0_139, %c0_140] : memref<1x128xf32, #tpu.memory_space<vmem>>, vector<1x128xf32>
    %144 = vector.broadcast %143 : vector<1x128xf32> to vector<256x128xf32>
    %145 = arith.addf %142, %144 : vector<256x128xf32>
    %146 = vector.shape_cast %145 : vector<256x128xf32> to vector<16x16x128xf32>
    %147 = arith.addf %137, %146 : vector<16x16x128xf32>
    %cst_141 = arith.constant 0.000000e+00 : f32
    %148 = vector.broadcast %cst_141 : f32 to vector<16x16x128xf32>
    %149 = arith.maximumf %147, %148 : vector<16x16x128xf32>
    %150 = vector.shape_cast %149 : vector<16x16x128xf32> to vector<1x16x16x128xf32>
    %151 = arith.truncf %150 : vector<1x16x16x128xf32> to vector<1x16x16x128xbf16>
    %c0_142 = arith.constant 0 : index
    %c0_143 = arith.constant 0 : index
    %c0_144 = arith.constant 0 : index
    %c0_145 = arith.constant 0 : index
    %152 = vector.load %arg17[%c0_142, %c0_143, %c0_144, %c0_145] : memref<1x16x16x128xbf16, #tpu.memory_space<vmem>>, vector<1x16x16x128xbf16>
    tpu.vector_store %arg17[%c0_142, %c0_143, %c0_144, %c0_145], %151 {strides = array<i32>} : memref<1x16x16x128xbf16, #tpu.memory_space<vmem>>, vector<1x16x16x128xbf16>,
    return
  }
  func.func @transform_0(%arg0: i32, %arg1: i32) -> (i32, i32, i32, i32) {
    %c0_i32 = arith.constant 0 : i32
    %c0_i32_0 = arith.constant 0 : i32
    %c0_i32_1 = arith.constant 0 : i32
    return %arg0, %arg1, %c0_i32, %c0_i32_0 : i32, i32, i32, i32
  }
  func.func @transform_1(%arg0: i32, %arg1: i32) -> (i32, i32, i32, i32) {
    %c16_i32 = arith.constant 16 : i32
    %0 = arith.muli %arg1, %c16_i32 : i32
    %c1_i32 = arith.constant 1 : i32
    %1 = arith.subi %0, %c1_i32 : i32
    %c0_i32 = arith.constant 0 : i32
    %2 = arith.maxsi %1, %c0_i32 : i32
    %c0_i32_0 = arith.constant 0 : i32
    %c0_i32_1 = arith.constant 0 : i32
    %c0_i32_2 = arith.constant 0 : i32
    return %arg0, %2, %c0_i32_0, %c0_i32_1 : i32, i32, i32, i32
  }
  func.func @transform_2(%arg0: i32, %arg1: i32) -> (i32, i32, i32, i32) {
    %c1_i32 = arith.constant 1 : i32
    %0 = arith.addi %arg1, %c1_i32 : i32
    %c16_i32 = arith.constant 16 : i32
    %1 = arith.muli %0, %c16_i32 : i32
    %c15_i32 = arith.constant 15 : i32
    %2 = arith.minsi %1, %c15_i32 : i32
    %c0_i32 = arith.constant 0 : i32
    %c0_i32_0 = arith.constant 0 : i32
    %c0_i32_1 = arith.constant 0 : i32
    return %arg0, %2, %c0_i32, %c0_i32_0 : i32, i32, i32, i32
  }
  func.func @transform_3(%arg0: i32, %arg1: i32) -> (i32, i32) {
    %c0_i32 = arith.constant 0 : i32
    %c0_i32_0 = arith.constant 0 : i32
    %c0_i32_1 = arith.constant 0 : i32
    return %c0_i32, %c0_i32_0 : i32, i32
  }
  func.func @transform_4(%arg0: i32, %arg1: i32) -> (i32, i32) {
    %c0_i32 = arith.constant 0 : i32
    %c0_i32_0 = arith.constant 0 : i32
    %c0_i32_1 = arith.constant 0 : i32
    return %c0_i32, %c0_i32_0 : i32, i32
  }
  func.func @transform_5(%arg0: i32, %arg1: i32) -> (i32, i32) {
    %c0_i32 = arith.constant 0 : i32
    %c0_i32_0 = arith.constant 0 : i32
    %c0_i32_1 = arith.constant 0 : i32
    return %c0_i32, %c0_i32_0 : i32, i32
  }
  func.func @transform_6(%arg0: i32, %arg1: i32) -> (i32, i32, i32) {
    %c0_i32 = arith.constant 0 : i32
    %c0_i32_0 = arith.constant 0 : i32
    %c0_i32_1 = arith.constant 0 : i32
    %c0_i32_2 = arith.constant 0 : i32
    return %c0_i32, %c0_i32_0, %c0_i32_1 : i32, i32, i32
  }
  func.func @transform_7(%arg0: i32, %arg1: i32) -> (i32, i32) {
    %c0_i32 = arith.constant 0 : i32
    %c0_i32_0 = arith.constant 0 : i32
    %c0_i32_1 = arith.constant 0 : i32
    return %c0_i32, %c0_i32_0 : i32, i32
  }
  func.func @transform_8(%arg0: i32, %arg1: i32) -> (i32, i32) {
    %c0_i32 = arith.constant 0 : i32
    %c0_i32_0 = arith.constant 0 : i32
    %c0_i32_1 = arith.constant 0 : i32
    return %c0_i32, %c0_i32_0 : i32, i32
  }
  func.func @transform_9(%arg0: i32, %arg1: i32) -> (i32, i32) {
    %c0_i32 = arith.constant 0 : i32
    %c0_i32_0 = arith.constant 0 : i32
    %c0_i32_1 = arith.constant 0 : i32
    return %c0_i32, %c0_i32_0 : i32, i32
  }
  func.func @transform_10(%arg0: i32, %arg1: i32) -> (i32, i32) {
    %c0_i32 = arith.constant 0 : i32
    %c0_i32_0 = arith.constant 0 : i32
    %c0_i32_1 = arith.constant 0 : i32
    return %c0_i32, %c0_i32_0 : i32, i32
  }
  func.func @transform_11(%arg0: i32, %arg1: i32) -> (i32, i32) {
    %c0_i32 = arith.constant 0 : i32
    %c0_i32_0 = arith.constant 0 : i32
    %c0_i32_1 = arith.constant 0 : i32
    return %c0_i32, %c0_i32_0 : i32, i32
  }
  func.func @transform_12(%arg0: i32, %arg1: i32) -> (i32, i32) {
    %c0_i32 = arith.constant 0 : i32
    %c0_i32_0 = arith.constant 0 : i32
    %c0_i32_1 = arith.constant 0 : i32
    return %c0_i32, %c0_i32_0 : i32, i32
  }
  func.func @transform_13(%arg0: i32, %arg1: i32) -> (i32, i32) {
    %c0_i32 = arith.constant 0 : i32
    %c0_i32_0 = arith.constant 0 : i32
    %c0_i32_1 = arith.constant 0 : i32
    return %c0_i32, %c0_i32_0 : i32, i32
  }
  func.func @transform_14(%arg0: i32, %arg1: i32) -> (i32, i32) {
    %c0_i32 = arith.constant 0 : i32
    %c0_i32_0 = arith.constant 0 : i32
    %c0_i32_1 = arith.constant 0 : i32
    return %c0_i32, %c0_i32_0 : i32, i32
  }
  func.func @transform_15(%arg0: i32, %arg1: i32) -> (i32, i32, i32, i32) {
    %c0_i32 = arith.constant 0 : i32
    %c0_i32_0 = arith.constant 0 : i32
    %c0_i32_1 = arith.constant 0 : i32
    return %arg0, %arg1, %c0_i32, %c0_i32_0 : i32, i32, i32, i32
  }
}

</mosaic_0001>

<llo_original>
// kernel: _lambda_.1
$region0: #{_lambda_.1}
  #allocation0 [shape = 'u32[]', space=smem, size = 0x4, offset = 0x4, fixed_abs, tag = 'smem constant byte address 0x4 - core index']
  #allocation1 [shape = 'u32[144,128]{1,0:T(1,128)}', space=vmem, size = 0x12000, scoped, tag = 'internal scratch']
  #allocation2 [shape = 'bf16[328,128]{1,0:T(8,128)(2,1)}', space=vmem, size = 0x14800, scoped, tag = 'scratch operand']
  #allocation3 [shape = 'f32[288,128]{1,0:T(8,128)}', space=vmem, size = 0x24000, scoped, tag = 'scratch operand']
  %s0 = inlined_call_operand.vmem [shape: bf16[2,16,16,128], index: 0, kind: input, shape index: {}, may-alias: {0,1,2}]
  %s1 = inlined_call_operand.vmem [shape: bf16[2,16,16,128], index: 1, kind: input, shape index: {}, may-alias: {0,1,2}]
  %s2 = inlined_call_operand.vmem [shape: bf16[2,16,16,128], index: 2, kind: input, shape index: {}, may-alias: {0,1,2}]
  %s3 = inlined_call_operand.vmem [shape: bf16[128,128], index: 3, kind: input, shape index: {}]
  %s4 = inlined_call_operand.vmem [shape: f32[1,128], index: 4, kind: input, shape index: {}]
  %s5 = inlined_call_operand.vmem [shape: f32[1,128], index: 5, kind: input, shape index: {}]
  %s6 = inlined_call_operand.vmem [shape: bf16[9,128,128], index: 6, kind: input, shape index: {}]
  %s7 = inlined_call_operand.vmem [shape: f32[1,128], index: 7, kind: input, shape index: {}]
  %s8 = inlined_call_operand.vmem [shape: f32[1,128], index: 8, kind: input, shape index: {}]
  %s9 = inlined_call_operand.vmem [shape: bf16[128,128], index: 9, kind: input, shape index: {}]
  %s10 = inlined_call_operand.vmem [shape: f32[1,128], index: 10, kind: input, shape index: {}]
  %s11 = inlined_call_operand.vmem [shape: f32[1,128], index: 11, kind: input, shape index: {}]
  %s12 = inlined_call_operand.vmem [shape: bf16[128,128], index: 12, kind: input, shape index: {}]
  %s13 = inlined_call_operand.vmem [shape: f32[1,128], index: 13, kind: input, shape index: {}]
  %s14 = inlined_call_operand.vmem [shape: f32[1,128], index: 14, kind: input, shape index: {}]
  %s15 = inlined_call_operand.vmem [shape: bf16[2,16,16,128], index: 15, kind: output, shape index: {}]
  %s16 = sld [smem:[#allocation0]]
  $region93: #{_lambda_.1} parent=0
    _
  %s18 = ssub.s32 1, %s16
  %s19 = scalar_select 0, %s18, %s16
  loop: start=0, step=1, limit=4
  $region2: #{_lambda_.1} parent=0 // loop_pre_header
    _
  $region3: #{_lambda_.1} parent=0 // loop_header
    %s21 = sphi 0, %s25
    %p22 = scmp.ge.s32.totalorder %s21, 4
    %s28 = sphi 0, %s40
    %s29 = sphi 0, %s36
    %s30 = sphi 0, %s28
    %s31 = sphi 0, %s29
    %s32 = sphi 0, %s30
    %s33 = sphi 0, %s31
    %s45 = sphi 0, %s47
    %s48 = sphi 0, %s45
    %s49 = sphi 0, %s48
    %s65 = sphi 0, %s49
    %s81 = sphi 0, %s83
    %s84 = sphi 0, %s81
    %s85 = sphi 0, %s84
    %s101 = sphi 0, %s85
    %s117 = sphi 0, %s119
    %s120 = sphi 0, %s117
    %s121 = sphi 0, %s120
    %s137 = sphi 0, %s121
    %s141 = sphi 0, %s141
    %s143 = sphi 0, %s141
    %s144 = sphi 0, %s143
    %s158 = sphi 0, %s144
    %s162 = sphi 0, %s162
    %s164 = sphi 0, %s162
    %s165 = sphi 0, %s164
    %s179 = sphi 0, %s165
    %s183 = sphi 0, %s183
    %s185 = sphi 0, %s183
    %s186 = sphi 0, %s185
    %s200 = sphi 0, %s186
    %s204 = sphi 0, %s204
    %s206 = sphi 0, %s204
    %s207 = sphi 0, %s206
    %s221 = sphi 0, %s207
    %s225 = sphi 0, %s225
    %s227 = sphi 0, %s225
    %s228 = sphi 0, %s227
    %s242 = sphi 0, %s228
    %s246 = sphi 0, %s246
    %s248 = sphi 0, %s246
    %s249 = sphi 0, %s248
    %s263 = sphi 0, %s249
    %s267 = sphi 0, %s267
    %s269 = sphi 0, %s267
    %s270 = sphi 0, %s269
    %s284 = sphi 0, %s270
    %s288 = sphi 0, %s288
    %s290 = sphi 0, %s288
    %s291 = sphi 0, %s290
    %s305 = sphi 0, %s291
    %s309 = sphi 0, %s309
    %s311 = sphi 0, %s309
    %s312 = sphi 0, %s311
    %s326 = sphi 0, %s312
    %s330 = sphi 0, %s330
    %s332 = sphi 0, %s330
    %s333 = sphi 0, %s332
    %s347 = sphi 0, %s333
    %s351 = sphi 0, %s351
    %s353 = sphi 0, %s351
    %s354 = sphi 0, %s353
    %s368 = sphi 0, %s354
    %s372 = sphi 0, %s372
    %s374 = sphi 0, %s372
    %s375 = sphi 0, %s374
    %s389 = sphi 0, %s375
    %s397 = sphi 0, %s399
    %s400 = sphi 0, %s397
    %s401 = sphi 0, %s400
    %s417 = sphi 0, %s401
  $region4: #{_lambda_.1} parent=0 // loop_header_branch
    %24 = sbr.rel (%p22) target = $region8
  $region5: #{_lambda_.1} parent=0 // loop_body
    %s26 = ssub.s32 %s21, 1
    %s27 = ssub.s32 %s21, 2
    %s34 = sadd.s32 1, %s29
    %p35 = scmp.ge.s32.totalorder %s34, 1
    %s36 = scalar_select %p35, 0, %s34
    %s37 = sadd.s32 1, %s28
    %s38 = scalar_select %p35, %s37, %s28
    %p39 = scmp.ge.s32.totalorder %s38, 2
    %s40 = scalar_select %p39, 0, %s38
    %s41 = ssub.s32 %s28, %s40
    %s42 = ssub.s32 %s29, %s36
    %s43 = sor.u32 %s41, %s42
    %p44 = scmp.eq.s32.totalorder %s43, 0
    %s46 = sadd.s32 %s45, 1
    %s47 = scalar_select %p44, %s45, %s46
    %p50 = pneg %p44
    %p51 = scmp.eq.s32.totalorder %s21, 1
    %p52 = por %p50, %p51
    %p53 = scmp.ne.s32.totalorder %s45, %s48
    %p54 = scmp.eq.s32.totalorder %s21, 0
    %p55 = por %p53, %p54
    %p56 = scmp.ne.s32.totalorder %s45, %s48
    %p57 = scmp.eq.s32.totalorder %s26, 1
    %p58 = por %p56, %p57
    %p59 = scmp.ne.s32.totalorder %s48, %s49
    %p60 = scmp.eq.s32.totalorder %s26, 0
    %p61 = por %p59, %p60
    %p62 = scmp.ne.s32.totalorder %s48, %s49
    %p63 = scmp.eq.s32.totalorder %s27, 1
    %p64 = por %p62, %p63
    %p66 = scmp.ne.s32.totalorder %s49, %s65
    %p67 = scmp.eq.s32.totalorder %s27, 0
    %p68 = por %p66, %p67
    %s69 = smul.u32 %s29, 16
    %s70 = ssub.s32 %s69, 1
    %p71 = scmp.gt.s32.totalorder %s70, 0
    %s72 = scalar_select %p71, %s70, 0
    %s73 = smul.u32 %s36, 16
    %s74 = ssub.s32 %s73, 1
    %p75 = scmp.gt.s32.totalorder %s74, 0
    %s76 = scalar_select %p75, %s74, 0
    %s77 = ssub.s32 %s28, %s40
    %s78 = ssub.s32 %s72, %s76
    %s79 = sor.u32 %s77, %s78
    %p80 = scmp.eq.s32.totalorder %s79, 0
    %s82 = sadd.s32 %s81, 1
    %s83 = scalar_select %p80, %s81, %s82
    %p86 = pneg %p80
    %p87 = scmp.eq.s32.totalorder %s21, 1
    %p88 = por %p86, %p87
    %p89 = scmp.ne.s32.totalorder %s81, %s84
    %p90 = scmp.eq.s32.totalorder %s21, 0
    %p91 = por %p89, %p90
    %p92 = scmp.ne.s32.totalorder %s81, %s84
    %p93 = scmp.eq.s32.totalorder %s26, 1
    %p94 = por %p92, %p93
    %p95 = scmp.ne.s32.totalorder %s84, %s85
    %p96 = scmp.eq.s32.totalorder %s26, 0
    %p97 = por %p95, %p96
    %p98 = scmp.ne.s32.totalorder %s84, %s85
    %p99 = scmp.eq.s32.totalorder %s27, 1
    %p100 = por %p98, %p99
    %p102 = scmp.ne.s32.totalorder %s85, %s101
    %p103 = scmp.eq.s32.totalorder %s27, 0
    %p104 = por %p102, %p103
    %s105 = sadd.s32 %s29, 1
    %s106 = smul.u32 %s105, 16
    %p107 = scmp.lt.s32.totalorder %s106, 15
    %s108 = scalar_select %p107, %s106, 15
    %s109 = sadd.s32 %s36, 1
    %s110 = smul.u32 %s109, 16
    %p111 = scmp.lt.s32.totalorder %s110, 15
    %s112 = scalar_select %p111, %s110, 15
    %s113 = ssub.s32 %s28, %s40
    %s114 = ssub.s32 %s108, %s112
    %s115 = sor.u32 %s113, %s114
    %p116 = scmp.eq.s32.totalorder %s115, 0
    %s118 = sadd.s32 %s117, 1
    %s119 = scalar_select %p116, %s117, %s118
    %p122 = pneg %p116
    %p123 = scmp.eq.s32.totalorder %s21, 1
    %p124 = por %p122, %p123
    %p125 = scmp.ne.s32.totalorder %s117, %s120
    %p126 = scmp.eq.s32.totalorder %s21, 0
    %p127 = por %p125, %p126
    %p128 = scmp.ne.s32.totalorder %s117, %s120
    %p129 = scmp.eq.s32.totalorder %s26, 1
    %p130 = por %p128, %p129
    %p131 = scmp.ne.s32.totalorder %s120, %s121
    %p132 = scmp.eq.s32.totalorder %s26, 0
    %p133 = por %p131, %p132
    %p134 = scmp.ne.s32.totalorder %s120, %s121
    %p135 = scmp.eq.s32.totalorder %s27, 1
    %p136 = por %p134, %p135
    %p138 = scmp.ne.s32.totalorder %s121, %s137
    %p139 = scmp.eq.s32.totalorder %s27, 0
    %p140 = por %p138, %p139
    %s142 = sadd.s32 %s141, 1
    %p145 = scmp.eq.s32.totalorder %s21, 1
    %p146 = scmp.ne.s32.totalorder %s141, %s143
    %p147 = scmp.eq.s32.totalorder %s21, 0
    %p148 = por %p146, %p147
    %p149 = scmp.ne.s32.totalorder %s141, %s143
    %p150 = scmp.eq.s32.totalorder %s26, 1
    %p151 = por %p149, %p150
    %p152 = scmp.ne.s32.totalorder %s143, %s144
    %p153 = scmp.eq.s32.totalorder %s26, 0
    %p154 = por %p152, %p153
    %p155 = scmp.ne.s32.totalorder %s143, %s144
    %p156 = scmp.eq.s32.totalorder %s27, 1
    %p157 = por %p155, %p156
    %p159 = scmp.ne.s32.totalorder %s144, %s158
    %p160 = scmp.eq.s32.totalorder %s27, 0
    %p161 = por %p159, %p160
    %s163 = sadd.s32 %s162, 1
    %p166 = scmp.eq.s32.totalorder %s21, 1
    %p167 = scmp.ne.s32.totalorder %s162, %s164
    %p168 = scmp.eq.s32.totalorder %s21, 0
    %p169 = por %p167, %p168
    %p170 = scmp.ne.s32.totalorder %s162, %s164
    %p171 = scmp.eq.s32.totalorder %s26, 1
    %p172 = por %p170, %p171
    %p173 = scmp.ne.s32.totalorder %s164, %s165
    %p174 = scmp.eq.s32.totalorder %s26, 0
    %p175 = por %p173, %p174
    %p176 = scmp.ne.s32.totalorder %s164, %s165
    %p177 = scmp.eq.s32.totalorder %s27, 1
    %p178 = por %p176, %p177
    %p180 = scmp.ne.s32.totalorder %s165, %s179
    %p181 = scmp.eq.s32.totalorder %s27, 0
    %p182 = por %p180, %p181
    %s184 = sadd.s32 %s183, 1
    %p187 = scmp.eq.s32.totalorder %s21, 1
    %p188 = scmp.ne.s32.totalorder %s183, %s185
    %p189 = scmp.eq.s32.totalorder %s21, 0
    %p190 = por %p188, %p189
    %p191 = scmp.ne.s32.totalorder %s183, %s185
    %p192 = scmp.eq.s32.totalorder %s26, 1
    %p193 = por %p191, %p192
    %p194 = scmp.ne.s32.totalorder %s185, %s186
    %p195 = scmp.eq.s32.totalorder %s26, 0
    %p196 = por %p194, %p195
    %p197 = scmp.ne.s32.totalorder %s185, %s186
    %p198 = scmp.eq.s32.totalorder %s27, 1
    %p199 = por %p197, %p198
    %p201 = scmp.ne.s32.totalorder %s186, %s200
    %p202 = scmp.eq.s32.totalorder %s27, 0
    %p203 = por %p201, %p202
    %s205 = sadd.s32 %s204, 1
    %p208 = scmp.eq.s32.totalorder %s21, 1
    %p209 = scmp.ne.s32.totalorder %s204, %s206
    %p210 = scmp.eq.s32.totalorder %s21, 0
    %p211 = por %p209, %p210
    %p212 = scmp.ne.s32.totalorder %s204, %s206
    %p213 = scmp.eq.s32.totalorder %s26, 1
    %p214 = por %p212, %p213
    %p215 = scmp.ne.s32.totalorder %s206, %s207
    %p216 = scmp.eq.s32.totalorder %s26, 0
    %p217 = por %p215, %p216
    %p218 = scmp.ne.s32.totalorder %s206, %s207
    %p219 = scmp.eq.s32.totalorder %s27, 1
    %p220 = por %p218, %p219
    %p222 = scmp.ne.s32.totalorder %s207, %s221
    %p223 = scmp.eq.s32.totalorder %s27, 0
    %p224 = por %p222, %p223
    %s226 = sadd.s32 %s225, 1
    %p229 = scmp.eq.s32.totalorder %s21, 1
    %p230 = scmp.ne.s32.totalorder %s225, %s227
    %p231 = scmp.eq.s32.totalorder %s21, 0
    %p232 = por %p230, %p231
    %p233 = scmp.ne.s32.totalorder %s225, %s227
    %p234 = scmp.eq.s32.totalorder %s26, 1
    %p235 = por %p233, %p234
    %p236 = scmp.ne.s32.totalorder %s227, %s228
    %p237 = scmp.eq.s32.totalorder %s26, 0
    %p238 = por %p236, %p237
    %p239 = scmp.ne.s32.totalorder %s227, %s228
    %p240 = scmp.eq.s32.totalorder %s27, 1
    %p241 = por %p239, %p240
    %p243 = scmp.ne.s32.totalorder %s228, %s242
    %p244 = scmp.eq.s32.totalorder %s27, 0
    %p245 = por %p243, %p244
    %s247 = sadd.s32 %s246, 1
    %p250 = scmp.eq.s32.totalorder %s21, 1
    %p251 = scmp.ne.s32.totalorder %s246, %s248
    %p252 = scmp.eq.s32.totalorder %s21, 0
    %p253 = por %p251, %p252
    %p254 = scmp.ne.s32.totalorder %s246, %s248
    %p255 = scmp.eq.s32.totalorder %s26, 1
    %p256 = por %p254, %p255
    %p257 = scmp.ne.s32.totalorder %s248, %s249
    %p258 = scmp.eq.s32.totalorder %s26, 0
    %p259 = por %p257, %p258
    %p260 = scmp.ne.s32.totalorder %s248, %s249
    %p261 = scmp.eq.s32.totalorder %s27, 1
    %p262 = por %p260, %p261
    %p264 = scmp.ne.s32.totalorder %s249, %s263
    %p265 = scmp.eq.s32.totalorder %s27, 0
    %p266 = por %p264, %p265
    %s268 = sadd.s32 %s267, 1
    %p271 = scmp.eq.s32.totalorder %s21, 1
    %p272 = scmp.ne.s32.totalorder %s267, %s269
    %p273 = scmp.eq.s32.totalorder %s21, 0
    %p274 = por %p272, %p273
    %p275 = scmp.ne.s32.totalorder %s267, %s269
    %p276 = scmp.eq.s32.totalorder %s26, 1
    %p277 = por %p275, %p276
    %p278 = scmp.ne.s32.totalorder %s269, %s270
    %p279 = scmp.eq.s32.totalorder %s26, 0
    %p280 = por %p278, %p279
    %p281 = scmp.ne.s32.totalorder %s269, %s270
    %p282 = scmp.eq.s32.totalorder %s27, 1
    %p283 = por %p281, %p282
    %p285 = scmp.ne.s32.totalorder %s270, %s284
    %p286 = scmp.eq.s32.totalorder %s27, 0
    %p287 = por %p285, %p286
    %s289 = sadd.s32 %s288, 1
    %p292 = scmp.eq.s32.totalorder %s21, 1
    %p293 = scmp.ne.s32.totalorder %s288, %s290
    %p294 = scmp.eq.s32.totalorder %s21, 0
    %p295 = por %p293, %p294
    %p296 = scmp.ne.s32.totalorder %s288, %s290
    %p297 = scmp.eq.s32.totalorder %s26, 1
    %p298 = por %p296, %p297
    %p299 = scmp.ne.s32.totalorder %s290, %s291
    %p300 = scmp.eq.s32.totalorder %s26, 0
    %p301 = por %p299, %p300
    %p302 = scmp.ne.s32.totalorder %s290, %s291
    %p303 = scmp.eq.s32.totalorder %s27, 1
    %p304 = por %p302, %p303
    %p306 = scmp.ne.s32.totalorder %s291, %s305
    %p307 = scmp.eq.s32.totalorder %s27, 0
    %p308 = por %p306, %p307
    %s310 = sadd.s32 %s309, 1
    %p313 = scmp.eq.s32.totalorder %s21, 1
    %p314 = scmp.ne.s32.totalorder %s309, %s311
    %p315 = scmp.eq.s32.totalorder %s21, 0
    %p316 = por %p314, %p315
    %p317 = scmp.ne.s32.totalorder %s309, %s311
    %p318 = scmp.eq.s32.totalorder %s26, 1
    %p319 = por %p317, %p318
    %p320 = scmp.ne.s32.totalorder %s311, %s312
    %p321 = scmp.eq.s32.totalorder %s26, 0
    %p322 = por %p320, %p321
    %p323 = scmp.ne.s32.totalorder %s311, %s312
    %p324 = scmp.eq.s32.totalorder %s27, 1
    %p325 = por %p323, %p324
    %p327 = scmp.ne.s32.totalorder %s312, %s326
    %p328 = scmp.eq.s32.totalorder %s27, 0
    %p329 = por %p327, %p328
    %s331 = sadd.s32 %s330, 1
    %p334 = scmp.eq.s32.totalorder %s21, 1
    %p335 = scmp.ne.s32.totalorder %s330, %s332
    %p336 = scmp.eq.s32.totalorder %s21, 0
    %p337 = por %p335, %p336
    %p338 = scmp.ne.s32.totalorder %s330, %s332
    %p339 = scmp.eq.s32.totalorder %s26, 1
    %p340 = por %p338, %p339
    %p341 = scmp.ne.s32.totalorder %s332, %s333
    %p342 = scmp.eq.s32.totalorder %s26, 0
    %p343 = por %p341, %p342
    %p344 = scmp.ne.s32.totalorder %s332, %s333
    %p345 = scmp.eq.s32.totalorder %s27, 1
    %p346 = por %p344, %p345
    %p348 = scmp.ne.s32.totalorder %s333, %s347
    %p349 = scmp.eq.s32.totalorder %s27, 0
    %p350 = por %p348, %p349
    %s352 = sadd.s32 %s351, 1
    %p355 = scmp.eq.s32.totalorder %s21, 1
    %p356 = scmp.ne.s32.totalorder %s351, %s353
    %p357 = scmp.eq.s32.totalorder %s21, 0
    %p358 = por %p356, %p357
    %p359 = scmp.ne.s32.totalorder %s351, %s353
    %p360 = scmp.eq.s32.totalorder %s26, 1
    %p361 = por %p359, %p360
    %p362 = scmp.ne.s32.totalorder %s353, %s354
    %p363 = scmp.eq.s32.totalorder %s26, 0
    %p364 = por %p362, %p363
    %p365 = scmp.ne.s32.totalorder %s353, %s354
    %p366 = scmp.eq.s32.totalorder %s27, 1
    %p367 = por %p365, %p366
    %p369 = scmp.ne.s32.totalorder %s354, %s368
    %p370 = scmp.eq.s32.totalorder %s27, 0
    %p371 = por %p369, %p370
    %s373 = sadd.s32 %s372, 1
    %p376 = scmp.eq.s32.totalorder %s21, 1
    %p377 = scmp.ne.s32.totalorder %s372, %s374
    %p378 = scmp.eq.s32.totalorder %s21, 0
    %p379 = por %p377, %p378
    %p380 = scmp.ne.s32.totalorder %s372, %s374
    %p381 = scmp.eq.s32.totalorder %s26, 1
    %p382 = por %p380, %p381
    %p383 = scmp.ne.s32.totalorder %s374, %s375
    %p384 = scmp.eq.s32.totalorder %s26, 0
    %p385 = por %p383, %p384
    %p386 = scmp.ne.s32.totalorder %s374, %s375
    %p387 = scmp.eq.s32.totalorder %s27, 1
    %p388 = por %p386, %p387
    %p390 = scmp.ne.s32.totalorder %s375, %s389
    %p391 = scmp.eq.s32.totalorder %s27, 0
    %p392 = por %p390, %p391
    %s393 = ssub.s32 %s28, %s40
    %s394 = ssub.s32 %s29, %s36
    %s395 = sor.u32 %s393, %s394
    %p396 = scmp.eq.s32.totalorder %s395, 0
    %s398 = sadd.s32 %s397, 1
    %s399 = scalar_select %p396, %s397, %s398
    %p402 = pneg %p396
    %p403 = scmp.eq.s32.totalorder %s21, 1
    %p404 = por %p402, %p403
    %p405 = scmp.ne.s32.totalorder %s397, %s400
    %p406 = scmp.eq.s32.totalorder %s21, 0
    %p407 = por %p405, %p406
    %p408 = scmp.ne.s32.totalorder %s397, %s400
    %p409 = scmp.eq.s32.totalorder %s26, 1
    %p410 = por %p408, %p409
    %p411 = scmp.ne.s32.totalorder %s400, %s401
    %p412 = scmp.eq.s32.totalorder %s26, 0
    %p413 = por %p411, %p412
    %p414 = scmp.ne.s32.totalorder %s400, %s401
    %p415 = scmp.eq.s32.totalorder %s27, 1
    %p416 = por %p414, %p415
    %p418 = scmp.ne.s32.totalorder %s401, %s417
    %p419 = scmp.eq.s32.totalorder %s27, 0
    %p420 = por %p418, %p419
    %p421 = scmp.le.s32.totalorder 1, %s21
    %p422 = scmp.lt.s32.totalorder %s21, 3
    %p423 = pnand %p421, %p422
    %p424 = pneg %p423
    // Predicated region
    $region9: #{_lambda_.1} parent=5 // pred_check
      _
    $region10: #{_lambda_.1} parent=5 // pred_check_branch
      %426 = sbr.rel (%p423) target = $region12
    $region11: #{_lambda_.1} parent=5 // pred_region
      %s427 = ssub.s32 %s21, 1
      // Predicated region
      $region13: #{_lambda_.1} parent=11 // pred_check
        %p428 = pneg %p154
      $region14: #{_lambda_.1} parent=11 // pred_check_branch
        %430 = sbr.rel (%p428) target = $region16
      $region15: #{_lambda_.1} parent=11 // pred_region
        _
      $region16: #{_lambda_.1} parent=11 // pred_fallthru
        _
      // Predicated region
      $region17: #{_lambda_.1} parent=11 // pred_check
        %p431 = pneg %p175
      $region18: #{_lambda_.1} parent=11 // pred_check_branch
        %433 = sbr.rel (%p431) target = $region20
      $region19: #{_lambda_.1} parent=11 // pred_region
        _
      $region20: #{_lambda_.1} parent=11 // pred_fallthru
        _
      // Predicated region
      $region21: #{_lambda_.1} parent=11 // pred_check
        %p434 = pneg %p196
      $region22: #{_lambda_.1} parent=11 // pred_check_branch
        %436 = sbr.rel (%p434) target = $region24
      $region23: #{_lambda_.1} parent=11 // pred_region
        _
      $region24: #{_lambda_.1} parent=11 // pred_fallthru
        _
      // Predicated region
      $region25: #{_lambda_.1} parent=11 // pred_check
        %p437 = pneg %p217
      $region26: #{_lambda_.1} parent=11 // pred_check_branch
        %439 = sbr.rel (%p437) target = $region28
      $region27: #{_lambda_.1} parent=11 // pred_region
        _
      $region28: #{_lambda_.1} parent=11 // pred_fallthru
        _
      // Predicated region
      $region29: #{_lambda_.1} parent=11 // pred_check
        %p440 = pneg %p238
      $region30: #{_lambda_.1} parent=11 // pred_check_branch
        %442 = sbr.rel (%p440) target = $region32
      $region31: #{_lambda_.1} parent=11 // pred_region
        _
      $region32: #{_lambda_.1} parent=11 // pred_fallthru
        _
      // Predicated region
      $region33: #{_lambda_.1} parent=11 // pred_check
        %p443 = pneg %p259
      $region34: #{_lambda_.1} parent=11 // pred_check_branch
        %445 = sbr.rel (%p443) target = $region36
      $region35: #{_lambda_.1} parent=11 // pred_region
        _
      $region36: #{_lambda_.1} parent=11 // pred_fallthru
        _
      // Predicated region
      $region37: #{_lambda_.1} parent=11 // pred_check
        %p446 = pneg %p280
      $region38: #{_lambda_.1} parent=11 // pred_check_branch
        %448 = sbr.rel (%p446) target = $region40
      $region39: #{_lambda_.1} parent=11 // pred_region
        _
      $region40: #{_lambda_.1} parent=11 // pred_fallthru
        _
      // Predicated region
      $region41: #{_lambda_.1} parent=11 // pred_check
        %p449 = pneg %p301
      $region42: #{_lambda_.1} parent=11 // pred_check_branch
        %451 = sbr.rel (%p449) target = $region44
      $region43: #{_lambda_.1} parent=11 // pred_region
        _
      $region44: #{_lambda_.1} parent=11 // pred_fallthru
        _
      // Predicated region
      $region45: #{_lambda_.1} parent=11 // pred_check
        %p452 = pneg %p322
      $region46: #{_lambda_.1} parent=11 // pred_check_branch
        %454 = sbr.rel (%p452) target = $region48
      $region47: #{_lambda_.1} parent=11 // pred_region
        _
      $region48: #{_lambda_.1} parent=11 // pred_fallthru
        _
      // Predicated region
      $region49: #{_lambda_.1} parent=11 // pred_check
        %p455 = pneg %p343
      $region50: #{_lambda_.1} parent=11 // pred_check_branch
        %457 = sbr.rel (%p455) target = $region52
      $region51: #{_lambda_.1} parent=11 // pred_region
        _
      $region52: #{_lambda_.1} parent=11 // pred_fallthru
        _
      // Predicated region
      $region53: #{_lambda_.1} parent=11 // pred_check
        %p458 = pneg %p364
      $region54: #{_lambda_.1} parent=11 // pred_check_branch
        %460 = sbr.rel (%p458) target = $region56
      $region55: #{_lambda_.1} parent=11 // pred_region
        _
      $region56: #{_lambda_.1} parent=11 // pred_fallthru
        _
      // Predicated region
      $region57: #{_lambda_.1} parent=11 // pred_check
        %p461 = pneg %p385
      $region58: #{_lambda_.1} parent=11 // pred_check_branch
        %463 = sbr.rel (%p461) target = $region60
      $region59: #{_lambda_.1} parent=11 // pred_region
        _
      $region60: #{_lambda_.1} parent=11 // pred_fallthru
        _
    $region12: #{_lambda_.1} parent=5 // pred_fallthru
      _
    %p464 = scmp.lt.s32.totalorder %s21, 2
    // Predicated region
    $region61: #{_lambda_.1} parent=5 // pred_check
      %p465 = pneg %p464
    $region62: #{_lambda_.1} parent=5 // pred_check_branch
      %467 = sbr.rel (%p465) target = $region64
    $region63: #{_lambda_.1} parent=5 // pred_region
      // Predicated region
      $region65: #{_lambda_.1} parent=63 // pred_check
        %p468 = pneg %p55
      $region66: #{_lambda_.1} parent=63 // pred_check_branch
        %470 = sbr.rel (%p468) target = $region68
      $region67: #{_lambda_.1} parent=63 // pred_region
        %s471 = smul.u32 16, %s29
        %p472 = scmp.lt.s32.totalorder %s28, 1
        %s473 = scalar_select %p472, %s28, 1
        %p474 = scmp.lt.s32.totalorder %s471, 15
        %s475 = scalar_select %p474, %s471, 15
        %s476 = smul.addr %s475, 2
        %s477 = smul.addr %s473, 32
        %s478 = sadd.s32 %s476, %s477
        %s479 = smul.addr %s478, 4
        %s480 = scalar_lea.vmem %s0, %s479
        %s481 = smul.u32 16, %s29
      $region68: #{_lambda_.1} parent=63 // pred_fallthru
        _
      // Predicated region
      $region69: #{_lambda_.1} parent=63 // pred_check
        %p482 = pneg %p91
      $region70: #{_lambda_.1} parent=63 // pred_check_branch
        %484 = sbr.rel (%p482) target = $region72
      $region71: #{_lambda_.1} parent=63 // pred_region
        %s485 = smul.u32 %s29, 16
        %s486 = ssub.s32 %s485, 1
        %p487 = scmp.gt.s32.totalorder %s486, 0
        %s488 = scalar_select %p487, %s486, 0
        %p489 = scmp.lt.s32.totalorder %s28, 1
        %s490 = scalar_select %p489, %s28, 1
        %p491 = scmp.lt.s32.totalorder %s488, 15
        %s492 = scalar_select %p491, %s488, 15
        %s493 = smul.addr %s492, 2
        %s494 = smul.addr %s490, 32
        %s495 = sadd.s32 %s493, %s494
        %s496 = smul.addr %s495, 4
        %s497 = scalar_lea.vmem %s1, %s496
        %s498 = smul.u32 %s29, 16
        %s499 = ssub.s32 %s498, 1
        %p500 = scmp.gt.s32.totalorder %s499, 0
        %s501 = scalar_select %p500, %s499, 0
      $region72: #{_lambda_.1} parent=63 // pred_fallthru
        _
      // Predicated region
      $region73: #{_lambda_.1} parent=63 // pred_check
        %p502 = pneg %p127
      $region74: #{_lambda_.1} parent=63 // pred_check_branch
        %504 = sbr.rel (%p502) target = $region76
      $region75: #{_lambda_.1} parent=63 // pred_region
        %s505 = sadd.s32 %s29, 1
        %s506 = smul.u32 %s505, 16
        %p507 = scmp.lt.s32.totalorder %s506, 15
        %s508 = scalar_select %p507, %s506, 15
        %p509 = scmp.lt.s32.totalorder %s28, 1
        %s510 = scalar_select %p509, %s28, 1
        %p511 = scmp.lt.s32.totalorder %s508, 15
        %s512 = scalar_select %p511, %s508, 15
        %s513 = smul.addr %s512, 2
        %s514 = smul.addr %s510, 32
        %s515 = sadd.s32 %s513, %s514
        %s516 = smul.addr %s515, 4
        %s517 = scalar_lea.vmem %s2, %s516
        %s518 = sadd.s32 %s29, 1
        %s519 = smul.u32 %s518, 16
        %p520 = scmp.lt.s32.totalorder %s519, 15
        %s521 = scalar_select %p520, %s519, 15
      $region76: #{_lambda_.1} parent=63 // pred_fallthru
        _
    $region64: #{_lambda_.1} parent=5 // pred_fallthru
      _
    %p522 = scmp.le.s32.totalorder 1, %s21
    %p523 = scmp.lt.s32.totalorder %s21, 3
    %p524 = pnand %p522, %p523
    %p525 = pneg %p524
    // Predicated region
    $region77: #{_lambda_.1} parent=5 // pred_check
      _
    $region78: #{_lambda_.1} parent=5 // pred_check_branch
      %527 = sbr.rel (%p524) target = $region80
    $region79: #{_lambda_.1} parent=5 // pred_region
      %s528 = ssub.s32 %s21, 1
      %s529 = smul.u32 16, %s31
      %p530 = scmp.lt.s32.totalorder %s30, 1
      %s531 = scalar_select %p530, %s30, 1
      %p532 = scmp.lt.s32.totalorder %s529, 15
      %s533 = scalar_select %p532, %s529, 15
      %s534 = smul.addr %s533, 2
      %s535 = smul.addr %s531, 32
      %s536 = sadd.s32 %s534, %s535
      %s537 = smul.addr %s536, 4
      %s538 = scalar_lea.vmem %s0, %s537
      %p539 = pneg %p61
      %p540 = pneg %p58
      %s541 = smul.u32 %s31, 16
      %s542 = ssub.s32 %s541, 1
      %p543 = scmp.gt.s32.totalorder %s542, 0
      %s544 = scalar_select %p543, %s542, 0
      %p545 = scmp.lt.s32.totalorder %s30, 1
      %s546 = scalar_select %p545, %s30, 1
      %p547 = scmp.lt.s32.totalorder %s544, 15
      %s548 = scalar_select %p547, %s544, 15
      %s549 = smul.addr %s548, 2
      %s550 = smul.addr %s546, 32
      %s551 = sadd.s32 %s549, %s550
      %s552 = smul.addr %s551, 4
      %s553 = scalar_lea.vmem %s1, %s552
      %p554 = pneg %p97
      %p555 = pneg %p94
      %s556 = sadd.s32 %s31, 1
      %s557 = smul.u32 %s556, 16
      %p558 = scmp.lt.s32.totalorder %s557, 15
      %s559 = scalar_select %p558, %s557, 15
      %p560 = scmp.lt.s32.totalorder %s30, 1
      %s561 = scalar_select %p560, %s30, 1
      %p562 = scmp.lt.s32.totalorder %s559, 15
      %s563 = scalar_select %p562, %s559, 15
      %s564 = smul.addr %s563, 2
      %s565 = smul.addr %s561, 32
      %s566 = sadd.s32 %s564, %s565
      %s567 = smul.addr %s566, 4
      %s568 = scalar_lea.vmem %s2, %s567
      %p569 = pneg %p133
      %p570 = pneg %p130
      %p571 = pneg %p154
      %p572 = pneg %p151
      %p573 = pneg %p175
      %p574 = pneg %p172
      %p575 = pneg %p196
      %p576 = pneg %p193
      %p577 = pneg %p217
      %p578 = pneg %p214
      %p579 = pneg %p238
      %p580 = pneg %p235
      %p581 = pneg %p259
      %p582 = pneg %p256
      %p583 = pneg %p280
      %p584 = pneg %p277
      %p585 = pneg %p301
      %p586 = pneg %p298
      %p587 = pneg %p322
      %p588 = pneg %p319
      %p589 = pneg %p343
      %p590 = pneg %p340
      %p591 = pneg %p364
      %p592 = pneg %p361
      %p593 = pneg %p385
      %p594 = pneg %p382
      %p595 = pneg %p413
      %p596 = pneg %p410
      %s597 = smul.u32 16, %s31
      %p598 = scmp.lt.s32.totalorder %s30, 1
      %s599 = scalar_select %p598, %s30, 1
      %p600 = scmp.lt.s32.totalorder %s597, 15
      %s601 = scalar_select %p600, %s597, 15
      %s602 = smul.addr %s601, 2
      %s603 = smul.addr %s599, 32
      %s604 = sadd.s32 %s602, %s603
      %s605 = smul.addr %s604, 4
      %s606 = scalar_lea.vmem %s15, %s605
      %s607 = smul.u32 16, %s31
      %p608 = scmp.lt.s32.totalorder %s30, 1
      %s609 = scalar_select %p608, %s30, 1
      %p610 = scmp.lt.s32.totalorder %s607, 15
      %s611 = scalar_select %p610, %s607, 15
      %s612 = smul.addr %s611, 2
      %s613 = smul.addr %s609, 32
      %s614 = sadd.s32 %s612, %s613
      %s615 = smul.addr %s614, 4
      %s616 = scalar_lea.vmem %s0, %s615
      %s617 = smul.u32 16, %s31
      %s618 = smul.u32 %s31, 16
      %s619 = ssub.s32 %s618, 1
      %p620 = scmp.gt.s32.totalorder %s619, 0
      %s621 = scalar_select %p620, %s619, 0
      %p622 = scmp.lt.s32.totalorder %s30, 1
      %s623 = scalar_select %p622, %s30, 1
      %p624 = scmp.lt.s32.totalorder %s621, 15
      %s625 = scalar_select %p624, %s621, 15
      %s626 = smul.addr %s625, 2
      %s627 = smul.addr %s623, 32
      %s628 = sadd.s32 %s626, %s627
      %s629 = smul.addr %s628, 4
      %s630 = scalar_lea.vmem %s1, %s629
      %s631 = smul.u32 %s31, 16
      %s632 = ssub.s32 %s631, 1
      %p633 = scmp.gt.s32.totalorder %s632, 0
      %s634 = scalar_select %p633, %s632, 0
      %s635 = sadd.s32 %s31, 1
      %s636 = smul.u32 %s635, 16
      %p637 = scmp.lt.s32.totalorder %s636, 15
      %s638 = scalar_select %p637, %s636, 15
      %p639 = scmp.lt.s32.totalorder %s30, 1
      %s640 = scalar_select %p639, %s30, 1
      %p641 = scmp.lt.s32.totalorder %s638, 15
      %s642 = scalar_select %p641, %s638, 15
      %s643 = smul.addr %s642, 2
      %s644 = smul.addr %s640, 32
      %s645 = sadd.s32 %s643, %s644
      %s646 = smul.addr %s645, 4
      %s647 = scalar_lea.vmem %s2, %s646
      %s648 = sadd.s32 %s31, 1
      %s649 = smul.u32 %s648, 16
      %p650 = scmp.lt.s32.totalorder %s649, 15
      %s651 = scalar_select %p650, %s649, 15
      %s652 = smul.u32 16, %s31
      %p653 = scmp.lt.s32.totalorder %s30, 1
      %s654 = scalar_select %p653, %s30, 1
      %p655 = scmp.lt.s32.totalorder %s652, 15
      %s656 = scalar_select %p655, %s652, 15
      %s657 = smul.addr %s656, 2
      %s658 = smul.addr %s654, 32
      %s659 = sadd.s32 %s657, %s658
      %s660 = smul.addr %s659, 4
      %s661 = scalar_lea.vmem %s15, %s660
      %s662 = smul.u32 16, %s31
      %v664 = vld [vmem:[%s616] sm:$0xf]
      %v665 = vld [vmem:[%s616 + $0x4] sm:$0xf]
      %v666 = vld [vmem:[%s616 + $0x8] sm:$0xf]
      %v667 = vld [vmem:[%s616 + $0xc] sm:$0xf]
      %v668 = vld [vmem:[%s616 + $0x10] sm:$0xf]
      %v669 = vld [vmem:[%s616 + $0x14] sm:$0xf]
      %v670 = vld [vmem:[%s616 + $0x18] sm:$0xf]
      %v671 = vld [vmem:[%s616 + $0x1c] sm:$0xf]
      %v672 = vld [vmem:[%s616 + $0x20] sm:$0xf]
      %v673 = vld [vmem:[%s616 + $0x24] sm:$0xf]
      %v674 = vld [vmem:[%s616 + $0x28] sm:$0xf]
      %v675 = vld [vmem:[%s616 + $0x2c] sm:$0xf]
      %v676 = vld [vmem:[%s616 + $0x30] sm:$0xf]
      %v677 = vld [vmem:[%s616 + $0x34] sm:$0xf]
      %v678 = vld [vmem:[%s616 + $0x38] sm:$0xf]
      %v679 = vld [vmem:[%s616 + $0x3c] sm:$0xf]
      %v680 = vld [vmem:[%s616 + $0x40] sm:$0xf]
      %v681 = vld [vmem:[%s616 + $0x44] sm:$0xf]
      %v682 = vld [vmem:[%s616 + $0x48] sm:$0xf]
      %v683 = vld [vmem:[%s616 + $0x4c] sm:$0xf]
      %v684 = vld [vmem:[%s616 + $0x50] sm:$0xf]
      %v685 = vld [vmem:[%s616 + $0x54] sm:$0xf]
      %v686 = vld [vmem:[%s616 + $0x58] sm:$0xf]
      %v687 = vld [vmem:[%s616 + $0x5c] sm:$0xf]
      %v688 = vld [vmem:[%s616 + $0x60] sm:$0xf]
      %v689 = vld [vmem:[%s616 + $0x64] sm:$0xf]
      %v690 = vld [vmem:[%s616 + $0x68] sm:$0xf]
      %v691 = vld [vmem:[%s616 + $0x6c] sm:$0xf]
      %v692 = vld [vmem:[%s616 + $0x70] sm:$0xf]
      %v693 = vld [vmem:[%s616 + $0x74] sm:$0xf]
      %v694 = vld [vmem:[%s616 + $0x78] sm:$0xf]
      %v695 = vld [vmem:[%s616 + $0x7c] sm:$0xf]
      %v696 = vld [vmem:[%s3] sm:$0xf]
      %v697 = vld [vmem:[%s3 + $0x4] sm:$0xf]
      %v698 = vld [vmem:[%s3 + $0x8] sm:$0xf]
      %v699 = vld [vmem:[%s3 + $0xc] sm:$0xf]
      %v700 = vld [vmem:[%s3 + $0x10] sm:$0xf]
      %v701 = vld [vmem:[%s3 + $0x14] sm:$0xf]
      %v702 = vld [vmem:[%s3 + $0x18] sm:$0xf]
      %v703 = vld [vmem:[%s3 + $0x1c] sm:$0xf]
      %v704 = vld [vmem:[%s3 + $0x20] sm:$0xf]
      %v705 = vld [vmem:[%s3 + $0x24] sm:$0xf]
      %v706 = vld [vmem:[%s3 + $0x28] sm:$0xf]
      %v707 = vld [vmem:[%s3 + $0x2c] sm:$0xf]
      %v708 = vld [vmem:[%s3 + $0x30] sm:$0xf]
      %v709 = vld [vmem:[%s3 + $0x34] sm:$0xf]
      %v710 = vld [vmem:[%s3 + $0x38] sm:$0xf]
      %v711 = vld [vmem:[%s3 + $0x3c] sm:$0xf]
      %v744 = vunpack.c.l.b16 %v664
      %v745 = vunpack.c.l.b16 %v665
      %v746 = vunpack.c.l.b16 %v666
      %v747 = vunpack.c.l.b16 %v667
      %v748 = vunpack.c.l.b16 %v668
      %v749 = vunpack.c.l.b16 %v669
      %v750 = vunpack.c.l.b16 %v670
      %v751 = vunpack.c.l.b16 %v671
      %v752 = vunpack.c.l.b16 %v672
      %v753 = vunpack.c.l.b16 %v673
      %v754 = vunpack.c.l.b16 %v674
      %v755 = vunpack.c.l.b16 %v675
      %v756 = vunpack.c.l.b16 %v676
      %v757 = vunpack.c.l.b16 %v677
      %v758 = vunpack.c.l.b16 %v678
      %v759 = vunpack.c.l.b16 %v679
      %v760 = vunpack.c.l.b16 %v680
      %v761 = vunpack.c.l.b16 %v681
      %v762 = vunpack.c.l.b16 %v682
      %v763 = vunpack.c.l.b16 %v683
      %v764 = vunpack.c.l.b16 %v684
      %v765 = vunpack.c.l.b16 %v685
      %v766 = vunpack.c.l.b16 %v686
      %v767 = vunpack.c.l.b16 %v687
      %v768 = vunpack.c.l.b16 %v688
      %v769 = vunpack.c.l.b16 %v689
      %v770 = vunpack.c.l.b16 %v690
      %v771 = vunpack.c.l.b16 %v691
      %v772 = vunpack.c.l.b16 %v692
      %v773 = vunpack.c.l.b16 %v693
      %v774 = vunpack.c.l.b16 %v694
      %v775 = vunpack.c.l.b16 %v695
      %v776 = vpack.c.b16 %v745, %v744
      %v777 = vpack.c.b16 %v747, %v746
      %v778 = vpack.c.b16 %v749, %v748
      %v779 = vpack.c.b16 %v751, %v750
      %v780 = vpack.c.b16 %v753, %v752
      %v781 = vpack.c.b16 %v755, %v754
      %v782 = vpack.c.b16 %v757, %v756
      %v783 = vpack.c.b16 %v759, %v758
      %v784 = vpack.c.b16 %v761, %v760
      %v785 = vpack.c.b16 %v763, %v762
      %v786 = vpack.c.b16 %v765, %v764
      %v787 = vpack.c.b16 %v767, %v766
      %v788 = vpack.c.b16 %v769, %v768
      %v789 = vpack.c.b16 %v771, %v770
      %v790 = vpack.c.b16 %v773, %v772
      %v791 = vpack.c.b16 %v775, %v774
      %v824 = vunpack.c.l.b16 %v696
      %v825 = vunpack.c.l.b16 %v697
      %v826 = vunpack.c.l.b16 %v698
      %v827 = vunpack.c.l.b16 %v699
      %v828 = vunpack.c.l.b16 %v700
      %v829 = vunpack.c.l.b16 %v701
      %v830 = vunpack.c.l.b16 %v702
      %v831 = vunpack.c.l.b16 %v703
      %v832 = vunpack.c.l.b16 %v704
      %v833 = vunpack.c.l.b16 %v705
      %v834 = vunpack.c.l.b16 %v706
      %v835 = vunpack.c.l.b16 %v707
      %v836 = vunpack.c.l.b16 %v708
      %v837 = vunpack.c.l.b16 %v709
      %v838 = vunpack.c.l.b16 %v710
      %v839 = vunpack.c.l.b16 %v711
      %v840 = vpack.c.b16 %v825, %v824
      %v841 = vpack.c.b16 %v827, %v826
      %v842 = vpack.c.b16 %v829, %v828
      %v843 = vpack.c.b16 %v831, %v830
      %v844 = vpack.c.b16 %v833, %v832
      %v845 = vpack.c.b16 %v835, %v834
      %v846 = vpack.c.b16 %v837, %v836
      %v847 = vpack.c.b16 %v839, %v838
      %856 = vmatprep.subr.bf16.mxu0 0
      %857 = vmatpush1.bf16.msra.mxu0 %v840
      %858 = vmatprep.subr.bf16.mxu0 0
      %859 = vmatpush1.bf16.msra.mxu0 %v841
      %860 = vmatprep.subr.bf16.mxu0 0
      %861 = vmatpush1.bf16.msra.mxu0 %v842
      %862 = vmatprep.subr.bf16.mxu0 0
      %863 = vmatpush1.bf16.msra.mxu0 %v843
      %864 = vmatprep.subr.bf16.mxu0 0
      %865 = vmatpush1.bf16.msra.mxu0 %v844
      %866 = vmatprep.subr.bf16.mxu0 0
      %867 = vmatpush1.bf16.msra.mxu0 %v845
      %868 = vmatprep.subr.bf16.mxu0 0
      %869 = vmatpush1.bf16.msra.mxu0 %v846
      %870 = vmatprep.subr.bf16.mxu0 0
      %871 = vmatpush1.bf16.msra.mxu0 %v847
      %872 = vmatprep.subr.bf16.mxu0 0
      %873 = vmatpush1.bf16.msra.mxu0 0
      %874 = vmatprep.subr.bf16.mxu0 0
      %875 = vmatpush1.bf16.msra.mxu0 0
      %876 = vmatprep.subr.bf16.mxu0 0
      %877 = vmatpush1.bf16.msra.mxu0 0
      %878 = vmatprep.subr.bf16.mxu0 0
      %879 = vmatpush1.bf16.msra.mxu0 0
      %880 = vmatprep.subr.bf16.mxu0 0
      %881 = vmatpush1.bf16.msra.mxu0 0
      %882 = vmatprep.subr.bf16.mxu0 0
      %883 = vmatpush1.bf16.msra.mxu0 0
      %884 = vmatprep.subr.bf16.mxu0 0
      %885 = vmatpush1.bf16.msra.mxu0 0
      %886 = vmatprep.subr.bf16.mxu0 0
      %887 = vmatpush1.bf16.msra.mxu0 0
      %888 = vmatprep.mubr.bf16.mxu0 0
      %889 = vmatmul.mubr.bf16.gmra.mrb[0].mxu0 %v776
      %v890 = vpop.f32.mrb[0].mxu0
      %v891 = vadd.f32 0.0, %v890
      %v892 = vpop.f32.mrb[0].mxu0
      %v893 = vpop.f32.mrb[0].mxu0
      %v894 = vadd.f32 0.0, %v893
      %v895 = vpop.f32.mrb[0].mxu0
      %896 = vmatprep.mubr.bf16.mxu0 0
      %897 = vmatmul.mubr.bf16.gmra.mrb[0].mxu0 %v777
      %v898 = vpop.f32.mrb[0].mxu0
      %v899 = vadd.f32 0.0, %v898
      %v900 = vpop.f32.mrb[0].mxu0
      %v901 = vpop.f32.mrb[0].mxu0
      %v902 = vadd.f32 0.0, %v901
      %v903 = vpop.f32.mrb[0].mxu0
      %904 = vmatprep.mubr.bf16.mxu0 0
      %905 = vmatmul.mubr.bf16.gmra.mrb[0].mxu0 %v778
      %v906 = vpop.f32.mrb[0].mxu0
      %v907 = vadd.f32 0.0, %v906
      %v908 = vpop.f32.mrb[0].mxu0
      %v909 = vpop.f32.mrb[0].mxu0
      %v910 = vadd.f32 0.0, %v909
      %v911 = vpop.f32.mrb[0].mxu0
      %912 = vmatprep.mubr.bf16.mxu0 0
      %913 = vmatmul.mubr.bf16.gmra.mrb[0].mxu0 %v779
      %v914 = vpop.f32.mrb[0].mxu0
      %v915 = vadd.f32 0.0, %v914
      %v916 = vpop.f32.mrb[0].mxu0
      %v917 = vpop.f32.mrb[0].mxu0
      %v918 = vadd.f32 0.0, %v917
      %v919 = vpop.f32.mrb[0].mxu0
      %920 = vmatprep.mubr.bf16.mxu0 0
      %921 = vmatmul.mubr.bf16.gmra.mrb[0].mxu0 %v780
      %v922 = vpop.f32.mrb[0].mxu0
      %v923 = vadd.f32 0.0, %v922
      %v924 = vpop.f32.mrb[0].mxu0
      %v925 = vpop.f32.mrb[0].mxu0
      %v926 = vadd.f32 0.0, %v925
      %v927 = vpop.f32.mrb[0].mxu0
      %928 = vmatprep.mubr.bf16.mxu0 0
      %929 = vmatmul.mubr.bf16.gmra.mrb[0].mxu0 %v781
      %v930 = vpop.f32.mrb[0].mxu0
      %v931 = vadd.f32 0.0, %v930
      %v932 = vpop.f32.mrb[0].mxu0
      %v933 = vpop.f32.mrb[0].mxu0
      %v934 = vadd.f32 0.0, %v933
      %v935 = vpop.f32.mrb[0].mxu0
      %936 = vmatprep.mubr.bf16.mxu0 0
      %937 = vmatmul.mubr.bf16.gmra.mrb[0].mxu0 %v782
      %v938 = vpop.f32.mrb[0].mxu0
      %v939 = vadd.f32 0.0, %v938
      %v940 = vpop.f32.mrb[0].mxu0
      %v941 = vpop.f32.mrb[0].mxu0
      %v942 = vadd.f32 0.0, %v941
      %v943 = vpop.f32.mrb[0].mxu0
      %944 = vmatprep.mubr.bf16.mxu0 0
      %945 = vmatmul.mubr.bf16.gmra.mrb[0].mxu0 %v783
      %v946 = vpop.f32.mrb[0].mxu0
      %v947 = vadd.f32 0.0, %v946
      %v948 = vpop.f32.mrb[0].mxu0
      %v949 = vpop.f32.mrb[0].mxu0
      %v950 = vadd.f32 0.0, %v949
      %v951 = vpop.f32.mrb[0].mxu0
      %952 = vmatprep.mubr.bf16.mxu0 0
      %953 = vmatmul.mubr.bf16.gmra.mrb[0].mxu0 %v784
      %v954 = vpop.f32.mrb[0].mxu0
      %v955 = vadd.f32 0.0, %v954
      %v956 = vpop.f32.mrb[0].mxu0
      %v957 = vpop.f32.mrb[0].mxu0
      %v958 = vadd.f32 0.0, %v957
      %v959 = vpop.f32.mrb[0].mxu0
      %960 = vmatprep.mubr.bf16.mxu0 0
      %961 = vmatmul.mubr.bf16.gmra.mrb[0].mxu0 %v785
      %v962 = vpop.f32.mrb[0].mxu0
      %v963 = vadd.f32 0.0, %v962
      %v964 = vpop.f32.mrb[0].mxu0
      %v965 = vpop.f32.mrb[0].mxu0
      %v966 = vadd.f32 0.0, %v965
      %v967 = vpop.f32.mrb[0].mxu0
      %968 = vmatprep.mubr.bf16.mxu0 0
      %969 = vmatmul.mubr.bf16.gmra.mrb[0].mxu0 %v786
      %v970 = vpop.f32.mrb[0].mxu0
      %v971 = vadd.f32 0.0, %v970
      %v972 = vpop.f32.mrb[0].mxu0
      %v973 = vpop.f32.mrb[0].mxu0
      %v974 = vadd.f32 0.0, %v973
      %v975 = vpop.f32.mrb[0].mxu0
      %976 = vmatprep.mubr.bf16.mxu0 0
      %977 = vmatmul.mubr.bf16.gmra.mrb[0].mxu0 %v787
      %v978 = vpop.f32.mrb[0].mxu0
      %v979 = vadd.f32 0.0, %v978
      %v980 = vpop.f32.mrb[0].mxu0
      %v981 = vpop.f32.mrb[0].mxu0
      %v982 = vadd.f32 0.0, %v981
      %v983 = vpop.f32.mrb[0].mxu0
      %984 = vmatprep.mubr.bf16.mxu0 0
      %985 = vmatmul.mubr.bf16.gmra.mrb[0].mxu0 %v788
      %v986 = vpop.f32.mrb[0].mxu0
      %v987 = vadd.f32 0.0, %v986
      %v988 = vpop.f32.mrb[0].mxu0
      %v989 = vpop.f32.mrb[0].mxu0
      %v990 = vadd.f32 0.0, %v989
      %v991 = vpop.f32.mrb[0].mxu0
      %992 = vmatprep.mubr.bf16.mxu0 0
      %993 = vmatmul.mubr.bf16.gmra.mrb[0].mxu0 %v789
      %v994 = vpop.f32.mrb[0].mxu0
      %v995 = vadd.f32 0.0, %v994
      %v996 = vpop.f32.mrb[0].mxu0
      %v997 = vpop.f32.mrb[0].mxu0
      %v998 = vadd.f32 0.0, %v997
      %v999 = vpop.f32.mrb[0].mxu0
      %1000 = vmatprep.mubr.bf16.mxu0 0
      %1001 = vmatmul.mubr.bf16.gmra.mrb[0].mxu0 %v790
      %v1002 = vpop.f32.mrb[0].mxu0
      %v1003 = vadd.f32 0.0, %v1002
      %v1004 = vpop.f32.mrb[0].mxu0
      %v1005 = vpop.f32.mrb[0].mxu0
      %v1006 = vadd.f32 0.0, %v1005
      %v1007 = vpop.f32.mrb[0].mxu0
      %1008 = vmatprep.mubr.bf16.mxu0 0
      %1009 = vmatmul.mubr.bf16.gmra.mrb[0].mxu0 %v791
      %v1010 = vpop.f32.mrb[0].mxu0
      %v1011 = vadd.f32 0.0, %v1010
      %v1012 = vpop.f32.mrb[0].mxu0
      %v1013 = vpop.f32.mrb[0].mxu0
      %v1014 = vadd.f32 0.0, %v1013
      %v1015 = vpop.f32.mrb[0].mxu0
      %1016 = vdwg.mxu0
      %v1017 = vld [vmem:[%s4] sm:$0x1]
      %v1019 = vlaneseq
      %v1020 = vshrl.u32 %v1019, 7
      %v1021 = vsub.s32 0, %v1020
      %v1022 = vrot.slane %v1017, %v1021
      %v1024 = vmul.f32 %v891, %v1022
      %v1025 = vmul.f32 %v894, %v1022
      %v1026 = vmul.f32 %v899, %v1022
      %v1027 = vmul.f32 %v902, %v1022
      %v1028 = vmul.f32 %v907, %v1022
      %v1029 = vmul.f32 %v910, %v1022
      %v1030 = vmul.f32 %v915, %v1022
      %v1031 = vmul.f32 %v918, %v1022
      %v1032 = vmul.f32 %v923, %v1022
      %v1033 = vmul.f32 %v926, %v1022
      %v1034 = vmul.f32 %v931, %v1022
      %v1035 = vmul.f32 %v934, %v1022
      %v1036 = vmul.f32 %v939, %v1022
      %v1037 = vmul.f32 %v942, %v1022
      %v1038 = vmul.f32 %v947, %v1022
      %v1039 = vmul.f32 %v950, %v1022
      %v1040 = vmul.f32 %v955, %v1022
      %v1041 = vmul.f32 %v958, %v1022
      %v1042 = vmul.f32 %v963, %v1022
      %v1043 = vmul.f32 %v966, %v1022
      %v1044 = vmul.f32 %v971, %v1022
      %v1045 = vmul.f32 %v974, %v1022
      %v1046 = vmul.f32 %v979, %v1022
      %v1047 = vmul.f32 %v982, %v1022
      %v1048 = vmul.f32 %v987, %v1022
      %v1049 = vmul.f32 %v990, %v1022
      %v1050 = vmul.f32 %v995, %v1022
      %v1051 = vmul.f32 %v998, %v1022
      %v1052 = vmul.f32 %v1003, %v1022
      %v1053 = vmul.f32 %v1006, %v1022
      %v1054 = vmul.f32 %v1011, %v1022
      %v1055 = vmul.f32 %v1014, %v1022
      %v1056 = vld [vmem:[%s5] sm:$0x1]
      %v1058 = vlaneseq
      %v1059 = vshrl.u32 %v1058, 7
      %v1060 = vsub.s32 0, %v1059
      %v1061 = vrot.slane %v1056, %v1060
      %v1063 = vadd.f32 %v1024, %v1061
      %v1064 = vadd.f32 %v1025, %v1061
      %v1065 = vadd.f32 %v1026, %v1061
      %v1066 = vadd.f32 %v1027, %v1061
      %v1067 = vadd.f32 %v1028, %v1061
      %v1068 = vadd.f32 %v1029, %v1061
      %v1069 = vadd.f32 %v1030, %v1061
      %v1070 = vadd.f32 %v1031, %v1061
      %v1071 = vadd.f32 %v1032, %v1061
      %v1072 = vadd.f32 %v1033, %v1061
      %v1073 = vadd.f32 %v1034, %v1061
      %v1074 = vadd.f32 %v1035, %v1061
      %v1075 = vadd.f32 %v1036, %v1061
      %v1076 = vadd.f32 %v1037, %v1061
      %v1077 = vadd.f32 %v1038, %v1061
      %v1078 = vadd.f32 %v1039, %v1061
      %v1079 = vadd.f32 %v1040, %v1061
      %v1080 = vadd.f32 %v1041, %v1061
      %v1081 = vadd.f32 %v1042, %v1061
      %v1082 = vadd.f32 %v1043, %v1061
      %v1083 = vadd.f32 %v1044, %v1061
      %v1084 = vadd.f32 %v1045, %v1061
      %v1085 = vadd.f32 %v1046, %v1061
      %v1086 = vadd.f32 %v1047, %v1061
      %v1087 = vadd.f32 %v1048, %v1061
      %v1088 = vadd.f32 %v1049, %v1061
      %v1089 = vadd.f32 %v1050, %v1061
      %v1090 = vadd.f32 %v1051, %v1061
      %v1091 = vadd.f32 %v1052, %v1061
      %v1092 = vadd.f32 %v1053, %v1061
      %v1093 = vadd.f32 %v1054, %v1061
      %v1094 = vadd.f32 %v1055, %v1061
      %v1095 = vmax.f32 %v1063, 0.0
      %v1096 = vmax.f32 %v1064, 0.0
      %v1097 = vmax.f32 %v1065, 0.0
      %v1098 = vmax.f32 %v1066, 0.0
      %v1099 = vmax.f32 %v1067, 0.0
      %v1100 = vmax.f32 %v1068, 0.0
      %v1101 = vmax.f32 %v1069, 0.0
      %v1102 = vmax.f32 %v1070, 0.0
      %v1103 = vmax.f32 %v1071, 0.0
      %v1104 = vmax.f32 %v1072, 0.0
      %v1105 = vmax.f32 %v1073, 0.0
      %v1106 = vmax.f32 %v1074, 0.0
      %v1107 = vmax.f32 %v1075, 0.0
      %v1108 = vmax.f32 %v1076, 0.0
      %v1109 = vmax.f32 %v1077, 0.0
      %v1110 = vmax.f32 %v1078, 0.0
      %v1111 = vmax.f32 %v1079, 0.0
      %v1112 = vmax.f32 %v1080, 0.0
      %v1113 = vmax.f32 %v1081, 0.0
      %v1114 = vmax.f32 %v1082, 0.0
      %v1115 = vmax.f32 %v1083, 0.0
      %v1116 = vmax.f32 %v1084, 0.0
      %v1117 = vmax.f32 %v1085, 0.0
      %v1118 = vmax.f32 %v1086, 0.0
      %v1119 = vmax.f32 %v1087, 0.0
      %v1120 = vmax.f32 %v1088, 0.0
      %v1121 = vmax.f32 %v1089, 0.0
      %v1122 = vmax.f32 %v1090, 0.0
      %v1123 = vmax.f32 %v1091, 0.0
      %v1124 = vmax.f32 %v1092, 0.0
      %v1125 = vmax.f32 %v1093, 0.0
      %v1126 = vmax.f32 %v1094, 0.0
      %v1127 = vpack.c.bf16 %v1096, %v1095
      %v1128 = vpack.c.bf16 %v1098, %v1097
      %v1129 = vpack.c.bf16 %v1100, %v1099
      %v1130 = vpack.c.bf16 %v1102, %v1101
      %v1131 = vpack.c.bf16 %v1104, %v1103
      %v1132 = vpack.c.bf16 %v1106, %v1105
      %v1133 = vpack.c.bf16 %v1108, %v1107
      %v1134 = vpack.c.bf16 %v1110, %v1109
      %v1135 = vpack.c.bf16 %v1112, %v1111
      %v1136 = vpack.c.bf16 %v1114, %v1113
      %v1137 = vpack.c.bf16 %v1116, %v1115
      %v1138 = vpack.c.bf16 %v1118, %v1117
      %v1139 = vpack.c.bf16 %v1120, %v1119
      %v1140 = vpack.c.bf16 %v1122, %v1121
      %v1141 = vpack.c.bf16 %v1124, %v1123
      %v1142 = vpack.c.bf16 %v1126, %v1125
      %v1144 = vshrl.u32 %v1127, 16
      %v1146 = vrot.slane %v1144, 7
      %v1147 = vshll.u32 %v1127, 16
      %v1149 = vor.u32 %v1146, %v1147
      %v1151 = vshrl.u32 %v1128, 16
      %v1153 = vrot.slane %v1151, 7
      %v1154 = vshll.u32 %v1128, 16
      %v1156 = vor.u32 %v1153, %v1154
      %v1158 = vshrl.u32 %v1129, 16
      %v1160 = vrot.slane %v1158, 7
      %v1161 = vshll.u32 %v1129, 16
      %v1163 = vor.u32 %v1160, %v1161
      %v1165 = vshrl.u32 %v1130, 16
      %v1167 = vrot.slane %v1165, 7
      %v1168 = vshll.u32 %v1130, 16
      %v1170 = vor.u32 %v1167, %v1168
      %v1172 = vshrl.u32 %v1131, 16
      %v1174 = vrot.slane %v1172, 7
      %v1175 = vshll.u32 %v1131, 16
      %v1177 = vor.u32 %v1174, %v1175
      %v1179 = vshrl.u32 %v1132, 16
      %v1181 = vrot.slane %v1179, 7
      %v1182 = vshll.u32 %v1132, 16
      %v1184 = vor.u32 %v1181, %v1182
      %v1186 = vshrl.u32 %v1133, 16
      %v1188 = vrot.slane %v1186, 7
      %v1189 = vshll.u32 %v1133, 16
      %v1191 = vor.u32 %v1188, %v1189
      %v1193 = vshrl.u32 %v1134, 16
      %v1195 = vrot.slane %v1193, 7
      %v1196 = vshll.u32 %v1134, 16
      %v1198 = vor.u32 %v1195, %v1196
      %v1200 = vshrl.u32 %v1135, 16
      %v1202 = vrot.slane %v1200, 7
      %v1203 = vshll.u32 %v1135, 16
      %v1205 = vor.u32 %v1202, %v1203
      %v1207 = vshrl.u32 %v1136, 16
      %v1209 = vrot.slane %v1207, 7
      %v1210 = vshll.u32 %v1136, 16
      %v1212 = vor.u32 %v1209, %v1210
      %v1214 = vshrl.u32 %v1137, 16
      %v1216 = vrot.slane %v1214, 7
      %v1217 = vshll.u32 %v1137, 16
      %v1219 = vor.u32 %v1216, %v1217
      %v1221 = vshrl.u32 %v1138, 16
      %v1223 = vrot.slane %v1221, 7
      %v1224 = vshll.u32 %v1138, 16
      %v1226 = vor.u32 %v1223, %v1224
      %v1228 = vshrl.u32 %v1139, 16
      %v1230 = vrot.slane %v1228, 7
      %v1231 = vshll.u32 %v1139, 16
      %v1233 = vor.u32 %v1230, %v1231
      %v1235 = vshrl.u32 %v1140, 16
      %v1237 = vrot.slane %v1235, 7
      %v1238 = vshll.u32 %v1140, 16
      %v1240 = vor.u32 %v1237, %v1238
      %v1242 = vshrl.u32 %v1141, 16
      %v1244 = vrot.slane %v1242, 7
      %v1245 = vshll.u32 %v1141, 16
      %v1247 = vor.u32 %v1244, %v1245
      %v1249 = vshrl.u32 %v1142, 16
      %v1251 = vrot.slane %v1249, 7
      %v1252 = vshll.u32 %v1142, 16
      %v1254 = vor.u32 %v1251, %v1252
      %vm1287 = vcmask 1040384
      %vm1288 = vsmask.f32 256
      %vm1289 = vmand %vm1287, %vm1288
      %v1290 = vsel %vm1289, 0, %v1149
      %v1291 = vsel %vm1289, 0, %v1156
      %v1292 = vsel %vm1289, 0, %v1163
      %v1293 = vsel %vm1289, 0, %v1170
      %v1294 = vsel %vm1289, 0, %v1177
      %v1295 = vsel %vm1289, 0, %v1184
      %v1296 = vsel %vm1289, 0, %v1191
      %v1297 = vsel %vm1289, 0, %v1198
      %v1298 = vsel %vm1289, 0, %v1205
      %v1299 = vsel %vm1289, 0, %v1212
      %v1300 = vsel %vm1289, 0, %v1219
      %v1301 = vsel %vm1289, 0, %v1226
      %v1302 = vsel %vm1289, 0, %v1233
      %v1303 = vsel %vm1289, 0, %v1240
      %v1304 = vsel %vm1289, 0, %v1247
      %v1305 = vsel %vm1289, 0, %v1254
      %v1306 = vsel %vm1289, %v1146, 0
      %v1307 = vsel %vm1289, %v1153, 0
      %v1308 = vsel %vm1289, %v1160, 0
      %v1309 = vsel %vm1289, %v1167, 0
      %v1310 = vsel %vm1289, %v1174, 0
      %v1311 = vsel %vm1289, %v1181, 0
      %v1312 = vsel %vm1289, %v1188, 0
      %v1313 = vsel %vm1289, %v1195, 0
      %v1314 = vsel %vm1289, %v1202, 0
      %v1315 = vsel %vm1289, %v1209, 0
      %v1316 = vsel %vm1289, %v1216, 0
      %v1317 = vsel %vm1289, %v1223, 0
      %v1318 = vsel %vm1289, %v1230, 0
      %v1319 = vsel %vm1289, %v1237, 0
      %v1320 = vsel %vm1289, %v1244, 0
      %v1321 = vsel %vm1289, %v1251, 0
      %v1354 = vcombine.high %v1290, %v1290
      %v1356 = vunpack.c.l.s4 1966171168
      %v1357 = vunpack.c.0.s8 %v1356
      %v1358 = vlaneseq
      %v1359 = vshrl.u32 %v1358, 7
      %v1360 = vsub.s32 %v1357, %v1359
      %v1361 = vrot.slane %v1290, %v1360
      %v1363 = vunpack.c.l.s4 1966171168
      %v1364 = vunpack.c.0.s8 %v1363
      %v1365 = vlaneseq
      %v1366 = vshrl.u32 %v1365, 7
      %v1367 = vsub.s32 %v1364, %v1366
      %v1368 = vrot.slane %v1354, %v1367
      %v1369 = vcombine.high %v1361, %v1361
      %v1370 = vcombine.high %v1368, %v1368
      %v1372 = vunpack.c.l.s4 1966171168
      %v1373 = vunpack.c.0.s8 %v1372
      %v1374 = vlaneseq
      %v1375 = vshrl.u32 %v1374, 7
      %v1376 = vsub.s32 %v1373, %v1375
      %v1377 = vrot.slane %v1361, %v1376
      %v1379 = vunpack.c.l.s4 1966171168
      %v1380 = vunpack.c.0.s8 %v1379
      %v1381 = vlaneseq
      %v1382 = vshrl.u32 %v1381, 7
      %v1383 = vsub.s32 %v1380, %v1382
      %v1384 = vrot.slane %v1368, %v1383
      %v1386 = vunpack.c.l.s4 1966171168
      %v1387 = vunpack.c.0.s8 %v1386
      %v1388 = vlaneseq
      %v1389 = vshrl.u32 %v1388, 7
      %v1390 = vsub.s32 %v1387, %v1389
      %v1391 = vrot.slane %v1369, %v1390
      %v1393 = vunpack.c.l.s4 1966171168
      %v1394 = vunpack.c.0.s8 %v1393
      %v1395 = vlaneseq
      %v1396 = vshrl.u32 %v1395, 7
      %v1397 = vsub.s32 %v1394, %v1396
      %v1398 = vrot.slane %v1370, %v1397
      %v1399 = vcombine.high %v1377, %v1377
      %v1400 = vcombine.high %v1384, %v1384
      %v1401 = vcombine.high %v1391, %v1391
      %v1402 = vcombine.high %v1398, %v1398
      %v1404 = vunpack.c.l.s4 1966171168
      %v1405 = vunpack.c.0.s8 %v1404
      %v1406 = vlaneseq
      %v1407 = vshrl.u32 %v1406, 7
      %v1408 = vsub.s32 %v1405, %v1407
      %v1409 = vrot.slane %v1306, %v1408
      %v1411 = vunpack.c.l.s4 1966171168
      %v1412 = vunpack.c.0.s8 %v1411
      %v1413 = vlaneseq
      %v1414 = vshrl.u32 %v1413, 7
      %v1415 = vsub.s32 %v1412, %v1414
      %v1416 = vrot.slane %v1409, %v1415
      %v1417 = vcombine.high %v1291, %v1291
      %v1419 = vunpack.c.l.s4 1966171168
      %v1420 = vunpack.c.0.s8 %v1419
      %v1421 = vlaneseq
      %v1422 = vshrl.u32 %v1421, 7
      %v1423 = vsub.s32 %v1420, %v1422
      %v1424 = vrot.slane %v1291, %v1423
      %v1426 = vunpack.c.l.s4 1966171168
      %v1427 = vunpack.c.0.s8 %v1426
      %v1428 = vlaneseq
      %v1429 = vshrl.u32 %v1428, 7
      %v1430 = vsub.s32 %v1427, %v1429
      %v1431 = vrot.slane %v1417, %v1430
      %v1432 = vcombine.high %v1424, %v1424
      %v1433 = vcombine.high %v1431, %v1431
      %v1435 = vunpack.c.l.s4 1966171168
      %v1436 = vunpack.c.0.s8 %v1435
      %v1437 = vlaneseq
      %v1438 = vshrl.u32 %v1437, 7
      %v1439 = vsub.s32 %v1436, %v1438
      %v1440 = vrot.slane %v1424, %v1439
      %v1442 = vunpack.c.l.s4 1966171168
      %v1443 = vunpack.c.0.s8 %v1442
      %v1444 = vlaneseq
      %v1445 = vshrl.u32 %v1444, 7
      %v1446 = vsub.s32 %v1443, %v1445
      %v1447 = vrot.slane %v1431, %v1446
      %v1449 = vunpack.c.l.s4 1966171168
      %v1450 = vunpack.c.0.s8 %v1449
      %v1451 = vlaneseq
      %v1452 = vshrl.u32 %v1451, 7
      %v1453 = vsub.s32 %v1450, %v1452
      %v1454 = vrot.slane %v1432, %v1453
      %v1456 = vunpack.c.l.s4 1966171168
      %v1457 = vunpack.c.0.s8 %v1456
      %v1458 = vlaneseq
      %v1459 = vshrl.u32 %v1458, 7
      %v1460 = vsub.s32 %v1457, %v1459
      %v1461 = vrot.slane %v1433, %v1460
      %v1462 = vcombine.high %v1440, %v1440
      %v1463 = vcombine.high %v1447, %v1447
      %v1464 = vcombine.high %v1454, %v1454
      %v1465 = vcombine.high %v1461, %v1461
      %v1467 = vunpack.c.l.s4 1966171168
      %v1468 = vunpack.c.0.s8 %v1467
      %v1469 = vlaneseq
      %v1470 = vshrl.u32 %v1469, 7
      %v1471 = vsub.s32 %v1468, %v1470
      %v1472 = vrot.slane %v1307, %v1471
      %v1474 = vunpack.c.l.s4 1966171168
      %v1475 = vunpack.c.0.s8 %v1474
      %v1476 = vlaneseq
      %v1477 = vshrl.u32 %v1476, 7
      %v1478 = vsub.s32 %v1475, %v1477
      %v1479 = vrot.slane %v1472, %v1478
      %v1480 = vcombine.high %v1292, %v1292
      %v1482 = vunpack.c.l.s4 1966171168
      %v1483 = vunpack.c.0.s8 %v1482
      %v1484 = vlaneseq
      %v1485 = vshrl.u32 %v1484, 7
      %v1486 = vsub.s32 %v1483, %v1485
      %v1487 = vrot.slane %v1292, %v1486
      %v1489 = vunpack.c.l.s4 1966171168
      %v1490 = vunpack.c.0.s8 %v1489
      %v1491 = vlaneseq
      %v1492 = vshrl.u32 %v1491, 7
      %v1493 = vsub.s32 %v1490, %v1492
      %v1494 = vrot.slane %v1480, %v1493
      %v1495 = vcombine.high %v1487, %v1487
      %v1496 = vcombine.high %v1494, %v1494
      %v1498 = vunpack.c.l.s4 1966171168
      %v1499 = vunpack.c.0.s8 %v1498
      %v1500 = vlaneseq
      %v1501 = vshrl.u32 %v1500, 7
      %v1502 = vsub.s32 %v1499, %v1501
      %v1503 = vrot.slane %v1487, %v1502
      %v1505 = vunpack.c.l.s4 1966171168
      %v1506 = vunpack.c.0.s8 %v1505
      %v1507 = vlaneseq
      %v1508 = vshrl.u32 %v1507, 7
      %v1509 = vsub.s32 %v1506, %v1508
      %v1510 = vrot.slane %v1494, %v1509
      %v1512 = vunpack.c.l.s4 1966171168
      %v1513 = vunpack.c.0.s8 %v1512
      %v1514 = vlaneseq
      %v1515 = vshrl.u32 %v1514, 7
      %v1516 = vsub.s32 %v1513, %v1515
      %v1517 = vrot.slane %v1495, %v1516
      %v1519 = vunpack.c.l.s4 1966171168
      %v1520 = vunpack.c.0.s8 %v1519
      %v1521 = vlaneseq
      %v1522 = vshrl.u32 %v1521, 7
      %v1523 = vsub.s32 %v1520, %v1522
      %v1524 = vrot.slane %v1496, %v1523
      %v1525 = vcombine.high %v1503, %v1503
      %v1526 = vcombine.high %v1510, %v1510
      %v1527 = vcombine.high %v1517, %v1517
      %v1528 = vcombine.high %v1524, %v1524
      %v1530 = vunpack.c.l.s4 1966171168
      %v1531 = vunpack.c.0.s8 %v1530
      %v1532 = vlaneseq
      %v1533 = vshrl.u32 %v1532, 7
      %v1534 = vsub.s32 %v1531, %v1533
      %v1535 = vrot.slane %v1308, %v1534
      %v1537 = vunpack.c.l.s4 1966171168
      %v1538 = vunpack.c.0.s8 %v1537
      %v1539 = vlaneseq
      %v1540 = vshrl.u32 %v1539, 7
      %v1541 = vsub.s32 %v1538, %v1540
      %v1542 = vrot.slane %v1535, %v1541
      %v1543 = vcombine.high %v1293, %v1293
      %v1545 = vunpack.c.l.s4 1966171168
      %v1546 = vunpack.c.0.s8 %v1545
      %v1547 = vlaneseq
      %v1548 = vshrl.u32 %v1547, 7
      %v1549 = vsub.s32 %v1546, %v1548
      %v1550 = vrot.slane %v1293, %v1549
      %v1552 = vunpack.c.l.s4 1966171168
      %v1553 = vunpack.c.0.s8 %v1552
      %v1554 = vlaneseq
      %v1555 = vshrl.u32 %v1554, 7
      %v1556 = vsub.s32 %v1553, %v1555
      %v1557 = vrot.slane %v1543, %v1556
      %v1558 = vcombine.high %v1550, %v1550
      %v1559 = vcombine.high %v1557, %v1557
      %v1561 = vunpack.c.l.s4 1966171168
      %v1562 = vunpack.c.0.s8 %v1561
      %v1563 = vlaneseq
      %v1564 = vshrl.u32 %v1563, 7
      %v1565 = vsub.s32 %v1562, %v1564
      %v1566 = vrot.slane %v1550, %v1565
      %v1568 = vunpack.c.l.s4 1966171168
      %v1569 = vunpack.c.0.s8 %v1568
      %v1570 = vlaneseq
      %v1571 = vshrl.u32 %v1570, 7
      %v1572 = vsub.s32 %v1569, %v1571
      %v1573 = vrot.slane %v1557, %v1572
      %v1575 = vunpack.c.l.s4 1966171168
      %v1576 = vunpack.c.0.s8 %v1575
      %v1577 = vlaneseq
      %v1578 = vshrl.u32 %v1577, 7
      %v1579 = vsub.s32 %v1576, %v1578
      %v1580 = vrot.slane %v1558, %v1579
      %v1582 = vunpack.c.l.s4 1966171168
      %v1583 = vunpack.c.0.s8 %v1582
      %v1584 = vlaneseq
      %v1585 = vshrl.u32 %v1584, 7
      %v1586 = vsub.s32 %v1583, %v1585
      %v1587 = vrot.slane %v1559, %v1586
      %v1588 = vcombine.high %v1566, %v1566
      %v1589 = vcombine.high %v1573, %v1573
      %v1590 = vcombine.high %v1580, %v1580
      %v1591 = vcombine.high %v1587, %v1587
      %v1593 = vunpack.c.l.s4 1966171168
      %v1594 = vunpack.c.0.s8 %v1593
      %v1595 = vlaneseq
      %v1596 = vshrl.u32 %v1595, 7
      %v1597 = vsub.s32 %v1594, %v1596
      %v1598 = vrot.slane %v1309, %v1597
      %v1600 = vunpack.c.l.s4 1966171168
      %v1601 = vunpack.c.0.s8 %v1600
      %v1602 = vlaneseq
      %v1603 = vshrl.u32 %v1602, 7
      %v1604 = vsub.s32 %v1601, %v1603
      %v1605 = vrot.slane %v1598, %v1604
      %v1606 = vcombine.high %v1294, %v1294
      %v1608 = vunpack.c.l.s4 1966171168
      %v1609 = vunpack.c.0.s8 %v1608
      %v1610 = vlaneseq
      %v1611 = vshrl.u32 %v1610, 7
      %v1612 = vsub.s32 %v1609, %v1611
      %v1613 = vrot.slane %v1294, %v1612
      %v1615 = vunpack.c.l.s4 1966171168
      %v1616 = vunpack.c.0.s8 %v1615
      %v1617 = vlaneseq
      %v1618 = vshrl.u32 %v1617, 7
      %v1619 = vsub.s32 %v1616, %v1618
      %v1620 = vrot.slane %v1606, %v1619
      %v1621 = vcombine.high %v1613, %v1613
      %v1622 = vcombine.high %v1620, %v1620
      %v1624 = vunpack.c.l.s4 1966171168
      %v1625 = vunpack.c.0.s8 %v1624
      %v1626 = vlaneseq
      %v1627 = vshrl.u32 %v1626, 7
      %v1628 = vsub.s32 %v1625, %v1627
      %v1629 = vrot.slane %v1613, %v1628
      %v1631 = vunpack.c.l.s4 1966171168
      %v1632 = vunpack.c.0.s8 %v1631
      %v1633 = vlaneseq
      %v1634 = vshrl.u32 %v1633, 7
      %v1635 = vsub.s32 %v1632, %v1634
      %v1636 = vrot.slane %v1620, %v1635
      %v1638 = vunpack.c.l.s4 1966171168
      %v1639 = vunpack.c.0.s8 %v1638
      %v1640 = vlaneseq
      %v1641 = vshrl.u32 %v1640, 7
      %v1642 = vsub.s32 %v1639, %v1641
      %v1643 = vrot.slane %v1621, %v1642
      %v1645 = vunpack.c.l.s4 1966171168
      %v1646 = vunpack.c.0.s8 %v1645
      %v1647 = vlaneseq
      %v1648 = vshrl.u32 %v1647, 7
      %v1649 = vsub.s32 %v1646, %v1648
      %v1650 = vrot.slane %v1622, %v1649
      %v1651 = vcombine.high %v1629, %v1629
      %v1652 = vcombine.high %v1636, %v1636
      %v1653 = vcombine.high %v1643, %v1643
      %v1654 = vcombine.high %v1650, %v1650
      %v1656 = vunpack.c.l.s4 1966171168
      %v1657 = vunpack.c.0.s8 %v1656
      %v1658 = vlaneseq
      %v1659 = vshrl.u32 %v1658, 7
      %v1660 = vsub.s32 %v1657, %v1659
      %v1661 = vrot.slane %v1310, %v1660
      %v1663 = vunpack.c.l.s4 1966171168
      %v1664 = vunpack.c.0.s8 %v1663
      %v1665 = vlaneseq
      %v1666 = vshrl.u32 %v1665, 7
      %v1667 = vsub.s32 %v1664, %v1666
      %v1668 = vrot.slane %v1661, %v1667
      %v1669 = vcombine.high %v1295, %v1295
      %v1671 = vunpack.c.l.s4 1966171168
      %v1672 = vunpack.c.0.s8 %v1671
      %v1673 = vlaneseq
      %v1674 = vshrl.u32 %v1673, 7
      %v1675 = vsub.s32 %v1672, %v1674
      %v1676 = vrot.slane %v1295, %v1675
      %v1678 = vunpack.c.l.s4 1966171168
      %v1679 = vunpack.c.0.s8 %v1678
      %v1680 = vlaneseq
      %v1681 = vshrl.u32 %v1680, 7
      %v1682 = vsub.s32 %v1679, %v1681
      %v1683 = vrot.slane %v1669, %v1682
      %v1684 = vcombine.high %v1676, %v1676
      %v1685 = vcombine.high %v1683, %v1683
      %v1687 = vunpack.c.l.s4 1966171168
      %v1688 = vunpack.c.0.s8 %v1687
      %v1689 = vlaneseq
      %v1690 = vshrl.u32 %v1689, 7
      %v1691 = vsub.s32 %v1688, %v1690
      %v1692 = vrot.slane %v1676, %v1691
      %v1694 = vunpack.c.l.s4 1966171168
      %v1695 = vunpack.c.0.s8 %v1694
      %v1696 = vlaneseq
      %v1697 = vshrl.u32 %v1696, 7
      %v1698 = vsub.s32 %v1695, %v1697
      %v1699 = vrot.slane %v1683, %v1698
      %v1701 = vunpack.c.l.s4 1966171168
      %v1702 = vunpack.c.0.s8 %v1701
      %v1703 = vlaneseq
      %v1704 = vshrl.u32 %v1703, 7
      %v1705 = vsub.s32 %v1702, %v1704
      %v1706 = vrot.slane %v1684, %v1705
      %v1708 = vunpack.c.l.s4 1966171168
      %v1709 = vunpack.c.0.s8 %v1708
      %v1710 = vlaneseq
      %v1711 = vshrl.u32 %v1710, 7
      %v1712 = vsub.s32 %v1709, %v1711
      %v1713 = vrot.slane %v1685, %v1712
      %v1714 = vcombine.high %v1692, %v1692
      %v1715 = vcombine.high %v1699, %v1699
      %v1716 = vcombine.high %v1706, %v1706
      %v1717 = vcombine.high %v1713, %v1713
      %v1719 = vunpack.c.l.s4 1966171168
      %v1720 = vunpack.c.0.s8 %v1719
      %v1721 = vlaneseq
      %v1722 = vshrl.u32 %v1721, 7
      %v1723 = vsub.s32 %v1720, %v1722
      %v1724 = vrot.slane %v1311, %v1723
      %v1726 = vunpack.c.l.s4 1966171168
      %v1727 = vunpack.c.0.s8 %v1726
      %v1728 = vlaneseq
      %v1729 = vshrl.u32 %v1728, 7
      %v1730 = vsub.s32 %v1727, %v1729
      %v1731 = vrot.slane %v1724, %v1730
      %v1732 = vcombine.high %v1296, %v1296
      %v1734 = vunpack.c.l.s4 1966171168
      %v1735 = vunpack.c.0.s8 %v1734
      %v1736 = vlaneseq
      %v1737 = vshrl.u32 %v1736, 7
      %v1738 = vsub.s32 %v1735, %v1737
      %v1739 = vrot.slane %v1296, %v1738
      %v1741 = vunpack.c.l.s4 1966171168
      %v1742 = vunpack.c.0.s8 %v1741
      %v1743 = vlaneseq
      %v1744 = vshrl.u32 %v1743, 7
      %v1745 = vsub.s32 %v1742, %v1744
      %v1746 = vrot.slane %v1732, %v1745
      %v1747 = vcombine.high %v1739, %v1739
      %v1748 = vcombine.high %v1746, %v1746
      %v1750 = vunpack.c.l.s4 1966171168
      %v1751 = vunpack.c.0.s8 %v1750
      %v1752 = vlaneseq
      %v1753 = vshrl.u32 %v1752, 7
      %v1754 = vsub.s32 %v1751, %v1753
      %v1755 = vrot.slane %v1739, %v1754
      %v1757 = vunpack.c.l.s4 1966171168
      %v1758 = vunpack.c.0.s8 %v1757
      %v1759 = vlaneseq
      %v1760 = vshrl.u32 %v1759, 7
      %v1761 = vsub.s32 %v1758, %v1760
      %v1762 = vrot.slane %v1746, %v1761
      %v1764 = vunpack.c.l.s4 1966171168
      %v1765 = vunpack.c.0.s8 %v1764
      %v1766 = vlaneseq
      %v1767 = vshrl.u32 %v1766, 7
      %v1768 = vsub.s32 %v1765, %v1767
      %v1769 = vrot.slane %v1747, %v1768
      %v1771 = vunpack.c.l.s4 1966171168
      %v1772 = vunpack.c.0.s8 %v1771
      %v1773 = vlaneseq
      %v1774 = vshrl.u32 %v1773, 7
      %v1775 = vsub.s32 %v1772, %v1774
      %v1776 = vrot.slane %v1748, %v1775
      %v1777 = vcombine.high %v1755, %v1755
      %v1778 = vcombine.high %v1762, %v1762
      %v1779 = vcombine.high %v1769, %v1769
      %v1780 = vcombine.high %v1776, %v1776
      %v1782 = vunpack.c.l.s4 1966171168
      %v1783 = vunpack.c.0.s8 %v1782
      %v1784 = vlaneseq
      %v1785 = vshrl.u32 %v1784, 7
      %v1786 = vsub.s32 %v1783, %v1785
      %v1787 = vrot.slane %v1312, %v1786
      %v1789 = vunpack.c.l.s4 1966171168
      %v1790 = vunpack.c.0.s8 %v1789
      %v1791 = vlaneseq
      %v1792 = vshrl.u32 %v1791, 7
      %v1793 = vsub.s32 %v1790, %v1792
      %v1794 = vrot.slane %v1787, %v1793
      %v1795 = vcombine.high %v1297, %v1297
      %v1797 = vunpack.c.l.s4 1966171168
      %v1798 = vunpack.c.0.s8 %v1797
      %v1799 = vlaneseq
      %v1800 = vshrl.u32 %v1799, 7
      %v1801 = vsub.s32 %v1798, %v1800
      %v1802 = vrot.slane %v1297, %v1801
      %v1804 = vunpack.c.l.s4 1966171168
      %v1805 = vunpack.c.0.s8 %v1804
      %v1806 = vlaneseq
      %v1807 = vshrl.u32 %v1806, 7
      %v1808 = vsub.s32 %v1805, %v1807
      %v1809 = vrot.slane %v1795, %v1808
      %v1810 = vcombine.high %v1802, %v1802
      %v1811 = vcombine.high %v1809, %v1809
      %v1813 = vunpack.c.l.s4 1966171168
      %v1814 = vunpack.c.0.s8 %v1813
      %v1815 = vlaneseq
      %v1816 = vshrl.u32 %v1815, 7
      %v1817 = vsub.s32 %v1814, %v1816
      %v1818 = vrot.slane %v1802, %v1817
      %v1820 = vunpack.c.l.s4 1966171168
      %v1821 = vunpack.c.0.s8 %v1820
      %v1822 = vlaneseq
      %v1823 = vshrl.u32 %v1822, 7
      %v1824 = vsub.s32 %v1821, %v1823
      %v1825 = vrot.slane %v1809, %v1824
      %v1827 = vunpack.c.l.s4 1966171168
      %v1828 = vunpack.c.0.s8 %v1827
      %v1829 = vlaneseq
      %v1830 = vshrl.u32 %v1829, 7
      %v1831 = vsub.s32 %v1828, %v1830
      %v1832 = vrot.slane %v1810, %v1831
      %v1834 = vunpack.c.l.s4 1966171168
      %v1835 = vunpack.c.0.s8 %v1834
      %v1836 = vlaneseq
      %v1837 = vshrl.u32 %v1836, 7
      %v1838 = vsub.s32 %v1835, %v1837
      %v1839 = vrot.slane %v1811, %v1838
      %v1840 = vcombine.high %v1818, %v1818
      %v1841 = vcombine.high %v1825, %v1825
      %v1842 = vcombine.high %v1832, %v1832
      %v1843 = vcombine.high %v1839, %v1839
      %v1845 = vunpack.c.l.s4 1966171168
      %v1846 = vunpack.c.0.s8 %v1845
      %v1847 = vlaneseq
      %v1848 = vshrl.u32 %v1847, 7
      %v1849 = vsub.s32 %v1846, %v1848
      %v1850 = vrot.slane %v1313, %v1849
      %v1852 = vunpack.c.l.s4 1966171168
      %v1853 = vunpack.c.0.s8 %v1852
      %v1854 = vlaneseq
      %v1855 = vshrl.u32 %v1854, 7
      %v1856 = vsub.s32 %v1853, %v1855
      %v1857 = vrot.slane %v1850, %v1856
      %v1858 = vcombine.high %v1298, %v1298
      %v1860 = vunpack.c.l.s4 1966171168
      %v1861 = vunpack.c.0.s8 %v1860
      %v1862 = vlaneseq
      %v1863 = vshrl.u32 %v1862, 7
      %v1864 = vsub.s32 %v1861, %v1863
      %v1865 = vrot.slane %v1298, %v1864
      %v1867 = vunpack.c.l.s4 1966171168
      %v1868 = vunpack.c.0.s8 %v1867
      %v1869 = vlaneseq
      %v1870 = vshrl.u32 %v1869, 7
      %v1871 = vsub.s32 %v1868, %v1870
      %v1872 = vrot.slane %v1858, %v1871
      %v1873 = vcombine.high %v1865, %v1865
      %v1874 = vcombine.high %v1872, %v1872
      %v1876 = vunpack.c.l.s4 1966171168
      %v1877 = vunpack.c.0.s8 %v1876
      %v1878 = vlaneseq
      %v1879 = vshrl.u32 %v1878, 7
      %v1880 = vsub.s32 %v1877, %v1879
      %v1881 = vrot.slane %v1865, %v1880
      %v1883 = vunpack.c.l.s4 1966171168
      %v1884 = vunpack.c.0.s8 %v1883
      %v1885 = vlaneseq
      %v1886 = vshrl.u32 %v1885, 7
      %v1887 = vsub.s32 %v1884, %v1886
      %v1888 = vrot.slane %v1872, %v1887
      %v1890 = vunpack.c.l.s4 1966171168
      %v1891 = vunpack.c.0.s8 %v1890
      %v1892 = vlaneseq
      %v1893 = vshrl.u32 %v1892, 7
      %v1894 = vsub.s32 %v1891, %v1893
      %v1895 = vrot.slane %v1873, %v1894
      %v1897 = vunpack.c.l.s4 1966171168
      %v1898 = vunpack.c.0.s8 %v1897
      %v1899 = vlaneseq
      %v1900 = vshrl.u32 %v1899, 7
      %v1901 = vsub.s32 %v1898, %v1900
      %v1902 = vrot.slane %v1874, %v1901
      %v1903 = vcombine.high %v1881, %v1881
      %v1904 = vcombine.high %v1888, %v1888
      %v1905 = vcombine.high %v1895, %v1895
      %v1906 = vcombine.high %v1902, %v1902
      %v1908 = vunpack.c.l.s4 1966171168
      %v1909 = vunpack.c.0.s8 %v1908
      %v1910 = vlaneseq
      %v1911 = vshrl.u32 %v1910, 7
      %v1912 = vsub.s32 %v1909, %v1911
      %v1913 = vrot.slane %v1314, %v1912
      %v1915 = vunpack.c.l.s4 1966171168
      %v1916 = vunpack.c.0.s8 %v1915
      %v1917 = vlaneseq
      %v1918 = vshrl.u32 %v1917, 7
      %v1919 = vsub.s32 %v1916, %v1918
      %v1920 = vrot.slane %v1913, %v1919
      %v1921 = vcombine.high %v1299, %v1299
      %v1923 = vunpack.c.l.s4 1966171168
      %v1924 = vunpack.c.0.s8 %v1923
      %v1925 = vlaneseq
      %v1926 = vshrl.u32 %v1925, 7
      %v1927 = vsub.s32 %v1924, %v1926
      %v1928 = vrot.slane %v1299, %v1927
      %v1930 = vunpack.c.l.s4 1966171168
      %v1931 = vunpack.c.0.s8 %v1930
      %v1932 = vlaneseq
      %v1933 = vshrl.u32 %v1932, 7
      %v1934 = vsub.s32 %v1931, %v1933
      %v1935 = vrot.slane %v1921, %v1934
      %v1936 = vcombine.high %v1928, %v1928
      %v1937 = vcombine.high %v1935, %v1935
      %v1939 = vunpack.c.l.s4 1966171168
      %v1940 = vunpack.c.0.s8 %v1939
      %v1941 = vlaneseq
      %v1942 = vshrl.u32 %v1941, 7
      %v1943 = vsub.s32 %v1940, %v1942
      %v1944 = vrot.slane %v1928, %v1943
      %v1946 = vunpack.c.l.s4 1966171168
      %v1947 = vunpack.c.0.s8 %v1946
      %v1948 = vlaneseq
      %v1949 = vshrl.u32 %v1948, 7
      %v1950 = vsub.s32 %v1947, %v1949
      %v1951 = vrot.slane %v1935, %v1950
      %v1953 = vunpack.c.l.s4 1966171168
      %v1954 = vunpack.c.0.s8 %v1953
      %v1955 = vlaneseq
      %v1956 = vshrl.u32 %v1955, 7
      %v1957 = vsub.s32 %v1954, %v1956
      %v1958 = vrot.slane %v1936, %v1957
      %v1960 = vunpack.c.l.s4 1966171168
      %v1961 = vunpack.c.0.s8 %v1960
      %v1962 = vlaneseq
      %v1963 = vshrl.u32 %v1962, 7
      %v1964 = vsub.s32 %v1961, %v1963
      %v1965 = vrot.slane %v1937, %v1964
      %v1966 = vcombine.high %v1944, %v1944
      %v1967 = vcombine.high %v1951, %v1951
      %v1968 = vcombine.high %v1958, %v1958
      %v1969 = vcombine.high %v1965, %v1965
      %v1971 = vunpack.c.l.s4 1966171168
      %v1972 = vunpack.c.0.s8 %v1971
      %v1973 = vlaneseq
      %v1974 = vshrl.u32 %v1973, 7
      %v1975 = vsub.s32 %v1972, %v1974
      %v1976 = vrot.slane %v1315, %v1975
      %v1978 = vunpack.c.l.s4 1966171168
      %v1979 = vunpack.c.0.s8 %v1978
      %v1980 = vlaneseq
      %v1981 = vshrl.u32 %v1980, 7
      %v1982 = vsub.s32 %v1979, %v1981
      %v1983 = vrot.slane %v1976, %v1982
      %v1984 = vcombine.high %v1300, %v1300
      %v1986 = vunpack.c.l.s4 1966171168
      %v1987 = vunpack.c.0.s8 %v1986
      %v1988 = vlaneseq
      %v1989 = vshrl.u32 %v1988, 7
      %v1990 = vsub.s32 %v1987, %v1989
      %v1991 = vrot.slane %v1300, %v1990
      %v1993 = vunpack.c.l.s4 1966171168
      %v1994 = vunpack.c.0.s8 %v1993
      %v1995 = vlaneseq
      %v1996 = vshrl.u32 %v1995, 7
      %v1997 = vsub.s32 %v1994, %v1996
      %v1998 = vrot.slane %v1984, %v1997
      %v1999 = vcombine.high %v1991, %v1991
      %v2000 = vcombine.high %v1998, %v1998
      %v2002 = vunpack.c.l.s4 1966171168
      %v2003 = vunpack.c.0.s8 %v2002
      %v2004 = vlaneseq
      %v2005 = vshrl.u32 %v2004, 7
      %v2006 = vsub.s32 %v2003, %v2005
      %v2007 = vrot.slane %v1991, %v2006
      %v2009 = vunpack.c.l.s4 1966171168
      %v2010 = vunpack.c.0.s8 %v2009
      %v2011 = vlaneseq
      %v2012 = vshrl.u32 %v2011, 7
      %v2013 = vsub.s32 %v2010, %v2012
      %v2014 = vrot.slane %v1998, %v2013
      %v2016 = vunpack.c.l.s4 1966171168
      %v2017 = vunpack.c.0.s8 %v2016
      %v2018 = vlaneseq
      %v2019 = vshrl.u32 %v2018, 7
      %v2020 = vsub.s32 %v2017, %v2019
      %v2021 = vrot.slane %v1999, %v2020
      %v2023 = vunpack.c.l.s4 1966171168
      %v2024 = vunpack.c.0.s8 %v2023
      %v2025 = vlaneseq
      %v2026 = vshrl.u32 %v2025, 7
      %v2027 = vsub.s32 %v2024, %v2026
      %v2028 = vrot.slane %v2000, %v2027
      %v2029 = vcombine.high %v2007, %v2007
      %v2030 = vcombine.high %v2014, %v2014
      %v2031 = vcombine.high %v2021, %v2021
      %v2032 = vcombine.high %v2028, %v2028
      %v2034 = vunpack.c.l.s4 1966171168
      %v2035 = vunpack.c.0.s8 %v2034
      %v2036 = vlaneseq
      %v2037 = vshrl.u32 %v2036, 7
      %v2038 = vsub.s32 %v2035, %v2037
      %v2039 = vrot.slane %v1316, %v2038
      %v2041 = vunpack.c.l.s4 1966171168
      %v2042 = vunpack.c.0.s8 %v2041
      %v2043 = vlaneseq
      %v2044 = vshrl.u32 %v2043, 7
      %v2045 = vsub.s32 %v2042, %v2044
      %v2046 = vrot.slane %v2039, %v2045
      %v2047 = vcombine.high %v1301, %v1301
      %v2049 = vunpack.c.l.s4 1966171168
      %v2050 = vunpack.c.0.s8 %v2049
      %v2051 = vlaneseq
      %v2052 = vshrl.u32 %v2051, 7
      %v2053 = vsub.s32 %v2050, %v2052
      %v2054 = vrot.slane %v1301, %v2053
      %v2056 = vunpack.c.l.s4 1966171168
      %v2057 = vunpack.c.0.s8 %v2056
      %v2058 = vlaneseq
      %v2059 = vshrl.u32 %v2058, 7
      %v2060 = vsub.s32 %v2057, %v2059
      %v2061 = vrot.slane %v2047, %v2060
      %v2062 = vcombine.high %v2054, %v2054
      %v2063 = vcombine.high %v2061, %v2061
      %v2065 = vunpack.c.l.s4 1966171168
      %v2066 = vunpack.c.0.s8 %v2065
      %v2067 = vlaneseq
      %v2068 = vshrl.u32 %v2067, 7
      %v2069 = vsub.s32 %v2066, %v2068
      %v2070 = vrot.slane %v2054, %v2069
      %v2072 = vunpack.c.l.s4 1966171168
      %v2073 = vunpack.c.0.s8 %v2072
      %v2074 = vlaneseq
      %v2075 = vshrl.u32 %v2074, 7
      %v2076 = vsub.s32 %v2073, %v2075
      %v2077 = vrot.slane %v2061, %v2076
      %v2079 = vunpack.c.l.s4 1966171168
      %v2080 = vunpack.c.0.s8 %v2079
      %v2081 = vlaneseq
      %v2082 = vshrl.u32 %v2081, 7
      %v2083 = vsub.s32 %v2080, %v2082
      %v2084 = vrot.slane %v2062, %v2083
      %v2086 = vunpack.c.l.s4 1966171168
      %v2087 = vunpack.c.0.s8 %v2086
      %v2088 = vlaneseq
      %v2089 = vshrl.u32 %v2088, 7
      %v2090 = vsub.s32 %v2087, %v2089
      %v2091 = vrot.slane %v2063, %v2090
      %v2092 = vcombine.high %v2070, %v2070
      %v2093 = vcombine.high %v2077, %v2077
      %v2094 = vcombine.high %v2084, %v2084
      %v2095 = vcombine.high %v2091, %v2091
      %v2097 = vunpack.c.l.s4 1966171168
      %v2098 = vunpack.c.0.s8 %v2097
      %v2099 = vlaneseq
      %v2100 = vshrl.u32 %v2099, 7
      %v2101 = vsub.s32 %v2098, %v2100
      %v2102 = vrot.slane %v1317, %v2101
      %v2104 = vunpack.c.l.s4 1966171168
      %v2105 = vunpack.c.0.s8 %v2104
      %v2106 = vlaneseq
      %v2107 = vshrl.u32 %v2106, 7
      %v2108 = vsub.s32 %v2105, %v2107
      %v2109 = vrot.slane %v2102, %v2108
      %v2110 = vcombine.high %v1302, %v1302
      %v2112 = vunpack.c.l.s4 1966171168
      %v2113 = vunpack.c.0.s8 %v2112
      %v2114 = vlaneseq
      %v2115 = vshrl.u32 %v2114, 7
      %v2116 = vsub.s32 %v2113, %v2115
      %v2117 = vrot.slane %v1302, %v2116
      %v2119 = vunpack.c.l.s4 1966171168
      %v2120 = vunpack.c.0.s8 %v2119
      %v2121 = vlaneseq
      %v2122 = vshrl.u32 %v2121, 7
      %v2123 = vsub.s32 %v2120, %v2122
      %v2124 = vrot.slane %v2110, %v2123
      %v2125 = vcombine.high %v2117, %v2117
      %v2126 = vcombine.high %v2124, %v2124
      %v2128 = vunpack.c.l.s4 1966171168
      %v2129 = vunpack.c.0.s8 %v2128
      %v2130 = vlaneseq
      %v2131 = vshrl.u32 %v2130, 7
      %v2132 = vsub.s32 %v2129, %v2131
      %v2133 = vrot.slane %v2117, %v2132
      %v2135 = vunpack.c.l.s4 1966171168
      %v2136 = vunpack.c.0.s8 %v2135
      %v2137 = vlaneseq
      %v2138 = vshrl.u32 %v2137, 7
      %v2139 = vsub.s32 %v2136, %v2138
      %v2140 = vrot.slane %v2124, %v2139
      %v2142 = vunpack.c.l.s4 1966171168
      %v2143 = vunpack.c.0.s8 %v2142
      %v2144 = vlaneseq
      %v2145 = vshrl.u32 %v2144, 7
      %v2146 = vsub.s32 %v2143, %v2145
      %v2147 = vrot.slane %v2125, %v2146
      %v2149 = vunpack.c.l.s4 1966171168
      %v2150 = vunpack.c.0.s8 %v2149
      %v2151 = vlaneseq
      %v2152 = vshrl.u32 %v2151, 7
      %v2153 = vsub.s32 %v2150, %v2152
      %v2154 = vrot.slane %v2126, %v2153
      %v2155 = vcombine.high %v2133, %v2133
      %v2156 = vcombine.high %v2140, %v2140
      %v2157 = vcombine.high %v2147, %v2147
      %v2158 = vcombine.high %v2154, %v2154
      %v2160 = vunpack.c.l.s4 1966171168
      %v2161 = vunpack.c.0.s8 %v2160
      %v2162 = vlaneseq
      %v2163 = vshrl.u32 %v2162, 7
      %v2164 = vsub.s32 %v2161, %v2163
      %v2165 = vrot.slane %v1318, %v2164
      %v2167 = vunpack.c.l.s4 1966171168
      %v2168 = vunpack.c.0.s8 %v2167
      %v2169 = vlaneseq
      %v2170 = vshrl.u32 %v2169, 7
      %v2171 = vsub.s32 %v2168, %v2170
      %v2172 = vrot.slane %v2165, %v2171
      %v2173 = vcombine.high %v1303, %v1303
      %v2175 = vunpack.c.l.s4 1966171168
      %v2176 = vunpack.c.0.s8 %v2175
      %v2177 = vlaneseq
      %v2178 = vshrl.u32 %v2177, 7
      %v2179 = vsub.s32 %v2176, %v2178
      %v2180 = vrot.slane %v1303, %v2179
      %v2182 = vunpack.c.l.s4 1966171168
      %v2183 = vunpack.c.0.s8 %v2182
      %v2184 = vlaneseq
      %v2185 = vshrl.u32 %v2184, 7
      %v2186 = vsub.s32 %v2183, %v2185
      %v2187 = vrot.slane %v2173, %v2186
      %v2188 = vcombine.high %v2180, %v2180
      %v2189 = vcombine.high %v2187, %v2187
      %v2191 = vunpack.c.l.s4 1966171168
      %v2192 = vunpack.c.0.s8 %v2191
      %v2193 = vlaneseq
      %v2194 = vshrl.u32 %v2193, 7
      %v2195 = vsub.s32 %v2192, %v2194
      %v2196 = vrot.slane %v2180, %v2195
      %v2198 = vunpack.c.l.s4 1966171168
      %v2199 = vunpack.c.0.s8 %v2198
      %v2200 = vlaneseq
      %v2201 = vshrl.u32 %v2200, 7
      %v2202 = vsub.s32 %v2199, %v2201
      %v2203 = vrot.slane %v2187, %v2202
      %v2205 = vunpack.c.l.s4 1966171168
      %v2206 = vunpack.c.0.s8 %v2205
      %v2207 = vlaneseq
      %v2208 = vshrl.u32 %v2207, 7
      %v2209 = vsub.s32 %v2206, %v2208
      %v2210 = vrot.slane %v2188, %v2209
      %v2212 = vunpack.c.l.s4 1966171168
      %v2213 = vunpack.c.0.s8 %v2212
      %v2214 = vlaneseq
      %v2215 = vshrl.u32 %v2214, 7
      %v2216 = vsub.s32 %v2213, %v2215
      %v2217 = vrot.slane %v2189, %v2216
      %v2218 = vcombine.high %v2196, %v2196
      %v2219 = vcombine.high %v2203, %v2203
      %v2220 = vcombine.high %v2210, %v2210
      %v2221 = vcombine.high %v2217, %v2217
      %v2223 = vunpack.c.l.s4 1966171168
      %v2224 = vunpack.c.0.s8 %v2223
      %v2225 = vlaneseq
      %v2226 = vshrl.u32 %v2225, 7
      %v2227 = vsub.s32 %v2224, %v2226
      %v2228 = vrot.slane %v1319, %v2227
      %v2230 = vunpack.c.l.s4 1966171168
      %v2231 = vunpack.c.0.s8 %v2230
      %v2232 = vlaneseq
      %v2233 = vshrl.u32 %v2232, 7
      %v2234 = vsub.s32 %v2231, %v2233
      %v2235 = vrot.slane %v2228, %v2234
      %v2236 = vcombine.high %v1304, %v1304
      %v2238 = vunpack.c.l.s4 1966171168
      %v2239 = vunpack.c.0.s8 %v2238
      %v2240 = vlaneseq
      %v2241 = vshrl.u32 %v2240, 7
      %v2242 = vsub.s32 %v2239, %v2241
      %v2243 = vrot.slane %v1304, %v2242
      %v2245 = vunpack.c.l.s4 1966171168
      %v2246 = vunpack.c.0.s8 %v2245
      %v2247 = vlaneseq
      %v2248 = vshrl.u32 %v2247, 7
      %v2249 = vsub.s32 %v2246, %v2248
      %v2250 = vrot.slane %v2236, %v2249
      %v2251 = vcombine.high %v2243, %v2243
      %v2252 = vcombine.high %v2250, %v2250
      %v2254 = vunpack.c.l.s4 1966171168
      %v2255 = vunpack.c.0.s8 %v2254
      %v2256 = vlaneseq
      %v2257 = vshrl.u32 %v2256, 7
      %v2258 = vsub.s32 %v2255, %v2257
      %v2259 = vrot.slane %v2243, %v2258
      %v2261 = vunpack.c.l.s4 1966171168
      %v2262 = vunpack.c.0.s8 %v2261
      %v2263 = vlaneseq
      %v2264 = vshrl.u32 %v2263, 7
      %v2265 = vsub.s32 %v2262, %v2264
      %v2266 = vrot.slane %v2250, %v2265
      %v2268 = vunpack.c.l.s4 1966171168
      %v2269 = vunpack.c.0.s8 %v2268
      %v2270 = vlaneseq
      %v2271 = vshrl.u32 %v2270, 7
      %v2272 = vsub.s32 %v2269, %v2271
      %v2273 = vrot.slane %v2251, %v2272
      %v2275 = vunpack.c.l.s4 1966171168
      %v2276 = vunpack.c.0.s8 %v2275
      %v2277 = vlaneseq
      %v2278 = vshrl.u32 %v2277, 7
      %v2279 = vsub.s32 %v2276, %v2278
      %v2280 = vrot.slane %v2252, %v2279
      %v2281 = vcombine.high %v2259, %v2259
      %v2282 = vcombine.high %v2266, %v2266
      %v2283 = vcombine.high %v2273, %v2273
      %v2284 = vcombine.high %v2280, %v2280
      %v2286 = vunpack.c.l.s4 1966171168
      %v2287 = vunpack.c.0.s8 %v2286
      %v2288 = vlaneseq
      %v2289 = vshrl.u32 %v2288, 7
      %v2290 = vsub.s32 %v2287, %v2289
      %v2291 = vrot.slane %v1320, %v2290
      %v2293 = vunpack.c.l.s4 1966171168
      %v2294 = vunpack.c.0.s8 %v2293
      %v2295 = vlaneseq
      %v2296 = vshrl.u32 %v2295, 7
      %v2297 = vsub.s32 %v2294, %v2296
      %v2298 = vrot.slane %v2291, %v2297
      %v2299 = vcombine.high %v1305, %v1305
      %v2301 = vunpack.c.l.s4 1966171168
      %v2302 = vunpack.c.0.s8 %v2301
      %v2303 = vlaneseq
      %v2304 = vshrl.u32 %v2303, 7
      %v2305 = vsub.s32 %v2302, %v2304
      %v2306 = vrot.slane %v1305, %v2305
      %v2308 = vunpack.c.l.s4 1966171168
      %v2309 = vunpack.c.0.s8 %v2308
      %v2310 = vlaneseq
      %v2311 = vshrl.u32 %v2310, 7
      %v2312 = vsub.s32 %v2309, %v2311
      %v2313 = vrot.slane %v2299, %v2312
      %v2314 = vcombine.high %v2306, %v2306
      %v2315 = vcombine.high %v2313, %v2313
      %v2317 = vunpack.c.l.s4 1966171168
      %v2318 = vunpack.c.0.s8 %v2317
      %v2319 = vlaneseq
      %v2320 = vshrl.u32 %v2319, 7
      %v2321 = vsub.s32 %v2318, %v2320
      %v2322 = vrot.slane %v2306, %v2321
      %v2324 = vunpack.c.l.s4 1966171168
      %v2325 = vunpack.c.0.s8 %v2324
      %v2326 = vlaneseq
      %v2327 = vshrl.u32 %v2326, 7
      %v2328 = vsub.s32 %v2325, %v2327
      %v2329 = vrot.slane %v2313, %v2328
      %v2331 = vunpack.c.l.s4 1966171168
      %v2332 = vunpack.c.0.s8 %v2331
      %v2333 = vlaneseq
      %v2334 = vshrl.u32 %v2333, 7
      %v2335 = vsub.s32 %v2332, %v2334
      %v2336 = vrot.slane %v2314, %v2335
      %v2338 = vunpack.c.l.s4 1966171168
      %v2339 = vunpack.c.0.s8 %v2338
      %v2340 = vlaneseq
      %v2341 = vshrl.u32 %v2340, 7
      %v2342 = vsub.s32 %v2339, %v2341
      %v2343 = vrot.slane %v2315, %v2342
      %v2344 = vcombine.high %v2322, %v2322
      %v2345 = vcombine.high %v2329, %v2329
      %v2346 = vcombine.high %v2336, %v2336
      %v2347 = vcombine.high %v2343, %v2343
      %v2349 = vunpack.c.l.s4 1966171168
      %v2350 = vunpack.c.0.s8 %v2349
      %v2351 = vlaneseq
      %v2352 = vshrl.u32 %v2351, 7
      %v2353 = vsub.s32 %v2350, %v2352
      %v2354 = vrot.slane %v1321, %v2353
      %v2356 = vunpack.c.l.s4 1966171168
      %v2357 = vunpack.c.0.s8 %v2356
      %v2358 = vlaneseq
      %v2359 = vshrl.u32 %v2358, 7
      %v2360 = vsub.s32 %v2357, %v2359
      %v2361 = vrot.slane %v2354, %v2360
      %v2362 = vcombine.low %v1391, %v1391
      %v2363 = vcombine.low %v1377, %v1399
      %v2365 = vunpack.c.l.s4 1935823168
      %v2366 = vunpack.c.0.s8 %v2365
      %v2367 = vlaneseq
      %v2368 = vshrl.u32 %v2367, 7
      %v2369 = vsub.s32 %v2366, %v2368
      %v2370 = vrot.slane %v2362, %v2369
      %v2372 = vunpack.c.l.s4 1935823168
      %v2373 = vunpack.c.0.s8 %v2372
      %v2374 = vlaneseq
      %v2375 = vshrl.u32 %v2374, 7
      %v2376 = vsub.s32 %v2373, %v2375
      %v2377 = vrot.slane %v2363, %v2376
      %v2378 = vcombine.low %v2370, %v2377
      %v2380 = vunpack.c.l.s4 1935823168
      %v2381 = vunpack.c.0.s8 %v2380
      %v2382 = vlaneseq
      %v2383 = vshrl.u32 %v2382, 7
      %v2384 = vsub.s32 %v2381, %v2383
      %v2385 = vrot.slane %v2378, %v2384
      %v2386 = vcombine.low %v1401, %v1398
      %v2387 = vcombine.low %v1384, %v1400
      %v2389 = vunpack.c.l.s4 1935823168
      %v2390 = vunpack.c.0.s8 %v2389
      %v2391 = vlaneseq
      %v2392 = vshrl.u32 %v2391, 7
      %v2393 = vsub.s32 %v2390, %v2392
      %v2394 = vrot.slane %v2386, %v2393
      %v2396 = vunpack.c.l.s4 1935823168
      %v2397 = vunpack.c.0.s8 %v2396
      %v2398 = vlaneseq
      %v2399 = vshrl.u32 %v2398, 7
      %v2400 = vsub.s32 %v2397, %v2399
      %v2401 = vrot.slane %v2387, %v2400
      %v2402 = vcombine.low %v2394, %v2401
      %v2404 = vunpack.c.l.s4 1935823168
      %v2405 = vunpack.c.0.s8 %v2404
      %v2406 = vlaneseq
      %v2407 = vshrl.u32 %v2406, 7
      %v2408 = vsub.s32 %v2405, %v2407
      %v2409 = vrot.slane %v2402, %v2408
      %v2410 = vcombine.low %v1402, %v1440
      %v2411 = vcombine.low %v1416, %v1454
      %v2413 = vunpack.c.l.s4 1935823168
      %v2414 = vunpack.c.0.s8 %v2413
      %v2415 = vlaneseq
      %v2416 = vshrl.u32 %v2415, 7
      %v2417 = vsub.s32 %v2414, %v2416
      %v2418 = vrot.slane %v2410, %v2417
      %v2420 = vunpack.c.l.s4 1935823168
      %v2421 = vunpack.c.0.s8 %v2420
      %v2422 = vlaneseq
      %v2423 = vshrl.u32 %v2422, 7
      %v2424 = vsub.s32 %v2421, %v2423
      %v2425 = vrot.slane %v2411, %v2424
      %v2426 = vcombine.low %v2418, %v2425
      %v2428 = vunpack.c.l.s4 1935823168
      %v2429 = vunpack.c.0.s8 %v2428
      %v2430 = vlaneseq
      %v2431 = vshrl.u32 %v2430, 7
      %v2432 = vsub.s32 %v2429, %v2431
      %v2433 = vrot.slane %v2426, %v2432
      %v2434 = vcombine.low %v1462, %v1447
      %v2435 = vcombine.low %v1464, %v1461
      %v2437 = vunpack.c.l.s4 1935823168
      %v2438 = vunpack.c.0.s8 %v2437
      %v2439 = vlaneseq
      %v2440 = vshrl.u32 %v2439, 7
      %v2441 = vsub.s32 %v2438, %v2440
      %v2442 = vrot.slane %v2434, %v2441
      %v2444 = vunpack.c.l.s4 1935823168
      %v2445 = vunpack.c.0.s8 %v2444
      %v2446 = vlaneseq
      %v2447 = vshrl.u32 %v2446, 7
      %v2448 = vsub.s32 %v2445, %v2447
      %v2449 = vrot.slane %v2435, %v2448
      %v2450 = vcombine.low %v2442, %v2449
      %v2452 = vunpack.c.l.s4 1935823168
      %v2453 = vunpack.c.0.s8 %v2452
      %v2454 = vlaneseq
      %v2455 = vshrl.u32 %v2454, 7
      %v2456 = vsub.s32 %v2453, %v2455
      %v2457 = vrot.slane %v2450, %v2456
      %v2458 = vcombine.low %v1463, %v1479
      %v2459 = vcombine.low %v1465, %v1503
      %v2461 = vunpack.c.l.s4 1935823168
      %v2462 = vunpack.c.0.s8 %v2461
      %v2463 = vlaneseq
      %v2464 = vshrl.u32 %v2463, 7
      %v2465 = vsub.s32 %v2462, %v2464
      %v2466 = vrot.slane %v2458, %v2465
      %v2468 = vunpack.c.l.s4 1935823168
      %v2469 = vunpack.c.0.s8 %v2468
      %v2470 = vlaneseq
      %v2471 = vshrl.u32 %v2470, 7
      %v2472 = vsub.s32 %v2469, %v2471
      %v2473 = vrot.slane %v2459, %v2472
      %v2474 = vcombine.low %v2466, %v2473
      %v2476 = vunpack.c.l.s4 1935823168
      %v2477 = vunpack.c.0.s8 %v2476
      %v2478 = vlaneseq
      %v2479 = vshrl.u32 %v2478, 7
      %v2480 = vsub.s32 %v2477, %v2479
      %v2481 = vrot.slane %v2474, %v2480
      %v2482 = vcombine.low %v1517, %v1527
      %v2483 = vcombine.low %v1525, %v1510
      %v2485 = vunpack.c.l.s4 1935823168
      %v2486 = vunpack.c.0.s8 %v2485
      %v2487 = vlaneseq
      %v2488 = vshrl.u32 %v2487, 7
      %v2489 = vsub.s32 %v2486, %v2488
      %v2490 = vrot.slane %v2482, %v2489
      %v2492 = vunpack.c.l.s4 1935823168
      %v2493 = vunpack.c.0.s8 %v2492
      %v2494 = vlaneseq
      %v2495 = vshrl.u32 %v2494, 7
      %v2496 = vsub.s32 %v2493, %v2495
      %v2497 = vrot.slane %v2483, %v2496
      %v2498 = vcombine.low %v2490, %v2497
      %v2500 = vunpack.c.l.s4 1935823168
      %v2501 = vunpack.c.0.s8 %v2500
      %v2502 = vlaneseq
      %v2503 = vshrl.u32 %v2502, 7
      %v2504 = vsub.s32 %v2501, %v2503
      %v2505 = vrot.slane %v2498, %v2504
      %v2506 = vcombine.low %v1524, %v1528
      %v2507 = vcombine.low %v1526, %v1542
      %v2509 = vunpack.c.l.s4 1935823168
      %v2510 = vunpack.c.0.s8 %v2509
      %v2511 = vlaneseq
      %v2512 = vshrl.u32 %v2511, 7
      %v2513 = vsub.s32 %v2510, %v2512
      %v2514 = vrot.slane %v2506, %v2513
      %v2516 = vunpack.c.l.s4 1935823168
      %v2517 = vunpack.c.0.s8 %v2516
      %v2518 = vlaneseq
      %v2519 = vshrl.u32 %v2518, 7
      %v2520 = vsub.s32 %v2517, %v2519
      %v2521 = vrot.slane %v2507, %v2520
      %v2522 = vcombine.low %v2514, %v2521
      %v2524 = vunpack.c.l.s4 1935823168
      %v2525 = vunpack.c.0.s8 %v2524
      %v2526 = vlaneseq
      %v2527 = vshrl.u32 %v2526, 7
      %v2528 = vsub.s32 %v2525, %v2527
      %v2529 = vrot.slane %v2522, %v2528
      %v2530 = vcombine.low %v1566, %v1588
      %v2531 = vcombine.low %v1580, %v1590
      %v2533 = vunpack.c.l.s4 1935823168
      %v2534 = vunpack.c.0.s8 %v2533
      %v2535 = vlaneseq
      %v2536 = vshrl.u32 %v2535, 7
      %v2537 = vsub.s32 %v2534, %v2536
      %v2538 = vrot.slane %v2530, %v2537
      %v2540 = vunpack.c.l.s4 1935823168
      %v2541 = vunpack.c.0.s8 %v2540
      %v2542 = vlaneseq
      %v2543 = vshrl.u32 %v2542, 7
      %v2544 = vsub.s32 %v2541, %v2543
      %v2545 = vrot.slane %v2531, %v2544
      %v2546 = vcombine.low %v2538, %v2545
      %v2548 = vunpack.c.l.s4 1935823168
      %v2549 = vunpack.c.0.s8 %v2548
      %v2550 = vlaneseq
      %v2551 = vshrl.u32 %v2550, 7
      %v2552 = vsub.s32 %v2549, %v2551
      %v2553 = vrot.slane %v2546, %v2552
      %v2554 = vcombine.low %v1573, %v1589
      %v2555 = vcombine.low %v1587, %v1591
      %v2557 = vunpack.c.l.s4 1935823168
      %v2558 = vunpack.c.0.s8 %v2557
      %v2559 = vlaneseq
      %v2560 = vshrl.u32 %v2559, 7
      %v2561 = vsub.s32 %v2558, %v2560
      %v2562 = vrot.slane %v2554, %v2561
      %v2564 = vunpack.c.l.s4 1935823168
      %v2565 = vunpack.c.0.s8 %v2564
      %v2566 = vlaneseq
      %v2567 = vshrl.u32 %v2566, 7
      %v2568 = vsub.s32 %v2565, %v2567
      %v2569 = vrot.slane %v2555, %v2568
      %v2570 = vcombine.low %v2562, %v2569
      %v2572 = vunpack.c.l.s4 1935823168
      %v2573 = vunpack.c.0.s8 %v2572
      %v2574 = vlaneseq
      %v2575 = vshrl.u32 %v2574, 7
      %v2576 = vsub.s32 %v2573, %v2575
      %v2577 = vrot.slane %v2570, %v2576
      %v2578 = vcombine.low %v1605, %v1643
      %v2579 = vcombine.low %v1629, %v1651
      %v2581 = vunpack.c.l.s4 1935823168
      %v2582 = vunpack.c.0.s8 %v2581
      %v2583 = vlaneseq
      %v2584 = vshrl.u32 %v2583, 7
      %v2585 = vsub.s32 %v2582, %v2584
      %v2586 = vrot.slane %v2578, %v2585
      %v2588 = vunpack.c.l.s4 1935823168
      %v2589 = vunpack.c.0.s8 %v2588
      %v2590 = vlaneseq
      %v2591 = vshrl.u32 %v2590, 7
      %v2592 = vsub.s32 %v2589, %v2591
      %v2593 = vrot.slane %v2579, %v2592
      %v2594 = vcombine.low %v2586, %v2593
      %v2596 = vunpack.c.l.s4 1935823168
      %v2597 = vunpack.c.0.s8 %v2596
      %v2598 = vlaneseq
      %v2599 = vshrl.u32 %v2598, 7
      %v2600 = vsub.s32 %v2597, %v2599
      %v2601 = vrot.slane %v2594, %v2600
      %v2602 = vcombine.low %v1653, %v1650
      %v2603 = vcombine.low %v1636, %v1652
      %v2605 = vunpack.c.l.s4 1935823168
      %v2606 = vunpack.c.0.s8 %v2605
      %v2607 = vlaneseq
      %v2608 = vshrl.u32 %v2607, 7
      %v2609 = vsub.s32 %v2606, %v2608
      %v2610 = vrot.slane %v2602, %v2609
      %v2612 = vunpack.c.l.s4 1935823168
      %v2613 = vunpack.c.0.s8 %v2612
      %v2614 = vlaneseq
      %v2615 = vshrl.u32 %v2614, 7
      %v2616 = vsub.s32 %v2613, %v2615
      %v2617 = vrot.slane %v2603, %v2616
      %v2618 = vcombine.low %v2610, %v2617
      %v2620 = vunpack.c.l.s4 1935823168
      %v2621 = vunpack.c.0.s8 %v2620
      %v2622 = vlaneseq
      %v2623 = vshrl.u32 %v2622, 7
      %v2624 = vsub.s32 %v2621, %v2623
      %v2625 = vrot.slane %v2618, %v2624
      %v2626 = vcombine.low %v1654, %v1692
      %v2627 = vcombine.low %v1668, %v1706
      %v2629 = vunpack.c.l.s4 1935823168
      %v2630 = vunpack.c.0.s8 %v2629
      %v2631 = vlaneseq
      %v2632 = vshrl.u32 %v2631, 7
      %v2633 = vsub.s32 %v2630, %v2632
      %v2634 = vrot.slane %v2626, %v2633
      %v2636 = vunpack.c.l.s4 1935823168
      %v2637 = vunpack.c.0.s8 %v2636
      %v2638 = vlaneseq
      %v2639 = vshrl.u32 %v2638, 7
      %v2640 = vsub.s32 %v2637, %v2639
      %v2641 = vrot.slane %v2627, %v2640
      %v2642 = vcombine.low %v2634, %v2641
      %v2644 = vunpack.c.l.s4 1935823168
      %v2645 = vunpack.c.0.s8 %v2644
      %v2646 = vlaneseq
      %v2647 = vshrl.u32 %v2646, 7
      %v2648 = vsub.s32 %v2645, %v2647
      %v2649 = vrot.slane %v2642, %v2648
      %v2650 = vcombine.low %v1714, %v1699
      %v2651 = vcombine.low %v1716, %v1713
      %v2653 = vunpack.c.l.s4 1935823168
      %v2654 = vunpack.c.0.s8 %v2653
      %v2655 = vlaneseq
      %v2656 = vshrl.u32 %v2655, 7
      %v2657 = vsub.s32 %v2654, %v2656
      %v2658 = vrot.slane %v2650, %v2657
      %v2660 = vunpack.c.l.s4 1935823168
      %v2661 = vunpack.c.0.s8 %v2660
      %v2662 = vlaneseq
      %v2663 = vshrl.u32 %v2662, 7
      %v2664 = vsub.s32 %v2661, %v2663
      %v2665 = vrot.slane %v2651, %v2664
      %v2666 = vcombine.low %v2658, %v2665
      %v2668 = vunpack.c.l.s4 1935823168
      %v2669 = vunpack.c.0.s8 %v2668
      %v2670 = vlaneseq
      %v2671 = vshrl.u32 %v2670, 7
      %v2672 = vsub.s32 %v2669, %v2671
      %v2673 = vrot.slane %v2666, %v2672
      %v2674 = vcombine.low %v1715, %v1731
      %v2675 = vcombine.low %v1717, %v1755
      %v2677 = vunpack.c.l.s4 1935823168
      %v2678 = vunpack.c.0.s8 %v2677
      %v2679 = vlaneseq
      %v2680 = vshrl.u32 %v2679, 7
      %v2681 = vsub.s32 %v2678, %v2680
      %v2682 = vrot.slane %v2674, %v2681
      %v2684 = vunpack.c.l.s4 1935823168
      %v2685 = vunpack.c.0.s8 %v2684
      %v2686 = vlaneseq
      %v2687 = vshrl.u32 %v2686, 7
      %v2688 = vsub.s32 %v2685, %v2687
      %v2689 = vrot.slane %v2675, %v2688
      %v2690 = vcombine.low %v2682, %v2689
      %v2692 = vunpack.c.l.s4 1935823168
      %v2693 = vunpack.c.0.s8 %v2692
      %v2694 = vlaneseq
      %v2695 = vshrl.u32 %v2694, 7
      %v2696 = vsub.s32 %v2693, %v2695
      %v2697 = vrot.slane %v2690, %v2696
      %v2698 = vcombine.low %v1769, %v1779
      %v2699 = vcombine.low %v1777, %v1762
      %v2701 = vunpack.c.l.s4 1935823168
      %v2702 = vunpack.c.0.s8 %v2701
      %v2703 = vlaneseq
      %v2704 = vshrl.u32 %v2703, 7
      %v2705 = vsub.s32 %v2702, %v2704
      %v2706 = vrot.slane %v2698, %v2705
      %v2708 = vunpack.c.l.s4 1935823168
      %v2709 = vunpack.c.0.s8 %v2708
      %v2710 = vlaneseq
      %v2711 = vshrl.u32 %v2710, 7
      %v2712 = vsub.s32 %v2709, %v2711
      %v2713 = vrot.slane %v2699, %v2712
      %v2714 = vcombine.low %v2706, %v2713
      %v2716 = vunpack.c.l.s4 1935823168
      %v2717 = vunpack.c.0.s8 %v2716
      %v2718 = vlaneseq
      %v2719 = vshrl.u32 %v2718, 7
      %v2720 = vsub.s32 %v2717, %v2719
      %v2721 = vrot.slane %v2714, %v2720
      %v2722 = vcombine.low %v1776, %v1780
      %v2723 = vcombine.low %v1778, %v1794
      %v2725 = vunpack.c.l.s4 1935823168
      %v2726 = vunpack.c.0.s8 %v2725
      %v2727 = vlaneseq
      %v2728 = vshrl.u32 %v2727, 7
      %v2729 = vsub.s32 %v2726, %v2728
      %v2730 = vrot.slane %v2722, %v2729
      %v2732 = vunpack.c.l.s4 1935823168
      %v2733 = vunpack.c.0.s8 %v2732
      %v2734 = vlaneseq
      %v2735 = vshrl.u32 %v2734, 7
      %v2736 = vsub.s32 %v2733, %v2735
      %v2737 = vrot.slane %v2723, %v2736
      %v2738 = vcombine.low %v2730, %v2737
      %v2740 = vunpack.c.l.s4 1935823168
      %v2741 = vunpack.c.0.s8 %v2740
      %v2742 = vlaneseq
      %v2743 = vshrl.u32 %v2742, 7
      %v2744 = vsub.s32 %v2741, %v2743
      %v2745 = vrot.slane %v2738, %v2744
      %v2746 = vcombine.low %v1818, %v1840
      %v2747 = vcombine.low %v1832, %v1842
      %v2749 = vunpack.c.l.s4 1935823168
      %v2750 = vunpack.c.0.s8 %v2749
      %v2751 = vlaneseq
      %v2752 = vshrl.u32 %v2751, 7
      %v2753 = vsub.s32 %v2750, %v2752
      %v2754 = vrot.slane %v2746, %v2753
      %v2756 = vunpack.c.l.s4 1935823168
      %v2757 = vunpack.c.0.s8 %v2756
      %v2758 = vlaneseq
      %v2759 = vshrl.u32 %v2758, 7
      %v2760 = vsub.s32 %v2757, %v2759
      %v2761 = vrot.slane %v2747, %v2760
      %v2762 = vcombine.low %v2754, %v2761
      %v2764 = vunpack.c.l.s4 1935823168
      %v2765 = vunpack.c.0.s8 %v2764
      %v2766 = vlaneseq
      %v2767 = vshrl.u32 %v2766, 7
      %v2768 = vsub.s32 %v2765, %v2767
      %v2769 = vrot.slane %v2762, %v2768
      %v2770 = vcombine.low %v1825, %v1841
      %v2771 = vcombine.low %v1839, %v1843
      %v2773 = vunpack.c.l.s4 1935823168
      %v2774 = vunpack.c.0.s8 %v2773
      %v2775 = vlaneseq
      %v2776 = vshrl.u32 %v2775, 7
      %v2777 = vsub.s32 %v2774, %v2776
      %v2778 = vrot.slane %v2770, %v2777
      %v2780 = vunpack.c.l.s4 1935823168
      %v2781 = vunpack.c.0.s8 %v2780
      %v2782 = vlaneseq
      %v2783 = vshrl.u32 %v2782, 7
      %v2784 = vsub.s32 %v2781, %v2783
      %v2785 = vrot.slane %v2771, %v2784
      %v2786 = vcombine.low %v2778, %v2785
      %v2788 = vunpack.c.l.s4 1935823168
      %v2789 = vunpack.c.0.s8 %v2788
      %v2790 = vlaneseq
      %v2791 = vshrl.u32 %v2790, 7
      %v2792 = vsub.s32 %v2789, %v2791
      %v2793 = vrot.slane %v2786, %v2792
      %v2794 = vcombine.low %v1857, %v1895
      %v2795 = vcombine.low %v1881, %v1903
      %v2797 = vunpack.c.l.s4 1935823168
      %v2798 = vunpack.c.0.s8 %v2797
      %v2799 = vlaneseq
      %v2800 = vshrl.u32 %v2799, 7
      %v2801 = vsub.s32 %v2798, %v2800
      %v2802 = vrot.slane %v2794, %v2801
      %v2804 = vunpack.c.l.s4 1935823168
      %v2805 = vunpack.c.0.s8 %v2804
      %v2806 = vlaneseq
      %v2807 = vshrl.u32 %v2806, 7
      %v2808 = vsub.s32 %v2805, %v2807
      %v2809 = vrot.slane %v2795, %v2808
      %v2810 = vcombine.low %v2802, %v2809
      %v2812 = vunpack.c.l.s4 1935823168
      %v2813 = vunpack.c.0.s8 %v2812
      %v2814 = vlaneseq
      %v2815 = vshrl.u32 %v2814, 7
      %v2816 = vsub.s32 %v2813, %v2815
      %v2817 = vrot.slane %v2810, %v2816
      %v2818 = vcombine.low %v1905, %v1902
      %v2819 = vcombine.low %v1888, %v1904
      %v2821 = vunpack.c.l.s4 1935823168
      %v2822 = vunpack.c.0.s8 %v2821
      %v2823 = vlaneseq
      %v2824 = vshrl.u32 %v2823, 7
      %v2825 = vsub.s32 %v2822, %v2824
      %v2826 = vrot.slane %v2818, %v2825
      %v2828 = vunpack.c.l.s4 1935823168
      %v2829 = vunpack.c.0.s8 %v2828
      %v2830 = vlaneseq
      %v2831 = vshrl.u32 %v2830, 7
      %v2832 = vsub.s32 %v2829, %v2831
      %v2833 = vrot.slane %v2819, %v2832
      %v2834 = vcombine.low %v2826, %v2833
      %v2836 = vunpack.c.l.s4 1935823168
      %v2837 = vunpack.c.0.s8 %v2836
      %v2838 = vlaneseq
      %v2839 = vshrl.u32 %v2838, 7
      %v2840 = vsub.s32 %v2837, %v2839
      %v2841 = vrot.slane %v2834, %v2840
      %v2842 = vcombine.low %v1906, %v1944
      %v2843 = vcombine.low %v1920, %v1958
      %v2845 = vunpack.c.l.s4 1935823168
      %v2846 = vunpack.c.0.s8 %v2845
      %v2847 = vlaneseq
      %v2848 = vshrl.u32 %v2847, 7
      %v2849 = vsub.s32 %v2846, %v2848
      %v2850 = vrot.slane %v2842, %v2849
      %v2852 = vunpack.c.l.s4 1935823168
      %v2853 = vunpack.c.0.s8 %v2852
      %v2854 = vlaneseq
      %v2855 = vshrl.u32 %v2854, 7
      %v2856 = vsub.s32 %v2853, %v2855
      %v2857 = vrot.slane %v2843, %v2856
      %v2858 = vcombine.low %v2850, %v2857
      %v2860 = vunpack.c.l.s4 1935823168
      %v2861 = vunpack.c.0.s8 %v2860
      %v2862 = vlaneseq
      %v2863 = vshrl.u32 %v2862, 7
      %v2864 = vsub.s32 %v2861, %v2863
      %v2865 = vrot.slane %v2858, %v2864
      %v2866 = vcombine.low %v1966, %v1951
      %v2867 = vcombine.low %v1968, %v1965
      %v2869 = vunpack.c.l.s4 1935823168
      %v2870 = vunpack.c.0.s8 %v2869
      %v2871 = vlaneseq
      %v2872 = vshrl.u32 %v2871, 7
      %v2873 = vsub.s32 %v2870, %v2872
      %v2874 = vrot.slane %v2866, %v2873
      %v2876 = vunpack.c.l.s4 1935823168
      %v2877 = vunpack.c.0.s8 %v2876
      %v2878 = vlaneseq
      %v2879 = vshrl.u32 %v2878, 7
      %v2880 = vsub.s32 %v2877, %v2879
      %v2881 = vrot.slane %v2867, %v2880
      %v2882 = vcombine.low %v2874, %v2881
      %v2884 = vunpack.c.l.s4 1935823168
      %v2885 = vunpack.c.0.s8 %v2884
      %v2886 = vlaneseq
      %v2887 = vshrl.u32 %v2886, 7
      %v2888 = vsub.s32 %v2885, %v2887
      %v2889 = vrot.slane %v2882, %v2888
      %v2890 = vcombine.low %v1967, %v1983
      %v2891 = vcombine.low %v1969, %v2007
      %v2893 = vunpack.c.l.s4 1935823168
      %v2894 = vunpack.c.0.s8 %v2893
      %v2895 = vlaneseq
      %v2896 = vshrl.u32 %v2895, 7
      %v2897 = vsub.s32 %v2894, %v2896
      %v2898 = vrot.slane %v2890, %v2897
      %v2900 = vunpack.c.l.s4 1935823168
      %v2901 = vunpack.c.0.s8 %v2900
      %v2902 = vlaneseq
      %v2903 = vshrl.u32 %v2902, 7
      %v2904 = vsub.s32 %v2901, %v2903
      %v2905 = vrot.slane %v2891, %v2904
      %v2906 = vcombine.low %v2898, %v2905
      %v2908 = vunpack.c.l.s4 1935823168
      %v2909 = vunpack.c.0.s8 %v2908
      %v2910 = vlaneseq
      %v2911 = vshrl.u32 %v2910, 7
      %v2912 = vsub.s32 %v2909, %v2911
      %v2913 = vrot.slane %v2906, %v2912
      %v2914 = vcombine.low %v2021, %v2031
      %v2915 = vcombine.low %v2029, %v2014
      %v2917 = vunpack.c.l.s4 1935823168
      %v2918 = vunpack.c.0.s8 %v2917
      %v2919 = vlaneseq
      %v2920 = vshrl.u32 %v2919, 7
      %v2921 = vsub.s32 %v2918, %v2920
      %v2922 = vrot.slane %v2914, %v2921
      %v2924 = vunpack.c.l.s4 1935823168
      %v2925 = vunpack.c.0.s8 %v2924
      %v2926 = vlaneseq
      %v2927 = vshrl.u32 %v2926, 7
      %v2928 = vsub.s32 %v2925, %v2927
      %v2929 = vrot.slane %v2915, %v2928
      %v2930 = vcombine.low %v2922, %v2929
      %v2932 = vunpack.c.l.s4 1935823168
      %v2933 = vunpack.c.0.s8 %v2932
      %v2934 = vlaneseq
      %v2935 = vshrl.u32 %v2934, 7
      %v2936 = vsub.s32 %v2933, %v2935
      %v2937 = vrot.slane %v2930, %v2936
      %v2938 = vcombine.low %v2028, %v2032
      %v2939 = vcombine.low %v2030, %v2046
      %v2941 = vunpack.c.l.s4 1935823168
      %v2942 = vunpack.c.0.s8 %v2941
      %v2943 = vlaneseq
      %v2944 = vshrl.u32 %v2943, 7
      %v2945 = vsub.s32 %v2942, %v2944
      %v2946 = vrot.slane %v2938, %v2945
      %v2948 = vunpack.c.l.s4 1935823168
      %v2949 = vunpack.c.0.s8 %v2948
      %v2950 = vlaneseq
      %v2951 = vshrl.u32 %v2950, 7
      %v2952 = vsub.s32 %v2949, %v2951
      %v2953 = vrot.slane %v2939, %v2952
      %v2954 = vcombine.low %v2946, %v2953
      %v2956 = vunpack.c.l.s4 1935823168
      %v2957 = vunpack.c.0.s8 %v2956
      %v2958 = vlaneseq
      %v2959 = vshrl.u32 %v2958, 7
      %v2960 = vsub.s32 %v2957, %v2959
      %v2961 = vrot.slane %v2954, %v2960
      %v2962 = vcombine.low %v2070, %v2092
      %v2963 = vcombine.low %v2084, %v2094
      %v2965 = vunpack.c.l.s4 1935823168
      %v2966 = vunpack.c.0.s8 %v2965
      %v2967 = vlaneseq
      %v2968 = vshrl.u32 %v2967, 7
      %v2969 = vsub.s32 %v2966, %v2968
      %v2970 = vrot.slane %v2962, %v2969
      %v2972 = vunpack.c.l.s4 1935823168
      %v2973 = vunpack.c.0.s8 %v2972
      %v2974 = vlaneseq
      %v2975 = vshrl.u32 %v2974, 7
      %v2976 = vsub.s32 %v2973, %v2975
      %v2977 = vrot.slane %v2963, %v2976
      %v2978 = vcombine.low %v2970, %v2977
      %v2980 = vunpack.c.l.s4 1935823168
      %v2981 = vunpack.c.0.s8 %v2980
      %v2982 = vlaneseq
      %v2983 = vshrl.u32 %v2982, 7
      %v2984 = vsub.s32 %v2981, %v2983
      %v2985 = vrot.slane %v2978, %v2984
      %v2986 = vcombine.low %v2077, %v2093
      %v2987 = vcombine.low %v2091, %v2095
      %v2989 = vunpack.c.l.s4 1935823168
      %v2990 = vunpack.c.0.s8 %v2989
      %v2991 = vlaneseq
      %v2992 = vshrl.u32 %v2991, 7
      %v2993 = vsub.s32 %v2990, %v2992
      %v2994 = vrot.slane %v2986, %v2993
      %v2996 = vunpack.c.l.s4 1935823168
      %v2997 = vunpack.c.0.s8 %v2996
      %v2998 = vlaneseq
      %v2999 = vshrl.u32 %v2998, 7
      %v3000 = vsub.s32 %v2997, %v2999
      %v3001 = vrot.slane %v2987, %v3000
      %v3002 = vcombine.low %v2994, %v3001
      %v3004 = vunpack.c.l.s4 1935823168
      %v3005 = vunpack.c.0.s8 %v3004
      %v3006 = vlaneseq
      %v3007 = vshrl.u32 %v3006, 7
      %v3008 = vsub.s32 %v3005, %v3007
      %v3009 = vrot.slane %v3002, %v3008
      %v3010 = vcombine.low %v2109, %v2147
      %v3011 = vcombine.low %v2133, %v2155
      %v3013 = vunpack.c.l.s4 1935823168
      %v3014 = vunpack.c.0.s8 %v3013
      %v3015 = vlaneseq
      %v3016 = vshrl.u32 %v3015, 7
      %v3017 = vsub.s32 %v3014, %v3016
      %v3018 = vrot.slane %v3010, %v3017
      %v3020 = vunpack.c.l.s4 1935823168
      %v3021 = vunpack.c.0.s8 %v3020
      %v3022 = vlaneseq
      %v3023 = vshrl.u32 %v3022, 7
      %v3024 = vsub.s32 %v3021, %v3023
      %v3025 = vrot.slane %v3011, %v3024
      %v3026 = vcombine.low %v3018, %v3025
      %v3028 = vunpack.c.l.s4 1935823168
      %v3029 = vunpack.c.0.s8 %v3028
      %v3030 = vlaneseq
      %v3031 = vshrl.u32 %v3030, 7
      %v3032 = vsub.s32 %v3029, %v3031
      %v3033 = vrot.slane %v3026, %v3032
      %v3034 = vcombine.low %v2157, %v2154
      %v3035 = vcombine.low %v2140, %v2156
      %v3037 = vunpack.c.l.s4 1935823168
      %v3038 = vunpack.c.0.s8 %v3037
      %v3039 = vlaneseq
      %v3040 = vshrl.u32 %v3039, 7
      %v3041 = vsub.s32 %v3038, %v3040
      %v3042 = vrot.slane %v3034, %v3041
      %v3044 = vunpack.c.l.s4 1935823168
      %v3045 = vunpack.c.0.s8 %v3044
      %v3046 = vlaneseq
      %v3047 = vshrl.u32 %v3046, 7
      %v3048 = vsub.s32 %v3045, %v3047
      %v3049 = vrot.slane %v3035, %v3048
      %v3050 = vcombine.low %v3042, %v3049
      %v3052 = vunpack.c.l.s4 1935823168
      %v3053 = vunpack.c.0.s8 %v3052
      %v3054 = vlaneseq
      %v3055 = vshrl.u32 %v3054, 7
      %v3056 = vsub.s32 %v3053, %v3055
      %v3057 = vrot.slane %v3050, %v3056
      %v3058 = vcombine.low %v2158, %v2196
      %v3059 = vcombine.low %v2172, %v2210
      %v3061 = vunpack.c.l.s4 1935823168
      %v3062 = vunpack.c.0.s8 %v3061
      %v3063 = vlaneseq
      %v3064 = vshrl.u32 %v3063, 7
      %v3065 = vsub.s32 %v3062, %v3064
      %v3066 = vrot.slane %v3058, %v3065
      %v3068 = vunpack.c.l.s4 1935823168
      %v3069 = vunpack.c.0.s8 %v3068
      %v3070 = vlaneseq
      %v3071 = vshrl.u32 %v3070, 7
      %v3072 = vsub.s32 %v3069, %v3071
      %v3073 = vrot.slane %v3059, %v3072
      %v3074 = vcombine.low %v3066, %v3073
      %v3076 = vunpack.c.l.s4 1935823168
      %v3077 = vunpack.c.0.s8 %v3076
      %v3078 = vlaneseq
      %v3079 = vshrl.u32 %v3078, 7
      %v3080 = vsub.s32 %v3077, %v3079
      %v3081 = vrot.slane %v3074, %v3080
      %v3082 = vcombine.low %v2218, %v2203
      %v3083 = vcombine.low %v2220, %v2217
      %v3085 = vunpack.c.l.s4 1935823168
      %v3086 = vunpack.c.0.s8 %v3085
      %v3087 = vlaneseq
      %v3088 = vshrl.u32 %v3087, 7
      %v3089 = vsub.s32 %v3086, %v3088
      %v3090 = vrot.slane %v3082, %v3089
      %v3092 = vunpack.c.l.s4 1935823168
      %v3093 = vunpack.c.0.s8 %v3092
      %v3094 = vlaneseq
      %v3095 = vshrl.u32 %v3094, 7
      %v3096 = vsub.s32 %v3093, %v3095
      %v3097 = vrot.slane %v3083, %v3096
      %v3098 = vcombine.low %v3090, %v3097
      %v3100 = vunpack.c.l.s4 1935823168
      %v3101 = vunpack.c.0.s8 %v3100
      %v3102 = vlaneseq
      %v3103 = vshrl.u32 %v3102, 7
      %v3104 = vsub.s32 %v3101, %v3103
      %v3105 = vrot.slane %v3098, %v3104
      %v3106 = vcombine.low %v2219, %v2235
      %v3107 = vcombine.low %v2221, %v2259
      %v3109 = vunpack.c.l.s4 1935823168
      %v3110 = vunpack.c.0.s8 %v3109
      %v3111 = vlaneseq
      %v3112 = vshrl.u32 %v3111, 7
      %v3113 = vsub.s32 %v3110, %v3112
      %v3114 = vrot.slane %v3106, %v3113
      %v3116 = vunpack.c.l.s4 1935823168
      %v3117 = vunpack.c.0.s8 %v3116
      %v3118 = vlaneseq
      %v3119 = vshrl.u32 %v3118, 7
      %v3120 = vsub.s32 %v3117, %v3119
      %v3121 = vrot.slane %v3107, %v3120
      %v3122 = vcombine.low %v3114, %v3121
      %v3124 = vunpack.c.l.s4 1935823168
      %v3125 = vunpack.c.0.s8 %v3124
      %v3126 = vlaneseq
      %v3127 = vshrl.u32 %v3126, 7
      %v3128 = vsub.s32 %v3125, %v3127
      %v3129 = vrot.slane %v3122, %v3128
      %v3130 = vcombine.low %v2273, %v2283
      %v3131 = vcombine.low %v2281, %v2266
      %v3133 = vunpack.c.l.s4 1935823168
      %v3134 = vunpack.c.0.s8 %v3133
      %v3135 = vlaneseq
      %v3136 = vshrl.u32 %v3135, 7
      %v3137 = vsub.s32 %v3134, %v3136
      %v3138 = vrot.slane %v3130, %v3137
      %v3140 = vunpack.c.l.s4 1935823168
      %v3141 = vunpack.c.0.s8 %v3140
      %v3142 = vlaneseq
      %v3143 = vshrl.u32 %v3142, 7
      %v3144 = vsub.s32 %v3141, %v3143
      %v3145 = vrot.slane %v3131, %v3144
      %v3146 = vcombine.low %v3138, %v3145
      %v3148 = vunpack.c.l.s4 1935823168
      %v3149 = vunpack.c.0.s8 %v3148
      %v3150 = vlaneseq
      %v3151 = vshrl.u32 %v3150, 7
      %v3152 = vsub.s32 %v3149, %v3151
      %v3153 = vrot.slane %v3146, %v3152
      %v3154 = vcombine.low %v2280, %v2284
      %v3155 = vcombine.low %v2282, %v2298
      %v3157 = vunpack.c.l.s4 1935823168
      %v3158 = vunpack.c.0.s8 %v3157
      %v3159 = vlaneseq
      %v3160 = vshrl.u32 %v3159, 7
      %v3161 = vsub.s32 %v3158, %v3160
      %v3162 = vrot.slane %v3154, %v3161
      %v3164 = vunpack.c.l.s4 1935823168
      %v3165 = vunpack.c.0.s8 %v3164
      %v3166 = vlaneseq
      %v3167 = vshrl.u32 %v3166, 7
      %v3168 = vsub.s32 %v3165, %v3167
      %v3169 = vrot.slane %v3155, %v3168
      %v3170 = vcombine.low %v3162, %v3169
      %v3172 = vunpack.c.l.s4 1935823168
      %v3173 = vunpack.c.0.s8 %v3172
      %v3174 = vlaneseq
      %v3175 = vshrl.u32 %v3174, 7
      %v3176 = vsub.s32 %v3173, %v3175
      %v3177 = vrot.slane %v3170, %v3176
      %v3178 = vcombine.low %v2322, %v2344
      %v3179 = vcombine.low %v2336, %v2346
      %v3181 = vunpack.c.l.s4 1935823168
      %v3182 = vunpack.c.0.s8 %v3181
      %v3183 = vlaneseq
      %v3184 = vshrl.u32 %v3183, 7
      %v3185 = vsub.s32 %v3182, %v3184
      %v3186 = vrot.slane %v3178, %v3185
      %v3188 = vunpack.c.l.s4 1935823168
      %v3189 = vunpack.c.0.s8 %v3188
      %v3190 = vlaneseq
      %v3191 = vshrl.u32 %v3190, 7
      %v3192 = vsub.s32 %v3189, %v3191
      %v3193 = vrot.slane %v3179, %v3192
      %v3194 = vcombine.low %v3186, %v3193
      %v3196 = vunpack.c.l.s4 1935823168
      %v3197 = vunpack.c.0.s8 %v3196
      %v3198 = vlaneseq
      %v3199 = vshrl.u32 %v3198, 7
      %v3200 = vsub.s32 %v3197, %v3199
      %v3201 = vrot.slane %v3194, %v3200
      %v3202 = vcombine.low %v2329, %v2345
      %v3203 = vcombine.low %v2343, %v2347
      %v3205 = vunpack.c.l.s4 1935823168
      %v3206 = vunpack.c.0.s8 %v3205
      %v3207 = vlaneseq
      %v3208 = vshrl.u32 %v3207, 7
      %v3209 = vsub.s32 %v3206, %v3208
      %v3210 = vrot.slane %v3202, %v3209
      %v3212 = vunpack.c.l.s4 1935823168
      %v3213 = vunpack.c.0.s8 %v3212
      %v3214 = vlaneseq
      %v3215 = vshrl.u32 %v3214, 7
      %v3216 = vsub.s32 %v3213, %v3215
      %v3217 = vrot.slane %v3203, %v3216
      %v3218 = vcombine.low %v3210, %v3217
      %v3220 = vunpack.c.l.s4 1935823168
      %v3221 = vunpack.c.0.s8 %v3220
      %v3222 = vlaneseq
      %v3223 = vshrl.u32 %v3222, 7
      %v3224 = vsub.s32 %v3221, %v3223
      %v3225 = vrot.slane %v3218, %v3224
      %v3227 = vunpack.c.l.s4 1935823168
      %v3228 = vunpack.c.0.s8 %v3227
      %v3229 = vlaneseq
      %v3230 = vshrl.u32 %v3229, 7
      %v3231 = vsub.s32 %v3228, %v3230
      %v3232 = vrot.slane %v2361, %v3231
      %v3234 = vunpack.c.l.s4 1935823168
      %v3235 = vunpack.c.0.s8 %v3234
      %v3236 = vlaneseq
      %v3237 = vshrl.u32 %v3236, 7
      %v3238 = vsub.s32 %v3235, %v3237
      %v3239 = vrot.slane %v3232, %v3238
      %3277 = vst [vmem:[#allocation2 + $0x8] sm:$0xe] %v2385
      %3278 = vst [vmem:[#allocation2 + $0xc] sm:$0xf] %v2409
      %3279 = vst [vmem:[#allocation2 + $0x10] sm:$0xf] %v2433
      %3280 = vst [vmem:[#allocation2 + $0x14] sm:$0xf] %v2457
      %3281 = vst [vmem:[#allocation2 + $0x18] sm:$0xf] %v2481
      %3282 = vst [vmem:[#allocation2 + $0x1c] sm:$0xf] %v2505
      %3283 = vst [vmem:[#allocation2 + $0x20] sm:$0xf] %v2529
      %3284 = vst [vmem:[#allocation2 + $0x24] sm:$0xf] %v2553
      %3285 = vst [vmem:[#allocation2 + $0x28] sm:$0xf] %v2577
      %3286 = vst [vmem:[#allocation2 + $0x2c] sm:$0xf] %v2601
      %3287 = vst [vmem:[#allocation2 + $0x30] sm:$0xf] %v2625
      %3288 = vst [vmem:[#allocation2 + $0x34] sm:$0xf] %v2649
      %3289 = vst [vmem:[#allocation2 + $0x38] sm:$0xf] %v2673
      %3290 = vst [vmem:[#allocation2 + $0x3c] sm:$0xf] %v2697
      %3291 = vst [vmem:[#allocation2 + $0x40] sm:$0xf] %v2721
      %3292 = vst [vmem:[#allocation2 + $0x44] sm:$0xf] %v2745
      %3293 = vst [vmem:[#allocation2 + $0x48] sm:$0xf] %v2769
      %3294 = vst [vmem:[#allocation2 + $0x4c] sm:$0xf] %v2793
      %3295 = vst [vmem:[#allocation2 + $0x50] sm:$0xf] %v2817
      %3296 = vst [vmem:[#allocation2 + $0x54] sm:$0xf] %v2841
      %3297 = vst [vmem:[#allocation2 + $0x58] sm:$0xf] %v2865
      %3298 = vst [vmem:[#allocation2 + $0x5c] sm:$0xf] %v2889
      %3299 = vst [vmem:[#allocation2 + $0x60] sm:$0xf] %v2913
      %3300 = vst [vmem:[#allocation2 + $0x64] sm:$0xf] %v2937
      %3301 = vst [vmem:[#allocation2 + $0x68] sm:$0xf] %v2961
      %3302 = vst [vmem:[#allocation2 + $0x6c] sm:$0xf] %v2985
      %3303 = vst [vmem:[#allocation2 + $0x70] sm:$0xf] %v3009
      %3304 = vst [vmem:[#allocation2 + $0x74] sm:$0xf] %v3033
      %3305 = vst [vmem:[#allocation2 + $0x78] sm:$0xf] %v3057
      %3306 = vst [vmem:[#allocation2 + $0x7c] sm:$0xf] %v3081
      %3307 = vst [vmem:[#allocation2 + $0x80] sm:$0xf] %v3105
      %3308 = vst [vmem:[#allocation2 + $0x84] sm:$0xf] %v3129
      %3309 = vst [vmem:[#allocation2 + $0x88] sm:$0xf] %v3153
      %3310 = vst [vmem:[#allocation2 + $0x8c] sm:$0xf] %v3177
      %3311 = vst [vmem:[#allocation2 + $0x90] sm:$0xf] %v3201
      %3312 = vst [vmem:[#allocation2 + $0x94] sm:$0xf] %v3225
      %3313 = vst [vmem:[#allocation2 + $0x98] sm:$0x1] %v3239
      %v3314 = vld [vmem:[%s630] sm:$0xf]
      %v3315 = vld [vmem:[%s630 + $0x4] sm:$0xf]
      %v3316 = vld [vmem:[%s3] sm:$0xf]
      %v3317 = vld [vmem:[%s3 + $0x4] sm:$0xf]
      %v3318 = vld [vmem:[%s3 + $0x8] sm:$0xf]
      %v3319 = vld [vmem:[%s3 + $0xc] sm:$0xf]
      %v3320 = vld [vmem:[%s3 + $0x10] sm:$0xf]
      %v3321 = vld [vmem:[%s3 + $0x14] sm:$0xf]
      %v3322 = vld [vmem:[%s3 + $0x18] sm:$0xf]
      %v3323 = vld [vmem:[%s3 + $0x1c] sm:$0xf]
      %v3324 = vld [vmem:[%s3 + $0x20] sm:$0xf]
      %v3325 = vld [vmem:[%s3 + $0x24] sm:$0xf]
      %v3326 = vld [vmem:[%s3 + $0x28] sm:$0xf]
      %v3327 = vld [vmem:[%s3 + $0x2c] sm:$0xf]
      %v3328 = vld [vmem:[%s3 + $0x30] sm:$0xf]
      %v3329 = vld [vmem:[%s3 + $0x34] sm:$0xf]
      %v3330 = vld [vmem:[%s3 + $0x38] sm:$0xf]
      %v3331 = vld [vmem:[%s3 + $0x3c] sm:$0xf]
      %v3334 = vunpack.c.l.b16 %v3314
      %v3335 = vunpack.c.l.b16 %v3315
      %v3336 = vpack.c.b16 %v3335, %v3334
      %v3354 = vunpack.c.l.b16 %v3316
      %v3355 = vunpack.c.l.b16 %v3317
      %v3356 = vunpack.c.l.b16 %v3318
      %v3357 = vunpack.c.l.b16 %v3319
      %v3358 = vunpack.c.l.b16 %v3320
      %v3359 = vunpack.c.l.b16 %v3321
      %v3360 = vunpack.c.l.b16 %v3322
      %v3361 = vunpack.c.l.b16 %v3323
      %v3362 = vunpack.c.l.b16 %v3324
      %v3363 = vunpack.c.l.b16 %v3325
      %v3364 = vunpack.c.l.b16 %v3326
      %v3365 = vunpack.c.l.b16 %v3327
      %v3366 = vunpack.c.l.b16 %v3328
      %v3367 = vunpack.c.l.b16 %v3329
      %v3368 = vunpack.c.l.b16 %v3330
      %v3369 = vunpack.c.l.b16 %v3331
      %v3370 = vpack.c.b16 %v3355, %v3354
      %v3371 = vpack.c.b16 %v3357, %v3356
      %v3372 = vpack.c.b16 %v3359, %v3358
      %v3373 = vpack.c.b16 %v3361, %v3360
      %v3374 = vpack.c.b16 %v3363, %v3362
      %v3375 = vpack.c.b16 %v3365, %v3364
      %v3376 = vpack.c.b16 %v3367, %v3366
      %v3377 = vpack.c.b16 %v3369, %v3368
      %3386 = vmatprep.subr.bf16.mxu0 0
      %3387 = vmatpush1.bf16.msra.mxu0 %v3370
      %3388 = vmatprep.subr.bf16.mxu0 0
      %3389 = vmatpush1.bf16.msra.mxu0 %v3371
      %3390 = vmatprep.subr.bf16.mxu0 0
      %3391 = vmatpush1.bf16.msra.mxu0 %v3372
      %3392 = vmatprep.subr.bf16.mxu0 0
      %3393 = vmatpush1.bf16.msra.mxu0 %v3373
      %3394 = vmatprep.subr.bf16.mxu0 0
      %3395 = vmatpush1.bf16.msra.mxu0 %v3374
      %3396 = vmatprep.subr.bf16.mxu0 0
      %3397 = vmatpush1.bf16.msra.mxu0 %v3375
      %3398 = vmatprep.subr.bf16.mxu0 0
      %3399 = vmatpush1.bf16.msra.mxu0 %v3376
      %3400 = vmatprep.subr.bf16.mxu0 0
      %3401 = vmatpush1.bf16.msra.mxu0 %v3377
      %3402 = vmatprep.subr.bf16.mxu0 0
      %3403 = vmatpush1.bf16.msra.mxu0 0
      %3404 = vmatprep.subr.bf16.mxu0 0
      %3405 = vmatpush1.bf16.msra.mxu0 0
      %3406 = vmatprep.subr.bf16.mxu0 0
      %3407 = vmatpush1.bf16.msra.mxu0 0
      %3408 = vmatprep.subr.bf16.mxu0 0
      %3409 = vmatpush1.bf16.msra.mxu0 0
      %3410 = vmatprep.subr.bf16.mxu0 0
      %3411 = vmatpush1.bf16.msra.mxu0 0
      %3412 = vmatprep.subr.bf16.mxu0 0
      %3413 = vmatpush1.bf16.msra.mxu0 0
      %3414 = vmatprep.subr.bf16.mxu0 0
      %3415 = vmatpush1.bf16.msra.mxu0 0
      %3416 = vmatprep.subr.bf16.mxu0 0
      %3417 = vmatpush1.bf16.msra.mxu0 0
      %3418 = vmatprep.mubr.bf16.mxu0 0
      %3419 = vmatmul.mubr.bf16.gmra.mrb[0].mxu0 %v3336
      %v3420 = vpop.f32.mrb[0].mxu0
      %v3421 = vadd.f32 0.0, %v3420
      %v3422 = vpop.f32.mrb[0].mxu0
      %v3423 = vpop.f32.mrb[0].mxu0
      %v3424 = vadd.f32 0.0, %v3423
      %v3425 = vpop.f32.mrb[0].mxu0
      %3426 = vdwg.mxu0
      %v3427 = vld [vmem:[%s4] sm:$0x1]
      %v3429 = vlaneseq
      %v3430 = vshrl.u32 %v3429, 7
      %v3431 = vsub.s32 0, %v3430
      %v3432 = vrot.slane %v3427, %v3431
      %v3434 = vmul.f32 %v3421, %v3432
      %v3435 = vmul.f32 %v3424, %v3432
      %v3436 = vld [vmem:[%s5] sm:$0x1]
      %v3438 = vlaneseq
      %v3439 = vshrl.u32 %v3438, 7
      %v3440 = vsub.s32 0, %v3439
      %v3441 = vrot.slane %v3436, %v3440
      %v3443 = vadd.f32 %v3434, %v3441
      %v3444 = vadd.f32 %v3435, %v3441
      %v3445 = vmax.f32 %v3443, 0.0
      %v3446 = vmax.f32 %v3444, 0.0
      %v3447 = vpack.c.bf16 %v3446, %v3445
      %p3448 = scmp.gt.s32.totalorder %s31, 0
      %s3449 = scalar_select %p3448, 1, 0
      %v3450 = vstv %s3449
      %vm3451 = vcmp.eq.s32.totalorder %v3450, 1
      %v3452 = vsel %vm3451, %v3447, 0
      %v3454 = vshrl.u32 %v3452, 16
      %v3456 = vrot.slane %v3454, 7
      %v3457 = vshll.u32 %v3452, 16
      %v3459 = vor.u32 %v3456, %v3457
      %v3462 = vsel %vm1289, 0, %v3459
      %v3463 = vsel %vm1289, %v3456, 0
      %v3466 = vunpack.c.l.b16 %v3462
      %v3467 = vunpack.c.h.b16 %v3462
      %v3468 = vunpack.c.l.b16 %v3463
      %v3469 = vpack.c.b16 %v3466, %v3466
      %v3470 = vpack.c.b16 %v3467, %v3467
      %v3471 = vpack.c.b16 %v3468, %v3468
      %3475 = vst [vmem:[#allocation2] sm:$0xf] %v3469
      %3476 = vst [vmem:[#allocation2 + $0x4] sm:$0xf] %v3470
      %3477 = vst [vmem:[#allocation2 + $0x8] sm:$0x1] %v3471
      %v3478 = vld [vmem:[%s647] sm:$0xf]
      %v3479 = vld [vmem:[%s647 + $0x4] sm:$0xf]
      %v3480 = vld [vmem:[%s3] sm:$0xf]
      %v3481 = vld [vmem:[%s3 + $0x4] sm:$0xf]
      %v3482 = vld [vmem:[%s3 + $0x8] sm:$0xf]
      %v3483 = vld [vmem:[%s3 + $0xc] sm:$0xf]
      %v3484 = vld [vmem:[%s3 + $0x10] sm:$0xf]
      %v3485 = vld [vmem:[%s3 + $0x14] sm:$0xf]
      %v3486 = vld [vmem:[%s3 + $0x18] sm:$0xf]
      %v3487 = vld [vmem:[%s3 + $0x1c] sm:$0xf]
      %v3488 = vld [vmem:[%s3 + $0x20] sm:$0xf]
      %v3489 = vld [vmem:[%s3 + $0x24] sm:$0xf]
      %v3490 = vld [vmem:[%s3 + $0x28] sm:$0xf]
      %v3491 = vld [vmem:[%s3 + $0x2c] sm:$0xf]
      %v3492 = vld [vmem:[%s3 + $0x30] sm:$0xf]
      %v3493 = vld [vmem:[%s3 + $0x34] sm:$0xf]
      %v3494 = vld [vmem:[%s3 + $0x38] sm:$0xf]
      %v3495 = vld [vmem:[%s3 + $0x3c] sm:$0xf]
      %v3498 = vunpack.c.l.b16 %v3478
      %v3499 = vunpack.c.l.b16 %v3479
      %v3500 = vpack.c.b16 %v3499, %v3498
      %v3518 = vunpack.c.l.b16 %v3480
      %v3519 = vunpack.c.l.b16 %v3481
      %v3520 = vunpack.c.l.b16 %v3482
      %v3521 = vunpack.c.l.b16 %v3483
      %v3522 = vunpack.c.l.b16 %v3484
      %v3523 = vunpack.c.l.b16 %v3485
      %v3524 = vunpack.c.l.b16 %v3486
      %v3525 = vunpack.c.l.b16 %v3487
      %v3526 = vunpack.c.l.b16 %v3488
      %v3527 = vunpack.c.l.b16 %v3489
      %v3528 = vunpack.c.l.b16 %v3490
      %v3529 = vunpack.c.l.b16 %v3491
      %v3530 = vunpack.c.l.b16 %v3492
      %v3531 = vunpack.c.l.b16 %v3493
      %v3532 = vunpack.c.l.b16 %v3494
      %v3533 = vunpack.c.l.b16 %v3495
      %v3534 = vpack.c.b16 %v3519, %v3518
      %v3535 = vpack.c.b16 %v3521, %v3520
      %v3536 = vpack.c.b16 %v3523, %v3522
      %v3537 = vpack.c.b16 %v3525, %v3524
      %v3538 = vpack.c.b16 %v3527, %v3526
      %v3539 = vpack.c.b16 %v3529, %v3528
      %v3540 = vpack.c.b16 %v3531, %v3530
      %v3541 = vpack.c.b16 %v3533, %v3532
      %3550 = vmatprep.subr.bf16.mxu0 0
      %3551 = vmatpush1.bf16.msra.mxu0 %v3534
      %3552 = vmatprep.subr.bf16.mxu0 0
      %3553 = vmatpush1.bf16.msra.mxu0 %v3535
      %3554 = vmatprep.subr.bf16.mxu0 0
      %3555 = vmatpush1.bf16.msra.mxu0 %v3536
      %3556 = vmatprep.subr.bf16.mxu0 0
      %3557 = vmatpush1.bf16.msra.mxu0 %v3537
      %3558 = vmatprep.subr.bf16.mxu0 0
      %3559 = vmatpush1.bf16.msra.mxu0 %v3538
      %3560 = vmatprep.subr.bf16.mxu0 0
      %3561 = vmatpush1.bf16.msra.mxu0 %v3539
      %3562 = vmatprep.subr.bf16.mxu0 0
      %3563 = vmatpush1.bf16.msra.mxu0 %v3540
      %3564 = vmatprep.subr.bf16.mxu0 0
      %3565 = vmatpush1.bf16.msra.mxu0 %v3541
      %3566 = vmatprep.subr.bf16.mxu0 0
      %3567 = vmatpush1.bf16.msra.mxu0 0
      %3568 = vmatprep.subr.bf16.mxu0 0
      %3569 = vmatpush1.bf16.msra.mxu0 0
      %3570 = vmatprep.subr.bf16.mxu0 0
      %3571 = vmatpush1.bf16.msra.mxu0 0
      %3572 = vmatprep.subr.bf16.mxu0 0
      %3573 = vmatpush1.bf16.msra.mxu0 0
      %3574 = vmatprep.subr.bf16.mxu0 0
      %3575 = vmatpush1.bf16.msra.mxu0 0
      %3576 = vmatprep.subr.bf16.mxu0 0
      %3577 = vmatpush1.bf16.msra.mxu0 0
      %3578 = vmatprep.subr.bf16.mxu0 0
      %3579 = vmatpush1.bf16.msra.mxu0 0
      %3580 = vmatprep.subr.bf16.mxu0 0
      %3581 = vmatpush1.bf16.msra.mxu0 0
      %3582 = vmatprep.mubr.bf16.mxu0 0
      %3583 = vmatmul.mubr.bf16.gmra.mrb[0].mxu0 %v3500
      %v3584 = vpop.f32.mrb[0].mxu0
      %v3585 = vadd.f32 0.0, %v3584
      %v3586 = vpop.f32.mrb[0].mxu0
      %v3587 = vpop.f32.mrb[0].mxu0
      %v3588 = vadd.f32 0.0, %v3587
      %v3589 = vpop.f32.mrb[0].mxu0
      %3590 = vdwg.mxu0
      %v3591 = vld [vmem:[%s4] sm:$0x1]
      %v3593 = vlaneseq
      %v3594 = vshrl.u32 %v3593, 7
      %v3595 = vsub.s32 0, %v3594
      %v3596 = vrot.slane %v3591, %v3595
      %v3598 = vmul.f32 %v3585, %v3596
      %v3599 = vmul.f32 %v3588, %v3596
      %v3600 = vld [vmem:[%s5] sm:$0x1]
      %v3602 = vlaneseq
      %v3603 = vshrl.u32 %v3602, 7
      %v3604 = vsub.s32 0, %v3603
      %v3605 = vrot.slane %v3600, %v3604
      %v3607 = vadd.f32 %v3598, %v3605
      %v3608 = vadd.f32 %v3599, %v3605
      %v3609 = vmax.f32 %v3607, 0.0
      %v3610 = vmax.f32 %v3608, 0.0
      %v3611 = vpack.c.bf16 %v3610, %v3609
      %p3612 = scmp.lt.s32.totalorder %s31, 0
      %s3613 = scalar_select %p3612, 1, 0
      %v3614 = vstv %s3613
      %vm3615 = vcmp.eq.s32.totalorder %v3614, 1
      %v3616 = vsel %vm3615, %v3611, 0
      %v3618 = vshrl.u32 %v3616, 16
      %v3620 = vrot.slane %v3618, 7
      %v3621 = vshll.u32 %v3616, 16
      %v3623 = vor.u32 %v3620, %v3621
      %v3626 = vsel %vm1289, 0, %v3623
      %v3627 = vsel %vm1289, %v3620, 0
      %v3630 = vunpack.c.l.b16 %v3626
      %v3631 = vunpack.c.h.b16 %v3626
      %v3632 = vunpack.c.l.b16 %v3627
      %v3633 = vpack.c.b16 %v3630, %v3630
      %v3634 = vpack.c.b16 %v3631, %v3631
      %v3635 = vpack.c.b16 %v3632, %v3632
      %vm3636 = vcmask 1044484
      %vm3637 = vmor %vm1287, %vm3636
      %v3638 = vrot.slane %v3633, 7
      %v3639 = vrot.slane %v3638, 4
      %v3640 = vrot.slane %v3634, 7
      %v3641 = vsel %vm3637, %v3639, %v3640
      %v3642 = vrot.slane %v3640, 4
      %v3643 = vrot.slane %v3635, 7
      %v3644 = vsel %vm3637, %v3642, %v3643
      %3648 = vst [vmem:[#allocation2 + $0x98] sm:$0xe] %v3638
      %3649 = vst [vmem:[#allocation2 + $0x9c] sm:$0xf] %v3641
      %3650 = vst [vmem:[#allocation2 + $0xa0] sm:$0x3] %v3644
      %3651 = vst [vmem:[#allocation2 + $0xa0] sm:$0xc] 0
      %v3652 = vld [vmem:[#allocation2] sm:$0xf]
      %v3653 = vld [vmem:[#allocation2 + $0x4] sm:$0xf]
      %v3654 = vld [vmem:[#allocation2 + $0x8] sm:$0xf]
      %v3655 = vld [vmem:[#allocation2 + $0xc] sm:$0xf]
      %v3656 = vld [vmem:[#allocation2 + $0x10] sm:$0xf]
      %v3657 = vld [vmem:[#allocation2 + $0x14] sm:$0xf]
      %v3658 = vld [vmem:[#allocation2 + $0x18] sm:$0xf]
      %v3659 = vld [vmem:[#allocation2 + $0x1c] sm:$0xf]
      %v3660 = vld [vmem:[#allocation2 + $0x20] sm:$0xf]
      %v3661 = vld [vmem:[#allocation2 + $0x24] sm:$0xf]
      %v3662 = vld [vmem:[#allocation2 + $0x28] sm:$0xf]
      %v3663 = vld [vmem:[#allocation2 + $0x2c] sm:$0xf]
      %v3664 = vld [vmem:[#allocation2 + $0x30] sm:$0xf]
      %v3665 = vld [vmem:[#allocation2 + $0x34] sm:$0xf]
      %v3666 = vld [vmem:[#allocation2 + $0x38] sm:$0xf]
      %v3667 = vld [vmem:[#allocation2 + $0x3c] sm:$0xf]
      %v3668 = vld [vmem:[#allocation2 + $0x40] sm:$0xf]
      %v3669 = vld [vmem:[#allocation2 + $0x44] sm:$0xf]
      %v3670 = vld [vmem:[#allocation2 + $0x48] sm:$0xf]
      %v3671 = vld [vmem:[#allocation2 + $0x4c] sm:$0xf]
      %v3672 = vld [vmem:[#allocation2 + $0x50] sm:$0xf]
      %v3673 = vld [vmem:[#allocation2 + $0x54] sm:$0xf]
      %v3674 = vld [vmem:[#allocation2 + $0x58] sm:$0xf]
      %v3675 = vld [vmem:[#allocation2 + $0x5c] sm:$0xf]
      %v3676 = vld [vmem:[#allocation2 + $0x60] sm:$0xf]
      %v3677 = vld [vmem:[#allocation2 + $0x64] sm:$0xf]
      %v3678 = vld [vmem:[#allocation2 + $0x68] sm:$0xf]
      %v3679 = vld [vmem:[#allocation2 + $0x6c] sm:$0xf]
      %v3680 = vld [vmem:[#allocation2 + $0x70] sm:$0xf]
      %v3681 = vld [vmem:[#allocation2 + $0x74] sm:$0xf]
      %v3682 = vld [vmem:[#allocation2 + $0x78] sm:$0xf]
      %v3683 = vld [vmem:[#allocation2 + $0x7c] sm:$0xf]
      %v3684 = vld [vmem:[#allocation2 + $0x80] sm:$0xf]
      %v3685 = vld [vmem:[#allocation2 + $0x84] sm:$0xf]
      %v3686 = vld [vmem:[#allocation2 + $0x88] sm:$0xf]
      %v3687 = vld [vmem:[#allocation2 + $0x8c] sm:$0xf]
      %v3688 = vld [vmem:[%s6] sm:$0xf]
      %v3689 = vld [vmem:[%s6 + $0x4] sm:$0xf]
      %v3690 = vld [vmem:[%s6 + $0x8] sm:$0xf]
      %v3691 = vld [vmem:[%s6 + $0xc] sm:$0xf]
      %v3692 = vld [vmem:[%s6 + $0x10] sm:$0xf]
      %v3693 = vld [vmem:[%s6 + $0x14] sm:$0xf]
      %v3694 = vld [vmem:[%s6 + $0x18] sm:$0xf]
      %v3695 = vld [vmem:[%s6 + $0x1c] sm:$0xf]
      %v3696 = vld [vmem:[%s6 + $0x20] sm:$0xf]
      %v3697 = vld [vmem:[%s6 + $0x24] sm:$0xf]
      %v3698 = vld [vmem:[%s6 + $0x28] sm:$0xf]
      %v3699 = vld [vmem:[%s6 + $0x2c] sm:$0xf]
      %v3700 = vld [vmem:[%s6 + $0x30] sm:$0xf]
      %v3701 = vld [vmem:[%s6 + $0x34] sm:$0xf]
      %v3702 = vld [vmem:[%s6 + $0x38] sm:$0xf]
      %v3703 = vld [vmem:[%s6 + $0x3c] sm:$0xf]
      %v3740 = vunpack.c.l.b16 %v3652
      %v3741 = vunpack.c.l.b16 %v3653
      %v3742 = vunpack.c.l.b16 %v3654
      %v3743 = vunpack.c.l.b16 %v3655
      %v3744 = vunpack.c.l.b16 %v3656
      %v3745 = vunpack.c.l.b16 %v3657
      %v3746 = vunpack.c.l.b16 %v3658
      %v3747 = vunpack.c.l.b16 %v3659
      %v3748 = vunpack.c.l.b16 %v3660
      %v3749 = vunpack.c.l.b16 %v3661
      %v3750 = vunpack.c.l.b16 %v3662
      %v3751 = vunpack.c.l.b16 %v3663
      %v3752 = vunpack.c.l.b16 %v3664
      %v3753 = vunpack.c.l.b16 %v3665
      %v3754 = vunpack.c.l.b16 %v3666
      %v3755 = vunpack.c.l.b16 %v3667
      %v3756 = vunpack.c.l.b16 %v3668
      %v3757 = vunpack.c.l.b16 %v3669
      %v3758 = vunpack.c.l.b16 %v3670
      %v3759 = vunpack.c.l.b16 %v3671
      %v3760 = vunpack.c.l.b16 %v3672
      %v3761 = vunpack.c.l.b16 %v3673
      %v3762 = vunpack.c.l.b16 %v3674
      %v3763 = vunpack.c.l.b16 %v3675
      %v3764 = vunpack.c.l.b16 %v3676
      %v3765 = vunpack.c.l.b16 %v3677
      %v3766 = vunpack.c.l.b16 %v3678
      %v3767 = vunpack.c.l.b16 %v3679
      %v3768 = vunpack.c.l.b16 %v3680
      %v3769 = vunpack.c.l.b16 %v3681
      %v3770 = vunpack.c.l.b16 %v3682
      %v3771 = vunpack.c.l.b16 %v3683
      %v3772 = vunpack.c.l.b16 %v3684
      %v3773 = vunpack.c.l.b16 %v3685
      %v3774 = vunpack.c.l.b16 %v3686
      %v3775 = vunpack.c.l.b16 %v3687
      %v3776 = vpack.c.b16 %v3741, %v3740
      %v3777 = vpack.c.b16 %v3743, %v3742
      %v3778 = vpack.c.b16 %v3745, %v3744
      %v3779 = vpack.c.b16 %v3747, %v3746
      %v3780 = vpack.c.b16 %v3749, %v3748
      %v3781 = vpack.c.b16 %v3751, %v3750
      %v3782 = vpack.c.b16 %v3753, %v3752
      %v3783 = vpack.c.b16 %v3755, %v3754
      %v3784 = vpack.c.b16 %v3757, %v3756
      %v3785 = vpack.c.b16 %v3759, %v3758
      %v3786 = vpack.c.b16 %v3761, %v3760
      %v3787 = vpack.c.b16 %v3763, %v3762
      %v3788 = vpack.c.b16 %v3765, %v3764
      %v3789 = vpack.c.b16 %v3767, %v3766
      %v3790 = vpack.c.b16 %v3769, %v3768
      %v3791 = vpack.c.b16 %v3771, %v3770
      %v3792 = vpack.c.b16 %v3773, %v3772
      %v3793 = vpack.c.b16 %v3775, %v3774
      %v3828 = vunpack.c.l.b16 %v3688
      %v3829 = vunpack.c.l.b16 %v3689
      %v3830 = vunpack.c.l.b16 %v3690
      %v3831 = vunpack.c.l.b16 %v3691
      %v3832 = vunpack.c.l.b16 %v3692
      %v3833 = vunpack.c.l.b16 %v3693
      %v3834 = vunpack.c.l.b16 %v3694
      %v3835 = vunpack.c.l.b16 %v3695
      %v3836 = vunpack.c.l.b16 %v3696
      %v3837 = vunpack.c.l.b16 %v3697
      %v3838 = vunpack.c.l.b16 %v3698
      %v3839 = vunpack.c.l.b16 %v3699
      %v3840 = vunpack.c.l.b16 %v3700
      %v3841 = vunpack.c.l.b16 %v3701
      %v3842 = vunpack.c.l.b16 %v3702
      %v3843 = vunpack.c.l.b16 %v3703
      %v3844 = vpack.c.b16 %v3829, %v3828
      %v3845 = vpack.c.b16 %v3831, %v3830
      %v3846 = vpack.c.b16 %v3833, %v3832
      %v3847 = vpack.c.b16 %v3835, %v3834
      %v3848 = vpack.c.b16 %v3837, %v3836
      %v3849 = vpack.c.b16 %v3839, %v3838
      %v3850 = vpack.c.b16 %v3841, %v3840
      %v3851 = vpack.c.b16 %v3843, %v3842
      %3860 = vmatprep.subr.bf16.mxu0 0
      %3861 = vmatpush1.bf16.msra.mxu0 %v3844
      %3862 = vmatprep.subr.bf16.mxu0 0
      %3863 = vmatpush1.bf16.msra.mxu0 %v3845
      %3864 = vmatprep.subr.bf16.mxu0 0
      %3865 = vmatpush1.bf16.msra.mxu0 %v3846
      %3866 = vmatprep.subr.bf16.mxu0 0
      %3867 = vmatpush1.bf16.msra.mxu0 %v3847
      %3868 = vmatprep.subr.bf16.mxu0 0
      %3869 = vmatpush1.bf16.msra.mxu0 %v3848
      %3870 = vmatprep.subr.bf16.mxu0 0
      %3871 = vmatpush1.bf16.msra.mxu0 %v3849
      %3872 = vmatprep.subr.bf16.mxu0 0
      %3873 = vmatpush1.bf16.msra.mxu0 %v3850
      %3874 = vmatprep.subr.bf16.mxu0 0
      %3875 = vmatpush1.bf16.msra.mxu0 %v3851
      %3876 = vmatprep.subr.bf16.mxu0 0
      %3877 = vmatpush1.bf16.msra.mxu0 0
      %3878 = vmatprep.subr.bf16.mxu0 0
      %3879 = vmatpush1.bf16.msra.mxu0 0
      %3880 = vmatprep.subr.bf16.mxu0 0
      %3881 = vmatpush1.bf16.msra.mxu0 0
      %3882 = vmatprep.subr.bf16.mxu0 0
      %3883 = vmatpush1.bf16.msra.mxu0 0
      %3884 = vmatprep.subr.bf16.mxu0 0
      %3885 = vmatpush1.bf16.msra.mxu0 0
      %3886 = vmatprep.subr.bf16.mxu0 0
      %3887 = vmatpush1.bf16.msra.mxu0 0
      %3888 = vmatprep.subr.bf16.mxu0 0
      %3889 = vmatpush1.bf16.msra.mxu0 0
      %3890 = vmatprep.subr.bf16.mxu0 0
      %3891 = vmatpush1.bf16.msra.mxu0 0
      %3892 = vmatprep.mubr.bf16.mxu0 0
      %3893 = vmatmul.mubr.bf16.gmra.mrb[0].mxu0 %v3776
      %v3894 = vpop.f32.mrb[0].mxu0
      %v3895 = vadd.f32 0.0, %v3894
      %v3896 = vpop.f32.mrb[0].mxu0
      %v3897 = vpop.f32.mrb[0].mxu0
      %v3898 = vadd.f32 0.0, %v3897
      %v3899 = vpop.f32.mrb[0].mxu0
      %3900 = vmatprep.mubr.bf16.mxu0 0
      %3901 = vmatmul.mubr.bf16.gmra.mrb[0].mxu0 %v3777
      %v3902 = vpop.f32.mrb[0].mxu0
      %v3903 = vadd.f32 0.0, %v3902
      %v3904 = vpop.f32.mrb[0].mxu0
      %v3905 = vpop.f32.mrb[0].mxu0
      %v3906 = vadd.f32 0.0, %v3905
      %v3907 = vpop.f32.mrb[0].mxu0
      %3908 = vmatprep.mubr.bf16.mxu0 0
      %3909 = vmatmul.mubr.bf16.gmra.mrb[0].mxu0 %v3778
      %v3910 = vpop.f32.mrb[0].mxu0
      %v3911 = vadd.f32 0.0, %v3910
      %v3912 = vpop.f32.mrb[0].mxu0
      %v3913 = vpop.f32.mrb[0].mxu0
      %v3914 = vadd.f32 0.0, %v3913
      %v3915 = vpop.f32.mrb[0].mxu0
      %3916 = vmatprep.mubr.bf16.mxu0 0
      %3917 = vmatmul.mubr.bf16.gmra.mrb[0].mxu0 %v3779
      %v3918 = vpop.f32.mrb[0].mxu0
      %v3919 = vadd.f32 0.0, %v3918
      %v3920 = vpop.f32.mrb[0].mxu0
      %v3921 = vpop.f32.mrb[0].mxu0
      %v3922 = vadd.f32 0.0, %v3921
      %v3923 = vpop.f32.mrb[0].mxu0
      %3924 = vmatprep.mubr.bf16.mxu0 0
      %3925 = vmatmul.mubr.bf16.gmra.mrb[0].mxu0 %v3780
      %v3926 = vpop.f32.mrb[0].mxu0
      %v3927 = vadd.f32 0.0, %v3926
      %v3928 = vpop.f32.mrb[0].mxu0
      %v3929 = vpop.f32.mrb[0].mxu0
      %v3930 = vadd.f32 0.0, %v3929
      %v3931 = vpop.f32.mrb[0].mxu0
      %3932 = vmatprep.mubr.bf16.mxu0 0
      %3933 = vmatmul.mubr.bf16.gmra.mrb[0].mxu0 %v3781
      %v3934 = vpop.f32.mrb[0].mxu0
      %v3935 = vadd.f32 0.0, %v3934
      %v3936 = vpop.f32.mrb[0].mxu0
      %v3937 = vpop.f32.mrb[0].mxu0
      %v3938 = vadd.f32 0.0, %v3937
      %v3939 = vpop.f32.mrb[0].mxu0
      %3940 = vmatprep.mubr.bf16.mxu0 0
      %3941 = vmatmul.mubr.bf16.gmra.mrb[0].mxu0 %v3782
      %v3942 = vpop.f32.mrb[0].mxu0
      %v3943 = vadd.f32 0.0, %v3942
      %v3944 = vpop.f32.mrb[0].mxu0
      %v3945 = vpop.f32.mrb[0].mxu0
      %v3946 = vadd.f32 0.0, %v3945
      %v3947 = vpop.f32.mrb[0].mxu0
      %3948 = vmatprep.mubr.bf16.mxu0 0
      %3949 = vmatmul.mubr.bf16.gmra.mrb[0].mxu0 %v3783
      %v3950 = vpop.f32.mrb[0].mxu0
      %v3951 = vadd.f32 0.0, %v3950
      %v3952 = vpop.f32.mrb[0].mxu0
      %v3953 = vpop.f32.mrb[0].mxu0
      %v3954 = vadd.f32 0.0, %v3953
      %v3955 = vpop.f32.mrb[0].mxu0
      %3956 = vmatprep.mubr.bf16.mxu0 0
      %3957 = vmatmul.mubr.bf16.gmra.mrb[0].mxu0 %v3784
      %v3958 = vpop.f32.mrb[0].mxu0
      %v3959 = vadd.f32 0.0, %v3958
      %v3960 = vpop.f32.mrb[0].mxu0
      %v3961 = vpop.f32.mrb[0].mxu0
      %v3962 = vadd.f32 0.0, %v3961
      %v3963 = vpop.f32.mrb[0].mxu0
      %3964 = vmatprep.mubr.bf16.mxu0 0
      %3965 = vmatmul.mubr.bf16.gmra.mrb[0].mxu0 %v3785
      %v3966 = vpop.f32.mrb[0].mxu0
      %v3967 = vadd.f32 0.0, %v3966
      %v3968 = vpop.f32.mrb[0].mxu0
      %v3969 = vpop.f32.mrb[0].mxu0
      %v3970 = vadd.f32 0.0, %v3969
      %v3971 = vpop.f32.mrb[0].mxu0
      %3972 = vmatprep.mubr.bf16.mxu0 0
      %3973 = vmatmul.mubr.bf16.gmra.mrb[0].mxu0 %v3786
      %v3974 = vpop.f32.mrb[0].mxu0
      %v3975 = vadd.f32 0.0, %v3974
      %v3976 = vpop.f32.mrb[0].mxu0
      %v3977 = vpop.f32.mrb[0].mxu0
      %v3978 = vadd.f32 0.0, %v3977
      %v3979 = vpop.f32.mrb[0].mxu0
      %3980 = vmatprep.mubr.bf16.mxu0 0
      %3981 = vmatmul.mubr.bf16.gmra.mrb[0].mxu0 %v3787
      %v3982 = vpop.f32.mrb[0].mxu0
      %v3983 = vadd.f32 0.0, %v3982
      %v3984 = vpop.f32.mrb[0].mxu0
      %v3985 = vpop.f32.mrb[0].mxu0
      %v3986 = vadd.f32 0.0, %v3985
      %v3987 = vpop.f32.mrb[0].mxu0
      %3988 = vmatprep.mubr.bf16.mxu0 0
      %3989 = vmatmul.mubr.bf16.gmra.mrb[0].mxu0 %v3788
      %v3990 = vpop.f32.mrb[0].mxu0
      %v3991 = vadd.f32 0.0, %v3990
      %v3992 = vpop.f32.mrb[0].mxu0
      %v3993 = vpop.f32.mrb[0].mxu0
      %v3994 = vadd.f32 0.0, %v3993
      %v3995 = vpop.f32.mrb[0].mxu0
      %3996 = vmatprep.mubr.bf16.mxu0 0
      %3997 = vmatmul.mubr.bf16.gmra.mrb[0].mxu0 %v3789
      %v3998 = vpop.f32.mrb[0].mxu0
      %v3999 = vadd.f32 0.0, %v3998
      %v4000 = vpop.f32.mrb[0].mxu0
      %v4001 = vpop.f32.mrb[0].mxu0
      %v4002 = vadd.f32 0.0, %v4001
      %v4003 = vpop.f32.mrb[0].mxu0
      %4004 = vmatprep.mubr.bf16.mxu0 0
      %4005 = vmatmul.mubr.bf16.gmra.mrb[0].mxu0 %v3790
      %v4006 = vpop.f32.mrb[0].mxu0
      %v4007 = vadd.f32 0.0, %v4006
      %v4008 = vpop.f32.mrb[0].mxu0
      %v4009 = vpop.f32.mrb[0].mxu0
      %v4010 = vadd.f32 0.0, %v4009
      %v4011 = vpop.f32.mrb[0].mxu0
      %4012 = vmatprep.mubr.bf16.mxu0 0
      %4013 = vmatmul.mubr.bf16.gmra.mrb[0].mxu0 %v3791
      %v4014 = vpop.f32.mrb[0].mxu0
      %v4015 = vadd.f32 0.0, %v4014
      %v4016 = vpop.f32.mrb[0].mxu0
      %v4017 = vpop.f32.mrb[0].mxu0
      %v4018 = vadd.f32 0.0, %v4017
      %v4019 = vpop.f32.mrb[0].mxu0
      %4020 = vmatprep.mubr.bf16.mxu0 0
      %4021 = vmatmul.mubr.bf16.gmra.mrb[0].mxu0 %v3792
      %v4022 = vpop.f32.mrb[0].mxu0
      %v4023 = vadd.f32 0.0, %v4022
      %v4024 = vpop.f32.mrb[0].mxu0
      %v4025 = vpop.f32.mrb[0].mxu0
      %v4026 = vadd.f32 0.0, %v4025
      %v4027 = vpop.f32.mrb[0].mxu0
      %4028 = vmatprep.mubr.bf16.mxu0 0
      %4029 = vmatmul.mubr.bf16.gmra.mrb[0].mxu0 %v3793
      %v4030 = vpop.f32.mrb[0].mxu0
      %v4031 = vadd.f32 0.0, %v4030
      %v4032 = vpop.f32.mrb[0].mxu0
      %v4033 = vpop.f32.mrb[0].mxu0
      %v4034 = vadd.f32 0.0, %v4033
      %v4035 = vpop.f32.mrb[0].mxu0
      %4036 = vdwg.mxu0
      %4037 = vst [vmem:[#allocation3] sm:$0xff] %v3895
      %4038 = vst [vmem:[#allocation3 + $0x8] sm:$0xff] %v3898
      %4039 = vst [vmem:[#allocation3 + $0x10] sm:$0xff] %v3903
      %4040 = vst [vmem:[#allocation3 + $0x18] sm:$0xff] %v3906
      %4041 = vst [vmem:[#allocation3 + $0x20] sm:$0xff] %v3911
      %4042 = vst [vmem:[#allocation3 + $0x28] sm:$0xff] %v3914
      %4043 = vst [vmem:[#allocation3 + $0x30] sm:$0xff] %v3919
      %4044 = vst [vmem:[#allocation3 + $0x38] sm:$0xff] %v3922
      %4045 = vst [vmem:[#allocation3 + $0x40] sm:$0xff] %v3927
      %4046 = vst [vmem:[#allocation3 + $0x48] sm:$0xff] %v3930
      %4047 = vst [vmem:[#allocation3 + $0x50] sm:$0xff] %v3935
      %4048 = vst [vmem:[#allocation3 + $0x58] sm:$0xff] %v3938
      %4049 = vst [vmem:[#allocation3 + $0x60] sm:$0xff] %v3943
      %4050 = vst [vmem:[#allocation3 + $0x68] sm:$0xff] %v3946
      %4051 = vst [vmem:[#allocation3 + $0x70] sm:$0xff] %v3951
      %4052 = vst [vmem:[#allocation3 + $0x78] sm:$0xff] %v3954
      %4053 = vst [vmem:[#allocation3 + $0x80] sm:$0xff] %v3959
      %4054 = vst [vmem:[#allocation3 + $0x88] sm:$0xff] %v3962
      %4055 = vst [vmem:[#allocation3 + $0x90] sm:$0xff] %v3967
      %4056 = vst [vmem:[#allocation3 + $0x98] sm:$0xff] %v3970
      %4057 = vst [vmem:[#allocation3 + $0xa0] sm:$0xff] %v3975
      %4058 = vst [vmem:[#allocation3 + $0xa8] sm:$0xff] %v3978
      %4059 = vst [vmem:[#allocation3 + $0xb0] sm:$0xff] %v3983
      %4060 = vst [vmem:[#allocation3 + $0xb8] sm:$0xff] %v3986
      %4061 = vst [vmem:[#allocation3 + $0xc0] sm:$0xff] %v3991
      %4062 = vst [vmem:[#allocation3 + $0xc8] sm:$0xff] %v3994
      %4063 = vst [vmem:[#allocation3 + $0xd0] sm:$0xff] %v3999
      %4064 = vst [vmem:[#allocation3 + $0xd8] sm:$0xff] %v4002
      %4065 = vst [vmem:[#allocation3 + $0xe0] sm:$0xff] %v4007
      %4066 = vst [vmem:[#allocation3 + $0xe8] sm:$0xff] %v4010
      %4067 = vst [vmem:[#allocation3 + $0xf0] sm:$0xff] %v4015
      %4068 = vst [vmem:[#allocation3 + $0xf8] sm:$0xff] %v4018
      %4069 = vst [vmem:[#allocation3 + $0x100] sm:$0xff] %v4023
      %4070 = vst [vmem:[#allocation3 + $0x108] sm:$0xff] %v4026
      %4071 = vst [vmem:[#allocation3 + $0x110] sm:$0xff] %v4031
      %4072 = vst [vmem:[#allocation3 + $0x118] sm:$0xff] %v4034
      %v4073 = vld [vmem:[#allocation2] sm:$0xf]
      %v4074 = vld [vmem:[#allocation2 + $0x4] sm:$0xf]
      %v4075 = vld [vmem:[#allocation2 + $0x8] sm:$0xf]
      %v4076 = vld [vmem:[#allocation2 + $0xc] sm:$0xf]
      %v4077 = vld [vmem:[#allocation2 + $0x10] sm:$0xf]
      %v4078 = vld [vmem:[#allocation2 + $0x14] sm:$0xf]
      %v4079 = vld [vmem:[#allocation2 + $0x18] sm:$0xf]
      %v4080 = vld [vmem:[#allocation2 + $0x1c] sm:$0xf]
      %v4081 = vld [vmem:[#allocation2 + $0x20] sm:$0xf]
      %v4082 = vld [vmem:[#allocation2 + $0x24] sm:$0xf]
      %v4083 = vld [vmem:[#allocation2 + $0x28] sm:$0xf]
      %v4084 = vld [vmem:[#allocation2 + $0x2c] sm:$0xf]
      %v4085 = vld [vmem:[#allocation2 + $0x30] sm:$0xf]
      %v4086 = vld [vmem:[#allocation2 + $0x34] sm:$0xf]
      %v4087 = vld [vmem:[#allocation2 + $0x38] sm:$0xf]
      %v4088 = vld [vmem:[#allocation2 + $0x3c] sm:$0xf]
      %v4089 = vld [vmem:[#allocation2 + $0x40] sm:$0xf]
      %v4090 = vld [vmem:[#allocation2 + $0x44] sm:$0xf]
      %v4091 = vld [vmem:[#allocation2 + $0x48] sm:$0xf]
      %v4092 = vld [vmem:[#allocation2 + $0x4c] sm:$0xf]
      %v4093 = vld [vmem:[#allocation2 + $0x50] sm:$0xf]
      %v4094 = vld [vmem:[#allocation2 + $0x54] sm:$0xf]
      %v4095 = vld [vmem:[#allocation2 + $0x58] sm:$0xf]
      %v4096 = vld [vmem:[#allocation2 + $0x5c] sm:$0xf]
      %v4097 = vld [vmem:[#allocation2 + $0x60] sm:$0xf]
      %v4098 = vld [vmem:[#allocation2 + $0x64] sm:$0xf]
      %v4099 = vld [vmem:[#allocation2 + $0x68] sm:$0xf]
      %v4100 = vld [vmem:[#allocation2 + $0x6c] sm:$0xf]
      %v4101 = vld [vmem:[#allocation2 + $0x70] sm:$0xf]
      %v4102 = vld [vmem:[#allocation2 + $0x74] sm:$0xf]
      %v4103 = vld [vmem:[#allocation2 + $0x78] sm:$0xf]
      %v4104 = vld [vmem:[#allocation2 + $0x7c] sm:$0xf]
      %v4105 = vld [vmem:[#allocation2 + $0x80] sm:$0xf]
      %v4106 = vld [vmem:[#allocation2 + $0x84] sm:$0xf]
      %v4107 = vld [vmem:[#allocation2 + $0x88] sm:$0xf]
      %v4108 = vld [vmem:[#allocation2 + $0x8c] sm:$0xf]
      %v4109 = vld [vmem:[#allocation2 + $0x90] sm:$0x1]
      %s4110 = scalar_lea.vmem %s6, 64
      %v4111 = vld [vmem:[%s4110] sm:$0xf]
      %v4112 = vld [vmem:[%s4110 + $0x4] sm:$0xf]
      %v4113 = vld [vmem:[%s4110 + $0x8] sm:$0xf]
      %v4114 = vld [vmem:[%s4110 + $0xc] sm:$0xf]
      %v4115 = vld [vmem:[%s4110 + $0x10] sm:$0xf]
      %v4116 = vld [vmem:[%s4110 + $0x14] sm:$0xf]
      %v4117 = vld [vmem:[%s4110 + $0x18] sm:$0xf]
      %v4118 = vld [vmem:[%s4110 + $0x1c] sm:$0xf]
      %v4119 = vld [vmem:[%s4110 + $0x20] sm:$0xf]
      %v4120 = vld [vmem:[%s4110 + $0x24] sm:$0xf]
      %v4121 = vld [vmem:[%s4110 + $0x28] sm:$0xf]
      %v4122 = vld [vmem:[%s4110 + $0x2c] sm:$0xf]
      %v4123 = vld [vmem:[%s4110 + $0x30] sm:$0xf]
      %v4124 = vld [vmem:[%s4110 + $0x34] sm:$0xf]
      %v4125 = vld [vmem:[%s4110 + $0x38] sm:$0xf]
      %v4126 = vld [vmem:[%s4110 + $0x3c] sm:$0xf]
      %v4164 = vunpack.c.l.b16 %v4073
      %v4165 = vunpack.c.l.b16 %v4074
      %v4166 = vunpack.c.l.b16 %v4075
      %v4167 = vunpack.c.l.b16 %v4076
      %v4168 = vunpack.c.l.b16 %v4077
      %v4169 = vunpack.c.l.b16 %v4078
      %v4170 = vunpack.c.l.b16 %v4079
      %v4171 = vunpack.c.l.b16 %v4080
      %v4172 = vunpack.c.l.b16 %v4081
      %v4173 = vunpack.c.l.b16 %v4082
      %v4174 = vunpack.c.l.b16 %v4083
      %v4175 = vunpack.c.l.b16 %v4084
      %v4176 = vunpack.c.l.b16 %v4085
      %v4177 = vunpack.c.l.b16 %v4086
      %v4178 = vunpack.c.l.b16 %v4087
      %v4179 = vunpack.c.l.b16 %v4088
      %v4180 = vunpack.c.l.b16 %v4089
      %v4181 = vunpack.c.l.b16 %v4090
      %v4182 = vunpack.c.l.b16 %v4091
      %v4183 = vunpack.c.l.b16 %v4092
      %v4184 = vunpack.c.l.b16 %v4093
      %v4185 = vunpack.c.l.b16 %v4094
      %v4186 = vunpack.c.l.b16 %v4095
      %v4187 = vunpack.c.l.b16 %v4096
      %v4188 = vunpack.c.l.b16 %v4097
      %v4189 = vunpack.c.l.b16 %v4098
      %v4190 = vunpack.c.l.b16 %v4099
      %v4191 = vunpack.c.l.b16 %v4100
      %v4192 = vunpack.c.l.b16 %v4101
      %v4193 = vunpack.c.l.b16 %v4102
      %v4194 = vunpack.c.l.b16 %v4103
      %v4195 = vunpack.c.l.b16 %v4104
      %v4196 = vunpack.c.l.b16 %v4105
      %v4197 = vunpack.c.l.b16 %v4106
      %v4198 = vunpack.c.l.b16 %v4107
      %v4199 = vunpack.c.l.b16 %v4108
      %v4200 = vunpack.c.l.b16 %v4109
      %v4201 = vpack.c.b16 %v4165, %v4164
      %v4202 = vpack.c.b16 %v4167, %v4166
      %v4203 = vpack.c.b16 %v4169, %v4168
      %v4204 = vpack.c.b16 %v4171, %v4170
      %v4205 = vpack.c.b16 %v4173, %v4172
      %v4206 = vpack.c.b16 %v4175, %v4174
      %v4207 = vpack.c.b16 %v4177, %v4176
      %v4208 = vpack.c.b16 %v4179, %v4178
      %v4209 = vpack.c.b16 %v4181, %v4180
      %v4210 = vpack.c.b16 %v4183, %v4182
      %v4211 = vpack.c.b16 %v4185, %v4184
      %v4212 = vpack.c.b16 %v4187, %v4186
      %v4213 = vpack.c.b16 %v4189, %v4188
      %v4214 = vpack.c.b16 %v4191, %v4190
      %v4215 = vpack.c.b16 %v4193, %v4192
      %v4216 = vpack.c.b16 %v4195, %v4194
      %v4217 = vpack.c.b16 %v4197, %v4196
      %v4218 = vpack.c.b16 %v4199, %v4198
      %v4219 = vpack.c.b16 %v4200, %v4200
      %vm4220 = vsmask.f32 7424
      %v4222 = vshrl.u32 %v4201, 16
      %v4224 = vshll.u32 %v4201, 16
      %v4226 = vrot.slane %v4224, 1
      %v4227 = vor.u32 %v4222, %v4226
      %v4229 = vshll.u32 %v4202, 16
      %v4231 = vrot.slane %v4229, 1
      %v4232 = vsel %vm4220, %v4227, %v4231
      %v4233 = vshrl.u32 %v4202, 16
      %v4235 = vor.u32 %v4233, %v4231
      %v4237 = vshll.u32 %v4203, 16
      %v4239 = vrot.slane %v4237, 1
      %v4240 = vsel %vm4220, %v4235, %v4239
      %v4241 = vshrl.u32 %v4203, 16
      %v4243 = vor.u32 %v4241, %v4239
      %v4245 = vshll.u32 %v4204, 16
      %v4247 = vrot.slane %v4245, 1
      %v4248 = vsel %vm4220, %v4243, %v4247
      %v4249 = vshrl.u32 %v4204, 16
      %v4251 = vor.u32 %v4249, %v4247
      %v4253 = vshll.u32 %v4205, 16
      %v4255 = vrot.slane %v4253, 1
      %v4256 = vsel %vm4220, %v4251, %v4255
      %v4257 = vshrl.u32 %v4205, 16
      %v4259 = vor.u32 %v4257, %v4255
      %v4261 = vshll.u32 %v4206, 16
      %v4263 = vrot.slane %v4261, 1
      %v4264 = vsel %vm4220, %v4259, %v4263
      %v4265 = vshrl.u32 %v4206, 16
      %v4267 = vor.u32 %v4265, %v4263
      %v4269 = vshll.u32 %v4207, 16
      %v4271 = vrot.slane %v4269, 1
      %v4272 = vsel %vm4220, %v4267, %v4271
      %v4273 = vshrl.u32 %v4207, 16
      %v4275 = vor.u32 %v4273, %v4271
      %v4277 = vshll.u32 %v4208, 16
      %v4279 = vrot.slane %v4277, 1
      %v4280 = vsel %vm4220, %v4275, %v4279
      %v4281 = vshrl.u32 %v4208, 16
      %v4283 = vor.u32 %v4281, %v4279
      %v4285 = vshll.u32 %v4209, 16
      %v4287 = vrot.slane %v4285, 1
      %v4288 = vsel %vm4220, %v4283, %v4287
      %v4289 = vshrl.u32 %v4209, 16
      %v4291 = vor.u32 %v4289, %v4287
      %v4293 = vshll.u32 %v4210, 16
      %v4295 = vrot.slane %v4293, 1
      %v4296 = vsel %vm4220, %v4291, %v4295
      %v4297 = vshrl.u32 %v4210, 16
      %v4299 = vor.u32 %v4297, %v4295
      %v4301 = vshll.u32 %v4211, 16
      %v4303 = vrot.slane %v4301, 1
      %v4304 = vsel %vm4220, %v4299, %v4303
      %v4305 = vshrl.u32 %v4211, 16
      %v4307 = vor.u32 %v4305, %v4303
      %v4309 = vshll.u32 %v4212, 16
      %v4311 = vrot.slane %v4309, 1
      %v4312 = vsel %vm4220, %v4307, %v4311
      %v4313 = vshrl.u32 %v4212, 16
      %v4315 = vor.u32 %v4313, %v4311
      %v4317 = vshll.u32 %v4213, 16
      %v4319 = vrot.slane %v4317, 1
      %v4320 = vsel %vm4220, %v4315, %v4319
      %v4321 = vshrl.u32 %v4213, 16
      %v4323 = vor.u32 %v4321, %v4319
      %v4325 = vshll.u32 %v4214, 16
      %v4327 = vrot.slane %v4325, 1
      %v4328 = vsel %vm4220, %v4323, %v4327
      %v4329 = vshrl.u32 %v4214, 16
      %v4331 = vor.u32 %v4329, %v4327
      %v4333 = vshll.u32 %v4215, 16
      %v4335 = vrot.slane %v4333, 1
      %v4336 = vsel %vm4220, %v4331, %v4335
      %v4337 = vshrl.u32 %v4215, 16
      %v4339 = vor.u32 %v4337, %v4335
      %v4341 = vshll.u32 %v4216, 16
      %v4343 = vrot.slane %v4341, 1
      %v4344 = vsel %vm4220, %v4339, %v4343
      %v4345 = vshrl.u32 %v4216, 16
      %v4347 = vor.u32 %v4345, %v4343
      %v4349 = vshll.u32 %v4217, 16
      %v4351 = vrot.slane %v4349, 1
      %v4352 = vsel %vm4220, %v4347, %v4351
      %v4353 = vshrl.u32 %v4217, 16
      %v4355 = vor.u32 %v4353, %v4351
      %v4357 = vshll.u32 %v4218, 16
      %v4359 = vrot.slane %v4357, 1
      %v4360 = vsel %vm4220, %v4355, %v4359
      %v4361 = vshrl.u32 %v4218, 16
      %v4363 = vor.u32 %v4361, %v4359
      %v4365 = vshll.u32 %v4219, 16
      %v4367 = vrot.slane %v4365, 1
      %v4368 = vsel %vm4220, %v4363, %v4367
      %v4403 = vunpack.c.l.b16 %v4111
      %v4404 = vunpack.c.l.b16 %v4112
      %v4405 = vunpack.c.l.b16 %v4113
      %v4406 = vunpack.c.l.b16 %v4114
      %v4407 = vunpack.c.l.b16 %v4115
      %v4408 = vunpack.c.l.b16 %v4116
      %v4409 = vunpack.c.l.b16 %v4117
      %v4410 = vunpack.c.l.b16 %v4118
      %v4411 = vunpack.c.l.b16 %v4119
      %v4412 = vunpack.c.l.b16 %v4120
      %v4413 = vunpack.c.l.b16 %v4121
      %v4414 = vunpack.c.l.b16 %v4122
      %v4415 = vunpack.c.l.b16 %v4123
      %v4416 = vunpack.c.l.b16 %v4124
      %v4417 = vunpack.c.l.b16 %v4125
      %v4418 = vunpack.c.l.b16 %v4126
      %v4419 = vpack.c.b16 %v4404, %v4403
      %v4420 = vpack.c.b16 %v4406, %v4405
      %v4421 = vpack.c.b16 %v4408, %v4407
      %v4422 = vpack.c.b16 %v4410, %v4409
      %v4423 = vpack.c.b16 %v4412, %v4411
      %v4424 = vpack.c.b16 %v4414, %v4413
      %v4425 = vpack.c.b16 %v4416, %v4415
      %v4426 = vpack.c.b16 %v4418, %v4417
      %4435 = vmatprep.subr.bf16.mxu0 0
      %4436 = vmatpush1.bf16.msra.mxu0 %v4419
      %4437 = vmatprep.subr.bf16.mxu0 0
      %4438 = vmatpush1.bf16.msra.mxu0 %v4420
      %4439 = vmatprep.subr.bf16.mxu0 0
      %4440 = vmatpush1.bf16.msra.mxu0 %v4421
      %4441 = vmatprep.subr.bf16.mxu0 0
      %4442 = vmatpush1.bf16.msra.mxu0 %v4422
      %4443 = vmatprep.subr.bf16.mxu0 0
      %4444 = vmatpush1.bf16.msra.mxu0 %v4423
      %4445 = vmatprep.subr.bf16.mxu0 0
      %4446 = vmatpush1.bf16.msra.mxu0 %v4424
      %4447 = vmatprep.subr.bf16.mxu0 0
      %4448 = vmatpush1.bf16.msra.mxu0 %v4425
      %4449 = vmatprep.subr.bf16.mxu0 0
      %4450 = vmatpush1.bf16.msra.mxu0 %v4426
      %4451 = vmatprep.subr.bf16.mxu0 0
      %4452 = vmatpush1.bf16.msra.mxu0 0
      %4453 = vmatprep.subr.bf16.mxu0 0
      %4454 = vmatpush1.bf16.msra.mxu0 0
      %4455 = vmatprep.subr.bf16.mxu0 0
      %4456 = vmatpush1.bf16.msra.mxu0 0
      %4457 = vmatprep.subr.bf16.mxu0 0
      %4458 = vmatpush1.bf16.msra.mxu0 0
      %4459 = vmatprep.subr.bf16.mxu0 0
      %4460 = vmatpush1.bf16.msra.mxu0 0
      %4461 = vmatprep.subr.bf16.mxu0 0
      %4462 = vmatpush1.bf16.msra.mxu0 0
      %4463 = vmatprep.subr.bf16.mxu0 0
      %4464 = vmatpush1.bf16.msra.mxu0 0
      %4465 = vmatprep.subr.bf16.mxu0 0
      %4466 = vmatpush1.bf16.msra.mxu0 0
      %4467 = vmatprep.mubr.bf16.mxu0 0
      %4468 = vmatmul.mubr.bf16.gmra.mrb[0].mxu0 %v4232
      %v4469 = vpop.f32.mrb[0].mxu0
      %v4470 = vadd.f32 0.0, %v4469
      %v4471 = vpop.f32.mrb[0].mxu0
      %v4472 = vpop.f32.mrb[0].mxu0
      %v4473 = vadd.f32 0.0, %v4472
      %v4474 = vpop.f32.mrb[0].mxu0
      %4475 = vmatprep.mubr.bf16.mxu0 0
      %4476 = vmatmul.mubr.bf16.gmra.mrb[0].mxu0 %v4240
      %v4477 = vpop.f32.mrb[0].mxu0
      %v4478 = vadd.f32 0.0, %v4477
      %v4479 = vpop.f32.mrb[0].mxu0
      %v4480 = vpop.f32.mrb[0].mxu0
      %v4481 = vadd.f32 0.0, %v4480
      %v4482 = vpop.f32.mrb[0].mxu0
      %4483 = vmatprep.mubr.bf16.mxu0 0
      %4484 = vmatmul.mubr.bf16.gmra.mrb[0].mxu0 %v4248
      %v4485 = vpop.f32.mrb[0].mxu0
      %v4486 = vadd.f32 0.0, %v4485
      %v4487 = vpop.f32.mrb[0].mxu0
      %v4488 = vpop.f32.mrb[0].mxu0
      %v4489 = vadd.f32 0.0, %v4488
      %v4490 = vpop.f32.mrb[0].mxu0
      %4491 = vmatprep.mubr.bf16.mxu0 0
      %4492 = vmatmul.mubr.bf16.gmra.mrb[0].mxu0 %v4256
      %v4493 = vpop.f32.mrb[0].mxu0
      %v4494 = vadd.f32 0.0, %v4493
      %v4495 = vpop.f32.mrb[0].mxu0
      %v4496 = vpop.f32.mrb[0].mxu0
      %v4497 = vadd.f32 0.0, %v4496
      %v4498 = vpop.f32.mrb[0].mxu0
      %4499 = vmatprep.mubr.bf16.mxu0 0
      %4500 = vmatmul.mubr.bf16.gmra.mrb[0].mxu0 %v4264
      %v4501 = vpop.f32.mrb[0].mxu0
      %v4502 = vadd.f32 0.0, %v4501
      %v4503 = vpop.f32.mrb[0].mxu0
      %v4504 = vpop.f32.mrb[0].mxu0
      %v4505 = vadd.f32 0.0, %v4504
      %v4506 = vpop.f32.mrb[0].mxu0
      %4507 = vmatprep.mubr.bf16.mxu0 0
      %4508 = vmatmul.mubr.bf16.gmra.mrb[0].mxu0 %v4272
      %v4509 = vpop.f32.mrb[0].mxu0
      %v4510 = vadd.f32 0.0, %v4509
      %v4511 = vpop.f32.mrb[0].mxu0
      %v4512 = vpop.f32.mrb[0].mxu0
      %v4513 = vadd.f32 0.0, %v4512
      %v4514 = vpop.f32.mrb[0].mxu0
      %4515 = vmatprep.mubr.bf16.mxu0 0
      %4516 = vmatmul.mubr.bf16.gmra.mrb[0].mxu0 %v4280
      %v4517 = vpop.f32.mrb[0].mxu0
      %v4518 = vadd.f32 0.0, %v4517
      %v4519 = vpop.f32.mrb[0].mxu0
      %v4520 = vpop.f32.mrb[0].mxu0
      %v4521 = vadd.f32 0.0, %v4520
      %v4522 = vpop.f32.mrb[0].mxu0
      %4523 = vmatprep.mubr.bf16.mxu0 0
      %4524 = vmatmul.mubr.bf16.gmra.mrb[0].mxu0 %v4288
      %v4525 = vpop.f32.mrb[0].mxu0
      %v4526 = vadd.f32 0.0, %v4525
      %v4527 = vpop.f32.mrb[0].mxu0
      %v4528 = vpop.f32.mrb[0].mxu0
      %v4529 = vadd.f32 0.0, %v4528
      %v4530 = vpop.f32.mrb[0].mxu0
      %4531 = vmatprep.mubr.bf16.mxu0 0
      %4532 = vmatmul.mubr.bf16.gmra.mrb[0].mxu0 %v4296
      %v4533 = vpop.f32.mrb[0].mxu0
      %v4534 = vadd.f32 0.0, %v4533
      %v4535 = vpop.f32.mrb[0].mxu0
      %v4536 = vpop.f32.mrb[0].mxu0
      %v4537 = vadd.f32 0.0, %v4536
      %v4538 = vpop.f32.mrb[0].mxu0
      %4539 = vmatprep.mubr.bf16.mxu0 0
      %4540 = vmatmul.mubr.bf16.gmra.mrb[0].mxu0 %v4304
      %v4541 = vpop.f32.mrb[0].mxu0
      %v4542 = vadd.f32 0.0, %v4541
      %v4543 = vpop.f32.mrb[0].mxu0
      %v4544 = vpop.f32.mrb[0].mxu0
      %v4545 = vadd.f32 0.0, %v4544
      %v4546 = vpop.f32.mrb[0].mxu0
      %4547 = vmatprep.mubr.bf16.mxu0 0
      %4548 = vmatmul.mubr.bf16.gmra.mrb[0].mxu0 %v4312
      %v4549 = vpop.f32.mrb[0].mxu0
      %v4550 = vadd.f32 0.0, %v4549
      %v4551 = vpop.f32.mrb[0].mxu0
      %v4552 = vpop.f32.mrb[0].mxu0
      %v4553 = vadd.f32 0.0, %v4552
      %v4554 = vpop.f32.mrb[0].mxu0
      %4555 = vmatprep.mubr.bf16.mxu0 0
      %4556 = vmatmul.mubr.bf16.gmra.mrb[0].mxu0 %v4320
      %v4557 = vpop.f32.mrb[0].mxu0
      %v4558 = vadd.f32 0.0, %v4557
      %v4559 = vpop.f32.mrb[0].mxu0
      %v4560 = vpop.f32.mrb[0].mxu0
      %v4561 = vadd.f32 0.0, %v4560
      %v4562 = vpop.f32.mrb[0].mxu0
      %4563 = vmatprep.mubr.bf16.mxu0 0
      %4564 = vmatmul.mubr.bf16.gmra.mrb[0].mxu0 %v4328
      %v4565 = vpop.f32.mrb[0].mxu0
      %v4566 = vadd.f32 0.0, %v4565
      %v4567 = vpop.f32.mrb[0].mxu0
      %v4568 = vpop.f32.mrb[0].mxu0
      %v4569 = vadd.f32 0.0, %v4568
      %v4570 = vpop.f32.mrb[0].mxu0
      %4571 = vmatprep.mubr.bf16.mxu0 0
      %4572 = vmatmul.mubr.bf16.gmra.mrb[0].mxu0 %v4336
      %v4573 = vpop.f32.mrb[0].mxu0
      %v4574 = vadd.f32 0.0, %v4573
      %v4575 = vpop.f32.mrb[0].mxu0
      %v4576 = vpop.f32.mrb[0].mxu0
      %v4577 = vadd.f32 0.0, %v4576
      %v4578 = vpop.f32.mrb[0].mxu0
      %4579 = vmatprep.mubr.bf16.mxu0 0
      %4580 = vmatmul.mubr.bf16.gmra.mrb[0].mxu0 %v4344
      %v4581 = vpop.f32.mrb[0].mxu0
      %v4582 = vadd.f32 0.0, %v4581
      %v4583 = vpop.f32.mrb[0].mxu0
      %v4584 = vpop.f32.mrb[0].mxu0
      %v4585 = vadd.f32 0.0, %v4584
      %v4586 = vpop.f32.mrb[0].mxu0
      %4587 = vmatprep.mubr.bf16.mxu0 0
      %4588 = vmatmul.mubr.bf16.gmra.mrb[0].mxu0 %v4352
      %v4589 = vpop.f32.mrb[0].mxu0
      %v4590 = vadd.f32 0.0, %v4589
      %v4591 = vpop.f32.mrb[0].mxu0
      %v4592 = vpop.f32.mrb[0].mxu0
      %v4593 = vadd.f32 0.0, %v4592
      %v4594 = vpop.f32.mrb[0].mxu0
      %4595 = vmatprep.mubr.bf16.mxu0 0
      %4596 = vmatmul.mubr.bf16.gmra.mrb[0].mxu0 %v4360
      %v4597 = vpop.f32.mrb[0].mxu0
      %v4598 = vadd.f32 0.0, %v4597
      %v4599 = vpop.f32.mrb[0].mxu0
      %v4600 = vpop.f32.mrb[0].mxu0
      %v4601 = vadd.f32 0.0, %v4600
      %v4602 = vpop.f32.mrb[0].mxu0
      %4603 = vmatprep.mubr.bf16.mxu0 0
      %4604 = vmatmul.mubr.bf16.gmra.mrb[0].mxu0 %v4368
      %v4605 = vpop.f32.mrb[0].mxu0
      %v4606 = vadd.f32 0.0, %v4605
      %v4607 = vpop.f32.mrb[0].mxu0
      %v4608 = vpop.f32.mrb[0].mxu0
      %v4609 = vadd.f32 0.0, %v4608
      %v4610 = vpop.f32.mrb[0].mxu0
      %4611 = vdwg.mxu0
      %v4612 = vld [vmem:[#allocation3] sm:$0xff]
      %v4613 = vld [vmem:[#allocation3 + $0x8] sm:$0xff]
      %v4614 = vld [vmem:[#allocation3 + $0x10] sm:$0xff]
      %v4615 = vld [vmem:[#allocation3 + $0x18] sm:$0xff]
      %v4616 = vld [vmem:[#allocation3 + $0x20] sm:$0xff]
      %v4617 = vld [vmem:[#allocation3 + $0x28] sm:$0xff]
      %v4618 = vld [vmem:[#allocation3 + $0x30] sm:$0xff]
      %v4619 = vld [vmem:[#allocation3 + $0x38] sm:$0xff]
      %v4620 = vld [vmem:[#allocation3 + $0x40] sm:$0xff]
      %v4621 = vld [vmem:[#allocation3 + $0x48] sm:$0xff]
      %v4622 = vld [vmem:[#allocation3 + $0x50] sm:$0xff]
      %v4623 = vld [vmem:[#allocation3 + $0x58] sm:$0xff]
      %v4624 = vld [vmem:[#allocation3 + $0x60] sm:$0xff]
      %v4625 = vld [vmem:[#allocation3 + $0x68] sm:$0xff]
      %v4626 = vld [vmem:[#allocation3 + $0x70] sm:$0xff]
      %v4627 = vld [vmem:[#allocation3 + $0x78] sm:$0xff]
      %v4628 = vld [vmem:[#allocation3 + $0x80] sm:$0xff]
      %v4629 = vld [vmem:[#allocation3 + $0x88] sm:$0xff]
      %v4630 = vld [vmem:[#allocation3 + $0x90] sm:$0xff]
      %v4631 = vld [vmem:[#allocation3 + $0x98] sm:$0xff]
      %v4632 = vld [vmem:[#allocation3 + $0xa0] sm:$0xff]
      %v4633 = vld [vmem:[#allocation3 + $0xa8] sm:$0xff]
      %v4634 = vld [vmem:[#allocation3 + $0xb0] sm:$0xff]
      %v4635 = vld [vmem:[#allocation3 + $0xb8] sm:$0xff]
      %v4636 = vld [vmem:[#allocation3 + $0xc0] sm:$0xff]
      %v4637 = vld [vmem:[#allocation3 + $0xc8] sm:$0xff]
      %v4638 = vld [vmem:[#allocation3 + $0xd0] sm:$0xff]
      %v4639 = vld [vmem:[#allocation3 + $0xd8] sm:$0xff]
      %v4640 = vld [vmem:[#allocation3 + $0xe0] sm:$0xff]
      %v4641 = vld [vmem:[#allocation3 + $0xe8] sm:$0xff]
      %v4642 = vld [vmem:[#allocation3 + $0xf0] sm:$0xff]
      %v4643 = vld [vmem:[#allocation3 + $0xf8] sm:$0xff]
      %v4644 = vld [vmem:[#allocation3 + $0x100] sm:$0xff]
      %v4645 = vld [vmem:[#allocation3 + $0x108] sm:$0xff]
      %v4646 = vld [vmem:[#allocation3 + $0x110] sm:$0xff]
      %v4647 = vld [vmem:[#allocation3 + $0x118] sm:$0xff]
      %v4648 = vadd.f32 %v4612, %v4470
      %v4649 = vadd.f32 %v4613, %v4473
      %v4650 = vadd.f32 %v4614, %v4478
      %v4651 = vadd.f32 %v4615, %v4481
      %v4652 = vadd.f32 %v4616, %v4486
      %v4653 = vadd.f32 %v4617, %v4489
      %v4654 = vadd.f32 %v4618, %v4494
      %v4655 = vadd.f32 %v4619, %v4497
      %v4656 = vadd.f32 %v4620, %v4502
      %v4657 = vadd.f32 %v4621, %v4505
      %v4658 = vadd.f32 %v4622, %v4510
      %v4659 = vadd.f32 %v4623, %v4513
      %v4660 = vadd.f32 %v4624, %v4518
      %v4661 = vadd.f32 %v4625, %v4521
      %v4662 = vadd.f32 %v4626, %v4526
      %v4663 = vadd.f32 %v4627, %v4529
      %v4664 = vadd.f32 %v4628, %v4534
      %v4665 = vadd.f32 %v4629, %v4537
      %v4666 = vadd.f32 %v4630, %v4542
      %v4667 = vadd.f32 %v4631, %v4545
      %v4668 = vadd.f32 %v4632, %v4550
      %v4669 = vadd.f32 %v4633, %v4553
      %v4670 = vadd.f32 %v4634, %v4558
      %v4671 = vadd.f32 %v4635, %v4561
      %v4672 = vadd.f32 %v4636, %v4566
      %v4673 = vadd.f32 %v4637, %v4569
      %v4674 = vadd.f32 %v4638, %v4574
      %v4675 = vadd.f32 %v4639, %v4577
      %v4676 = vadd.f32 %v4640, %v4582
      %v4677 = vadd.f32 %v4641, %v4585
      %v4678 = vadd.f32 %v4642, %v4590
      %v4679 = vadd.f32 %v4643, %v4593
      %v4680 = vadd.f32 %v4644, %v4598
      %v4681 = vadd.f32 %v4645, %v4601
      %v4682 = vadd.f32 %v4646, %v4606
      %v4683 = vadd.f32 %v4647, %v4609
      %4684 = vst [vmem:[#allocation3] sm:$0xff] %v4648
      %4685 = vst [vmem:[#allocation3 + $0x8] sm:$0xff] %v4649
      %4686 = vst [vmem:[#allocation3 + $0x10] sm:$0xff] %v4650
      %4687 = vst [vmem:[#allocation3 + $0x18] sm:$0xff] %v4651
      %4688 = vst [vmem:[#allocation3 + $0x20] sm:$0xff] %v4652
      %4689 = vst [vmem:[#allocation3 + $0x28] sm:$0xff] %v4653
      %4690 = vst [vmem:[#allocation3 + $0x30] sm:$0xff] %v4654
      %4691 = vst [vmem:[#allocation3 + $0x38] sm:$0xff] %v4655
      %4692 = vst [vmem:[#allocation3 + $0x40] sm:$0xff] %v4656
      %4693 = vst [vmem:[#allocation3 + $0x48] sm:$0xff] %v4657
      %4694 = vst [vmem:[#allocation3 + $0x50] sm:$0xff] %v4658
      %4695 = vst [vmem:[#allocation3 + $0x58] sm:$0xff] %v4659
      %4696 = vst [vmem:[#allocation3 + $0x60] sm:$0xff] %v4660
      %4697 = vst [vmem:[#allocation3 + $0x68] sm:$0xff] %v4661
      %4698 = vst [vmem:[#allocation3 + $0x70] sm:$0xff] %v4662
      %4699 = vst [vmem:[#allocation3 + $0x78] sm:$0xff] %v4663
      %4700 = vst [vmem:[#allocation3 + $0x80] sm:$0xff] %v4664
      %4701 = vst [vmem:[#allocation3 + $0x88] sm:$0xff] %v4665
      %4702 = vst [vmem:[#allocation3 + $0x90] sm:$0xff] %v4666
      %4703 = vst [vmem:[#allocation3 + $0x98] sm:$0xff] %v4667
      %4704 = vst [vmem:[#allocation3 + $0xa0] sm:$0xff] %v4668
      %4705 = vst [vmem:[#allocation3 + $0xa8] sm:$0xff] %v4669
      %4706 = vst [vmem:[#allocation3 + $0xb0] sm:$0xff] %v4670
      %4707 = vst [vmem:[#allocation3 + $0xb8] sm:$0xff] %v4671
      %4708 = vst [vmem:[#allocation3 + $0xc0] sm:$0xff] %v4672
      %4709 = vst [vmem:[#allocation3 + $0xc8] sm:$0xff] %v4673
      %4710 = vst [vmem:[#allocation3 + $0xd0] sm:$0xff] %v4674
      %4711 = vst [vmem:[#allocation3 + $0xd8] sm:$0xff] %v4675
      %4712 = vst [vmem:[#allocation3 + $0xe0] sm:$0xff] %v4676
      %4713 = vst [vmem:[#allocation3 + $0xe8] sm:$0xff] %v4677
      %4714 = vst [vmem:[#allocation3 + $0xf0] sm:$0xff] %v4678
      %4715 = vst [vmem:[#allocation3 + $0xf8] sm:$0xff] %v4679
      %4716 = vst [vmem:[#allocation3 + $0x100] sm:$0xff] %v4680
      %4717 = vst [vmem:[#allocation3 + $0x108] sm:$0xff] %v4681
      %4718 = vst [vmem:[#allocation3 + $0x110] sm:$0xff] %v4682
      %4719 = vst [vmem:[#allocation3 + $0x118] sm:$0xff] %v4683
      %v4720 = vld [vmem:[#allocation2] sm:$0xe]
      %v4721 = vld [vmem:[#allocation2 + $0x4] sm:$0xf]
      %v4722 = vld [vmem:[#allocation2 + $0x8] sm:$0xf]
      %v4723 = vld [vmem:[#allocation2 + $0xc] sm:$0xf]
      %v4724 = vld [vmem:[#allocation2 + $0x10] sm:$0xf]
      %v4725 = vld [vmem:[#allocation2 + $0x14] sm:$0xf]
      %v4726 = vld [vmem:[#allocation2 + $0x18] sm:$0xf]
      %v4727 = vld [vmem:[#allocation2 + $0x1c] sm:$0xf]
      %v4728 = vld [vmem:[#allocation2 + $0x20] sm:$0xf]
      %v4729 = vld [vmem:[#allocation2 + $0x24] sm:$0xf]
      %v4730 = vld [vmem:[#allocation2 + $0x28] sm:$0xf]
      %v4731 = vld [vmem:[#allocation2 + $0x2c] sm:$0xf]
      %v4732 = vld [vmem:[#allocation2 + $0x30] sm:$0xf]
      %v4733 = vld [vmem:[#allocation2 + $0x34] sm:$0xf]
      %v4734 = vld [vmem:[#allocation2 + $0x38] sm:$0xf]
      %v4735 = vld [vmem:[#allocation2 + $0x3c] sm:$0xf]
      %v4736 = vld [vmem:[#allocation2 + $0x40] sm:$0xf]
      %v4737 = vld [vmem:[#allocation2 + $0x44] sm:$0xf]
      %v4738 = vld [vmem:[#allocation2 + $0x48] sm:$0xf]
      %v4739 = vld [vmem:[#allocation2 + $0x4c] sm:$0xf]
      %v4740 = vld [vmem:[#allocation2 + $0x50] sm:$0xf]
      %v4741 = vld [vmem:[#allocation2 + $0x54] sm:$0xf]
      %v4742 = vld [vmem:[#allocation2 + $0x58] sm:$0xf]
      %v4743 = vld [vmem:[#allocation2 + $0x5c] sm:$0xf]
      %v4744 = vld [vmem:[#allocation2 + $0x60] sm:$0xf]
      %v4745 = vld [vmem:[#allocation2 + $0x64] sm:$0xf]
      %v4746 = vld [vmem:[#allocation2 + $0x68] sm:$0xf]
      %v4747 = vld [vmem:[#allocation2 + $0x6c] sm:$0xf]
      %v4748 = vld [vmem:[#allocation2 + $0x70] sm:$0xf]
      %v4749 = vld [vmem:[#allocation2 + $0x74] sm:$0xf]
      %v4750 = vld [vmem:[#allocation2 + $0x78] sm:$0xf]
      %v4751 = vld [vmem:[#allocation2 + $0x7c] sm:$0xf]
      %v4752 = vld [vmem:[#allocation2 + $0x80] sm:$0xf]
      %v4753 = vld [vmem:[#allocation2 + $0x84] sm:$0xf]
      %v4754 = vld [vmem:[#allocation2 + $0x88] sm:$0xf]
      %v4755 = vld [vmem:[#allocation2 + $0x8c] sm:$0xf]
      %v4756 = vld [vmem:[#allocation2 + $0x90] sm:$0x1]
      %s4757 = scalar_lea.vmem %s6, 128
      %v4758 = vld [vmem:[%s4757] sm:$0xf]
      %v4759 = vld [vmem:[%s4757 + $0x4] sm:$0xf]
      %v4760 = vld [vmem:[%s4757 + $0x8] sm:$0xf]
      %v4761 = vld [vmem:[%s4757 + $0xc] sm:$0xf]
      %v4762 = vld [vmem:[%s4757 + $0x10] sm:$0xf]
      %v4763 = vld [vmem:[%s4757 + $0x14] sm:$0xf]
      %v4764 = vld [vmem:[%s4757 + $0x18] sm:$0xf]
      %v4765 = vld [vmem:[%s4757 + $0x1c] sm:$0xf]
      %v4766 = vld [vmem:[%s4757 + $0x20] sm:$0xf]
      %v4767 = vld [vmem:[%s4757 + $0x24] sm:$0xf]
      %v4768 = vld [vmem:[%s4757 + $0x28] sm:$0xf]
      %v4769 = vld [vmem:[%s4757 + $0x2c] sm:$0xf]
      %v4770 = vld [vmem:[%s4757 + $0x30] sm:$0xf]
      %v4771 = vld [vmem:[%s4757 + $0x34] sm:$0xf]
      %v4772 = vld [vmem:[%s4757 + $0x38] sm:$0xf]
      %v4773 = vld [vmem:[%s4757 + $0x3c] sm:$0xf]
      %v4811 = vunpack.c.l.b16 %v4720
      %v4812 = vunpack.c.l.b16 %v4721
      %v4813 = vunpack.c.l.b16 %v4722
      %v4814 = vunpack.c.l.b16 %v4723
      %v4815 = vunpack.c.l.b16 %v4724
      %v4816 = vunpack.c.l.b16 %v4725
      %v4817 = vunpack.c.l.b16 %v4726
      %v4818 = vunpack.c.l.b16 %v4727
      %v4819 = vunpack.c.l.b16 %v4728
      %v4820 = vunpack.c.l.b16 %v4729
      %v4821 = vunpack.c.l.b16 %v4730
      %v4822 = vunpack.c.l.b16 %v4731
      %v4823 = vunpack.c.l.b16 %v4732
      %v4824 = vunpack.c.l.b16 %v4733
      %v4825 = vunpack.c.l.b16 %v4734
      %v4826 = vunpack.c.l.b16 %v4735
      %v4827 = vunpack.c.l.b16 %v4736
      %v4828 = vunpack.c.l.b16 %v4737
      %v4829 = vunpack.c.l.b16 %v4738
      %v4830 = vunpack.c.l.b16 %v4739
      %v4831 = vunpack.c.l.b16 %v4740
      %v4832 = vunpack.c.l.b16 %v4741
      %v4833 = vunpack.c.l.b16 %v4742
      %v4834 = vunpack.c.l.b16 %v4743
      %v4835 = vunpack.c.l.b16 %v4744
      %v4836 = vunpack.c.l.b16 %v4745
      %v4837 = vunpack.c.l.b16 %v4746
      %v4838 = vunpack.c.l.b16 %v4747
      %v4839 = vunpack.c.l.b16 %v4748
      %v4840 = vunpack.c.l.b16 %v4749
      %v4841 = vunpack.c.l.b16 %v4750
      %v4842 = vunpack.c.l.b16 %v4751
      %v4843 = vunpack.c.l.b16 %v4752
      %v4844 = vunpack.c.l.b16 %v4753
      %v4845 = vunpack.c.l.b16 %v4754
      %v4846 = vunpack.c.l.b16 %v4755
      %v4847 = vunpack.c.l.b16 %v4756
      %v4848 = vpack.c.b16 %v4812, %v4811
      %v4849 = vpack.c.b16 %v4814, %v4813
      %v4850 = vpack.c.b16 %v4816, %v4815
      %v4851 = vpack.c.b16 %v4818, %v4817
      %v4852 = vpack.c.b16 %v4820, %v4819
      %v4853 = vpack.c.b16 %v4822, %v4821
      %v4854 = vpack.c.b16 %v4824, %v4823
      %v4855 = vpack.c.b16 %v4826, %v4825
      %v4856 = vpack.c.b16 %v4828, %v4827
      %v4857 = vpack.c.b16 %v4830, %v4829
      %v4858 = vpack.c.b16 %v4832, %v4831
      %v4859 = vpack.c.b16 %v4834, %v4833
      %v4860 = vpack.c.b16 %v4836, %v4835
      %v4861 = vpack.c.b16 %v4838, %v4837
      %v4862 = vpack.c.b16 %v4840, %v4839
      %v4863 = vpack.c.b16 %v4842, %v4841
      %v4864 = vpack.c.b16 %v4844, %v4843
      %v4865 = vpack.c.b16 %v4846, %v4845
      %v4866 = vpack.c.b16 %v4847, %v4847
      %vm4867 = vcmask 1046528
      %v4868 = vrot.slane %v4848, 1
      %v4869 = vrot.slane %v4849, 1
      %v4870 = vsel %vm4867, %v4868, %v4869
      %v4871 = vrot.slane %v4850, 1
      %v4872 = vsel %vm4867, %v4869, %v4871
      %v4873 = vrot.slane %v4851, 1
      %v4874 = vsel %vm4867, %v4871, %v4873
      %v4875 = vrot.slane %v4852, 1
      %v4876 = vsel %vm4867, %v4873, %v4875
      %v4877 = vrot.slane %v4853, 1
      %v4878 = vsel %vm4867, %v4875, %v4877
      %v4879 = vrot.slane %v4854, 1
      %v4880 = vsel %vm4867, %v4877, %v4879
      %v4881 = vrot.slane %v4855, 1
      %v4882 = vsel %vm4867, %v4879, %v4881
      %v4883 = vrot.slane %v4856, 1
      %v4884 = vsel %vm4867, %v4881, %v4883
      %v4885 = vrot.slane %v4857, 1
      %v4886 = vsel %vm4867, %v4883, %v4885
      %v4887 = vrot.slane %v4858, 1
      %v4888 = vsel %vm4867, %v4885, %v4887
      %v4889 = vrot.slane %v4859, 1
      %v4890 = vsel %vm4867, %v4887, %v4889
      %v4891 = vrot.slane %v4860, 1
      %v4892 = vsel %vm4867, %v4889, %v4891
      %v4893 = vrot.slane %v4861, 1
      %v4894 = vsel %vm4867, %v4891, %v4893
      %v4895 = vrot.slane %v4862, 1
      %v4896 = vsel %vm4867, %v4893, %v4895
      %v4897 = vrot.slane %v4863, 1
      %v4898 = vsel %vm4867, %v4895, %v4897
      %v4899 = vrot.slane %v4864, 1
      %v4900 = vsel %vm4867, %v4897, %v4899
      %v4901 = vrot.slane %v4865, 1
      %v4902 = vsel %vm4867, %v4899, %v4901
      %v4903 = vrot.slane %v4866, 1
      %v4904 = vsel %vm4867, %v4901, %v4903
      %v4939 = vunpack.c.l.b16 %v4758
      %v4940 = vunpack.c.l.b16 %v4759
      %v4941 = vunpack.c.l.b16 %v4760
      %v4942 = vunpack.c.l.b16 %v4761
      %v4943 = vunpack.c.l.b16 %v4762
      %v4944 = vunpack.c.l.b16 %v4763
      %v4945 = vunpack.c.l.b16 %v4764
      %v4946 = vunpack.c.l.b16 %v4765
      %v4947 = vunpack.c.l.b16 %v4766
      %v4948 = vunpack.c.l.b16 %v4767
      %v4949 = vunpack.c.l.b16 %v4768
      %v4950 = vunpack.c.l.b16 %v4769
      %v4951 = vunpack.c.l.b16 %v4770
      %v4952 = vunpack.c.l.b16 %v4771
      %v4953 = vunpack.c.l.b16 %v4772
      %v4954 = vunpack.c.l.b16 %v4773
      %v4955 = vpack.c.b16 %v4940, %v4939
      %v4956 = vpack.c.b16 %v4942, %v4941
      %v4957 = vpack.c.b16 %v4944, %v4943
      %v4958 = vpack.c.b16 %v4946, %v4945
      %v4959 = vpack.c.b16 %v4948, %v4947
      %v4960 = vpack.c.b16 %v4950, %v4949
      %v4961 = vpack.c.b16 %v4952, %v4951
      %v4962 = vpack.c.b16 %v4954, %v4953
      %4971 = vmatprep.subr.bf16.mxu0 0
      %4972 = vmatpush1.bf16.msra.mxu0 %v4955
      %4973 = vmatprep.subr.bf16.mxu0 0
      %4974 = vmatpush1.bf16.msra.mxu0 %v4956
      %4975 = vmatprep.subr.bf16.mxu0 0
      %4976 = vmatpush1.bf16.msra.mxu0 %v4957
      %4977 = vmatprep.subr.bf16.mxu0 0
      %4978 = vmatpush1.bf16.msra.mxu0 %v4958
      %4979 = vmatprep.subr.bf16.mxu0 0
      %4980 = vmatpush1.bf16.msra.mxu0 %v4959
      %4981 = vmatprep.subr.bf16.mxu0 0
      %4982 = vmatpush1.bf16.msra.mxu0 %v4960
      %4983 = vmatprep.subr.bf16.mxu0 0
      %4984 = vmatpush1.bf16.msra.mxu0 %v4961
      %4985 = vmatprep.subr.bf16.mxu0 0
      %4986 = vmatpush1.bf16.msra.mxu0 %v4962
      %4987 = vmatprep.subr.bf16.mxu0 0
      %4988 = vmatpush1.bf16.msra.mxu0 0
      %4989 = vmatprep.subr.bf16.mxu0 0
      %4990 = vmatpush1.bf16.msra.mxu0 0
      %4991 = vmatprep.subr.bf16.mxu0 0
      %4992 = vmatpush1.bf16.msra.mxu0 0
      %4993 = vmatprep.subr.bf16.mxu0 0
      %4994 = vmatpush1.bf16.msra.mxu0 0
      %4995 = vmatprep.subr.bf16.mxu0 0
      %4996 = vmatpush1.bf16.msra.mxu0 0
      %4997 = vmatprep.subr.bf16.mxu0 0
      %4998 = vmatpush1.bf16.msra.mxu0 0
      %4999 = vmatprep.subr.bf16.mxu0 0
      %5000 = vmatpush1.bf16.msra.mxu0 0
      %5001 = vmatprep.subr.bf16.mxu0 0
      %5002 = vmatpush1.bf16.msra.mxu0 0
      %5003 = vmatprep.mubr.bf16.mxu0 0
      %5004 = vmatmul.mubr.bf16.gmra.mrb[0].mxu0 %v4870
      %v5005 = vpop.f32.mrb[0].mxu0
      %v5006 = vadd.f32 0.0, %v5005
      %v5007 = vpop.f32.mrb[0].mxu0
      %v5008 = vpop.f32.mrb[0].mxu0
      %v5009 = vadd.f32 0.0, %v5008
      %v5010 = vpop.f32.mrb[0].mxu0
      %5011 = vmatprep.mubr.bf16.mxu0 0
      %5012 = vmatmul.mubr.bf16.gmra.mrb[0].mxu0 %v4872
      %v5013 = vpop.f32.mrb[0].mxu0
      %v5014 = vadd.f32 0.0, %v5013
      %v5015 = vpop.f32.mrb[0].mxu0
      %v5016 = vpop.f32.mrb[0].mxu0
      %v5017 = vadd.f32 0.0, %v5016
      %v5018 = vpop.f32.mrb[0].mxu0
      %5019 = vmatprep.mubr.bf16.mxu0 0
      %5020 = vmatmul.mubr.bf16.gmra.mrb[0].mxu0 %v4874
      %v5021 = vpop.f32.mrb[0].mxu0
      %v5022 = vadd.f32 0.0, %v5021
      %v5023 = vpop.f32.mrb[0].mxu0
      %v5024 = vpop.f32.mrb[0].mxu0
      %v5025 = vadd.f32 0.0, %v5024
      %v5026 = vpop.f32.mrb[0].mxu0
      %5027 = vmatprep.mubr.bf16.mxu0 0
      %5028 = vmatmul.mubr.bf16.gmra.mrb[0].mxu0 %v4876
      %v5029 = vpop.f32.mrb[0].mxu0
      %v5030 = vadd.f32 0.0, %v5029
      %v5031 = vpop.f32.mrb[0].mxu0
      %v5032 = vpop.f32.mrb[0].mxu0
      %v5033 = vadd.f32 0.0, %v5032
      %v5034 = vpop.f32.mrb[0].mxu0
      %5035 = vmatprep.mubr.bf16.mxu0 0
      %5036 = vmatmul.mubr.bf16.gmra.mrb[0].mxu0 %v4878
      %v5037 = vpop.f32.mrb[0].mxu0
      %v5038 = vadd.f32 0.0, %v5037
      %v5039 = vpop.f32.mrb[0].mxu0
      %v5040 = vpop.f32.mrb[0].mxu0
      %v5041 = vadd.f32 0.0, %v5040
      %v5042 = vpop.f32.mrb[0].mxu0
      %5043 = vmatprep.mubr.bf16.mxu0 0
      %5044 = vmatmul.mubr.bf16.gmra.mrb[0].mxu0 %v4880
      %v5045 = vpop.f32.mrb[0].mxu0
      %v5046 = vadd.f32 0.0, %v5045
      %v5047 = vpop.f32.mrb[0].mxu0
      %v5048 = vpop.f32.mrb[0].mxu0
      %v5049 = vadd.f32 0.0, %v5048
      %v5050 = vpop.f32.mrb[0].mxu0
      %5051 = vmatprep.mubr.bf16.mxu0 0
      %5052 = vmatmul.mubr.bf16.gmra.mrb[0].mxu0 %v4882
      %v5053 = vpop.f32.mrb[0].mxu0
      %v5054 = vadd.f32 0.0, %v5053
      %v5055 = vpop.f32.mrb[0].mxu0
      %v5056 = vpop.f32.mrb[0].mxu0
      %v5057 = vadd.f32 0.0, %v5056
      %v5058 = vpop.f32.mrb[0].mxu0
      %5059 = vmatprep.mubr.bf16.mxu0 0
      %5060 = vmatmul.mubr.bf16.gmra.mrb[0].mxu0 %v4884
      %v5061 = vpop.f32.mrb[0].mxu0
      %v5062 = vadd.f32 0.0, %v5061
      %v5063 = vpop.f32.mrb[0].mxu0
      %v5064 = vpop.f32.mrb[0].mxu0
      %v5065 = vadd.f32 0.0, %v5064
      %v5066 = vpop.f32.mrb[0].mxu0
      %5067 = vmatprep.mubr.bf16.mxu0 0
      %5068 = vmatmul.mubr.bf16.gmra.mrb[0].mxu0 %v4886
      %v5069 = vpop.f32.mrb[0].mxu0
      %v5070 = vadd.f32 0.0, %v5069
      %v5071 = vpop.f32.mrb[0].mxu0
      %v5072 = vpop.f32.mrb[0].mxu0
      %v5073 = vadd.f32 0.0, %v5072
      %v5074 = vpop.f32.mrb[0].mxu0
      %5075 = vmatprep.mubr.bf16.mxu0 0
      %5076 = vmatmul.mubr.bf16.gmra.mrb[0].mxu0 %v4888
      %v5077 = vpop.f32.mrb[0].mxu0
      %v5078 = vadd.f32 0.0, %v5077
      %v5079 = vpop.f32.mrb[0].mxu0
      %v5080 = vpop.f32.mrb[0].mxu0
      %v5081 = vadd.f32 0.0, %v5080
      %v5082 = vpop.f32.mrb[0].mxu0
      %5083 = vmatprep.mubr.bf16.mxu0 0
      %5084 = vmatmul.mubr.bf16.gmra.mrb[0].mxu0 %v4890
      %v5085 = vpop.f32.mrb[0].mxu0
      %v5086 = vadd.f32 0.0, %v5085
      %v5087 = vpop.f32.mrb[0].mxu0
      %v5088 = vpop.f32.mrb[0].mxu0
      %v5089 = vadd.f32 0.0, %v5088
      %v5090 = vpop.f32.mrb[0].mxu0
      %5091 = vmatprep.mubr.bf16.mxu0 0
      %5092 = vmatmul.mubr.bf16.gmra.mrb[0].mxu0 %v4892
      %v5093 = vpop.f32.mrb[0].mxu0
      %v5094 = vadd.f32 0.0, %v5093
      %v5095 = vpop.f32.mrb[0].mxu0
      %v5096 = vpop.f32.mrb[0].mxu0
      %v5097 = vadd.f32 0.0, %v5096
      %v5098 = vpop.f32.mrb[0].mxu0
      %5099 = vmatprep.mubr.bf16.mxu0 0
      %5100 = vmatmul.mubr.bf16.gmra.mrb[0].mxu0 %v4894
      %v5101 = vpop.f32.mrb[0].mxu0
      %v5102 = vadd.f32 0.0, %v5101
      %v5103 = vpop.f32.mrb[0].mxu0
      %v5104 = vpop.f32.mrb[0].mxu0
      %v5105 = vadd.f32 0.0, %v5104
      %v5106 = vpop.f32.mrb[0].mxu0
      %5107 = vmatprep.mubr.bf16.mxu0 0
      %5108 = vmatmul.mubr.bf16.gmra.mrb[0].mxu0 %v4896
      %v5109 = vpop.f32.mrb[0].mxu0
      %v5110 = vadd.f32 0.0, %v5109
      %v5111 = vpop.f32.mrb[0].mxu0
      %v5112 = vpop.f32.mrb[0].mxu0
      %v5113 = vadd.f32 0.0, %v5112
      %v5114 = vpop.f32.mrb[0].mxu0
      %5115 = vmatprep.mubr.bf16.mxu0 0
      %5116 = vmatmul.mubr.bf16.gmra.mrb[0].mxu0 %v4898
      %v5117 = vpop.f32.mrb[0].mxu0
      %v5118 = vadd.f32 0.0, %v5117
      %v5119 = vpop.f32.mrb[0].mxu0
      %v5120 = vpop.f32.mrb[0].mxu0
      %v5121 = vadd.f32 0.0, %v5120
      %v5122 = vpop.f32.mrb[0].mxu0
      %5123 = vmatprep.mubr.bf16.mxu0 0
      %5124 = vmatmul.mubr.bf16.gmra.mrb[0].mxu0 %v4900
      %v5125 = vpop.f32.mrb[0].mxu0
      %v5126 = vadd.f32 0.0, %v5125
      %v5127 = vpop.f32.mrb[0].mxu0
      %v5128 = vpop.f32.mrb[0].mxu0
      %v5129 = vadd.f32 0.0, %v5128
      %v5130 = vpop.f32.mrb[0].mxu0
      %5131 = vmatprep.mubr.bf16.mxu0 0
      %5132 = vmatmul.mubr.bf16.gmra.mrb[0].mxu0 %v4902
      %v5133 = vpop.f32.mrb[0].mxu0
      %v5134 = vadd.f32 0.0, %v5133
      %v5135 = vpop.f32.mrb[0].mxu0
      %v5136 = vpop.f32.mrb[0].mxu0
      %v5137 = vadd.f32 0.0, %v5136
      %v5138 = vpop.f32.mrb[0].mxu0
      %5139 = vmatprep.mubr.bf16.mxu0 0
      %5140 = vmatmul.mubr.bf16.gmra.mrb[0].mxu0 %v4904
      %v5141 = vpop.f32.mrb[0].mxu0
      %v5142 = vadd.f32 0.0, %v5141
      %v5143 = vpop.f32.mrb[0].mxu0
      %v5144 = vpop.f32.mrb[0].mxu0
      %v5145 = vadd.f32 0.0, %v5144
      %v5146 = vpop.f32.mrb[0].mxu0
      %5147 = vdwg.mxu0
      %v5148 = vld [vmem:[#allocation3] sm:$0xff]
      %v5149 = vld [vmem:[#allocation3 + $0x8] sm:$0xff]
      %v5150 = vld [vmem:[#allocation3 + $0x10] sm:$0xff]
      %v5151 = vld [vmem:[#allocation3 + $0x18] sm:$0xff]
      %v5152 = vld [vmem:[#allocation3 + $0x20] sm:$0xff]
      %v5153 = vld [vmem:[#allocation3 + $0x28] sm:$0xff]
      %v5154 = vld [vmem:[#allocation3 + $0x30] sm:$0xff]
      %v5155 = vld [vmem:[#allocation3 + $0x38] sm:$0xff]
      %v5156 = vld [vmem:[#allocation3 + $0x40] sm:$0xff]
      %v5157 = vld [vmem:[#allocation3 + $0x48] sm:$0xff]
      %v5158 = vld [vmem:[#allocation3 + $0x50] sm:$0xff]
      %v5159 = vld [vmem:[#allocation3 + $0x58] sm:$0xff]
      %v5160 = vld [vmem:[#allocation3 + $0x60] sm:$0xff]
      %v5161 = vld [vmem:[#allocation3 + $0x68] sm:$0xff]
      %v5162 = vld [vmem:[#allocation3 + $0x70] sm:$0xff]
      %v5163 = vld [vmem:[#allocation3 + $0x78] sm:$0xff]
      %v5164 = vld [vmem:[#allocation3 + $0x80] sm:$0xff]
      %v5165 = vld [vmem:[#allocation3 + $0x88] sm:$0xff]
      %v5166 = vld [vmem:[#allocation3 + $0x90] sm:$0xff]
      %v5167 = vld [vmem:[#allocation3 + $0x98] sm:$0xff]
      %v5168 = vld [vmem:[#allocation3 + $0xa0] sm:$0xff]
      %v5169 = vld [vmem:[#allocation3 + $0xa8] sm:$0xff]
      %v5170 = vld [vmem:[#allocation3 + $0xb0] sm:$0xff]
      %v5171 = vld [vmem:[#allocation3 + $0xb8] sm:$0xff]
      %v5172 = vld [vmem:[#allocation3 + $0xc0] sm:$0xff]
      %v5173 = vld [vmem:[#allocation3 + $0xc8] sm:$0xff]
      %v5174 = vld [vmem:[#allocation3 + $0xd0] sm:$0xff]
      %v5175 = vld [vmem:[#allocation3 + $0xd8] sm:$0xff]
      %v5176 = vld [vmem:[#allocation3 + $0xe0] sm:$0xff]
      %v5177 = vld [vmem:[#allocation3 + $0xe8] sm:$0xff]
      %v5178 = vld [vmem:[#allocation3 + $0xf0] sm:$0xff]
      %v5179 = vld [vmem:[#allocation3 + $0xf8] sm:$0xff]
      %v5180 = vld [vmem:[#allocation3 + $0x100] sm:$0xff]
      %v5181 = vld [vmem:[#allocation3 + $0x108] sm:$0xff]
      %v5182 = vld [vmem:[#allocation3 + $0x110] sm:$0xff]
      %v5183 = vld [vmem:[#allocation3 + $0x118] sm:$0xff]
      %v5184 = vadd.f32 %v5148, %v5006
      %v5185 = vadd.f32 %v5149, %v5009
      %v5186 = vadd.f32 %v5150, %v5014
      %v5187 = vadd.f32 %v5151, %v5017
      %v5188 = vadd.f32 %v5152, %v5022
      %v5189 = vadd.f32 %v5153, %v5025
      %v5190 = vadd.f32 %v5154, %v5030
      %v5191 = vadd.f32 %v5155, %v5033
      %v5192 = vadd.f32 %v5156, %v5038
      %v5193 = vadd.f32 %v5157, %v5041
      %v5194 = vadd.f32 %v5158, %v5046
      %v5195 = vadd.f32 %v5159, %v5049
      %v5196 = vadd.f32 %v5160, %v5054
      %v5197 = vadd.f32 %v5161, %v5057
      %v5198 = vadd.f32 %v5162, %v5062
      %v5199 = vadd.f32 %v5163, %v5065
      %v5200 = vadd.f32 %v5164, %v5070
      %v5201 = vadd.f32 %v5165, %v5073
      %v5202 = vadd.f32 %v5166, %v5078
      %v5203 = vadd.f32 %v5167, %v5081
      %v5204 = vadd.f32 %v5168, %v5086
      %v5205 = vadd.f32 %v5169, %v5089
      %v5206 = vadd.f32 %v5170, %v5094
      %v5207 = vadd.f32 %v5171, %v5097
      %v5208 = vadd.f32 %v5172, %v5102
      %v5209 = vadd.f32 %v5173, %v5105
      %v5210 = vadd.f32 %v5174, %v5110
      %v5211 = vadd.f32 %v5175, %v5113
      %v5212 = vadd.f32 %v5176, %v5118
      %v5213 = vadd.f32 %v5177, %v5121
      %v5214 = vadd.f32 %v5178, %v5126
      %v5215 = vadd.f32 %v5179, %v5129
      %v5216 = vadd.f32 %v5180, %v5134
      %v5217 = vadd.f32 %v5181, %v5137
      %v5218 = vadd.f32 %v5182, %v5142
      %v5219 = vadd.f32 %v5183, %v5145
      %5220 = vst [vmem:[#allocation3] sm:$0xff] %v5184
      %5221 = vst [vmem:[#allocation3 + $0x8] sm:$0xff] %v5185
      %5222 = vst [vmem:[#allocation3 + $0x10] sm:$0xff] %v5186
      %5223 = vst [vmem:[#allocation3 + $0x18] sm:$0xff] %v5187
      %5224 = vst [vmem:[#allocation3 + $0x20] sm:$0xff] %v5188
      %5225 = vst [vmem:[#allocation3 + $0x28] sm:$0xff] %v5189
      %5226 = vst [vmem:[#allocation3 + $0x30] sm:$0xff] %v5190
      %5227 = vst [vmem:[#allocation3 + $0x38] sm:$0xff] %v5191
      %5228 = vst [vmem:[#allocation3 + $0x40] sm:$0xff] %v5192
      %5229 = vst [vmem:[#allocation3 + $0x48] sm:$0xff] %v5193
      %5230 = vst [vmem:[#allocation3 + $0x50] sm:$0xff] %v5194
      %5231 = vst [vmem:[#allocation3 + $0x58] sm:$0xff] %v5195
      %5232 = vst [vmem:[#allocation3 + $0x60] sm:$0xff] %v5196
      %5233 = vst [vmem:[#allocation3 + $0x68] sm:$0xff] %v5197
      %5234 = vst [vmem:[#allocation3 + $0x70] sm:$0xff] %v5198
      %5235 = vst [vmem:[#allocation3 + $0x78] sm:$0xff] %v5199
      %5236 = vst [vmem:[#allocation3 + $0x80] sm:$0xff] %v5200
      %5237 = vst [vmem:[#allocation3 + $0x88] sm:$0xff] %v5201
      %5238 = vst [vmem:[#allocation3 + $0x90] sm:$0xff] %v5202
      %5239 = vst [vmem:[#allocation3 + $0x98] sm:$0xff] %v5203
      %5240 = vst [vmem:[#allocation3 + $0xa0] sm:$0xff] %v5204
      %5241 = vst [vmem:[#allocation3 + $0xa8] sm:$0xff] %v5205
      %5242 = vst [vmem:[#allocation3 + $0xb0] sm:$0xff] %v5206
      %5243 = vst [vmem:[#allocation3 + $0xb8] sm:$0xff] %v5207
      %5244 = vst [vmem:[#allocation3 + $0xc0] sm:$0xff] %v5208
      %5245 = vst [vmem:[#allocation3 + $0xc8] sm:$0xff] %v5209
      %5246 = vst [vmem:[#allocation3 + $0xd0] sm:$0xff] %v5210
      %5247 = vst [vmem:[#allocation3 + $0xd8] sm:$0xff] %v5211
      %5248 = vst [vmem:[#allocation3 + $0xe0] sm:$0xff] %v5212
      %5249 = vst [vmem:[#allocation3 + $0xe8] sm:$0xff] %v5213
      %5250 = vst [vmem:[#allocation3 + $0xf0] sm:$0xff] %v5214
      %5251 = vst [vmem:[#allocation3 + $0xf8] sm:$0xff] %v5215
      %5252 = vst [vmem:[#allocation3 + $0x100] sm:$0xff] %v5216
      %5253 = vst [vmem:[#allocation3 + $0x108] sm:$0xff] %v5217
      %5254 = vst [vmem:[#allocation3 + $0x110] sm:$0xff] %v5218
      %5255 = vst [vmem:[#allocation3 + $0x118] sm:$0xff] %v5219
      %v5256 = vld [vmem:[#allocation2 + $0x8] sm:$0xe]
      %v5257 = vld [vmem:[#allocation2 + $0xc] sm:$0xf]
      %v5258 = vld [vmem:[#allocation2 + $0x10] sm:$0xf]
      %v5259 = vld [vmem:[#allocation2 + $0x14] sm:$0xf]
      %v5260 = vld [vmem:[#allocation2 + $0x18] sm:$0xf]
      %v5261 = vld [vmem:[#allocation2 + $0x1c] sm:$0xf]
      %v5262 = vld [vmem:[#allocation2 + $0x20] sm:$0xf]
      %v5263 = vld [vmem:[#allocation2 + $0x24] sm:$0xf]
      %v5264 = vld [vmem:[#allocation2 + $0x28] sm:$0xf]
      %v5265 = vld [vmem:[#allocation2 + $0x2c] sm:$0xf]
      %v5266 = vld [vmem:[#allocation2 + $0x30] sm:$0xf]
      %v5267 = vld [vmem:[#allocation2 + $0x34] sm:$0xf]
      %v5268 = vld [vmem:[#allocation2 + $0x38] sm:$0xf]
      %v5269 = vld [vmem:[#allocation2 + $0x3c] sm:$0xf]
      %v5270 = vld [vmem:[#allocation2 + $0x40] sm:$0xf]
      %v5271 = vld [vmem:[#allocation2 + $0x44] sm:$0xf]
      %v5272 = vld [vmem:[#allocation2 + $0x48] sm:$0xf]
      %v5273 = vld [vmem:[#allocation2 + $0x4c] sm:$0xf]
      %v5274 = vld [vmem:[#allocation2 + $0x50] sm:$0xf]
      %v5275 = vld [vmem:[#allocation2 + $0x54] sm:$0xf]
      %v5276 = vld [vmem:[#allocation2 + $0x58] sm:$0xf]
      %v5277 = vld [vmem:[#allocation2 + $0x5c] sm:$0xf]
      %v5278 = vld [vmem:[#allocation2 + $0x60] sm:$0xf]
      %v5279 = vld [vmem:[#allocation2 + $0x64] sm:$0xf]
      %v5280 = vld [vmem:[#allocation2 + $0x68] sm:$0xf]
      %v5281 = vld [vmem:[#allocation2 + $0x6c] sm:$0xf]
      %v5282 = vld [vmem:[#allocation2 + $0x70] sm:$0xf]
      %v5283 = vld [vmem:[#allocation2 + $0x74] sm:$0xf]
      %v5284 = vld [vmem:[#allocation2 + $0x78] sm:$0xf]
      %v5285 = vld [vmem:[#allocation2 + $0x7c] sm:$0xf]
      %v5286 = vld [vmem:[#allocation2 + $0x80] sm:$0xf]
      %v5287 = vld [vmem:[#allocation2 + $0x84] sm:$0xf]
      %v5288 = vld [vmem:[#allocation2 + $0x88] sm:$0xf]
      %v5289 = vld [vmem:[#allocation2 + $0x8c] sm:$0xf]
      %v5290 = vld [vmem:[#allocation2 + $0x90] sm:$0xf]
      %v5291 = vld [vmem:[#allocation2 + $0x94] sm:$0xf]
      %v5292 = vld [vmem:[#allocation2 + $0x98] sm:$0x1]
      %s5293 = scalar_lea.vmem %s6, 192
      %v5294 = vld [vmem:[%s5293] sm:$0xf]
      %v5295 = vld [vmem:[%s5293 + $0x4] sm:$0xf]
      %v5296 = vld [vmem:[%s5293 + $0x8] sm:$0xf]
      %v5297 = vld [vmem:[%s5293 + $0xc] sm:$0xf]
      %v5298 = vld [vmem:[%s5293 + $0x10] sm:$0xf]
      %v5299 = vld [vmem:[%s5293 + $0x14] sm:$0xf]
      %v5300 = vld [vmem:[%s5293 + $0x18] sm:$0xf]
      %v5301 = vld [vmem:[%s5293 + $0x1c] sm:$0xf]
      %v5302 = vld [vmem:[%s5293 + $0x20] sm:$0xf]
      %v5303 = vld [vmem:[%s5293 + $0x24] sm:$0xf]
      %v5304 = vld [vmem:[%s5293 + $0x28] sm:$0xf]
      %v5305 = vld [vmem:[%s5293 + $0x2c] sm:$0xf]
      %v5306 = vld [vmem:[%s5293 + $0x30] sm:$0xf]
      %v5307 = vld [vmem:[%s5293 + $0x34] sm:$0xf]
      %v5308 = vld [vmem:[%s5293 + $0x38] sm:$0xf]
      %v5309 = vld [vmem:[%s5293 + $0x3c] sm:$0xf]
      %v5347 = vunpack.c.l.b16 %v5256
      %v5348 = vunpack.c.l.b16 %v5257
      %v5349 = vunpack.c.l.b16 %v5258
      %v5350 = vunpack.c.l.b16 %v5259
      %v5351 = vunpack.c.l.b16 %v5260
      %v5352 = vunpack.c.l.b16 %v5261
      %v5353 = vunpack.c.l.b16 %v5262
      %v5354 = vunpack.c.l.b16 %v5263
      %v5355 = vunpack.c.l.b16 %v5264
      %v5356 = vunpack.c.l.b16 %v5265
      %v5357 = vunpack.c.l.b16 %v5266
      %v5358 = vunpack.c.l.b16 %v5267
      %v5359 = vunpack.c.l.b16 %v5268
      %v5360 = vunpack.c.l.b16 %v5269
      %v5361 = vunpack.c.l.b16 %v5270
      %v5362 = vunpack.c.l.b16 %v5271
      %v5363 = vunpack.c.l.b16 %v5272
      %v5364 = vunpack.c.l.b16 %v5273
      %v5365 = vunpack.c.l.b16 %v5274
      %v5366 = vunpack.c.l.b16 %v5275
      %v5367 = vunpack.c.l.b16 %v5276
      %v5368 = vunpack.c.l.b16 %v5277
      %v5369 = vunpack.c.l.b16 %v5278
      %v5370 = vunpack.c.l.b16 %v5279
      %v5371 = vunpack.c.l.b16 %v5280
      %v5372 = vunpack.c.l.b16 %v5281
      %v5373 = vunpack.c.l.b16 %v5282
      %v5374 = vunpack.c.l.b16 %v5283
      %v5375 = vunpack.c.l.b16 %v5284
      %v5376 = vunpack.c.l.b16 %v5285
      %v5377 = vunpack.c.l.b16 %v5286
      %v5378 = vunpack.c.l.b16 %v5287
      %v5379 = vunpack.c.l.b16 %v5288
      %v5380 = vunpack.c.l.b16 %v5289
      %v5381 = vunpack.c.l.b16 %v5290
      %v5382 = vunpack.c.l.b16 %v5291
      %v5383 = vunpack.c.l.b16 %v5292
      %v5384 = vpack.c.b16 %v5348, %v5347
      %v5385 = vpack.c.b16 %v5350, %v5349
      %v5386 = vpack.c.b16 %v5352, %v5351
      %v5387 = vpack.c.b16 %v5354, %v5353
      %v5388 = vpack.c.b16 %v5356, %v5355
      %v5389 = vpack.c.b16 %v5358, %v5357
      %v5390 = vpack.c.b16 %v5360, %v5359
      %v5391 = vpack.c.b16 %v5362, %v5361
      %v5392 = vpack.c.b16 %v5364, %v5363
      %v5393 = vpack.c.b16 %v5366, %v5365
      %v5394 = vpack.c.b16 %v5368, %v5367
      %v5395 = vpack.c.b16 %v5370, %v5369
      %v5396 = vpack.c.b16 %v5372, %v5371
      %v5397 = vpack.c.b16 %v5374, %v5373
      %v5398 = vpack.c.b16 %v5376, %v5375
      %v5399 = vpack.c.b16 %v5378, %v5377
      %v5400 = vpack.c.b16 %v5380, %v5379
      %v5401 = vpack.c.b16 %v5382, %v5381
      %v5402 = vpack.c.b16 %v5383, %v5383
      %v5403 = vrot.slane %v5384, 1
      %v5404 = vrot.slane %v5385, 1
      %v5405 = vsel %vm4867, %v5403, %v5404
      %v5406 = vrot.slane %v5386, 1
      %v5407 = vsel %vm4867, %v5404, %v5406
      %v5408 = vrot.slane %v5387, 1
      %v5409 = vsel %vm4867, %v5406, %v5408
      %v5410 = vrot.slane %v5388, 1
      %v5411 = vsel %vm4867, %v5408, %v5410
      %v5412 = vrot.slane %v5389, 1
      %v5413 = vsel %vm4867, %v5410, %v5412
      %v5414 = vrot.slane %v5390, 1
      %v5415 = vsel %vm4867, %v5412, %v5414
      %v5416 = vrot.slane %v5391, 1
      %v5417 = vsel %vm4867, %v5414, %v5416
      %v5418 = vrot.slane %v5392, 1
      %v5419 = vsel %vm4867, %v5416, %v5418
      %v5420 = vrot.slane %v5393, 1
      %v5421 = vsel %vm4867, %v5418, %v5420
      %v5422 = vrot.slane %v5394, 1
      %v5423 = vsel %vm4867, %v5420, %v5422
      %v5424 = vrot.slane %v5395, 1
      %v5425 = vsel %vm4867, %v5422, %v5424
      %v5426 = vrot.slane %v5396, 1
      %v5427 = vsel %vm4867, %v5424, %v5426
      %v5428 = vrot.slane %v5397, 1
      %v5429 = vsel %vm4867, %v5426, %v5428
      %v5430 = vrot.slane %v5398, 1
      %v5431 = vsel %vm4867, %v5428, %v5430
      %v5432 = vrot.slane %v5399, 1
      %v5433 = vsel %vm4867, %v5430, %v5432
      %v5434 = vrot.slane %v5400, 1
      %v5435 = vsel %vm4867, %v5432, %v5434
      %v5436 = vrot.slane %v5401, 1
      %v5437 = vsel %vm4867, %v5434, %v5436
      %v5438 = vrot.slane %v5402, 1
      %v5439 = vsel %vm4867, %v5436, %v5438
      %v5474 = vunpack.c.l.b16 %v5294
      %v5475 = vunpack.c.l.b16 %v5295
      %v5476 = vunpack.c.l.b16 %v5296
      %v5477 = vunpack.c.l.b16 %v5297
      %v5478 = vunpack.c.l.b16 %v5298
      %v5479 = vunpack.c.l.b16 %v5299
      %v5480 = vunpack.c.l.b16 %v5300
      %v5481 = vunpack.c.l.b16 %v5301
      %v5482 = vunpack.c.l.b16 %v5302
      %v5483 = vunpack.c.l.b16 %v5303
      %v5484 = vunpack.c.l.b16 %v5304
      %v5485 = vunpack.c.l.b16 %v5305
      %v5486 = vunpack.c.l.b16 %v5306
      %v5487 = vunpack.c.l.b16 %v5307
      %v5488 = vunpack.c.l.b16 %v5308
      %v5489 = vunpack.c.l.b16 %v5309
      %v5490 = vpack.c.b16 %v5475, %v5474
      %v5491 = vpack.c.b16 %v5477, %v5476
      %v5492 = vpack.c.b16 %v5479, %v5478
      %v5493 = vpack.c.b16 %v5481, %v5480
      %v5494 = vpack.c.b16 %v5483, %v5482
      %v5495 = vpack.c.b16 %v5485, %v5484
      %v5496 = vpack.c.b16 %v5487, %v5486
      %v5497 = vpack.c.b16 %v5489, %v5488
      %5506 = vmatprep.subr.bf16.mxu0 0
      %5507 = vmatpush1.bf16.msra.mxu0 %v5490
      %5508 = vmatprep.subr.bf16.mxu0 0
      %5509 = vmatpush1.bf16.msra.mxu0 %v5491
      %5510 = vmatprep.subr.bf16.mxu0 0
      %5511 = vmatpush1.bf16.msra.mxu0 %v5492
      %5512 = vmatprep.subr.bf16.mxu0 0
      %5513 = vmatpush1.bf16.msra.mxu0 %v5493
      %5514 = vmatprep.subr.bf16.mxu0 0
      %5515 = vmatpush1.bf16.msra.mxu0 %v5494
      %5516 = vmatprep.subr.bf16.mxu0 0
      %5517 = vmatpush1.bf16.msra.mxu0 %v5495
      %5518 = vmatprep.subr.bf16.mxu0 0
      %5519 = vmatpush1.bf16.msra.mxu0 %v5496
      %5520 = vmatprep.subr.bf16.mxu0 0
      %5521 = vmatpush1.bf16.msra.mxu0 %v5497
      %5522 = vmatprep.subr.bf16.mxu0 0
      %5523 = vmatpush1.bf16.msra.mxu0 0
      %5524 = vmatprep.subr.bf16.mxu0 0
      %5525 = vmatpush1.bf16.msra.mxu0 0
      %5526 = vmatprep.subr.bf16.mxu0 0
      %5527 = vmatpush1.bf16.msra.mxu0 0
      %5528 = vmatprep.subr.bf16.mxu0 0
      %5529 = vmatpush1.bf16.msra.mxu0 0
      %5530 = vmatprep.subr.bf16.mxu0 0
      %5531 = vmatpush1.bf16.msra.mxu0 0
      %5532 = vmatprep.subr.bf16.mxu0 0
      %5533 = vmatpush1.bf16.msra.mxu0 0
      %5534 = vmatprep.subr.bf16.mxu0 0
      %5535 = vmatpush1.bf16.msra.mxu0 0
      %5536 = vmatprep.subr.bf16.mxu0 0
      %5537 = vmatpush1.bf16.msra.mxu0 0
      %5538 = vmatprep.mubr.bf16.mxu0 0
      %5539 = vmatmul.mubr.bf16.gmra.mrb[0].mxu0 %v5405
      %v5540 = vpop.f32.mrb[0].mxu0
      %v5541 = vadd.f32 0.0, %v5540
      %v5542 = vpop.f32.mrb[0].mxu0
      %v5543 = vpop.f32.mrb[0].mxu0
      %v5544 = vadd.f32 0.0, %v5543
      %v5545 = vpop.f32.mrb[0].mxu0
      %5546 = vmatprep.mubr.bf16.mxu0 0
      %5547 = vmatmul.mubr.bf16.gmra.mrb[0].mxu0 %v5407
      %v5548 = vpop.f32.mrb[0].mxu0
      %v5549 = vadd.f32 0.0, %v5548
      %v5550 = vpop.f32.mrb[0].mxu0
      %v5551 = vpop.f32.mrb[0].mxu0
      %v5552 = vadd.f32 0.0, %v5551
      %v5553 = vpop.f32.mrb[0].mxu0
      %5554 = vmatprep.mubr.bf16.mxu0 0
      %5555 = vmatmul.mubr.bf16.gmra.mrb[0].mxu0 %v5409
      %v5556 = vpop.f32.mrb[0].mxu0
      %v5557 = vadd.f32 0.0, %v5556
      %v5558 = vpop.f32.mrb[0].mxu0
      %v5559 = vpop.f32.mrb[0].mxu0
      %v5560 = vadd.f32 0.0, %v5559
      %v5561 = vpop.f32.mrb[0].mxu0
      %5562 = vmatprep.mubr.bf16.mxu0 0
      %5563 = vmatmul.mubr.bf16.gmra.mrb[0].mxu0 %v5411
      %v5564 = vpop.f32.mrb[0].mxu0
      %v5565 = vadd.f32 0.0, %v5564
      %v5566 = vpop.f32.mrb[0].mxu0
      %v5567 = vpop.f32.mrb[0].mxu0
      %v5568 = vadd.f32 0.0, %v5567
      %v5569 = vpop.f32.mrb[0].mxu0
      %5570 = vmatprep.mubr.bf16.mxu0 0
      %5571 = vmatmul.mubr.bf16.gmra.mrb[0].mxu0 %v5413
      %v5572 = vpop.f32.mrb[0].mxu0
      %v5573 = vadd.f32 0.0, %v5572
      %v5574 = vpop.f32.mrb[0].mxu0
      %v5575 = vpop.f32.mrb[0].mxu0
      %v5576 = vadd.f32 0.0, %v5575
      %v5577 = vpop.f32.mrb[0].mxu0
      %5578 = vmatprep.mubr.bf16.mxu0 0
      %5579 = vmatmul.mubr.bf16.gmra.mrb[0].mxu0 %v5415
      %v5580 = vpop.f32.mrb[0].mxu0
      %v5581 = vadd.f32 0.0, %v5580
      %v5582 = vpop.f32.mrb[0].mxu0
      %v5583 = vpop.f32.mrb[0].mxu0
      %v5584 = vadd.f32 0.0, %v5583
      %v5585 = vpop.f32.mrb[0].mxu0
      %5586 = vmatprep.mubr.bf16.mxu0 0
      %5587 = vmatmul.mubr.bf16.gmra.mrb[0].mxu0 %v5417
      %v5588 = vpop.f32.mrb[0].mxu0
      %v5589 = vadd.f32 0.0, %v5588
      %v5590 = vpop.f32.mrb[0].mxu0
      %v5591 = vpop.f32.mrb[0].mxu0
      %v5592 = vadd.f32 0.0, %v5591
      %v5593 = vpop.f32.mrb[0].mxu0
      %5594 = vmatprep.mubr.bf16.mxu0 0
      %5595 = vmatmul.mubr.bf16.gmra.mrb[0].mxu0 %v5419
      %v5596 = vpop.f32.mrb[0].mxu0
      %v5597 = vadd.f32 0.0, %v5596
      %v5598 = vpop.f32.mrb[0].mxu0
      %v5599 = vpop.f32.mrb[0].mxu0
      %v5600 = vadd.f32 0.0, %v5599
      %v5601 = vpop.f32.mrb[0].mxu0
      %5602 = vmatprep.mubr.bf16.mxu0 0
      %5603 = vmatmul.mubr.bf16.gmra.mrb[0].mxu0 %v5421
      %v5604 = vpop.f32.mrb[0].mxu0
      %v5605 = vadd.f32 0.0, %v5604
      %v5606 = vpop.f32.mrb[0].mxu0
      %v5607 = vpop.f32.mrb[0].mxu0
      %v5608 = vadd.f32 0.0, %v5607
      %v5609 = vpop.f32.mrb[0].mxu0
      %5610 = vmatprep.mubr.bf16.mxu0 0
      %5611 = vmatmul.mubr.bf16.gmra.mrb[0].mxu0 %v5423
      %v5612 = vpop.f32.mrb[0].mxu0
      %v5613 = vadd.f32 0.0, %v5612
      %v5614 = vpop.f32.mrb[0].mxu0
      %v5615 = vpop.f32.mrb[0].mxu0
      %v5616 = vadd.f32 0.0, %v5615
      %v5617 = vpop.f32.mrb[0].mxu0
      %5618 = vmatprep.mubr.bf16.mxu0 0
      %5619 = vmatmul.mubr.bf16.gmra.mrb[0].mxu0 %v5425
      %v5620 = vpop.f32.mrb[0].mxu0
      %v5621 = vadd.f32 0.0, %v5620
      %v5622 = vpop.f32.mrb[0].mxu0
      %v5623 = vpop.f32.mrb[0].mxu0
      %v5624 = vadd.f32 0.0, %v5623
      %v5625 = vpop.f32.mrb[0].mxu0
      %5626 = vmatprep.mubr.bf16.mxu0 0
      %5627 = vmatmul.mubr.bf16.gmra.mrb[0].mxu0 %v5427
      %v5628 = vpop.f32.mrb[0].mxu0
      %v5629 = vadd.f32 0.0, %v5628
      %v5630 = vpop.f32.mrb[0].mxu0
      %v5631 = vpop.f32.mrb[0].mxu0
      %v5632 = vadd.f32 0.0, %v5631
      %v5633 = vpop.f32.mrb[0].mxu0
      %5634 = vmatprep.mubr.bf16.mxu0 0
      %5635 = vmatmul.mubr.bf16.gmra.mrb[0].mxu0 %v5429
      %v5636 = vpop.f32.mrb[0].mxu0
      %v5637 = vadd.f32 0.0, %v5636
      %v5638 = vpop.f32.mrb[0].mxu0
      %v5639 = vpop.f32.mrb[0].mxu0
      %v5640 = vadd.f32 0.0, %v5639
      %v5641 = vpop.f32.mrb[0].mxu0
      %5642 = vmatprep.mubr.bf16.mxu0 0
      %5643 = vmatmul.mubr.bf16.gmra.mrb[0].mxu0 %v5431
      %v5644 = vpop.f32.mrb[0].mxu0
      %v5645 = vadd.f32 0.0, %v5644
      %v5646 = vpop.f32.mrb[0].mxu0
      %v5647 = vpop.f32.mrb[0].mxu0
      %v5648 = vadd.f32 0.0, %v5647
      %v5649 = vpop.f32.mrb[0].mxu0
      %5650 = vmatprep.mubr.bf16.mxu0 0
      %5651 = vmatmul.mubr.bf16.gmra.mrb[0].mxu0 %v5433
      %v5652 = vpop.f32.mrb[0].mxu0
      %v5653 = vadd.f32 0.0, %v5652
      %v5654 = vpop.f32.mrb[0].mxu0
      %v5655 = vpop.f32.mrb[0].mxu0
      %v5656 = vadd.f32 0.0, %v5655
      %v5657 = vpop.f32.mrb[0].mxu0
      %5658 = vmatprep.mubr.bf16.mxu0 0
      %5659 = vmatmul.mubr.bf16.gmra.mrb[0].mxu0 %v5435
      %v5660 = vpop.f32.mrb[0].mxu0
      %v5661 = vadd.f32 0.0, %v5660
      %v5662 = vpop.f32.mrb[0].mxu0
      %v5663 = vpop.f32.mrb[0].mxu0
      %v5664 = vadd.f32 0.0, %v5663
      %v5665 = vpop.f32.mrb[0].mxu0
      %5666 = vmatprep.mubr.bf16.mxu0 0
      %5667 = vmatmul.mubr.bf16.gmra.mrb[0].mxu0 %v5437
      %v5668 = vpop.f32.mrb[0].mxu0
      %v5669 = vadd.f32 0.0, %v5668
      %v5670 = vpop.f32.mrb[0].mxu0
      %v5671 = vpop.f32.mrb[0].mxu0
      %v5672 = vadd.f32 0.0, %v5671
      %v5673 = vpop.f32.mrb[0].mxu0
      %5674 = vmatprep.mubr.bf16.mxu0 0
      %5675 = vmatmul.mubr.bf16.gmra.mrb[0].mxu0 %v5439
      %v5676 = vpop.f32.mrb[0].mxu0
      %v5677 = vadd.f32 0.0, %v5676
      %v5678 = vpop.f32.mrb[0].mxu0
      %v5679 = vpop.f32.mrb[0].mxu0
      %v5680 = vadd.f32 0.0, %v5679
      %v5681 = vpop.f32.mrb[0].mxu0
      %5682 = vdwg.mxu0
      %v5683 = vld [vmem:[#allocation3] sm:$0xff]
      %v5684 = vld [vmem:[#allocation3 + $0x8] sm:$0xff]
      %v5685 = vld [vmem:[#allocation3 + $0x10] sm:$0xff]
      %v5686 = vld [vmem:[#allocation3 + $0x18] sm:$0xff]
      %v5687 = vld [vmem:[#allocation3 + $0x20] sm:$0xff]
      %v5688 = vld [vmem:[#allocation3 + $0x28] sm:$0xff]
      %v5689 = vld [vmem:[#allocation3 + $0x30] sm:$0xff]
      %v5690 = vld [vmem:[#allocation3 + $0x38] sm:$0xff]
      %v5691 = vld [vmem:[#allocation3 + $0x40] sm:$0xff]
      %v5692 = vld [vmem:[#allocation3 + $0x48] sm:$0xff]
      %v5693 = vld [vmem:[#allocation3 + $0x50] sm:$0xff]
      %v5694 = vld [vmem:[#allocation3 + $0x58] sm:$0xff]
      %v5695 = vld [vmem:[#allocation3 + $0x60] sm:$0xff]
      %v5696 = vld [vmem:[#allocation3 + $0x68] sm:$0xff]
      %v5697 = vld [vmem:[#allocation3 + $0x70] sm:$0xff]
      %v5698 = vld [vmem:[#allocation3 + $0x78] sm:$0xff]
      %v5699 = vld [vmem:[#allocation3 + $0x80] sm:$0xff]
      %v5700 = vld [vmem:[#allocation3 + $0x88] sm:$0xff]
      %v5701 = vld [vmem:[#allocation3 + $0x90] sm:$0xff]
      %v5702 = vld [vmem:[#allocation3 + $0x98] sm:$0xff]
      %v5703 = vld [vmem:[#allocation3 + $0xa0] sm:$0xff]
      %v5704 = vld [vmem:[#allocation3 + $0xa8] sm:$0xff]
      %v5705 = vld [vmem:[#allocation3 + $0xb0] sm:$0xff]
      %v5706 = vld [vmem:[#allocation3 + $0xb8] sm:$0xff]
      %v5707 = vld [vmem:[#allocation3 + $0xc0] sm:$0xff]
      %v5708 = vld [vmem:[#allocation3 + $0xc8] sm:$0xff]
      %v5709 = vld [vmem:[#allocation3 + $0xd0] sm:$0xff]
      %v5710 = vld [vmem:[#allocation3 + $0xd8] sm:$0xff]
      %v5711 = vld [vmem:[#allocation3 + $0xe0] sm:$0xff]
      %v5712 = vld [vmem:[#allocation3 + $0xe8] sm:$0xff]
      %v5713 = vld [vmem:[#allocation3 + $0xf0] sm:$0xff]
      %v5714 = vld [vmem:[#allocation3 + $0xf8] sm:$0xff]
      %v5715 = vld [vmem:[#allocation3 + $0x100] sm:$0xff]
      %v5716 = vld [vmem:[#allocation3 + $0x108] sm:$0xff]
      %v5717 = vld [vmem:[#allocation3 + $0x110] sm:$0xff]
      %v5718 = vld [vmem:[#allocation3 + $0x118] sm:$0xff]
      %v5719 = vadd.f32 %v5683, %v5541
      %v5720 = vadd.f32 %v5684, %v5544
      %v5721 = vadd.f32 %v5685, %v5549
      %v5722 = vadd.f32 %v5686, %v5552
      %v5723 = vadd.f32 %v5687, %v5557
      %v5724 = vadd.f32 %v5688, %v5560
      %v5725 = vadd.f32 %v5689, %v5565
      %v5726 = vadd.f32 %v5690, %v5568
      %v5727 = vadd.f32 %v5691, %v5573
      %v5728 = vadd.f32 %v5692, %v5576
      %v5729 = vadd.f32 %v5693, %v5581
      %v5730 = vadd.f32 %v5694, %v5584
      %v5731 = vadd.f32 %v5695, %v5589
      %v5732 = vadd.f32 %v5696, %v5592
      %v5733 = vadd.f32 %v5697, %v5597
      %v5734 = vadd.f32 %v5698, %v5600
      %v5735 = vadd.f32 %v5699, %v5605
      %v5736 = vadd.f32 %v5700, %v5608
      %v5737 = vadd.f32 %v5701, %v5613
      %v5738 = vadd.f32 %v5702, %v5616
      %v5739 = vadd.f32 %v5703, %v5621
      %v5740 = vadd.f32 %v5704, %v5624
      %v5741 = vadd.f32 %v5705, %v5629
      %v5742 = vadd.f32 %v5706, %v5632
      %v5743 = vadd.f32 %v5707, %v5637
      %v5744 = vadd.f32 %v5708, %v5640
      %v5745 = vadd.f32 %v5709, %v5645
      %v5746 = vadd.f32 %v5710, %v5648
      %v5747 = vadd.f32 %v5711, %v5653
      %v5748 = vadd.f32 %v5712, %v5656
      %v5749 = vadd.f32 %v5713, %v5661
      %v5750 = vadd.f32 %v5714, %v5664
      %v5751 = vadd.f32 %v5715, %v5669
      %v5752 = vadd.f32 %v5716, %v5672
      %v5753 = vadd.f32 %v5717, %v5677
      %v5754 = vadd.f32 %v5718, %v5680
      %5755 = vst [vmem:[#allocation3] sm:$0xff] %v5719
      %5756 = vst [vmem:[#allocation3 + $0x8] sm:$0xff] %v5720
      %5757 = vst [vmem:[#allocation3 + $0x10] sm:$0xff] %v5721
      %5758 = vst [vmem:[#allocation3 + $0x18] sm:$0xff] %v5722
      %5759 = vst [vmem:[#allocation3 + $0x20] sm:$0xff] %v5723
      %5760 = vst [vmem:[#allocation3 + $0x28] sm:$0xff] %v5724
      %5761 = vst [vmem:[#allocation3 + $0x30] sm:$0xff] %v5725
      %5762 = vst [vmem:[#allocation3 + $0x38] sm:$0xff] %v5726
      %5763 = vst [vmem:[#allocation3 + $0x40] sm:$0xff] %v5727
      %5764 = vst [vmem:[#allocation3 + $0x48] sm:$0xff] %v5728
      %5765 = vst [vmem:[#allocation3 + $0x50] sm:$0xff] %v5729
      %5766 = vst [vmem:[#allocation3 + $0x58] sm:$0xff] %v5730
      %5767 = vst [vmem:[#allocation3 + $0x60] sm:$0xff] %v5731
      %5768 = vst [vmem:[#allocation3 + $0x68] sm:$0xff] %v5732
      %5769 = vst [vmem:[#allocation3 + $0x70] sm:$0xff] %v5733
      %5770 = vst [vmem:[#allocation3 + $0x78] sm:$0xff] %v5734
      %5771 = vst [vmem:[#allocation3 + $0x80] sm:$0xff] %v5735
      %5772 = vst [vmem:[#allocation3 + $0x88] sm:$0xff] %v5736
      %5773 = vst [vmem:[#allocation3 + $0x90] sm:$0xff] %v5737
      %5774 = vst [vmem:[#allocation3 + $0x98] sm:$0xff] %v5738
      %5775 = vst [vmem:[#allocation3 + $0xa0] sm:$0xff] %v5739
      %5776 = vst [vmem:[#allocation3 + $0xa8] sm:$0xff] %v5740
      %5777 = vst [vmem:[#allocation3 + $0xb0] sm:$0xff] %v5741
      %5778 = vst [vmem:[#allocation3 + $0xb8] sm:$0xff] %v5742
      %5779 = vst [vmem:[#allocation3 + $0xc0] sm:$0xff] %v5743
      %5780 = vst [vmem:[#allocation3 + $0xc8] sm:$0xff] %v5744
      %5781 = vst [vmem:[#allocation3 + $0xd0] sm:$0xff] %v5745
      %5782 = vst [vmem:[#allocation3 + $0xd8] sm:$0xff] %v5746
      %5783 = vst [vmem:[#allocation3 + $0xe0] sm:$0xff] %v5747
      %5784 = vst [vmem:[#allocation3 + $0xe8] sm:$0xff] %v5748
      %5785 = vst [vmem:[#allocation3 + $0xf0] sm:$0xff] %v5749
      %5786 = vst [vmem:[#allocation3 + $0xf8] sm:$0xff] %v5750
      %5787 = vst [vmem:[#allocation3 + $0x100] sm:$0xff] %v5751
      %5788 = vst [vmem:[#allocation3 + $0x108] sm:$0xff] %v5752
      %5789 = vst [vmem:[#allocation3 + $0x110] sm:$0xff] %v5753
      %5790 = vst [vmem:[#allocation3 + $0x118] sm:$0xff] %v5754
      %v5791 = vld [vmem:[#allocation2 + $0x8] sm:$0xe]
      %v5792 = vld [vmem:[#allocation2 + $0xc] sm:$0xf]
      %v5793 = vld [vmem:[#allocation2 + $0x10] sm:$0xf]
      %v5794 = vld [vmem:[#allocation2 + $0x14] sm:$0xf]
      %v5795 = vld [vmem:[#allocation2 + $0x18] sm:$0xf]
      %v5796 = vld [vmem:[#allocation2 + $0x1c] sm:$0xf]
      %v5797 = vld [vmem:[#allocation2 + $0x20] sm:$0xf]
      %v5798 = vld [vmem:[#allocation2 + $0x24] sm:$0xf]
      %v5799 = vld [vmem:[#allocation2 + $0x28] sm:$0xf]
      %v5800 = vld [vmem:[#allocation2 + $0x2c] sm:$0xf]
      %v5801 = vld [vmem:[#allocation2 + $0x30] sm:$0xf]
      %v5802 = vld [vmem:[#allocation2 + $0x34] sm:$0xf]
      %v5803 = vld [vmem:[#allocation2 + $0x38] sm:$0xf]
      %v5804 = vld [vmem:[#allocation2 + $0x3c] sm:$0xf]
      %v5805 = vld [vmem:[#allocation2 + $0x40] sm:$0xf]
      %v5806 = vld [vmem:[#allocation2 + $0x44] sm:$0xf]
      %v5807 = vld [vmem:[#allocation2 + $0x48] sm:$0xf]
      %v5808 = vld [vmem:[#allocation2 + $0x4c] sm:$0xf]
      %v5809 = vld [vmem:[#allocation2 + $0x50] sm:$0xf]
      %v5810 = vld [vmem:[#allocation2 + $0x54] sm:$0xf]
      %v5811 = vld [vmem:[#allocation2 + $0x58] sm:$0xf]
      %v5812 = vld [vmem:[#allocation2 + $0x5c] sm:$0xf]
      %v5813 = vld [vmem:[#allocation2 + $0x60] sm:$0xf]
      %v5814 = vld [vmem:[#allocation2 + $0x64] sm:$0xf]
      %v5815 = vld [vmem:[#allocation2 + $0x68] sm:$0xf]
      %v5816 = vld [vmem:[#allocation2 + $0x6c] sm:$0xf]
      %v5817 = vld [vmem:[#allocation2 + $0x70] sm:$0xf]
      %v5818 = vld [vmem:[#allocation2 + $0x74] sm:$0xf]
      %v5819 = vld [vmem:[#allocation2 + $0x78] sm:$0xf]
      %v5820 = vld [vmem:[#allocation2 + $0x7c] sm:$0xf]
      %v5821 = vld [vmem:[#allocation2 + $0x80] sm:$0xf]
      %v5822 = vld [vmem:[#allocation2 + $0x84] sm:$0xf]
      %v5823 = vld [vmem:[#allocation2 + $0x88] sm:$0xf]
      %v5824 = vld [vmem:[#allocation2 + $0x8c] sm:$0xf]
      %v5825 = vld [vmem:[#allocation2 + $0x90] sm:$0xf]
      %v5826 = vld [vmem:[#allocation2 + $0x94] sm:$0xf]
      %v5827 = vld [vmem:[#allocation2 + $0x98] sm:$0x3]
      %s5828 = scalar_lea.vmem %s6, 256
      %v5829 = vld [vmem:[%s5828] sm:$0xf]
      %v5830 = vld [vmem:[%s5828 + $0x4] sm:$0xf]
      %v5831 = vld [vmem:[%s5828 + $0x8] sm:$0xf]
      %v5832 = vld [vmem:[%s5828 + $0xc] sm:$0xf]
      %v5833 = vld [vmem:[%s5828 + $0x10] sm:$0xf]
      %v5834 = vld [vmem:[%s5828 + $0x14] sm:$0xf]
      %v5835 = vld [vmem:[%s5828 + $0x18] sm:$0xf]
      %v5836 = vld [vmem:[%s5828 + $0x1c] sm:$0xf]
      %v5837 = vld [vmem:[%s5828 + $0x20] sm:$0xf]
      %v5838 = vld [vmem:[%s5828 + $0x24] sm:$0xf]
      %v5839 = vld [vmem:[%s5828 + $0x28] sm:$0xf]
      %v5840 = vld [vmem:[%s5828 + $0x2c] sm:$0xf]
      %v5841 = vld [vmem:[%s5828 + $0x30] sm:$0xf]
      %v5842 = vld [vmem:[%s5828 + $0x34] sm:$0xf]
      %v5843 = vld [vmem:[%s5828 + $0x38] sm:$0xf]
      %v5844 = vld [vmem:[%s5828 + $0x3c] sm:$0xf]
      %v5882 = vunpack.c.l.b16 %v5791
      %v5883 = vunpack.c.l.b16 %v5792
      %v5884 = vunpack.c.l.b16 %v5793
      %v5885 = vunpack.c.l.b16 %v5794
      %v5886 = vunpack.c.l.b16 %v5795
      %v5887 = vunpack.c.l.b16 %v5796
      %v5888 = vunpack.c.l.b16 %v5797
      %v5889 = vunpack.c.l.b16 %v5798
      %v5890 = vunpack.c.l.b16 %v5799
      %v5891 = vunpack.c.l.b16 %v5800
      %v5892 = vunpack.c.l.b16 %v5801
      %v5893 = vunpack.c.l.b16 %v5802
      %v5894 = vunpack.c.l.b16 %v5803
      %v5895 = vunpack.c.l.b16 %v5804
      %v5896 = vunpack.c.l.b16 %v5805
      %v5897 = vunpack.c.l.b16 %v5806
      %v5898 = vunpack.c.l.b16 %v5807
      %v5899 = vunpack.c.l.b16 %v5808
      %v5900 = vunpack.c.l.b16 %v5809
      %v5901 = vunpack.c.l.b16 %v5810
      %v5902 = vunpack.c.l.b16 %v5811
      %v5903 = vunpack.c.l.b16 %v5812
      %v5904 = vunpack.c.l.b16 %v5813
      %v5905 = vunpack.c.l.b16 %v5814
      %v5906 = vunpack.c.l.b16 %v5815
      %v5907 = vunpack.c.l.b16 %v5816
      %v5908 = vunpack.c.l.b16 %v5817
      %v5909 = vunpack.c.l.b16 %v5818
      %v5910 = vunpack.c.l.b16 %v5819
      %v5911 = vunpack.c.l.b16 %v5820
      %v5912 = vunpack.c.l.b16 %v5821
      %v5913 = vunpack.c.l.b16 %v5822
      %v5914 = vunpack.c.l.b16 %v5823
      %v5915 = vunpack.c.l.b16 %v5824
      %v5916 = vunpack.c.l.b16 %v5825
      %v5917 = vunpack.c.l.b16 %v5826
      %v5918 = vunpack.c.l.b16 %v5827
      %v5919 = vpack.c.b16 %v5883, %v5882
      %v5920 = vpack.c.b16 %v5885, %v5884
      %v5921 = vpack.c.b16 %v5887, %v5886
      %v5922 = vpack.c.b16 %v5889, %v5888
      %v5923 = vpack.c.b16 %v5891, %v5890
      %v5924 = vpack.c.b16 %v5893, %v5892
      %v5925 = vpack.c.b16 %v5895, %v5894
      %v5926 = vpack.c.b16 %v5897, %v5896
      %v5927 = vpack.c.b16 %v5899, %v5898
      %v5928 = vpack.c.b16 %v5901, %v5900
      %v5929 = vpack.c.b16 %v5903, %v5902
      %v5930 = vpack.c.b16 %v5905, %v5904
      %v5931 = vpack.c.b16 %v5907, %v5906
      %v5932 = vpack.c.b16 %v5909, %v5908
      %v5933 = vpack.c.b16 %v5911, %v5910
      %v5934 = vpack.c.b16 %v5913, %v5912
      %v5935 = vpack.c.b16 %v5915, %v5914
      %v5936 = vpack.c.b16 %v5917, %v5916
      %v5937 = vpack.c.b16 %v5918, %v5918
      %vm5938 = vsmask.f32 6400
      %v5940 = vshrl.u32 %v5919, 16
      %v5942 = vrot.slane %v5940, 1
      %v5943 = vshll.u32 %v5919, 16
      %v5945 = vrot.slane %v5943, 2
      %v5946 = vor.u32 %v5942, %v5945
      %v5948 = vshrl.u32 %v5920, 16
      %v5950 = vrot.slane %v5948, 1
      %v5951 = vshll.u32 %v5920, 16
      %v5953 = vrot.slane %v5951, 2
      %v5954 = vor.u32 %v5950, %v5953
      %v5955 = vsel %vm5938, %v5946, %v5954
      %v5957 = vshrl.u32 %v5921, 16
      %v5959 = vrot.slane %v5957, 1
      %v5960 = vshll.u32 %v5921, 16
      %v5962 = vrot.slane %v5960, 2
      %v5963 = vor.u32 %v5959, %v5962
      %v5964 = vsel %vm5938, %v5954, %v5963
      %v5966 = vshrl.u32 %v5922, 16
      %v5968 = vrot.slane %v5966, 1
      %v5969 = vshll.u32 %v5922, 16
      %v5971 = vrot.slane %v5969, 2
      %v5972 = vor.u32 %v5968, %v5971
      %v5973 = vsel %vm5938, %v5963, %v5972
      %v5975 = vshrl.u32 %v5923, 16
      %v5977 = vrot.slane %v5975, 1
      %v5978 = vshll.u32 %v5923, 16
      %v5980 = vrot.slane %v5978, 2
      %v5981 = vor.u32 %v5977, %v5980
      %v5982 = vsel %vm5938, %v5972, %v5981
      %v5984 = vshrl.u32 %v5924, 16
      %v5986 = vrot.slane %v5984, 1
      %v5987 = vshll.u32 %v5924, 16
      %v5989 = vrot.slane %v5987, 2
      %v5990 = vor.u32 %v5986, %v5989
      %v5991 = vsel %vm5938, %v5981, %v5990
      %v5993 = vshrl.u32 %v5925, 16
      %v5995 = vrot.slane %v5993, 1
      %v5996 = vshll.u32 %v5925, 16
      %v5998 = vrot.slane %v5996, 2
      %v5999 = vor.u32 %v5995, %v5998
      %v6000 = vsel %vm5938, %v5990, %v5999
      %v6002 = vshrl.u32 %v5926, 16
      %v6004 = vrot.slane %v6002, 1
      %v6005 = vshll.u32 %v5926, 16
      %v6007 = vrot.slane %v6005, 2
      %v6008 = vor.u32 %v6004, %v6007
      %v6009 = vsel %vm5938, %v5999, %v6008
      %v6011 = vshrl.u32 %v5927, 16
      %v6013 = vrot.slane %v6011, 1
      %v6014 = vshll.u32 %v5927, 16
      %v6016 = vrot.slane %v6014, 2
      %v6017 = vor.u32 %v6013, %v6016
      %v6018 = vsel %vm5938, %v6008, %v6017
      %v6020 = vshrl.u32 %v5928, 16
      %v6022 = vrot.slane %v6020, 1
      %v6023 = vshll.u32 %v5928, 16
      %v6025 = vrot.slane %v6023, 2
      %v6026 = vor.u32 %v6022, %v6025
      %v6027 = vsel %vm5938, %v6017, %v6026
      %v6029 = vshrl.u32 %v5929, 16
      %v6031 = vrot.slane %v6029, 1
      %v6032 = vshll.u32 %v5929, 16
      %v6034 = vrot.slane %v6032, 2
      %v6035 = vor.u32 %v6031, %v6034
      %v6036 = vsel %vm5938, %v6026, %v6035
      %v6038 = vshrl.u32 %v5930, 16
      %v6040 = vrot.slane %v6038, 1
      %v6041 = vshll.u32 %v5930, 16
      %v6043 = vrot.slane %v6041, 2
      %v6044 = vor.u32 %v6040, %v6043
      %v6045 = vsel %vm5938, %v6035, %v6044
      %v6047 = vshrl.u32 %v5931, 16
      %v6049 = vrot.slane %v6047, 1
      %v6050 = vshll.u32 %v5931, 16
      %v6052 = vrot.slane %v6050, 2
      %v6053 = vor.u32 %v6049, %v6052
      %v6054 = vsel %vm5938, %v6044, %v6053
      %v6056 = vshrl.u32 %v5932, 16
      %v6058 = vrot.slane %v6056, 1
      %v6059 = vshll.u32 %v5932, 16
      %v6061 = vrot.slane %v6059, 2
      %v6062 = vor.u32 %v6058, %v6061
      %v6063 = vsel %vm5938, %v6053, %v6062
      %v6065 = vshrl.u32 %v5933, 16
      %v6067 = vrot.slane %v6065, 1
      %v6068 = vshll.u32 %v5933, 16
      %v6070 = vrot.slane %v6068, 2
      %v6071 = vor.u32 %v6067, %v6070
      %v6072 = vsel %vm5938, %v6062, %v6071
      %v6074 = vshrl.u32 %v5934, 16
      %v6076 = vrot.slane %v6074, 1
      %v6077 = vshll.u32 %v5934, 16
      %v6079 = vrot.slane %v6077, 2
      %v6080 = vor.u32 %v6076, %v6079
      %v6081 = vsel %vm5938, %v6071, %v6080
      %v6083 = vshrl.u32 %v5935, 16
      %v6085 = vrot.slane %v6083, 1
      %v6086 = vshll.u32 %v5935, 16
      %v6088 = vrot.slane %v6086, 2
      %v6089 = vor.u32 %v6085, %v6088
      %v6090 = vsel %vm5938, %v6080, %v6089
      %v6092 = vshrl.u32 %v5936, 16
      %v6094 = vrot.slane %v6092, 1
      %v6095 = vshll.u32 %v5936, 16
      %v6097 = vrot.slane %v6095, 2
      %v6098 = vor.u32 %v6094, %v6097
      %v6099 = vsel %vm5938, %v6089, %v6098
      %v6101 = vshrl.u32 %v5937, 16
      %v6103 = vrot.slane %v6101, 1
      %v6104 = vshll.u32 %v5937, 16
      %v6106 = vrot.slane %v6104, 2
      %v6107 = vor.u32 %v6103, %v6106
      %v6108 = vsel %vm5938, %v6098, %v6107
      %v6143 = vunpack.c.l.b16 %v5829
      %v6144 = vunpack.c.l.b16 %v5830
      %v6145 = vunpack.c.l.b16 %v5831
      %v6146 = vunpack.c.l.b16 %v5832
      %v6147 = vunpack.c.l.b16 %v5833
      %v6148 = vunpack.c.l.b16 %v5834
      %v6149 = vunpack.c.l.b16 %v5835
      %v6150 = vunpack.c.l.b16 %v5836
      %v6151 = vunpack.c.l.b16 %v5837
      %v6152 = vunpack.c.l.b16 %v5838
      %v6153 = vunpack.c.l.b16 %v5839
      %v6154 = vunpack.c.l.b16 %v5840
      %v6155 = vunpack.c.l.b16 %v5841
      %v6156 = vunpack.c.l.b16 %v5842
      %v6157 = vunpack.c.l.b16 %v5843
      %v6158 = vunpack.c.l.b16 %v5844
      %v6159 = vpack.c.b16 %v6144, %v6143
      %v6160 = vpack.c.b16 %v6146, %v6145
      %v6161 = vpack.c.b16 %v6148, %v6147
      %v6162 = vpack.c.b16 %v6150, %v6149
      %v6163 = vpack.c.b16 %v6152, %v6151
      %v6164 = vpack.c.b16 %v6154, %v6153
      %v6165 = vpack.c.b16 %v6156, %v6155
      %v6166 = vpack.c.b16 %v6158, %v6157
      %6175 = vmatprep.subr.bf16.mxu0 0
      %6176 = vmatpush1.bf16.msra.mxu0 %v6159
      %6177 = vmatprep.subr.bf16.mxu0 0
      %6178 = vmatpush1.bf16.msra.mxu0 %v6160
      %6179 = vmatprep.subr.bf16.mxu0 0
      %6180 = vmatpush1.bf16.msra.mxu0 %v6161
      %6181 = vmatprep.subr.bf16.mxu0 0
      %6182 = vmatpush1.bf16.msra.mxu0 %v6162
      %6183 = vmatprep.subr.bf16.mxu0 0
      %6184 = vmatpush1.bf16.msra.mxu0 %v6163
      %6185 = vmatprep.subr.bf16.mxu0 0
      %6186 = vmatpush1.bf16.msra.mxu0 %v6164
      %6187 = vmatprep.subr.bf16.mxu0 0
      %6188 = vmatpush1.bf16.msra.mxu0 %v6165
      %6189 = vmatprep.subr.bf16.mxu0 0
      %6190 = vmatpush1.bf16.msra.mxu0 %v6166
      %6191 = vmatprep.subr.bf16.mxu0 0
      %6192 = vmatpush1.bf16.msra.mxu0 0
      %6193 = vmatprep.subr.bf16.mxu0 0
      %6194 = vmatpush1.bf16.msra.mxu0 0
      %6195 = vmatprep.subr.bf16.mxu0 0
      %6196 = vmatpush1.bf16.msra.mxu0 0
      %6197 = vmatprep.subr.bf16.mxu0 0
      %6198 = vmatpush1.bf16.msra.mxu0 0
      %6199 = vmatprep.subr.bf16.mxu0 0
      %6200 = vmatpush1.bf16.msra.mxu0 0
      %6201 = vmatprep.subr.bf16.mxu0 0
      %6202 = vmatpush1.bf16.msra.mxu0 0
      %6203 = vmatprep.subr.bf16.mxu0 0
      %6204 = vmatpush1.bf16.msra.mxu0 0
      %6205 = vmatprep.subr.bf16.mxu0 0
      %6206 = vmatpush1.bf16.msra.mxu0 0
      %6207 = vmatprep.mubr.bf16.mxu0 0
      %6208 = vmatmul.mubr.bf16.gmra.mrb[0].mxu0 %v5955
      %v6209 = vpop.f32.mrb[0].mxu0
      %v6210 = vadd.f32 0.0, %v6209
      %v6211 = vpop.f32.mrb[0].mxu0
      %v6212 = vpop.f32.mrb[0].mxu0
      %v6213 = vadd.f32 0.0, %v6212
      %v6214 = vpop.f32.mrb[0].mxu0
      %6215 = vmatprep.mubr.bf16.mxu0 0
      %6216 = vmatmul.mubr.bf16.gmra.mrb[0].mxu0 %v5964
      %v6217 = vpop.f32.mrb[0].mxu0
      %v6218 = vadd.f32 0.0, %v6217
      %v6219 = vpop.f32.mrb[0].mxu0
      %v6220 = vpop.f32.mrb[0].mxu0
      %v6221 = vadd.f32 0.0, %v6220
      %v6222 = vpop.f32.mrb[0].mxu0
      %6223 = vmatprep.mubr.bf16.mxu0 0
      %6224 = vmatmul.mubr.bf16.gmra.mrb[0].mxu0 %v5973
      %v6225 = vpop.f32.mrb[0].mxu0
      %v6226 = vadd.f32 0.0, %v6225
      %v6227 = vpop.f32.mrb[0].mxu0
      %v6228 = vpop.f32.mrb[0].mxu0
      %v6229 = vadd.f32 0.0, %v6228
      %v6230 = vpop.f32.mrb[0].mxu0
      %6231 = vmatprep.mubr.bf16.mxu0 0
      %6232 = vmatmul.mubr.bf16.gmra.mrb[0].mxu0 %v5982
      %v6233 = vpop.f32.mrb[0].mxu0
      %v6234 = vadd.f32 0.0, %v6233
      %v6235 = vpop.f32.mrb[0].mxu0
      %v6236 = vpop.f32.mrb[0].mxu0
      %v6237 = vadd.f32 0.0, %v6236
      %v6238 = vpop.f32.mrb[0].mxu0
      %6239 = vmatprep.mubr.bf16.mxu0 0
      %6240 = vmatmul.mubr.bf16.gmra.mrb[0].mxu0 %v5991
      %v6241 = vpop.f32.mrb[0].mxu0
      %v6242 = vadd.f32 0.0, %v6241
      %v6243 = vpop.f32.mrb[0].mxu0
      %v6244 = vpop.f32.mrb[0].mxu0
      %v6245 = vadd.f32 0.0, %v6244
      %v6246 = vpop.f32.mrb[0].mxu0
      %6247 = vmatprep.mubr.bf16.mxu0 0
      %6248 = vmatmul.mubr.bf16.gmra.mrb[0].mxu0 %v6000
      %v6249 = vpop.f32.mrb[0].mxu0
      %v6250 = vadd.f32 0.0, %v6249
      %v6251 = vpop.f32.mrb[0].mxu0
      %v6252 = vpop.f32.mrb[0].mxu0
      %v6253 = vadd.f32 0.0, %v6252
      %v6254 = vpop.f32.mrb[0].mxu0
      %6255 = vmatprep.mubr.bf16.mxu0 0
      %6256 = vmatmul.mubr.bf16.gmra.mrb[0].mxu0 %v6009
      %v6257 = vpop.f32.mrb[0].mxu0
      %v6258 = vadd.f32 0.0, %v6257
      %v6259 = vpop.f32.mrb[0].mxu0
      %v6260 = vpop.f32.mrb[0].mxu0
      %v6261 = vadd.f32 0.0, %v6260
      %v6262 = vpop.f32.mrb[0].mxu0
      %6263 = vmatprep.mubr.bf16.mxu0 0
      %6264 = vmatmul.mubr.bf16.gmra.mrb[0].mxu0 %v6018
      %v6265 = vpop.f32.mrb[0].mxu0
      %v6266 = vadd.f32 0.0, %v6265
      %v6267 = vpop.f32.mrb[0].mxu0
      %v6268 = vpop.f32.mrb[0].mxu0
      %v6269 = vadd.f32 0.0, %v6268
      %v6270 = vpop.f32.mrb[0].mxu0
      %6271 = vmatprep.mubr.bf16.mxu0 0
      %6272 = vmatmul.mubr.bf16.gmra.mrb[0].mxu0 %v6027
      %v6273 = vpop.f32.mrb[0].mxu0
      %v6274 = vadd.f32 0.0, %v6273
      %v6275 = vpop.f32.mrb[0].mxu0
      %v6276 = vpop.f32.mrb[0].mxu0
      %v6277 = vadd.f32 0.0, %v6276
      %v6278 = vpop.f32.mrb[0].mxu0
      %6279 = vmatprep.mubr.bf16.mxu0 0
      %6280 = vmatmul.mubr.bf16.gmra.mrb[0].mxu0 %v6036
      %v6281 = vpop.f32.mrb[0].mxu0
      %v6282 = vadd.f32 0.0, %v6281
      %v6283 = vpop.f32.mrb[0].mxu0
      %v6284 = vpop.f32.mrb[0].mxu0
      %v6285 = vadd.f32 0.0, %v6284
      %v6286 = vpop.f32.mrb[0].mxu0
      %6287 = vmatprep.mubr.bf16.mxu0 0
      %6288 = vmatmul.mubr.bf16.gmra.mrb[0].mxu0 %v6045
      %v6289 = vpop.f32.mrb[0].mxu0
      %v6290 = vadd.f32 0.0, %v6289
      %v6291 = vpop.f32.mrb[0].mxu0
      %v6292 = vpop.f32.mrb[0].mxu0
      %v6293 = vadd.f32 0.0, %v6292
      %v6294 = vpop.f32.mrb[0].mxu0
      %6295 = vmatprep.mubr.bf16.mxu0 0
      %6296 = vmatmul.mubr.bf16.gmra.mrb[0].mxu0 %v6054
      %v6297 = vpop.f32.mrb[0].mxu0
      %v6298 = vadd.f32 0.0, %v6297
      %v6299 = vpop.f32.mrb[0].mxu0
      %v6300 = vpop.f32.mrb[0].mxu0
      %v6301 = vadd.f32 0.0, %v6300
      %v6302 = vpop.f32.mrb[0].mxu0
      %6303 = vmatprep.mubr.bf16.mxu0 0
      %6304 = vmatmul.mubr.bf16.gmra.mrb[0].mxu0 %v6063
      %v6305 = vpop.f32.mrb[0].mxu0
      %v6306 = vadd.f32 0.0, %v6305
      %v6307 = vpop.f32.mrb[0].mxu0
      %v6308 = vpop.f32.mrb[0].mxu0
      %v6309 = vadd.f32 0.0, %v6308
      %v6310 = vpop.f32.mrb[0].mxu0
      %6311 = vmatprep.mubr.bf16.mxu0 0
      %6312 = vmatmul.mubr.bf16.gmra.mrb[0].mxu0 %v6072
      %v6313 = vpop.f32.mrb[0].mxu0
      %v6314 = vadd.f32 0.0, %v6313
      %v6315 = vpop.f32.mrb[0].mxu0
      %v6316 = vpop.f32.mrb[0].mxu0
      %v6317 = vadd.f32 0.0, %v6316
      %v6318 = vpop.f32.mrb[0].mxu0
      %6319 = vmatprep.mubr.bf16.mxu0 0
      %6320 = vmatmul.mubr.bf16.gmra.mrb[0].mxu0 %v6081
      %v6321 = vpop.f32.mrb[0].mxu0
      %v6322 = vadd.f32 0.0, %v6321
      %v6323 = vpop.f32.mrb[0].mxu0
      %v6324 = vpop.f32.mrb[0].mxu0
      %v6325 = vadd.f32 0.0, %v6324
      %v6326 = vpop.f32.mrb[0].mxu0
      %6327 = vmatprep.mubr.bf16.mxu0 0
      %6328 = vmatmul.mubr.bf16.gmra.mrb[0].mxu0 %v6090
      %v6329 = vpop.f32.mrb[0].mxu0
      %v6330 = vadd.f32 0.0, %v6329
      %v6331 = vpop.f32.mrb[0].mxu0
      %v6332 = vpop.f32.mrb[0].mxu0
      %v6333 = vadd.f32 0.0, %v6332
      %v6334 = vpop.f32.mrb[0].mxu0
      %6335 = vmatprep.mubr.bf16.mxu0 0
      %6336 = vmatmul.mubr.bf16.gmra.mrb[0].mxu0 %v6099
      %v6337 = vpop.f32.mrb[0].mxu0
      %v6338 = vadd.f32 0.0, %v6337
      %v6339 = vpop.f32.mrb[0].mxu0
      %v6340 = vpop.f32.mrb[0].mxu0
      %v6341 = vadd.f32 0.0, %v6340
      %v6342 = vpop.f32.mrb[0].mxu0
      %6343 = vmatprep.mubr.bf16.mxu0 0
      %6344 = vmatmul.mubr.bf16.gmra.mrb[0].mxu0 %v6108
      %v6345 = vpop.f32.mrb[0].mxu0
      %v6346 = vadd.f32 0.0, %v6345
      %v6347 = vpop.f32.mrb[0].mxu0
      %v6348 = vpop.f32.mrb[0].mxu0
      %v6349 = vadd.f32 0.0, %v6348
      %v6350 = vpop.f32.mrb[0].mxu0
      %6351 = vdwg.mxu0
      %v6352 = vld [vmem:[#allocation3] sm:$0xff]
      %v6353 = vld [vmem:[#allocation3 + $0x8] sm:$0xff]
      %v6354 = vld [vmem:[#allocation3 + $0x10] sm:$0xff]
      %v6355 = vld [vmem:[#allocation3 + $0x18] sm:$0xff]
      %v6356 = vld [vmem:[#allocation3 + $0x20] sm:$0xff]
      %v6357 = vld [vmem:[#allocation3 + $0x28] sm:$0xff]
      %v6358 = vld [vmem:[#allocation3 + $0x30] sm:$0xff]
      %v6359 = vld [vmem:[#allocation3 + $0x38] sm:$0xff]
      %v6360 = vld [vmem:[#allocation3 + $0x40] sm:$0xff]
      %v6361 = vld [vmem:[#allocation3 + $0x48] sm:$0xff]
      %v6362 = vld [vmem:[#allocation3 + $0x50] sm:$0xff]
      %v6363 = vld [vmem:[#allocation3 + $0x58] sm:$0xff]
      %v6364 = vld [vmem:[#allocation3 + $0x60] sm:$0xff]
      %v6365 = vld [vmem:[#allocation3 + $0x68] sm:$0xff]
      %v6366 = vld [vmem:[#allocation3 + $0x70] sm:$0xff]
      %v6367 = vld [vmem:[#allocation3 + $0x78] sm:$0xff]
      %v6368 = vld [vmem:[#allocation3 + $0x80] sm:$0xff]
      %v6369 = vld [vmem:[#allocation3 + $0x88] sm:$0xff]
      %v6370 = vld [vmem:[#allocation3 + $0x90] sm:$0xff]
      %v6371 = vld [vmem:[#allocation3 + $0x98] sm:$0xff]
      %v6372 = vld [vmem:[#allocation3 + $0xa0] sm:$0xff]
      %v6373 = vld [vmem:[#allocation3 + $0xa8] sm:$0xff]
      %v6374 = vld [vmem:[#allocation3 + $0xb0] sm:$0xff]
      %v6375 = vld [vmem:[#allocation3 + $0xb8] sm:$0xff]
      %v6376 = vld [vmem:[#allocation3 + $0xc0] sm:$0xff]
      %v6377 = vld [vmem:[#allocation3 + $0xc8] sm:$0xff]
      %v6378 = vld [vmem:[#allocation3 + $0xd0] sm:$0xff]
      %v6379 = vld [vmem:[#allocation3 + $0xd8] sm:$0xff]
      %v6380 = vld [vmem:[#allocation3 + $0xe0] sm:$0xff]
      %v6381 = vld [vmem:[#allocation3 + $0xe8] sm:$0xff]
      %v6382 = vld [vmem:[#allocation3 + $0xf0] sm:$0xff]
      %v6383 = vld [vmem:[#allocation3 + $0xf8] sm:$0xff]
      %v6384 = vld [vmem:[#allocation3 + $0x100] sm:$0xff]
      %v6385 = vld [vmem:[#allocation3 + $0x108] sm:$0xff]
      %v6386 = vld [vmem:[#allocation3 + $0x110] sm:$0xff]
      %v6387 = vld [vmem:[#allocation3 + $0x118] sm:$0xff]
      %v6388 = vadd.f32 %v6352, %v6210
      %v6389 = vadd.f32 %v6353, %v6213
      %v6390 = vadd.f32 %v6354, %v6218
      %v6391 = vadd.f32 %v6355, %v6221
      %v6392 = vadd.f32 %v6356, %v6226
      %v6393 = vadd.f32 %v6357, %v6229
      %v6394 = vadd.f32 %v6358, %v6234
      %v6395 = vadd.f32 %v6359, %v6237
      %v6396 = vadd.f32 %v6360, %v6242
      %v6397 = vadd.f32 %v6361, %v6245
      %v6398 = vadd.f32 %v6362, %v6250
      %v6399 = vadd.f32 %v6363, %v6253
      %v6400 = vadd.f32 %v6364, %v6258
      %v6401 = vadd.f32 %v6365, %v6261
      %v6402 = vadd.f32 %v6366, %v6266
      %v6403 = vadd.f32 %v6367, %v6269
      %v6404 = vadd.f32 %v6368, %v6274
      %v6405 = vadd.f32 %v6369, %v6277
      %v6406 = vadd.f32 %v6370, %v6282
      %v6407 = vadd.f32 %v6371, %v6285
      %v6408 = vadd.f32 %v6372, %v6290
      %v6409 = vadd.f32 %v6373, %v6293
      %v6410 = vadd.f32 %v6374, %v6298
      %v6411 = vadd.f32 %v6375, %v6301
      %v6412 = vadd.f32 %v6376, %v6306
      %v6413 = vadd.f32 %v6377, %v6309
      %v6414 = vadd.f32 %v6378, %v6314
      %v6415 = vadd.f32 %v6379, %v6317
      %v6416 = vadd.f32 %v6380, %v6322
      %v6417 = vadd.f32 %v6381, %v6325
      %v6418 = vadd.f32 %v6382, %v6330
      %v6419 = vadd.f32 %v6383, %v6333
      %v6420 = vadd.f32 %v6384, %v6338
      %v6421 = vadd.f32 %v6385, %v6341
      %v6422 = vadd.f32 %v6386, %v6346
      %v6423 = vadd.f32 %v6387, %v6349
      %6424 = vst [vmem:[#allocation3] sm:$0xff] %v6388
      %6425 = vst [vmem:[#allocation3 + $0x8] sm:$0xff] %v6389
      %6426 = vst [vmem:[#allocation3 + $0x10] sm:$0xff] %v6390
      %6427 = vst [vmem:[#allocation3 + $0x18] sm:$0xff] %v6391
      %6428 = vst [vmem:[#allocation3 + $0x20] sm:$0xff] %v6392
      %6429 = vst [vmem:[#allocation3 + $0x28] sm:$0xff] %v6393
      %6430 = vst [vmem:[#allocation3 + $0x30] sm:$0xff] %v6394
      %6431 = vst [vmem:[#allocation3 + $0x38] sm:$0xff] %v6395
      %6432 = vst [vmem:[#allocation3 + $0x40] sm:$0xff] %v6396
      %6433 = vst [vmem:[#allocation3 + $0x48] sm:$0xff] %v6397
      %6434 = vst [vmem:[#allocation3 + $0x50] sm:$0xff] %v6398
      %6435 = vst [vmem:[#allocation3 + $0x58] sm:$0xff] %v6399
      %6436 = vst [vmem:[#allocation3 + $0x60] sm:$0xff] %v6400
      %6437 = vst [vmem:[#allocation3 + $0x68] sm:$0xff] %v6401
      %6438 = vst [vmem:[#allocation3 + $0x70] sm:$0xff] %v6402
      %6439 = vst [vmem:[#allocation3 + $0x78] sm:$0xff] %v6403
      %6440 = vst [vmem:[#allocation3 + $0x80] sm:$0xff] %v6404
      %6441 = vst [vmem:[#allocation3 + $0x88] sm:$0xff] %v6405
      %6442 = vst [vmem:[#allocation3 + $0x90] sm:$0xff] %v6406
      %6443 = vst [vmem:[#allocation3 + $0x98] sm:$0xff] %v6407
      %6444 = vst [vmem:[#allocation3 + $0xa0] sm:$0xff] %v6408
      %6445 = vst [vmem:[#allocation3 + $0xa8] sm:$0xff] %v6409
      %6446 = vst [vmem:[#allocation3 + $0xb0] sm:$0xff] %v6410
      %6447 = vst [vmem:[#allocation3 + $0xb8] sm:$0xff] %v6411
      %6448 = vst [vmem:[#allocation3 + $0xc0] sm:$0xff] %v6412
      %6449 = vst [vmem:[#allocation3 + $0xc8] sm:$0xff] %v6413
      %6450 = vst [vmem:[#allocation3 + $0xd0] sm:$0xff] %v6414
      %6451 = vst [vmem:[#allocation3 + $0xd8] sm:$0xff] %v6415
      %6452 = vst [vmem:[#allocation3 + $0xe0] sm:$0xff] %v6416
      %6453 = vst [vmem:[#allocation3 + $0xe8] sm:$0xff] %v6417
      %6454 = vst [vmem:[#allocation3 + $0xf0] sm:$0xff] %v6418
      %6455 = vst [vmem:[#allocation3 + $0xf8] sm:$0xff] %v6419
      %6456 = vst [vmem:[#allocation3 + $0x100] sm:$0xff] %v6420
      %6457 = vst [vmem:[#allocation3 + $0x108] sm:$0xff] %v6421
      %6458 = vst [vmem:[#allocation3 + $0x110] sm:$0xff] %v6422
      %6459 = vst [vmem:[#allocation3 + $0x118] sm:$0xff] %v6423
      %v6460 = vld [vmem:[#allocation2 + $0x8] sm:$0xc]
      %v6461 = vld [vmem:[#allocation2 + $0xc] sm:$0xf]
      %v6462 = vld [vmem:[#allocation2 + $0x10] sm:$0xf]
      %v6463 = vld [vmem:[#allocation2 + $0x14] sm:$0xf]
      %v6464 = vld [vmem:[#allocation2 + $0x18] sm:$0xf]
      %v6465 = vld [vmem:[#allocation2 + $0x1c] sm:$0xf]
      %v6466 = vld [vmem:[#allocation2 + $0x20] sm:$0xf]
      %v6467 = vld [vmem:[#allocation2 + $0x24] sm:$0xf]
      %v6468 = vld [vmem:[#allocation2 + $0x28] sm:$0xf]
      %v6469 = vld [vmem:[#allocation2 + $0x2c] sm:$0xf]
      %v6470 = vld [vmem:[#allocation2 + $0x30] sm:$0xf]
      %v6471 = vld [vmem:[#allocation2 + $0x34] sm:$0xf]
      %v6472 = vld [vmem:[#allocation2 + $0x38] sm:$0xf]
      %v6473 = vld [vmem:[#allocation2 + $0x3c] sm:$0xf]
      %v6474 = vld [vmem:[#allocation2 + $0x40] sm:$0xf]
      %v6475 = vld [vmem:[#allocation2 + $0x44] sm:$0xf]
      %v6476 = vld [vmem:[#allocation2 + $0x48] sm:$0xf]
      %v6477 = vld [vmem:[#allocation2 + $0x4c] sm:$0xf]
      %v6478 = vld [vmem:[#allocation2 + $0x50] sm:$0xf]
      %v6479 = vld [vmem:[#allocation2 + $0x54] sm:$0xf]
      %v6480 = vld [vmem:[#allocation2 + $0x58] sm:$0xf]
      %v6481 = vld [vmem:[#allocation2 + $0x5c] sm:$0xf]
      %v6482 = vld [vmem:[#allocation2 + $0x60] sm:$0xf]
      %v6483 = vld [vmem:[#allocation2 + $0x64] sm:$0xf]
      %v6484 = vld [vmem:[#allocation2 + $0x68] sm:$0xf]
      %v6485 = vld [vmem:[#allocation2 + $0x6c] sm:$0xf]
      %v6486 = vld [vmem:[#allocation2 + $0x70] sm:$0xf]
      %v6487 = vld [vmem:[#allocation2 + $0x74] sm:$0xf]
      %v6488 = vld [vmem:[#allocation2 + $0x78] sm:$0xf]
      %v6489 = vld [vmem:[#allocation2 + $0x7c] sm:$0xf]
      %v6490 = vld [vmem:[#allocation2 + $0x80] sm:$0xf]
      %v6491 = vld [vmem:[#allocation2 + $0x84] sm:$0xf]
      %v6492 = vld [vmem:[#allocation2 + $0x88] sm:$0xf]
      %v6493 = vld [vmem:[#allocation2 + $0x8c] sm:$0xf]
      %v6494 = vld [vmem:[#allocation2 + $0x90] sm:$0xf]
      %v6495 = vld [vmem:[#allocation2 + $0x94] sm:$0xf]
      %v6496 = vld [vmem:[#allocation2 + $0x98] sm:$0x3]
      %s6497 = scalar_lea.vmem %s6, 320
      %v6498 = vld [vmem:[%s6497] sm:$0xf]
      %v6499 = vld [vmem:[%s6497 + $0x4] sm:$0xf]
      %v6500 = vld [vmem:[%s6497 + $0x8] sm:$0xf]
      %v6501 = vld [vmem:[%s6497 + $0xc] sm:$0xf]
      %v6502 = vld [vmem:[%s6497 + $0x10] sm:$0xf]
      %v6503 = vld [vmem:[%s6497 + $0x14] sm:$0xf]
      %v6504 = vld [vmem:[%s6497 + $0x18] sm:$0xf]
      %v6505 = vld [vmem:[%s6497 + $0x1c] sm:$0xf]
      %v6506 = vld [vmem:[%s6497 + $0x20] sm:$0xf]
      %v6507 = vld [vmem:[%s6497 + $0x24] sm:$0xf]
      %v6508 = vld [vmem:[%s6497 + $0x28] sm:$0xf]
      %v6509 = vld [vmem:[%s6497 + $0x2c] sm:$0xf]
      %v6510 = vld [vmem:[%s6497 + $0x30] sm:$0xf]
      %v6511 = vld [vmem:[%s6497 + $0x34] sm:$0xf]
      %v6512 = vld [vmem:[%s6497 + $0x38] sm:$0xf]
      %v6513 = vld [vmem:[%s6497 + $0x3c] sm:$0xf]
      %v6551 = vunpack.c.l.b16 %v6460
      %v6552 = vunpack.c.l.b16 %v6461
      %v6553 = vunpack.c.l.b16 %v6462
      %v6554 = vunpack.c.l.b16 %v6463
      %v6555 = vunpack.c.l.b16 %v6464
      %v6556 = vunpack.c.l.b16 %v6465
      %v6557 = vunpack.c.l.b16 %v6466
      %v6558 = vunpack.c.l.b16 %v6467
      %v6559 = vunpack.c.l.b16 %v6468
      %v6560 = vunpack.c.l.b16 %v6469
      %v6561 = vunpack.c.l.b16 %v6470
      %v6562 = vunpack.c.l.b16 %v6471
      %v6563 = vunpack.c.l.b16 %v6472
      %v6564 = vunpack.c.l.b16 %v6473
      %v6565 = vunpack.c.l.b16 %v6474
      %v6566 = vunpack.c.l.b16 %v6475
      %v6567 = vunpack.c.l.b16 %v6476
      %v6568 = vunpack.c.l.b16 %v6477
      %v6569 = vunpack.c.l.b16 %v6478
      %v6570 = vunpack.c.l.b16 %v6479
      %v6571 = vunpack.c.l.b16 %v6480
      %v6572 = vunpack.c.l.b16 %v6481
      %v6573 = vunpack.c.l.b16 %v6482
      %v6574 = vunpack.c.l.b16 %v6483
      %v6575 = vunpack.c.l.b16 %v6484
      %v6576 = vunpack.c.l.b16 %v6485
      %v6577 = vunpack.c.l.b16 %v6486
      %v6578 = vunpack.c.l.b16 %v6487
      %v6579 = vunpack.c.l.b16 %v6488
      %v6580 = vunpack.c.l.b16 %v6489
      %v6581 = vunpack.c.l.b16 %v6490
      %v6582 = vunpack.c.l.b16 %v6491
      %v6583 = vunpack.c.l.b16 %v6492
      %v6584 = vunpack.c.l.b16 %v6493
      %v6585 = vunpack.c.l.b16 %v6494
      %v6586 = vunpack.c.l.b16 %v6495
      %v6587 = vunpack.c.l.b16 %v6496
      %v6588 = vpack.c.b16 %v6552, %v6551
      %v6589 = vpack.c.b16 %v6554, %v6553
      %v6590 = vpack.c.b16 %v6556, %v6555
      %v6591 = vpack.c.b16 %v6558, %v6557
      %v6592 = vpack.c.b16 %v6560, %v6559
      %v6593 = vpack.c.b16 %v6562, %v6561
      %v6594 = vpack.c.b16 %v6564, %v6563
      %v6595 = vpack.c.b16 %v6566, %v6565
      %v6596 = vpack.c.b16 %v6568, %v6567
      %v6597 = vpack.c.b16 %v6570, %v6569
      %v6598 = vpack.c.b16 %v6572, %v6571
      %v6599 = vpack.c.b16 %v6574, %v6573
      %v6600 = vpack.c.b16 %v6576, %v6575
      %v6601 = vpack.c.b16 %v6578, %v6577
      %v6602 = vpack.c.b16 %v6580, %v6579
      %v6603 = vpack.c.b16 %v6582, %v6581
      %v6604 = vpack.c.b16 %v6584, %v6583
      %v6605 = vpack.c.b16 %v6586, %v6585
      %v6606 = vpack.c.b16 %v6587, %v6587
      %vm6607 = vcmask 1045504
      %v6608 = vrot.slane %v6588, 2
      %v6609 = vrot.slane %v6589, 2
      %v6610 = vsel %vm6607, %v6608, %v6609
      %v6611 = vrot.slane %v6590, 2
      %v6612 = vsel %vm6607, %v6609, %v6611
      %v6613 = vrot.slane %v6591, 2
      %v6614 = vsel %vm6607, %v6611, %v6613
      %v6615 = vrot.slane %v6592, 2
      %v6616 = vsel %vm6607, %v6613, %v6615
      %v6617 = vrot.slane %v6593, 2
      %v6618 = vsel %vm6607, %v6615, %v6617
      %v6619 = vrot.slane %v6594, 2
      %v6620 = vsel %vm6607, %v6617, %v6619
      %v6621 = vrot.slane %v6595, 2
      %v6622 = vsel %vm6607, %v6619, %v6621
      %v6623 = vrot.slane %v6596, 2
      %v6624 = vsel %vm6607, %v6621, %v6623
      %v6625 = vrot.slane %v6597, 2
      %v6626 = vsel %vm6607, %v6623, %v6625
      %v6627 = vrot.slane %v6598, 2
      %v6628 = vsel %vm6607, %v6625, %v6627
      %v6629 = vrot.slane %v6599, 2
      %v6630 = vsel %vm6607, %v6627, %v6629
      %v6631 = vrot.slane %v6600, 2
      %v6632 = vsel %vm6607, %v6629, %v6631
      %v6633 = vrot.slane %v6601, 2
      %v6634 = vsel %vm6607, %v6631, %v6633
      %v6635 = vrot.slane %v6602, 2
      %v6636 = vsel %vm6607, %v6633, %v6635
      %v6637 = vrot.slane %v6603, 2
      %v6638 = vsel %vm6607, %v6635, %v6637
      %v6639 = vrot.slane %v6604, 2
      %v6640 = vsel %vm6607, %v6637, %v6639
      %v6641 = vrot.slane %v6605, 2
      %v6642 = vsel %vm6607, %v6639, %v6641
      %v6643 = vrot.slane %v6606, 2
      %v6644 = vsel %vm6607, %v6641, %v6643
      %v6679 = vunpack.c.l.b16 %v6498
      %v6680 = vunpack.c.l.b16 %v6499
      %v6681 = vunpack.c.l.b16 %v6500
      %v6682 = vunpack.c.l.b16 %v6501
      %v6683 = vunpack.c.l.b16 %v6502
      %v6684 = vunpack.c.l.b16 %v6503
      %v6685 = vunpack.c.l.b16 %v6504
      %v6686 = vunpack.c.l.b16 %v6505
      %v6687 = vunpack.c.l.b16 %v6506
      %v6688 = vunpack.c.l.b16 %v6507
      %v6689 = vunpack.c.l.b16 %v6508
      %v6690 = vunpack.c.l.b16 %v6509
      %v6691 = vunpack.c.l.b16 %v6510
      %v6692 = vunpack.c.l.b16 %v6511
      %v6693 = vunpack.c.l.b16 %v6512
      %v6694 = vunpack.c.l.b16 %v6513
      %v6695 = vpack.c.b16 %v6680, %v6679
      %v6696 = vpack.c.b16 %v6682, %v6681
      %v6697 = vpack.c.b16 %v6684, %v6683
      %v6698 = vpack.c.b16 %v6686, %v6685
      %v6699 = vpack.c.b16 %v6688, %v6687
      %v6700 = vpack.c.b16 %v6690, %v6689
      %v6701 = vpack.c.b16 %v6692, %v6691
      %v6702 = vpack.c.b16 %v6694, %v6693
      %6711 = vmatprep.subr.bf16.mxu0 0
      %6712 = vmatpush1.bf16.msra.mxu0 %v6695
      %6713 = vmatprep.subr.bf16.mxu0 0
      %6714 = vmatpush1.bf16.msra.mxu0 %v6696
      %6715 = vmatprep.subr.bf16.mxu0 0
      %6716 = vmatpush1.bf16.msra.mxu0 %v6697
      %6717 = vmatprep.subr.bf16.mxu0 0
      %6718 = vmatpush1.bf16.msra.mxu0 %v6698
      %6719 = vmatprep.subr.bf16.mxu0 0
      %6720 = vmatpush1.bf16.msra.mxu0 %v6699
      %6721 = vmatprep.subr.bf16.mxu0 0
      %6722 = vmatpush1.bf16.msra.mxu0 %v6700
      %6723 = vmatprep.subr.bf16.mxu0 0
      %6724 = vmatpush1.bf16.msra.mxu0 %v6701
      %6725 = vmatprep.subr.bf16.mxu0 0
      %6726 = vmatpush1.bf16.msra.mxu0 %v6702
      %6727 = vmatprep.subr.bf16.mxu0 0
      %6728 = vmatpush1.bf16.msra.mxu0 0
      %6729 = vmatprep.subr.bf16.mxu0 0
      %6730 = vmatpush1.bf16.msra.mxu0 0
      %6731 = vmatprep.subr.bf16.mxu0 0
      %6732 = vmatpush1.bf16.msra.mxu0 0
      %6733 = vmatprep.subr.bf16.mxu0 0
      %6734 = vmatpush1.bf16.msra.mxu0 0
      %6735 = vmatprep.subr.bf16.mxu0 0
      %6736 = vmatpush1.bf16.msra.mxu0 0
      %6737 = vmatprep.subr.bf16.mxu0 0
      %6738 = vmatpush1.bf16.msra.mxu0 0
      %6739 = vmatprep.subr.bf16.mxu0 0
      %6740 = vmatpush1.bf16.msra.mxu0 0
      %6741 = vmatprep.subr.bf16.mxu0 0
      %6742 = vmatpush1.bf16.msra.mxu0 0
      %6743 = vmatprep.mubr.bf16.mxu0 0
      %6744 = vmatmul.mubr.bf16.gmra.mrb[0].mxu0 %v6610
      %v6745 = vpop.f32.mrb[0].mxu0
      %v6746 = vadd.f32 0.0, %v6745
      %v6747 = vpop.f32.mrb[0].mxu0
      %v6748 = vpop.f32.mrb[0].mxu0
      %v6749 = vadd.f32 0.0, %v6748
      %v6750 = vpop.f32.mrb[0].mxu0
      %6751 = vmatprep.mubr.bf16.mxu0 0
      %6752 = vmatmul.mubr.bf16.gmra.mrb[0].mxu0 %v6612
      %v6753 = vpop.f32.mrb[0].mxu0
      %v6754 = vadd.f32 0.0, %v6753
      %v6755 = vpop.f32.mrb[0].mxu0
      %v6756 = vpop.f32.mrb[0].mxu0
      %v6757 = vadd.f32 0.0, %v6756
      %v6758 = vpop.f32.mrb[0].mxu0
      %6759 = vmatprep.mubr.bf16.mxu0 0
      %6760 = vmatmul.mubr.bf16.gmra.mrb[0].mxu0 %v6614
      %v6761 = vpop.f32.mrb[0].mxu0
      %v6762 = vadd.f32 0.0, %v6761
      %v6763 = vpop.f32.mrb[0].mxu0
      %v6764 = vpop.f32.mrb[0].mxu0
      %v6765 = vadd.f32 0.0, %v6764
      %v6766 = vpop.f32.mrb[0].mxu0
      %6767 = vmatprep.mubr.bf16.mxu0 0
      %6768 = vmatmul.mubr.bf16.gmra.mrb[0].mxu0 %v6616
      %v6769 = vpop.f32.mrb[0].mxu0
      %v6770 = vadd.f32 0.0, %v6769
      %v6771 = vpop.f32.mrb[0].mxu0
      %v6772 = vpop.f32.mrb[0].mxu0
      %v6773 = vadd.f32 0.0, %v6772
      %v6774 = vpop.f32.mrb[0].mxu0
      %6775 = vmatprep.mubr.bf16.mxu0 0
      %6776 = vmatmul.mubr.bf16.gmra.mrb[0].mxu0 %v6618
      %v6777 = vpop.f32.mrb[0].mxu0
      %v6778 = vadd.f32 0.0, %v6777
      %v6779 = vpop.f32.mrb[0].mxu0
      %v6780 = vpop.f32.mrb[0].mxu0
      %v6781 = vadd.f32 0.0, %v6780
      %v6782 = vpop.f32.mrb[0].mxu0
      %6783 = vmatprep.mubr.bf16.mxu0 0
      %6784 = vmatmul.mubr.bf16.gmra.mrb[0].mxu0 %v6620
      %v6785 = vpop.f32.mrb[0].mxu0
      %v6786 = vadd.f32 0.0, %v6785
      %v6787 = vpop.f32.mrb[0].mxu0
      %v6788 = vpop.f32.mrb[0].mxu0
      %v6789 = vadd.f32 0.0, %v6788
      %v6790 = vpop.f32.mrb[0].mxu0
      %6791 = vmatprep.mubr.bf16.mxu0 0
      %6792 = vmatmul.mubr.bf16.gmra.mrb[0].mxu0 %v6622
      %v6793 = vpop.f32.mrb[0].mxu0
      %v6794 = vadd.f32 0.0, %v6793
      %v6795 = vpop.f32.mrb[0].mxu0
      %v6796 = vpop.f32.mrb[0].mxu0
      %v6797 = vadd.f32 0.0, %v6796
      %v6798 = vpop.f32.mrb[0].mxu0
      %6799 = vmatprep.mubr.bf16.mxu0 0
      %6800 = vmatmul.mubr.bf16.gmra.mrb[0].mxu0 %v6624
      %v6801 = vpop.f32.mrb[0].mxu0
      %v6802 = vadd.f32 0.0, %v6801
      %v6803 = vpop.f32.mrb[0].mxu0
      %v6804 = vpop.f32.mrb[0].mxu0
      %v6805 = vadd.f32 0.0, %v6804
      %v6806 = vpop.f32.mrb[0].mxu0
      %6807 = vmatprep.mubr.bf16.mxu0 0
      %6808 = vmatmul.mubr.bf16.gmra.mrb[0].mxu0 %v6626
      %v6809 = vpop.f32.mrb[0].mxu0
      %v6810 = vadd.f32 0.0, %v6809
      %v6811 = vpop.f32.mrb[0].mxu0
      %v6812 = vpop.f32.mrb[0].mxu0
      %v6813 = vadd.f32 0.0, %v6812
      %v6814 = vpop.f32.mrb[0].mxu0
      %6815 = vmatprep.mubr.bf16.mxu0 0
      %6816 = vmatmul.mubr.bf16.gmra.mrb[0].mxu0 %v6628
      %v6817 = vpop.f32.mrb[0].mxu0
      %v6818 = vadd.f32 0.0, %v6817
      %v6819 = vpop.f32.mrb[0].mxu0
      %v6820 = vpop.f32.mrb[0].mxu0
      %v6821 = vadd.f32 0.0, %v6820
      %v6822 = vpop.f32.mrb[0].mxu0
      %6823 = vmatprep.mubr.bf16.mxu0 0
      %6824 = vmatmul.mubr.bf16.gmra.mrb[0].mxu0 %v6630
      %v6825 = vpop.f32.mrb[0].mxu0
      %v6826 = vadd.f32 0.0, %v6825
      %v6827 = vpop.f32.mrb[0].mxu0
      %v6828 = vpop.f32.mrb[0].mxu0
      %v6829 = vadd.f32 0.0, %v6828
      %v6830 = vpop.f32.mrb[0].mxu0
      %6831 = vmatprep.mubr.bf16.mxu0 0
      %6832 = vmatmul.mubr.bf16.gmra.mrb[0].mxu0 %v6632
      %v6833 = vpop.f32.mrb[0].mxu0
      %v6834 = vadd.f32 0.0, %v6833
      %v6835 = vpop.f32.mrb[0].mxu0
      %v6836 = vpop.f32.mrb[0].mxu0
      %v6837 = vadd.f32 0.0, %v6836
      %v6838 = vpop.f32.mrb[0].mxu0
      %6839 = vmatprep.mubr.bf16.mxu0 0
      %6840 = vmatmul.mubr.bf16.gmra.mrb[0].mxu0 %v6634
      %v6841 = vpop.f32.mrb[0].mxu0
      %v6842 = vadd.f32 0.0, %v6841
      %v6843 = vpop.f32.mrb[0].mxu0
      %v6844 = vpop.f32.mrb[0].mxu0
      %v6845 = vadd.f32 0.0, %v6844
      %v6846 = vpop.f32.mrb[0].mxu0
      %6847 = vmatprep.mubr.bf16.mxu0 0
      %6848 = vmatmul.mubr.bf16.gmra.mrb[0].mxu0 %v6636
      %v6849 = vpop.f32.mrb[0].mxu0
      %v6850 = vadd.f32 0.0, %v6849
      %v6851 = vpop.f32.mrb[0].mxu0
      %v6852 = vpop.f32.mrb[0].mxu0
      %v6853 = vadd.f32 0.0, %v6852
      %v6854 = vpop.f32.mrb[0].mxu0
      %6855 = vmatprep.mubr.bf16.mxu0 0
      %6856 = vmatmul.mubr.bf16.gmra.mrb[0].mxu0 %v6638
      %v6857 = vpop.f32.mrb[0].mxu0
      %v6858 = vadd.f32 0.0, %v6857
      %v6859 = vpop.f32.mrb[0].mxu0
      %v6860 = vpop.f32.mrb[0].mxu0
      %v6861 = vadd.f32 0.0, %v6860
      %v6862 = vpop.f32.mrb[0].mxu0
      %6863 = vmatprep.mubr.bf16.mxu0 0
      %6864 = vmatmul.mubr.bf16.gmra.mrb[0].mxu0 %v6640
      %v6865 = vpop.f32.mrb[0].mxu0
      %v6866 = vadd.f32 0.0, %v6865
      %v6867 = vpop.f32.mrb[0].mxu0
      %v6868 = vpop.f32.mrb[0].mxu0
      %v6869 = vadd.f32 0.0, %v6868
      %v6870 = vpop.f32.mrb[0].mxu0
      %6871 = vmatprep.mubr.bf16.mxu0 0
      %6872 = vmatmul.mubr.bf16.gmra.mrb[0].mxu0 %v6642
      %v6873 = vpop.f32.mrb[0].mxu0
      %v6874 = vadd.f32 0.0, %v6873
      %v6875 = vpop.f32.mrb[0].mxu0
      %v6876 = vpop.f32.mrb[0].mxu0
      %v6877 = vadd.f32 0.0, %v6876
      %v6878 = vpop.f32.mrb[0].mxu0
      %6879 = vmatprep.mubr.bf16.mxu0 0
      %6880 = vmatmul.mubr.bf16.gmra.mrb[0].mxu0 %v6644
      %v6881 = vpop.f32.mrb[0].mxu0
      %v6882 = vadd.f32 0.0, %v6881
      %v6883 = vpop.f32.mrb[0].mxu0
      %v6884 = vpop.f32.mrb[0].mxu0
      %v6885 = vadd.f32 0.0, %v6884
      %v6886 = vpop.f32.mrb[0].mxu0
      %6887 = vdwg.mxu0
      %v6888 = vld [vmem:[#allocation3] sm:$0xff]
      %v6889 = vld [vmem:[#allocation3 + $0x8] sm:$0xff]
      %v6890 = vld [vmem:[#allocation3 + $0x10] sm:$0xff]
      %v6891 = vld [vmem:[#allocation3 + $0x18] sm:$0xff]
      %v6892 = vld [vmem:[#allocation3 + $0x20] sm:$0xff]
      %v6893 = vld [vmem:[#allocation3 + $0x28] sm:$0xff]
      %v6894 = vld [vmem:[#allocation3 + $0x30] sm:$0xff]
      %v6895 = vld [vmem:[#allocation3 + $0x38] sm:$0xff]
      %v6896 = vld [vmem:[#allocation3 + $0x40] sm:$0xff]
      %v6897 = vld [vmem:[#allocation3 + $0x48] sm:$0xff]
      %v6898 = vld [vmem:[#allocation3 + $0x50] sm:$0xff]
      %v6899 = vld [vmem:[#allocation3 + $0x58] sm:$0xff]
      %v6900 = vld [vmem:[#allocation3 + $0x60] sm:$0xff]
      %v6901 = vld [vmem:[#allocation3 + $0x68] sm:$0xff]
      %v6902 = vld [vmem:[#allocation3 + $0x70] sm:$0xff]
      %v6903 = vld [vmem:[#allocation3 + $0x78] sm:$0xff]
      %v6904 = vld [vmem:[#allocation3 + $0x80] sm:$0xff]
      %v6905 = vld [vmem:[#allocation3 + $0x88] sm:$0xff]
      %v6906 = vld [vmem:[#allocation3 + $0x90] sm:$0xff]
      %v6907 = vld [vmem:[#allocation3 + $0x98] sm:$0xff]
      %v6908 = vld [vmem:[#allocation3 + $0xa0] sm:$0xff]
      %v6909 = vld [vmem:[#allocation3 + $0xa8] sm:$0xff]
      %v6910 = vld [vmem:[#allocation3 + $0xb0] sm:$0xff]
      %v6911 = vld [vmem:[#allocation3 + $0xb8] sm:$0xff]
      %v6912 = vld [vmem:[#allocation3 + $0xc0] sm:$0xff]
      %v6913 = vld [vmem:[#allocation3 + $0xc8] sm:$0xff]
      %v6914 = vld [vmem:[#allocation3 + $0xd0] sm:$0xff]
      %v6915 = vld [vmem:[#allocation3 + $0xd8] sm:$0xff]
      %v6916 = vld [vmem:[#allocation3 + $0xe0] sm:$0xff]
      %v6917 = vld [vmem:[#allocation3 + $0xe8] sm:$0xff]
      %v6918 = vld [vmem:[#allocation3 + $0xf0] sm:$0xff]
      %v6919 = vld [vmem:[#allocation3 + $0xf8] sm:$0xff]
      %v6920 = vld [vmem:[#allocation3 + $0x100] sm:$0xff]
      %v6921 = vld [vmem:[#allocation3 + $0x108] sm:$0xff]
      %v6922 = vld [vmem:[#allocation3 + $0x110] sm:$0xff]
      %v6923 = vld [vmem:[#allocation3 + $0x118] sm:$0xff]
      %v6924 = vadd.f32 %v6888, %v6746
      %v6925 = vadd.f32 %v6889, %v6749
      %v6926 = vadd.f32 %v6890, %v6754
      %v6927 = vadd.f32 %v6891, %v6757
      %v6928 = vadd.f32 %v6892, %v6762
      %v6929 = vadd.f32 %v6893, %v6765
      %v6930 = vadd.f32 %v6894, %v6770
      %v6931 = vadd.f32 %v6895, %v6773
      %v6932 = vadd.f32 %v6896, %v6778
      %v6933 = vadd.f32 %v6897, %v6781
      %v6934 = vadd.f32 %v6898, %v6786
      %v6935 = vadd.f32 %v6899, %v6789
      %v6936 = vadd.f32 %v6900, %v6794
      %v6937 = vadd.f32 %v6901, %v6797
      %v6938 = vadd.f32 %v6902, %v6802
      %v6939 = vadd.f32 %v6903, %v6805
      %v6940 = vadd.f32 %v6904, %v6810
      %v6941 = vadd.f32 %v6905, %v6813
      %v6942 = vadd.f32 %v6906, %v6818
      %v6943 = vadd.f32 %v6907, %v6821
      %v6944 = vadd.f32 %v6908, %v6826
      %v6945 = vadd.f32 %v6909, %v6829
      %v6946 = vadd.f32 %v6910, %v6834
      %v6947 = vadd.f32 %v6911, %v6837
      %v6948 = vadd.f32 %v6912, %v6842
      %v6949 = vadd.f32 %v6913, %v6845
      %v6950 = vadd.f32 %v6914, %v6850
      %v6951 = vadd.f32 %v6915, %v6853
      %v6952 = vadd.f32 %v6916, %v6858
      %v6953 = vadd.f32 %v6917, %v6861
      %v6954 = vadd.f32 %v6918, %v6866
      %v6955 = vadd.f32 %v6919, %v6869
      %v6956 = vadd.f32 %v6920, %v6874
      %v6957 = vadd.f32 %v6921, %v6877
      %v6958 = vadd.f32 %v6922, %v6882
      %v6959 = vadd.f32 %v6923, %v6885
      %6960 = vst [vmem:[#allocation3] sm:$0xff] %v6924
      %6961 = vst [vmem:[#allocation3 + $0x8] sm:$0xff] %v6925
      %6962 = vst [vmem:[#allocation3 + $0x10] sm:$0xff] %v6926
      %6963 = vst [vmem:[#allocation3 + $0x18] sm:$0xff] %v6927
      %6964 = vst [vmem:[#allocation3 + $0x20] sm:$0xff] %v6928
      %6965 = vst [vmem:[#allocation3 + $0x28] sm:$0xff] %v6929
      %6966 = vst [vmem:[#allocation3 + $0x30] sm:$0xff] %v6930
      %6967 = vst [vmem:[#allocation3 + $0x38] sm:$0xff] %v6931
      %6968 = vst [vmem:[#allocation3 + $0x40] sm:$0xff] %v6932
      %6969 = vst [vmem:[#allocation3 + $0x48] sm:$0xff] %v6933
      %6970 = vst [vmem:[#allocation3 + $0x50] sm:$0xff] %v6934
      %6971 = vst [vmem:[#allocation3 + $0x58] sm:$0xff] %v6935
      %6972 = vst [vmem:[#allocation3 + $0x60] sm:$0xff] %v6936
      %6973 = vst [vmem:[#allocation3 + $0x68] sm:$0xff] %v6937
      %6974 = vst [vmem:[#allocation3 + $0x70] sm:$0xff] %v6938
      %6975 = vst [vmem:[#allocation3 + $0x78] sm:$0xff] %v6939
      %6976 = vst [vmem:[#allocation3 + $0x80] sm:$0xff] %v6940
      %6977 = vst [vmem:[#allocation3 + $0x88] sm:$0xff] %v6941
      %6978 = vst [vmem:[#allocation3 + $0x90] sm:$0xff] %v6942
      %6979 = vst [vmem:[#allocation3 + $0x98] sm:$0xff] %v6943
      %6980 = vst [vmem:[#allocation3 + $0xa0] sm:$0xff] %v6944
      %6981 = vst [vmem:[#allocation3 + $0xa8] sm:$0xff] %v6945
      %6982 = vst [vmem:[#allocation3 + $0xb0] sm:$0xff] %v6946
      %6983 = vst [vmem:[#allocation3 + $0xb8] sm:$0xff] %v6947
      %6984 = vst [vmem:[#allocation3 + $0xc0] sm:$0xff] %v6948
      %6985 = vst [vmem:[#allocation3 + $0xc8] sm:$0xff] %v6949
      %6986 = vst [vmem:[#allocation3 + $0xd0] sm:$0xff] %v6950
      %6987 = vst [vmem:[#allocation3 + $0xd8] sm:$0xff] %v6951
      %6988 = vst [vmem:[#allocation3 + $0xe0] sm:$0xff] %v6952
      %6989 = vst [vmem:[#allocation3 + $0xe8] sm:$0xff] %v6953
      %6990 = vst [vmem:[#allocation3 + $0xf0] sm:$0xff] %v6954
      %6991 = vst [vmem:[#allocation3 + $0xf8] sm:$0xff] %v6955
      %6992 = vst [vmem:[#allocation3 + $0x100] sm:$0xff] %v6956
      %6993 = vst [vmem:[#allocation3 + $0x108] sm:$0xff] %v6957
      %6994 = vst [vmem:[#allocation3 + $0x110] sm:$0xff] %v6958
      %6995 = vst [vmem:[#allocation3 + $0x118] sm:$0xff] %v6959
      %v6996 = vld [vmem:[#allocation2 + $0x10] sm:$0xc]
      %v6997 = vld [vmem:[#allocation2 + $0x14] sm:$0xf]
      %v6998 = vld [vmem:[#allocation2 + $0x18] sm:$0xf]
      %v6999 = vld [vmem:[#allocation2 + $0x1c] sm:$0xf]
      %v7000 = vld [vmem:[#allocation2 + $0x20] sm:$0xf]
      %v7001 = vld [vmem:[#allocation2 + $0x24] sm:$0xf]
      %v7002 = vld [vmem:[#allocation2 + $0x28] sm:$0xf]
      %v7003 = vld [vmem:[#allocation2 + $0x2c] sm:$0xf]
      %v7004 = vld [vmem:[#allocation2 + $0x30] sm:$0xf]
      %v7005 = vld [vmem:[#allocation2 + $0x34] sm:$0xf]
      %v7006 = vld [vmem:[#allocation2 + $0x38] sm:$0xf]
      %v7007 = vld [vmem:[#allocation2 + $0x3c] sm:$0xf]
      %v7008 = vld [vmem:[#allocation2 + $0x40] sm:$0xf]
      %v7009 = vld [vmem:[#allocation2 + $0x44] sm:$0xf]
      %v7010 = vld [vmem:[#allocation2 + $0x48] sm:$0xf]
      %v7011 = vld [vmem:[#allocation2 + $0x4c] sm:$0xf]
      %v7012 = vld [vmem:[#allocation2 + $0x50] sm:$0xf]
      %v7013 = vld [vmem:[#allocation2 + $0x54] sm:$0xf]
      %v7014 = vld [vmem:[#allocation2 + $0x58] sm:$0xf]
      %v7015 = vld [vmem:[#allocation2 + $0x5c] sm:$0xf]
      %v7016 = vld [vmem:[#allocation2 + $0x60] sm:$0xf]
      %v7017 = vld [vmem:[#allocation2 + $0x64] sm:$0xf]
      %v7018 = vld [vmem:[#allocation2 + $0x68] sm:$0xf]
      %v7019 = vld [vmem:[#allocation2 + $0x6c] sm:$0xf]
      %v7020 = vld [vmem:[#allocation2 + $0x70] sm:$0xf]
      %v7021 = vld [vmem:[#allocation2 + $0x74] sm:$0xf]
      %v7022 = vld [vmem:[#allocation2 + $0x78] sm:$0xf]
      %v7023 = vld [vmem:[#allocation2 + $0x7c] sm:$0xf]
      %v7024 = vld [vmem:[#allocation2 + $0x80] sm:$0xf]
      %v7025 = vld [vmem:[#allocation2 + $0x84] sm:$0xf]
      %v7026 = vld [vmem:[#allocation2 + $0x88] sm:$0xf]
      %v7027 = vld [vmem:[#allocation2 + $0x8c] sm:$0xf]
      %v7028 = vld [vmem:[#allocation2 + $0x90] sm:$0xf]
      %v7029 = vld [vmem:[#allocation2 + $0x94] sm:$0xf]
      %v7030 = vld [vmem:[#allocation2 + $0x98] sm:$0xf]
      %v7031 = vld [vmem:[#allocation2 + $0x9c] sm:$0xf]
      %v7032 = vld [vmem:[#allocation2 + $0xa0] sm:$0x3]
      %s7033 = scalar_lea.vmem %s6, 384
      %v7034 = vld [vmem:[%s7033] sm:$0xf]
      %v7035 = vld [vmem:[%s7033 + $0x4] sm:$0xf]
      %v7036 = vld [vmem:[%s7033 + $0x8] sm:$0xf]
      %v7037 = vld [vmem:[%s7033 + $0xc] sm:$0xf]
      %v7038 = vld [vmem:[%s7033 + $0x10] sm:$0xf]
      %v7039 = vld [vmem:[%s7033 + $0x14] sm:$0xf]
      %v7040 = vld [vmem:[%s7033 + $0x18] sm:$0xf]
      %v7041 = vld [vmem:[%s7033 + $0x1c] sm:$0xf]
      %v7042 = vld [vmem:[%s7033 + $0x20] sm:$0xf]
      %v7043 = vld [vmem:[%s7033 + $0x24] sm:$0xf]
      %v7044 = vld [vmem:[%s7033 + $0x28] sm:$0xf]
      %v7045 = vld [vmem:[%s7033 + $0x2c] sm:$0xf]
      %v7046 = vld [vmem:[%s7033 + $0x30] sm:$0xf]
      %v7047 = vld [vmem:[%s7033 + $0x34] sm:$0xf]
      %v7048 = vld [vmem:[%s7033 + $0x38] sm:$0xf]
      %v7049 = vld [vmem:[%s7033 + $0x3c] sm:$0xf]
      %v7087 = vunpack.c.l.b16 %v6996
      %v7088 = vunpack.c.l.b16 %v6997
      %v7089 = vunpack.c.l.b16 %v6998
      %v7090 = vunpack.c.l.b16 %v6999
      %v7091 = vunpack.c.l.b16 %v7000
      %v7092 = vunpack.c.l.b16 %v7001
      %v7093 = vunpack.c.l.b16 %v7002
      %v7094 = vunpack.c.l.b16 %v7003
      %v7095 = vunpack.c.l.b16 %v7004
      %v7096 = vunpack.c.l.b16 %v7005
      %v7097 = vunpack.c.l.b16 %v7006
      %v7098 = vunpack.c.l.b16 %v7007
      %v7099 = vunpack.c.l.b16 %v7008
      %v7100 = vunpack.c.l.b16 %v7009
      %v7101 = vunpack.c.l.b16 %v7010
      %v7102 = vunpack.c.l.b16 %v7011
      %v7103 = vunpack.c.l.b16 %v7012
      %v7104 = vunpack.c.l.b16 %v7013
      %v7105 = vunpack.c.l.b16 %v7014
      %v7106 = vunpack.c.l.b16 %v7015
      %v7107 = vunpack.c.l.b16 %v7016
      %v7108 = vunpack.c.l.b16 %v7017
      %v7109 = vunpack.c.l.b16 %v7018
      %v7110 = vunpack.c.l.b16 %v7019
      %v7111 = vunpack.c.l.b16 %v7020
      %v7112 = vunpack.c.l.b16 %v7021
      %v7113 = vunpack.c.l.b16 %v7022
      %v7114 = vunpack.c.l.b16 %v7023
      %v7115 = vunpack.c.l.b16 %v7024
      %v7116 = vunpack.c.l.b16 %v7025
      %v7117 = vunpack.c.l.b16 %v7026
      %v7118 = vunpack.c.l.b16 %v7027
      %v7119 = vunpack.c.l.b16 %v7028
      %v7120 = vunpack.c.l.b16 %v7029
      %v7121 = vunpack.c.l.b16 %v7030
      %v7122 = vunpack.c.l.b16 %v7031
      %v7123 = vunpack.c.l.b16 %v7032
      %v7124 = vpack.c.b16 %v7088, %v7087
      %v7125 = vpack.c.b16 %v7090, %v7089
      %v7126 = vpack.c.b16 %v7092, %v7091
      %v7127 = vpack.c.b16 %v7094, %v7093
      %v7128 = vpack.c.b16 %v7096, %v7095
      %v7129 = vpack.c.b16 %v7098, %v7097
      %v7130 = vpack.c.b16 %v7100, %v7099
      %v7131 = vpack.c.b16 %v7102, %v7101
      %v7132 = vpack.c.b16 %v7104, %v7103
      %v7133 = vpack.c.b16 %v7106, %v7105
      %v7134 = vpack.c.b16 %v7108, %v7107
      %v7135 = vpack.c.b16 %v7110, %v7109
      %v7136 = vpack.c.b16 %v7112, %v7111
      %v7137 = vpack.c.b16 %v7114, %v7113
      %v7138 = vpack.c.b16 %v7116, %v7115
      %v7139 = vpack.c.b16 %v7118, %v7117
      %v7140 = vpack.c.b16 %v7120, %v7119
      %v7141 = vpack.c.b16 %v7122, %v7121
      %v7142 = vpack.c.b16 %v7123, %v7123
      %v7143 = vrot.slane %v7124, 2
      %v7144 = vrot.slane %v7125, 2
      %v7145 = vsel %vm6607, %v7143, %v7144
      %v7146 = vrot.slane %v7126, 2
      %v7147 = vsel %vm6607, %v7144, %v7146
      %v7148 = vrot.slane %v7127, 2
      %v7149 = vsel %vm6607, %v7146, %v7148
      %v7150 = vrot.slane %v7128, 2
      %v7151 = vsel %vm6607, %v7148, %v7150
      %v7152 = vrot.slane %v7129, 2
      %v7153 = vsel %vm6607, %v7150, %v7152
      %v7154 = vrot.slane %v7130, 2
      %v7155 = vsel %vm6607, %v7152, %v7154
      %v7156 = vrot.slane %v7131, 2
      %v7157 = vsel %vm6607, %v7154, %v7156
      %v7158 = vrot.slane %v7132, 2
      %v7159 = vsel %vm6607, %v7156, %v7158
      %v7160 = vrot.slane %v7133, 2
      %v7161 = vsel %vm6607, %v7158, %v7160
      %v7162 = vrot.slane %v7134, 2
      %v7163 = vsel %vm6607, %v7160, %v7162
      %v7164 = vrot.slane %v7135, 2
      %v7165 = vsel %vm6607, %v7162, %v7164
      %v7166 = vrot.slane %v7136, 2
      %v7167 = vsel %vm6607, %v7164, %v7166
      %v7168 = vrot.slane %v7137, 2
      %v7169 = vsel %vm6607, %v7166, %v7168
      %v7170 = vrot.slane %v7138, 2
      %v7171 = vsel %vm6607, %v7168, %v7170
      %v7172 = vrot.slane %v7139, 2
      %v7173 = vsel %vm6607, %v7170, %v7172
      %v7174 = vrot.slane %v7140, 2
      %v7175 = vsel %vm6607, %v7172, %v7174
      %v7176 = vrot.slane %v7141, 2
      %v7177 = vsel %vm6607, %v7174, %v7176
      %v7178 = vrot.slane %v7142, 2
      %v7179 = vsel %vm6607, %v7176, %v7178
      %v7214 = vunpack.c.l.b16 %v7034
      %v7215 = vunpack.c.l.b16 %v7035
      %v7216 = vunpack.c.l.b16 %v7036
      %v7217 = vunpack.c.l.b16 %v7037
      %v7218 = vunpack.c.l.b16 %v7038
      %v7219 = vunpack.c.l.b16 %v7039
      %v7220 = vunpack.c.l.b16 %v7040
      %v7221 = vunpack.c.l.b16 %v7041
      %v7222 = vunpack.c.l.b16 %v7042
      %v7223 = vunpack.c.l.b16 %v7043
      %v7224 = vunpack.c.l.b16 %v7044
      %v7225 = vunpack.c.l.b16 %v7045
      %v7226 = vunpack.c.l.b16 %v7046
      %v7227 = vunpack.c.l.b16 %v7047
      %v7228 = vunpack.c.l.b16 %v7048
      %v7229 = vunpack.c.l.b16 %v7049
      %v7230 = vpack.c.b16 %v7215, %v7214
      %v7231 = vpack.c.b16 %v7217, %v7216
      %v7232 = vpack.c.b16 %v7219, %v7218
      %v7233 = vpack.c.b16 %v7221, %v7220
      %v7234 = vpack.c.b16 %v7223, %v7222
      %v7235 = vpack.c.b16 %v7225, %v7224
      %v7236 = vpack.c.b16 %v7227, %v7226
      %v7237 = vpack.c.b16 %v7229, %v7228
      %7246 = vmatprep.subr.bf16.mxu0 0
      %7247 = vmatpush1.bf16.msra.mxu0 %v7230
      %7248 = vmatprep.subr.bf16.mxu0 0
      %7249 = vmatpush1.bf16.msra.mxu0 %v7231
      %7250 = vmatprep.subr.bf16.mxu0 0
      %7251 = vmatpush1.bf16.msra.mxu0 %v7232
      %7252 = vmatprep.subr.bf16.mxu0 0
      %7253 = vmatpush1.bf16.msra.mxu0 %v7233
      %7254 = vmatprep.subr.bf16.mxu0 0
      %7255 = vmatpush1.bf16.msra.mxu0 %v7234
      %7256 = vmatprep.subr.bf16.mxu0 0
      %7257 = vmatpush1.bf16.msra.mxu0 %v7235
      %7258 = vmatprep.subr.bf16.mxu0 0
      %7259 = vmatpush1.bf16.msra.mxu0 %v7236
      %7260 = vmatprep.subr.bf16.mxu0 0
      %7261 = vmatpush1.bf16.msra.mxu0 %v7237
      %7262 = vmatprep.subr.bf16.mxu0 0
      %7263 = vmatpush1.bf16.msra.mxu0 0
      %7264 = vmatprep.subr.bf16.mxu0 0
      %7265 = vmatpush1.bf16.msra.mxu0 0
      %7266 = vmatprep.subr.bf16.mxu0 0
      %7267 = vmatpush1.bf16.msra.mxu0 0
      %7268 = vmatprep.subr.bf16.mxu0 0
      %7269 = vmatpush1.bf16.msra.mxu0 0
      %7270 = vmatprep.subr.bf16.mxu0 0
      %7271 = vmatpush1.bf16.msra.mxu0 0
      %7272 = vmatprep.subr.bf16.mxu0 0
      %7273 = vmatpush1.bf16.msra.mxu0 0
      %7274 = vmatprep.subr.bf16.mxu0 0
      %7275 = vmatpush1.bf16.msra.mxu0 0
      %7276 = vmatprep.subr.bf16.mxu0 0
      %7277 = vmatpush1.bf16.msra.mxu0 0
      %7278 = vmatprep.mubr.bf16.mxu0 0
      %7279 = vmatmul.mubr.bf16.gmra.mrb[0].mxu0 %v7145
      %v7280 = vpop.f32.mrb[0].mxu0
      %v7281 = vadd.f32 0.0, %v7280
      %v7282 = vpop.f32.mrb[0].mxu0
      %v7283 = vpop.f32.mrb[0].mxu0
      %v7284 = vadd.f32 0.0, %v7283
      %v7285 = vpop.f32.mrb[0].mxu0
      %7286 = vmatprep.mubr.bf16.mxu0 0
      %7287 = vmatmul.mubr.bf16.gmra.mrb[0].mxu0 %v7147
      %v7288 = vpop.f32.mrb[0].mxu0
      %v7289 = vadd.f32 0.0, %v7288
      %v7290 = vpop.f32.mrb[0].mxu0
      %v7291 = vpop.f32.mrb[0].mxu0
      %v7292 = vadd.f32 0.0, %v7291
      %v7293 = vpop.f32.mrb[0].mxu0
      %7294 = vmatprep.mubr.bf16.mxu0 0
      %7295 = vmatmul.mubr.bf16.gmra.mrb[0].mxu0 %v7149
      %v7296 = vpop.f32.mrb[0].mxu0
      %v7297 = vadd.f32 0.0, %v7296
      %v7298 = vpop.f32.mrb[0].mxu0
      %v7299 = vpop.f32.mrb[0].mxu0
      %v7300 = vadd.f32 0.0, %v7299
      %v7301 = vpop.f32.mrb[0].mxu0
      %7302 = vmatprep.mubr.bf16.mxu0 0
      %7303 = vmatmul.mubr.bf16.gmra.mrb[0].mxu0 %v7151
      %v7304 = vpop.f32.mrb[0].mxu0
      %v7305 = vadd.f32 0.0, %v7304
      %v7306 = vpop.f32.mrb[0].mxu0
      %v7307 = vpop.f32.mrb[0].mxu0
      %v7308 = vadd.f32 0.0, %v7307
      %v7309 = vpop.f32.mrb[0].mxu0
      %7310 = vmatprep.mubr.bf16.mxu0 0
      %7311 = vmatmul.mubr.bf16.gmra.mrb[0].mxu0 %v7153
      %v7312 = vpop.f32.mrb[0].mxu0
      %v7313 = vadd.f32 0.0, %v7312
      %v7314 = vpop.f32.mrb[0].mxu0
      %v7315 = vpop.f32.mrb[0].mxu0
      %v7316 = vadd.f32 0.0, %v7315
      %v7317 = vpop.f32.mrb[0].mxu0
      %7318 = vmatprep.mubr.bf16.mxu0 0
      %7319 = vmatmul.mubr.bf16.gmra.mrb[0].mxu0 %v7155
      %v7320 = vpop.f32.mrb[0].mxu0
      %v7321 = vadd.f32 0.0, %v7320
      %v7322 = vpop.f32.mrb[0].mxu0
      %v7323 = vpop.f32.mrb[0].mxu0
      %v7324 = vadd.f32 0.0, %v7323
      %v7325 = vpop.f32.mrb[0].mxu0
      %7326 = vmatprep.mubr.bf16.mxu0 0
      %7327 = vmatmul.mubr.bf16.gmra.mrb[0].mxu0 %v7157
      %v7328 = vpop.f32.mrb[0].mxu0
      %v7329 = vadd.f32 0.0, %v7328
      %v7330 = vpop.f32.mrb[0].mxu0
      %v7331 = vpop.f32.mrb[0].mxu0
      %v7332 = vadd.f32 0.0, %v7331
      %v7333 = vpop.f32.mrb[0].mxu0
      %7334 = vmatprep.mubr.bf16.mxu0 0
      %7335 = vmatmul.mubr.bf16.gmra.mrb[0].mxu0 %v7159
      %v7336 = vpop.f32.mrb[0].mxu0
      %v7337 = vadd.f32 0.0, %v7336
      %v7338 = vpop.f32.mrb[0].mxu0
      %v7339 = vpop.f32.mrb[0].mxu0
      %v7340 = vadd.f32 0.0, %v7339
      %v7341 = vpop.f32.mrb[0].mxu0
      %7342 = vmatprep.mubr.bf16.mxu0 0
      %7343 = vmatmul.mubr.bf16.gmra.mrb[0].mxu0 %v7161
      %v7344 = vpop.f32.mrb[0].mxu0
      %v7345 = vadd.f32 0.0, %v7344
      %v7346 = vpop.f32.mrb[0].mxu0
      %v7347 = vpop.f32.mrb[0].mxu0
      %v7348 = vadd.f32 0.0, %v7347
      %v7349 = vpop.f32.mrb[0].mxu0
      %7350 = vmatprep.mubr.bf16.mxu0 0
      %7351 = vmatmul.mubr.bf16.gmra.mrb[0].mxu0 %v7163
      %v7352 = vpop.f32.mrb[0].mxu0
      %v7353 = vadd.f32 0.0, %v7352
      %v7354 = vpop.f32.mrb[0].mxu0
      %v7355 = vpop.f32.mrb[0].mxu0
      %v7356 = vadd.f32 0.0, %v7355
      %v7357 = vpop.f32.mrb[0].mxu0
      %7358 = vmatprep.mubr.bf16.mxu0 0
      %7359 = vmatmul.mubr.bf16.gmra.mrb[0].mxu0 %v7165
      %v7360 = vpop.f32.mrb[0].mxu0
      %v7361 = vadd.f32 0.0, %v7360
      %v7362 = vpop.f32.mrb[0].mxu0
      %v7363 = vpop.f32.mrb[0].mxu0
      %v7364 = vadd.f32 0.0, %v7363
      %v7365 = vpop.f32.mrb[0].mxu0
      %7366 = vmatprep.mubr.bf16.mxu0 0
      %7367 = vmatmul.mubr.bf16.gmra.mrb[0].mxu0 %v7167
      %v7368 = vpop.f32.mrb[0].mxu0
      %v7369 = vadd.f32 0.0, %v7368
      %v7370 = vpop.f32.mrb[0].mxu0
      %v7371 = vpop.f32.mrb[0].mxu0
      %v7372 = vadd.f32 0.0, %v7371
      %v7373 = vpop.f32.mrb[0].mxu0
      %7374 = vmatprep.mubr.bf16.mxu0 0
      %7375 = vmatmul.mubr.bf16.gmra.mrb[0].mxu0 %v7169
      %v7376 = vpop.f32.mrb[0].mxu0
      %v7377 = vadd.f32 0.0, %v7376
      %v7378 = vpop.f32.mrb[0].mxu0
      %v7379 = vpop.f32.mrb[0].mxu0
      %v7380 = vadd.f32 0.0, %v7379
      %v7381 = vpop.f32.mrb[0].mxu0
      %7382 = vmatprep.mubr.bf16.mxu0 0
      %7383 = vmatmul.mubr.bf16.gmra.mrb[0].mxu0 %v7171
      %v7384 = vpop.f32.mrb[0].mxu0
      %v7385 = vadd.f32 0.0, %v7384
      %v7386 = vpop.f32.mrb[0].mxu0
      %v7387 = vpop.f32.mrb[0].mxu0
      %v7388 = vadd.f32 0.0, %v7387
      %v7389 = vpop.f32.mrb[0].mxu0
      %7390 = vmatprep.mubr.bf16.mxu0 0
      %7391 = vmatmul.mubr.bf16.gmra.mrb[0].mxu0 %v7173
      %v7392 = vpop.f32.mrb[0].mxu0
      %v7393 = vadd.f32 0.0, %v7392
      %v7394 = vpop.f32.mrb[0].mxu0
      %v7395 = vpop.f32.mrb[0].mxu0
      %v7396 = vadd.f32 0.0, %v7395
      %v7397 = vpop.f32.mrb[0].mxu0
      %7398 = vmatprep.mubr.bf16.mxu0 0
      %7399 = vmatmul.mubr.bf16.gmra.mrb[0].mxu0 %v7175
      %v7400 = vpop.f32.mrb[0].mxu0
      %v7401 = vadd.f32 0.0, %v7400
      %v7402 = vpop.f32.mrb[0].mxu0
      %v7403 = vpop.f32.mrb[0].mxu0
      %v7404 = vadd.f32 0.0, %v7403
      %v7405 = vpop.f32.mrb[0].mxu0
      %7406 = vmatprep.mubr.bf16.mxu0 0
      %7407 = vmatmul.mubr.bf16.gmra.mrb[0].mxu0 %v7177
      %v7408 = vpop.f32.mrb[0].mxu0
      %v7409 = vadd.f32 0.0, %v7408
      %v7410 = vpop.f32.mrb[0].mxu0
      %v7411 = vpop.f32.mrb[0].mxu0
      %v7412 = vadd.f32 0.0, %v7411
      %v7413 = vpop.f32.mrb[0].mxu0
      %7414 = vmatprep.mubr.bf16.mxu0 0
      %7415 = vmatmul.mubr.bf16.gmra.mrb[0].mxu0 %v7179
      %v7416 = vpop.f32.mrb[0].mxu0
      %v7417 = vadd.f32 0.0, %v7416
      %v7418 = vpop.f32.mrb[0].mxu0
      %v7419 = vpop.f32.mrb[0].mxu0
      %v7420 = vadd.f32 0.0, %v7419
      %v7421 = vpop.f32.mrb[0].mxu0
      %7422 = vdwg.mxu0
      %v7423 = vld [vmem:[#allocation3] sm:$0xff]
      %v7424 = vld [vmem:[#allocation3 + $0x8] sm:$0xff]
      %v7425 = vld [vmem:[#allocation3 + $0x10] sm:$0xff]
      %v7426 = vld [vmem:[#allocation3 + $0x18] sm:$0xff]
      %v7427 = vld [vmem:[#allocation3 + $0x20] sm:$0xff]
      %v7428 = vld [vmem:[#allocation3 + $0x28] sm:$0xff]
      %v7429 = vld [vmem:[#allocation3 + $0x30] sm:$0xff]
      %v7430 = vld [vmem:[#allocation3 + $0x38] sm:$0xff]
      %v7431 = vld [vmem:[#allocation3 + $0x40] sm:$0xff]
      %v7432 = vld [vmem:[#allocation3 + $0x48] sm:$0xff]
      %v7433 = vld [vmem:[#allocation3 + $0x50] sm:$0xff]
      %v7434 = vld [vmem:[#allocation3 + $0x58] sm:$0xff]
      %v7435 = vld [vmem:[#allocation3 + $0x60] sm:$0xff]
      %v7436 = vld [vmem:[#allocation3 + $0x68] sm:$0xff]
      %v7437 = vld [vmem:[#allocation3 + $0x70] sm:$0xff]
      %v7438 = vld [vmem:[#allocation3 + $0x78] sm:$0xff]
      %v7439 = vld [vmem:[#allocation3 + $0x80] sm:$0xff]
      %v7440 = vld [vmem:[#allocation3 + $0x88] sm:$0xff]
      %v7441 = vld [vmem:[#allocation3 + $0x90] sm:$0xff]
      %v7442 = vld [vmem:[#allocation3 + $0x98] sm:$0xff]
      %v7443 = vld [vmem:[#allocation3 + $0xa0] sm:$0xff]
      %v7444 = vld [vmem:[#allocation3 + $0xa8] sm:$0xff]
      %v7445 = vld [vmem:[#allocation3 + $0xb0] sm:$0xff]
      %v7446 = vld [vmem:[#allocation3 + $0xb8] sm:$0xff]
      %v7447 = vld [vmem:[#allocation3 + $0xc0] sm:$0xff]
      %v7448 = vld [vmem:[#allocation3 + $0xc8] sm:$0xff]
      %v7449 = vld [vmem:[#allocation3 + $0xd0] sm:$0xff]
      %v7450 = vld [vmem:[#allocation3 + $0xd8] sm:$0xff]
      %v7451 = vld [vmem:[#allocation3 + $0xe0] sm:$0xff]
      %v7452 = vld [vmem:[#allocation3 + $0xe8] sm:$0xff]
      %v7453 = vld [vmem:[#allocation3 + $0xf0] sm:$0xff]
      %v7454 = vld [vmem:[#allocation3 + $0xf8] sm:$0xff]
      %v7455 = vld [vmem:[#allocation3 + $0x100] sm:$0xff]
      %v7456 = vld [vmem:[#allocation3 + $0x108] sm:$0xff]
      %v7457 = vld [vmem:[#allocation3 + $0x110] sm:$0xff]
      %v7458 = vld [vmem:[#allocation3 + $0x118] sm:$0xff]
      %v7459 = vadd.f32 %v7423, %v7281
      %v7460 = vadd.f32 %v7424, %v7284
      %v7461 = vadd.f32 %v7425, %v7289
      %v7462 = vadd.f32 %v7426, %v7292
      %v7463 = vadd.f32 %v7427, %v7297
      %v7464 = vadd.f32 %v7428, %v7300
      %v7465 = vadd.f32 %v7429, %v7305
      %v7466 = vadd.f32 %v7430, %v7308
      %v7467 = vadd.f32 %v7431, %v7313
      %v7468 = vadd.f32 %v7432, %v7316
      %v7469 = vadd.f32 %v7433, %v7321
      %v7470 = vadd.f32 %v7434, %v7324
      %v7471 = vadd.f32 %v7435, %v7329
      %v7472 = vadd.f32 %v7436, %v7332
      %v7473 = vadd.f32 %v7437, %v7337
      %v7474 = vadd.f32 %v7438, %v7340
      %v7475 = vadd.f32 %v7439, %v7345
      %v7476 = vadd.f32 %v7440, %v7348
      %v7477 = vadd.f32 %v7441, %v7353
      %v7478 = vadd.f32 %v7442, %v7356
      %v7479 = vadd.f32 %v7443, %v7361
      %v7480 = vadd.f32 %v7444, %v7364
      %v7481 = vadd.f32 %v7445, %v7369
      %v7482 = vadd.f32 %v7446, %v7372
      %v7483 = vadd.f32 %v7447, %v7377
      %v7484 = vadd.f32 %v7448, %v7380
      %v7485 = vadd.f32 %v7449, %v7385
      %v7486 = vadd.f32 %v7450, %v7388
      %v7487 = vadd.f32 %v7451, %v7393
      %v7488 = vadd.f32 %v7452, %v7396
      %v7489 = vadd.f32 %v7453, %v7401
      %v7490 = vadd.f32 %v7454, %v7404
      %v7491 = vadd.f32 %v7455, %v7409
      %v7492 = vadd.f32 %v7456, %v7412
      %v7493 = vadd.f32 %v7457, %v7417
      %v7494 = vadd.f32 %v7458, %v7420
      %7495 = vst [vmem:[#allocation3] sm:$0xff] %v7459
      %7496 = vst [vmem:[#allocation3 + $0x8] sm:$0xff] %v7460
      %7497 = vst [vmem:[#allocation3 + $0x10] sm:$0xff] %v7461
      %7498 = vst [vmem:[#allocation3 + $0x18] sm:$0xff] %v7462
      %7499 = vst [vmem:[#allocation3 + $0x20] sm:$0xff] %v7463
      %7500 = vst [vmem:[#allocation3 + $0x28] sm:$0xff] %v7464
      %7501 = vst [vmem:[#allocation3 + $0x30] sm:$0xff] %v7465
      %7502 = vst [vmem:[#allocation3 + $0x38] sm:$0xff] %v7466
      %7503 = vst [vmem:[#allocation3 + $0x40] sm:$0xff] %v7467
      %7504 = vst [vmem:[#allocation3 + $0x48] sm:$0xff] %v7468
      %7505 = vst [vmem:[#allocation3 + $0x50] sm:$0xff] %v7469
      %7506 = vst [vmem:[#allocation3 + $0x58] sm:$0xff] %v7470
      %7507 = vst [vmem:[#allocation3 + $0x60] sm:$0xff] %v7471
      %7508 = vst [vmem:[#allocation3 + $0x68] sm:$0xff] %v7472
      %7509 = vst [vmem:[#allocation3 + $0x70] sm:$0xff] %v7473
      %7510 = vst [vmem:[#allocation3 + $0x78] sm:$0xff] %v7474
      %7511 = vst [vmem:[#allocation3 + $0x80] sm:$0xff] %v7475
      %7512 = vst [vmem:[#allocation3 + $0x88] sm:$0xff] %v7476
      %7513 = vst [vmem:[#allocation3 + $0x90] sm:$0xff] %v7477
      %7514 = vst [vmem:[#allocation3 + $0x98] sm:$0xff] %v7478
      %7515 = vst [vmem:[#allocation3 + $0xa0] sm:$0xff] %v7479
      %7516 = vst [vmem:[#allocation3 + $0xa8] sm:$0xff] %v7480
      %7517 = vst [vmem:[#allocation3 + $0xb0] sm:$0xff] %v7481
      %7518 = vst [vmem:[#allocation3 + $0xb8] sm:$0xff] %v7482
      %7519 = vst [vmem:[#allocation3 + $0xc0] sm:$0xff] %v7483
      %7520 = vst [vmem:[#allocation3 + $0xc8] sm:$0xff] %v7484
      %7521 = vst [vmem:[#allocation3 + $0xd0] sm:$0xff] %v7485
      %7522 = vst [vmem:[#allocation3 + $0xd8] sm:$0xff] %v7486
      %7523 = vst [vmem:[#allocation3 + $0xe0] sm:$0xff] %v7487
      %7524 = vst [vmem:[#allocation3 + $0xe8] sm:$0xff] %v7488
      %7525 = vst [vmem:[#allocation3 + $0xf0] sm:$0xff] %v7489
      %7526 = vst [vmem:[#allocation3 + $0xf8] sm:$0xff] %v7490
      %7527 = vst [vmem:[#allocation3 + $0x100] sm:$0xff] %v7491
      %7528 = vst [vmem:[#allocation3 + $0x108] sm:$0xff] %v7492
      %7529 = vst [vmem:[#allocation3 + $0x110] sm:$0xff] %v7493
      %7530 = vst [vmem:[#allocation3 + $0x118] sm:$0xff] %v7494
      %v7531 = vld [vmem:[#allocation2 + $0x10] sm:$0xc]
      %v7532 = vld [vmem:[#allocation2 + $0x14] sm:$0xf]
      %v7533 = vld [vmem:[#allocation2 + $0x18] sm:$0xf]
      %v7534 = vld [vmem:[#allocation2 + $0x1c] sm:$0xf]
      %v7535 = vld [vmem:[#allocation2 + $0x20] sm:$0xf]
      %v7536 = vld [vmem:[#allocation2 + $0x24] sm:$0xf]
      %v7537 = vld [vmem:[#allocation2 + $0x28] sm:$0xf]
      %v7538 = vld [vmem:[#allocation2 + $0x2c] sm:$0xf]
      %v7539 = vld [vmem:[#allocation2 + $0x30] sm:$0xf]
      %v7540 = vld [vmem:[#allocation2 + $0x34] sm:$0xf]
      %v7541 = vld [vmem:[#allocation2 + $0x38] sm:$0xf]
      %v7542 = vld [vmem:[#allocation2 + $0x3c] sm:$0xf]
      %v7543 = vld [vmem:[#allocation2 + $0x40] sm:$0xf]
      %v7544 = vld [vmem:[#allocation2 + $0x44] sm:$0xf]
      %v7545 = vld [vmem:[#allocation2 + $0x48] sm:$0xf]
      %v7546 = vld [vmem:[#allocation2 + $0x4c] sm:$0xf]
      %v7547 = vld [vmem:[#allocation2 + $0x50] sm:$0xf]
      %v7548 = vld [vmem:[#allocation2 + $0x54] sm:$0xf]
      %v7549 = vld [vmem:[#allocation2 + $0x58] sm:$0xf]
      %v7550 = vld [vmem:[#allocation2 + $0x5c] sm:$0xf]
      %v7551 = vld [vmem:[#allocation2 + $0x60] sm:$0xf]
      %v7552 = vld [vmem:[#allocation2 + $0x64] sm:$0xf]
      %v7553 = vld [vmem:[#allocation2 + $0x68] sm:$0xf]
      %v7554 = vld [vmem:[#allocation2 + $0x6c] sm:$0xf]
      %v7555 = vld [vmem:[#allocation2 + $0x70] sm:$0xf]
      %v7556 = vld [vmem:[#allocation2 + $0x74] sm:$0xf]
      %v7557 = vld [vmem:[#allocation2 + $0x78] sm:$0xf]
      %v7558 = vld [vmem:[#allocation2 + $0x7c] sm:$0xf]
      %v7559 = vld [vmem:[#allocation2 + $0x80] sm:$0xf]
      %v7560 = vld [vmem:[#allocation2 + $0x84] sm:$0xf]
      %v7561 = vld [vmem:[#allocation2 + $0x88] sm:$0xf]
      %v7562 = vld [vmem:[#allocation2 + $0x8c] sm:$0xf]
      %v7563 = vld [vmem:[#allocation2 + $0x90] sm:$0xf]
      %v7564 = vld [vmem:[#allocation2 + $0x94] sm:$0xf]
      %v7565 = vld [vmem:[#allocation2 + $0x98] sm:$0xf]
      %v7566 = vld [vmem:[#allocation2 + $0x9c] sm:$0xf]
      %v7567 = vld [vmem:[#allocation2 + $0xa0] sm:$0x7]
      %s7568 = scalar_lea.vmem %s6, 448
      %v7569 = vld [vmem:[%s7568] sm:$0xf]
      %v7570 = vld [vmem:[%s7568 + $0x4] sm:$0xf]
      %v7571 = vld [vmem:[%s7568 + $0x8] sm:$0xf]
      %v7572 = vld [vmem:[%s7568 + $0xc] sm:$0xf]
      %v7573 = vld [vmem:[%s7568 + $0x10] sm:$0xf]
      %v7574 = vld [vmem:[%s7568 + $0x14] sm:$0xf]
      %v7575 = vld [vmem:[%s7568 + $0x18] sm:$0xf]
      %v7576 = vld [vmem:[%s7568 + $0x1c] sm:$0xf]
      %v7577 = vld [vmem:[%s7568 + $0x20] sm:$0xf]
      %v7578 = vld [vmem:[%s7568 + $0x24] sm:$0xf]
      %v7579 = vld [vmem:[%s7568 + $0x28] sm:$0xf]
      %v7580 = vld [vmem:[%s7568 + $0x2c] sm:$0xf]
      %v7581 = vld [vmem:[%s7568 + $0x30] sm:$0xf]
      %v7582 = vld [vmem:[%s7568 + $0x34] sm:$0xf]
      %v7583 = vld [vmem:[%s7568 + $0x38] sm:$0xf]
      %v7584 = vld [vmem:[%s7568 + $0x3c] sm:$0xf]
      %v7622 = vunpack.c.l.b16 %v7531
      %v7623 = vunpack.c.l.b16 %v7532
      %v7624 = vunpack.c.l.b16 %v7533
      %v7625 = vunpack.c.l.b16 %v7534
      %v7626 = vunpack.c.l.b16 %v7535
      %v7627 = vunpack.c.l.b16 %v7536
      %v7628 = vunpack.c.l.b16 %v7537
      %v7629 = vunpack.c.l.b16 %v7538
      %v7630 = vunpack.c.l.b16 %v7539
      %v7631 = vunpack.c.l.b16 %v7540
      %v7632 = vunpack.c.l.b16 %v7541
      %v7633 = vunpack.c.l.b16 %v7542
      %v7634 = vunpack.c.l.b16 %v7543
      %v7635 = vunpack.c.l.b16 %v7544
      %v7636 = vunpack.c.l.b16 %v7545
      %v7637 = vunpack.c.l.b16 %v7546
      %v7638 = vunpack.c.l.b16 %v7547
      %v7639 = vunpack.c.l.b16 %v7548
      %v7640 = vunpack.c.l.b16 %v7549
      %v7641 = vunpack.c.l.b16 %v7550
      %v7642 = vunpack.c.l.b16 %v7551
      %v7643 = vunpack.c.l.b16 %v7552
      %v7644 = vunpack.c.l.b16 %v7553
      %v7645 = vunpack.c.l.b16 %v7554
      %v7646 = vunpack.c.l.b16 %v7555
      %v7647 = vunpack.c.l.b16 %v7556
      %v7648 = vunpack.c.l.b16 %v7557
      %v7649 = vunpack.c.l.b16 %v7558
      %v7650 = vunpack.c.l.b16 %v7559
      %v7651 = vunpack.c.l.b16 %v7560
      %v7652 = vunpack.c.l.b16 %v7561
      %v7653 = vunpack.c.l.b16 %v7562
      %v7654 = vunpack.c.l.b16 %v7563
      %v7655 = vunpack.c.l.b16 %v7564
      %v7656 = vunpack.c.l.b16 %v7565
      %v7657 = vunpack.c.l.b16 %v7566
      %v7658 = vunpack.c.l.b16 %v7567
      %v7659 = vpack.c.b16 %v7623, %v7622
      %v7660 = vpack.c.b16 %v7625, %v7624
      %v7661 = vpack.c.b16 %v7627, %v7626
      %v7662 = vpack.c.b16 %v7629, %v7628
      %v7663 = vpack.c.b16 %v7631, %v7630
      %v7664 = vpack.c.b16 %v7633, %v7632
      %v7665 = vpack.c.b16 %v7635, %v7634
      %v7666 = vpack.c.b16 %v7637, %v7636
      %v7667 = vpack.c.b16 %v7639, %v7638
      %v7668 = vpack.c.b16 %v7641, %v7640
      %v7669 = vpack.c.b16 %v7643, %v7642
      %v7670 = vpack.c.b16 %v7645, %v7644
      %v7671 = vpack.c.b16 %v7647, %v7646
      %v7672 = vpack.c.b16 %v7649, %v7648
      %v7673 = vpack.c.b16 %v7651, %v7650
      %v7674 = vpack.c.b16 %v7653, %v7652
      %v7675 = vpack.c.b16 %v7655, %v7654
      %v7676 = vpack.c.b16 %v7657, %v7656
      %v7677 = vpack.c.b16 %v7658, %v7658
      %vm7678 = vsmask.f32 5376
      %v7680 = vshrl.u32 %v7659, 16
      %v7682 = vrot.slane %v7680, 2
      %v7683 = vshll.u32 %v7659, 16
      %v7685 = vrot.slane %v7683, 3
      %v7686 = vor.u32 %v7682, %v7685
      %v7688 = vshrl.u32 %v7660, 16
      %v7690 = vrot.slane %v7688, 2
      %v7691 = vshll.u32 %v7660, 16
      %v7693 = vrot.slane %v7691, 3
      %v7694 = vor.u32 %v7690, %v7693
      %v7695 = vsel %vm7678, %v7686, %v7694
      %v7697 = vshrl.u32 %v7661, 16
      %v7699 = vrot.slane %v7697, 2
      %v7700 = vshll.u32 %v7661, 16
      %v7702 = vrot.slane %v7700, 3
      %v7703 = vor.u32 %v7699, %v7702
      %v7704 = vsel %vm7678, %v7694, %v7703
      %v7706 = vshrl.u32 %v7662, 16
      %v7708 = vrot.slane %v7706, 2
      %v7709 = vshll.u32 %v7662, 16
      %v7711 = vrot.slane %v7709, 3
      %v7712 = vor.u32 %v7708, %v7711
      %v7713 = vsel %vm7678, %v7703, %v7712
      %v7715 = vshrl.u32 %v7663, 16
      %v7717 = vrot.slane %v7715, 2
      %v7718 = vshll.u32 %v7663, 16
      %v7720 = vrot.slane %v7718, 3
      %v7721 = vor.u32 %v7717, %v7720
      %v7722 = vsel %vm7678, %v7712, %v7721
      %v7724 = vshrl.u32 %v7664, 16
      %v7726 = vrot.slane %v7724, 2
      %v7727 = vshll.u32 %v7664, 16
      %v7729 = vrot.slane %v7727, 3
      %v7730 = vor.u32 %v7726, %v7729
      %v7731 = vsel %vm7678, %v7721, %v7730
      %v7733 = vshrl.u32 %v7665, 16
      %v7735 = vrot.slane %v7733, 2
      %v7736 = vshll.u32 %v7665, 16
      %v7738 = vrot.slane %v7736, 3
      %v7739 = vor.u32 %v7735, %v7738
      %v7740 = vsel %vm7678, %v7730, %v7739
      %v7742 = vshrl.u32 %v7666, 16
      %v7744 = vrot.slane %v7742, 2
      %v7745 = vshll.u32 %v7666, 16
      %v7747 = vrot.slane %v7745, 3
      %v7748 = vor.u32 %v7744, %v7747
      %v7749 = vsel %vm7678, %v7739, %v7748
      %v7751 = vshrl.u32 %v7667, 16
      %v7753 = vrot.slane %v7751, 2
      %v7754 = vshll.u32 %v7667, 16
      %v7756 = vrot.slane %v7754, 3
      %v7757 = vor.u32 %v7753, %v7756
      %v7758 = vsel %vm7678, %v7748, %v7757
      %v7760 = vshrl.u32 %v7668, 16
      %v7762 = vrot.slane %v7760, 2
      %v7763 = vshll.u32 %v7668, 16
      %v7765 = vrot.slane %v7763, 3
      %v7766 = vor.u32 %v7762, %v7765
      %v7767 = vsel %vm7678, %v7757, %v7766
      %v7769 = vshrl.u32 %v7669, 16
      %v7771 = vrot.slane %v7769, 2
      %v7772 = vshll.u32 %v7669, 16
      %v7774 = vrot.slane %v7772, 3
      %v7775 = vor.u32 %v7771, %v7774
      %v7776 = vsel %vm7678, %v7766, %v7775
      %v7778 = vshrl.u32 %v7670, 16
      %v7780 = vrot.slane %v7778, 2
      %v7781 = vshll.u32 %v7670, 16
      %v7783 = vrot.slane %v7781, 3
      %v7784 = vor.u32 %v7780, %v7783
      %v7785 = vsel %vm7678, %v7775, %v7784
      %v7787 = vshrl.u32 %v7671, 16
      %v7789 = vrot.slane %v7787, 2
      %v7790 = vshll.u32 %v7671, 16
      %v7792 = vrot.slane %v7790, 3
      %v7793 = vor.u32 %v7789, %v7792
      %v7794 = vsel %vm7678, %v7784, %v7793
      %v7796 = vshrl.u32 %v7672, 16
      %v7798 = vrot.slane %v7796, 2
      %v7799 = vshll.u32 %v7672, 16
      %v7801 = vrot.slane %v7799, 3
      %v7802 = vor.u32 %v7798, %v7801
      %v7803 = vsel %vm7678, %v7793, %v7802
      %v7805 = vshrl.u32 %v7673, 16
      %v7807 = vrot.slane %v7805, 2
      %v7808 = vshll.u32 %v7673, 16
      %v7810 = vrot.slane %v7808, 3
      %v7811 = vor.u32 %v7807, %v7810
      %v7812 = vsel %vm7678, %v7802, %v7811
      %v7814 = vshrl.u32 %v7674, 16
      %v7816 = vrot.slane %v7814, 2
      %v7817 = vshll.u32 %v7674, 16
      %v7819 = vrot.slane %v7817, 3
      %v7820 = vor.u32 %v7816, %v7819
      %v7821 = vsel %vm7678, %v7811, %v7820
      %v7823 = vshrl.u32 %v7675, 16
      %v7825 = vrot.slane %v7823, 2
      %v7826 = vshll.u32 %v7675, 16
      %v7828 = vrot.slane %v7826, 3
      %v7829 = vor.u32 %v7825, %v7828
      %v7830 = vsel %vm7678, %v7820, %v7829
      %v7832 = vshrl.u32 %v7676, 16
      %v7834 = vrot.slane %v7832, 2
      %v7835 = vshll.u32 %v7676, 16
      %v7837 = vrot.slane %v7835, 3
      %v7838 = vor.u32 %v7834, %v7837
      %v7839 = vsel %vm7678, %v7829, %v7838
      %v7841 = vshrl.u32 %v7677, 16
      %v7843 = vrot.slane %v7841, 2
      %v7844 = vshll.u32 %v7677, 16
      %v7846 = vrot.slane %v7844, 3
      %v7847 = vor.u32 %v7843, %v7846
      %v7848 = vsel %vm7678, %v7838, %v7847
      %v7883 = vunpack.c.l.b16 %v7569
      %v7884 = vunpack.c.l.b16 %v7570
      %v7885 = vunpack.c.l.b16 %v7571
      %v7886 = vunpack.c.l.b16 %v7572
      %v7887 = vunpack.c.l.b16 %v7573
      %v7888 = vunpack.c.l.b16 %v7574
      %v7889 = vunpack.c.l.b16 %v7575
      %v7890 = vunpack.c.l.b16 %v7576
      %v7891 = vunpack.c.l.b16 %v7577
      %v7892 = vunpack.c.l.b16 %v7578
      %v7893 = vunpack.c.l.b16 %v7579
      %v7894 = vunpack.c.l.b16 %v7580
      %v7895 = vunpack.c.l.b16 %v7581
      %v7896 = vunpack.c.l.b16 %v7582
      %v7897 = vunpack.c.l.b16 %v7583
      %v7898 = vunpack.c.l.b16 %v7584
      %v7899 = vpack.c.b16 %v7884, %v7883
      %v7900 = vpack.c.b16 %v7886, %v7885
      %v7901 = vpack.c.b16 %v7888, %v7887
      %v7902 = vpack.c.b16 %v7890, %v7889
      %v7903 = vpack.c.b16 %v7892, %v7891
      %v7904 = vpack.c.b16 %v7894, %v7893
      %v7905 = vpack.c.b16 %v7896, %v7895
      %v7906 = vpack.c.b16 %v7898, %v7897
      %7915 = vmatprep.subr.bf16.mxu0 0
      %7916 = vmatpush1.bf16.msra.mxu0 %v7899
      %7917 = vmatprep.subr.bf16.mxu0 0
      %7918 = vmatpush1.bf16.msra.mxu0 %v7900
      %7919 = vmatprep.subr.bf16.mxu0 0
      %7920 = vmatpush1.bf16.msra.mxu0 %v7901
      %7921 = vmatprep.subr.bf16.mxu0 0
      %7922 = vmatpush1.bf16.msra.mxu0 %v7902
      %7923 = vmatprep.subr.bf16.mxu0 0
      %7924 = vmatpush1.bf16.msra.mxu0 %v7903
      %7925 = vmatprep.subr.bf16.mxu0 0
      %7926 = vmatpush1.bf16.msra.mxu0 %v7904
      %7927 = vmatprep.subr.bf16.mxu0 0
      %7928 = vmatpush1.bf16.msra.mxu0 %v7905
      %7929 = vmatprep.subr.bf16.mxu0 0
      %7930 = vmatpush1.bf16.msra.mxu0 %v7906
      %7931 = vmatprep.subr.bf16.mxu0 0
      %7932 = vmatpush1.bf16.msra.mxu0 0
      %7933 = vmatprep.subr.bf16.mxu0 0
      %7934 = vmatpush1.bf16.msra.mxu0 0
      %7935 = vmatprep.subr.bf16.mxu0 0
      %7936 = vmatpush1.bf16.msra.mxu0 0
      %7937 = vmatprep.subr.bf16.mxu0 0
      %7938 = vmatpush1.bf16.msra.mxu0 0
      %7939 = vmatprep.subr.bf16.mxu0 0
      %7940 = vmatpush1.bf16.msra.mxu0 0
      %7941 = vmatprep.subr.bf16.mxu0 0
      %7942 = vmatpush1.bf16.msra.mxu0 0
      %7943 = vmatprep.subr.bf16.mxu0 0
      %7944 = vmatpush1.bf16.msra.mxu0 0
      %7945 = vmatprep.subr.bf16.mxu0 0
      %7946 = vmatpush1.bf16.msra.mxu0 0
      %7947 = vmatprep.mubr.bf16.mxu0 0
      %7948 = vmatmul.mubr.bf16.gmra.mrb[0].mxu0 %v7695
      %v7949 = vpop.f32.mrb[0].mxu0
      %v7950 = vadd.f32 0.0, %v7949
      %v7951 = vpop.f32.mrb[0].mxu0
      %v7952 = vpop.f32.mrb[0].mxu0
      %v7953 = vadd.f32 0.0, %v7952
      %v7954 = vpop.f32.mrb[0].mxu0
      %7955 = vmatprep.mubr.bf16.mxu0 0
      %7956 = vmatmul.mubr.bf16.gmra.mrb[0].mxu0 %v7704
      %v7957 = vpop.f32.mrb[0].mxu0
      %v7958 = vadd.f32 0.0, %v7957
      %v7959 = vpop.f32.mrb[0].mxu0
      %v7960 = vpop.f32.mrb[0].mxu0
      %v7961 = vadd.f32 0.0, %v7960
      %v7962 = vpop.f32.mrb[0].mxu0
      %7963 = vmatprep.mubr.bf16.mxu0 0
      %7964 = vmatmul.mubr.bf16.gmra.mrb[0].mxu0 %v7713
      %v7965 = vpop.f32.mrb[0].mxu0
      %v7966 = vadd.f32 0.0, %v7965
      %v7967 = vpop.f32.mrb[0].mxu0
      %v7968 = vpop.f32.mrb[0].mxu0
      %v7969 = vadd.f32 0.0, %v7968
      %v7970 = vpop.f32.mrb[0].mxu0
      %7971 = vmatprep.mubr.bf16.mxu0 0
      %7972 = vmatmul.mubr.bf16.gmra.mrb[0].mxu0 %v7722
      %v7973 = vpop.f32.mrb[0].mxu0
      %v7974 = vadd.f32 0.0, %v7973
      %v7975 = vpop.f32.mrb[0].mxu0
      %v7976 = vpop.f32.mrb[0].mxu0
      %v7977 = vadd.f32 0.0, %v7976
      %v7978 = vpop.f32.mrb[0].mxu0
      %7979 = vmatprep.mubr.bf16.mxu0 0
      %7980 = vmatmul.mubr.bf16.gmra.mrb[0].mxu0 %v7731
      %v7981 = vpop.f32.mrb[0].mxu0
      %v7982 = vadd.f32 0.0, %v7981
      %v7983 = vpop.f32.mrb[0].mxu0
      %v7984 = vpop.f32.mrb[0].mxu0
      %v7985 = vadd.f32 0.0, %v7984
      %v7986 = vpop.f32.mrb[0].mxu0
      %7987 = vmatprep.mubr.bf16.mxu0 0
      %7988 = vmatmul.mubr.bf16.gmra.mrb[0].mxu0 %v7740
      %v7989 = vpop.f32.mrb[0].mxu0
      %v7990 = vadd.f32 0.0, %v7989
      %v7991 = vpop.f32.mrb[0].mxu0
      %v7992 = vpop.f32.mrb[0].mxu0
      %v7993 = vadd.f32 0.0, %v7992
      %v7994 = vpop.f32.mrb[0].mxu0
      %7995 = vmatprep.mubr.bf16.mxu0 0
      %7996 = vmatmul.mubr.bf16.gmra.mrb[0].mxu0 %v7749
      %v7997 = vpop.f32.mrb[0].mxu0
      %v7998 = vadd.f32 0.0, %v7997
      %v7999 = vpop.f32.mrb[0].mxu0
      %v8000 = vpop.f32.mrb[0].mxu0
      %v8001 = vadd.f32 0.0, %v8000
      %v8002 = vpop.f32.mrb[0].mxu0
      %8003 = vmatprep.mubr.bf16.mxu0 0
      %8004 = vmatmul.mubr.bf16.gmra.mrb[0].mxu0 %v7758
      %v8005 = vpop.f32.mrb[0].mxu0
      %v8006 = vadd.f32 0.0, %v8005
      %v8007 = vpop.f32.mrb[0].mxu0
      %v8008 = vpop.f32.mrb[0].mxu0
      %v8009 = vadd.f32 0.0, %v8008
      %v8010 = vpop.f32.mrb[0].mxu0
      %8011 = vmatprep.mubr.bf16.mxu0 0
      %8012 = vmatmul.mubr.bf16.gmra.mrb[0].mxu0 %v7767
      %v8013 = vpop.f32.mrb[0].mxu0
      %v8014 = vadd.f32 0.0, %v8013
      %v8015 = vpop.f32.mrb[0].mxu0
      %v8016 = vpop.f32.mrb[0].mxu0
      %v8017 = vadd.f32 0.0, %v8016
      %v8018 = vpop.f32.mrb[0].mxu0
      %8019 = vmatprep.mubr.bf16.mxu0 0
      %8020 = vmatmul.mubr.bf16.gmra.mrb[0].mxu0 %v7776
      %v8021 = vpop.f32.mrb[0].mxu0
      %v8022 = vadd.f32 0.0, %v8021
      %v8023 = vpop.f32.mrb[0].mxu0
      %v8024 = vpop.f32.mrb[0].mxu0
      %v8025 = vadd.f32 0.0, %v8024
      %v8026 = vpop.f32.mrb[0].mxu0
      %8027 = vmatprep.mubr.bf16.mxu0 0
      %8028 = vmatmul.mubr.bf16.gmra.mrb[0].mxu0 %v7785
      %v8029 = vpop.f32.mrb[0].mxu0
      %v8030 = vadd.f32 0.0, %v8029
      %v8031 = vpop.f32.mrb[0].mxu0
      %v8032 = vpop.f32.mrb[0].mxu0
      %v8033 = vadd.f32 0.0, %v8032
      %v8034 = vpop.f32.mrb[0].mxu0
      %8035 = vmatprep.mubr.bf16.mxu0 0
      %8036 = vmatmul.mubr.bf16.gmra.mrb[0].mxu0 %v7794
      %v8037 = vpop.f32.mrb[0].mxu0
      %v8038 = vadd.f32 0.0, %v8037
      %v8039 = vpop.f32.mrb[0].mxu0
      %v8040 = vpop.f32.mrb[0].mxu0
      %v8041 = vadd.f32 0.0, %v8040
      %v8042 = vpop.f32.mrb[0].mxu0
      %8043 = vmatprep.mubr.bf16.mxu0 0
      %8044 = vmatmul.mubr.bf16.gmra.mrb[0].mxu0 %v7803
      %v8045 = vpop.f32.mrb[0].mxu0
      %v8046 = vadd.f32 0.0, %v8045
      %v8047 = vpop.f32.mrb[0].mxu0
      %v8048 = vpop.f32.mrb[0].mxu0
      %v8049 = vadd.f32 0.0, %v8048
      %v8050 = vpop.f32.mrb[0].mxu0
      %8051 = vmatprep.mubr.bf16.mxu0 0
      %8052 = vmatmul.mubr.bf16.gmra.mrb[0].mxu0 %v7812
      %v8053 = vpop.f32.mrb[0].mxu0
      %v8054 = vadd.f32 0.0, %v8053
      %v8055 = vpop.f32.mrb[0].mxu0
      %v8056 = vpop.f32.mrb[0].mxu0
      %v8057 = vadd.f32 0.0, %v8056
      %v8058 = vpop.f32.mrb[0].mxu0
      %8059 = vmatprep.mubr.bf16.mxu0 0
      %8060 = vmatmul.mubr.bf16.gmra.mrb[0].mxu0 %v7821
      %v8061 = vpop.f32.mrb[0].mxu0
      %v8062 = vadd.f32 0.0, %v8061
      %v8063 = vpop.f32.mrb[0].mxu0
      %v8064 = vpop.f32.mrb[0].mxu0
      %v8065 = vadd.f32 0.0, %v8064
      %v8066 = vpop.f32.mrb[0].mxu0
      %8067 = vmatprep.mubr.bf16.mxu0 0
      %8068 = vmatmul.mubr.bf16.gmra.mrb[0].mxu0 %v7830
      %v8069 = vpop.f32.mrb[0].mxu0
      %v8070 = vadd.f32 0.0, %v8069
      %v8071 = vpop.f32.mrb[0].mxu0
      %v8072 = vpop.f32.mrb[0].mxu0
      %v8073 = vadd.f32 0.0, %v8072
      %v8074 = vpop.f32.mrb[0].mxu0
      %8075 = vmatprep.mubr.bf16.mxu0 0
      %8076 = vmatmul.mubr.bf16.gmra.mrb[0].mxu0 %v7839
      %v8077 = vpop.f32.mrb[0].mxu0
      %v8078 = vadd.f32 0.0, %v8077
      %v8079 = vpop.f32.mrb[0].mxu0
      %v8080 = vpop.f32.mrb[0].mxu0
      %v8081 = vadd.f32 0.0, %v8080
      %v8082 = vpop.f32.mrb[0].mxu0
      %8083 = vmatprep.mubr.bf16.mxu0 0
      %8084 = vmatmul.mubr.bf16.gmra.mrb[0].mxu0 %v7848
      %v8085 = vpop.f32.mrb[0].mxu0
      %v8086 = vadd.f32 0.0, %v8085
      %v8087 = vpop.f32.mrb[0].mxu0
      %v8088 = vpop.f32.mrb[0].mxu0
      %v8089 = vadd.f32 0.0, %v8088
      %v8090 = vpop.f32.mrb[0].mxu0
      %8091 = vdwg.mxu0
      %v8092 = vld [vmem:[#allocation3] sm:$0xff]
      %v8093 = vld [vmem:[#allocation3 + $0x8] sm:$0xff]
      %v8094 = vld [vmem:[#allocation3 + $0x10] sm:$0xff]
      %v8095 = vld [vmem:[#allocation3 + $0x18] sm:$0xff]
      %v8096 = vld [vmem:[#allocation3 + $0x20] sm:$0xff]
      %v8097 = vld [vmem:[#allocation3 + $0x28] sm:$0xff]
      %v8098 = vld [vmem:[#allocation3 + $0x30] sm:$0xff]
      %v8099 = vld [vmem:[#allocation3 + $0x38] sm:$0xff]
      %v8100 = vld [vmem:[#allocation3 + $0x40] sm:$0xff]
      %v8101 = vld [vmem:[#allocation3 + $0x48] sm:$0xff]
      %v8102 = vld [vmem:[#allocation3 + $0x50] sm:$0xff]
      %v8103 = vld [vmem:[#allocation3 + $0x58] sm:$0xff]
      %v8104 = vld [vmem:[#allocation3 + $0x60] sm:$0xff]
      %v8105 = vld [vmem:[#allocation3 + $0x68] sm:$0xff]
      %v8106 = vld [vmem:[#allocation3 + $0x70] sm:$0xff]
      %v8107 = vld [vmem:[#allocation3 + $0x78] sm:$0xff]
      %v8108 = vld [vmem:[#allocation3 + $0x80] sm:$0xff]
      %v8109 = vld [vmem:[#allocation3 + $0x88] sm:$0xff]
      %v8110 = vld [vmem:[#allocation3 + $0x90] sm:$0xff]
      %v8111 = vld [vmem:[#allocation3 + $0x98] sm:$0xff]
      %v8112 = vld [vmem:[#allocation3 + $0xa0] sm:$0xff]
      %v8113 = vld [vmem:[#allocation3 + $0xa8] sm:$0xff]
      %v8114 = vld [vmem:[#allocation3 + $0xb0] sm:$0xff]
      %v8115 = vld [vmem:[#allocation3 + $0xb8] sm:$0xff]
      %v8116 = vld [vmem:[#allocation3 + $0xc0] sm:$0xff]
      %v8117 = vld [vmem:[#allocation3 + $0xc8] sm:$0xff]
      %v8118 = vld [vmem:[#allocation3 + $0xd0] sm:$0xff]
      %v8119 = vld [vmem:[#allocation3 + $0xd8] sm:$0xff]
      %v8120 = vld [vmem:[#allocation3 + $0xe0] sm:$0xff]
      %v8121 = vld [vmem:[#allocation3 + $0xe8] sm:$0xff]
      %v8122 = vld [vmem:[#allocation3 + $0xf0] sm:$0xff]
      %v8123 = vld [vmem:[#allocation3 + $0xf8] sm:$0xff]
      %v8124 = vld [vmem:[#allocation3 + $0x100] sm:$0xff]
      %v8125 = vld [vmem:[#allocation3 + $0x108] sm:$0xff]
      %v8126 = vld [vmem:[#allocation3 + $0x110] sm:$0xff]
      %v8127 = vld [vmem:[#allocation3 + $0x118] sm:$0xff]
      %v8128 = vadd.f32 %v8092, %v7950
      %v8129 = vadd.f32 %v8093, %v7953
      %v8130 = vadd.f32 %v8094, %v7958
      %v8131 = vadd.f32 %v8095, %v7961
      %v8132 = vadd.f32 %v8096, %v7966
      %v8133 = vadd.f32 %v8097, %v7969
      %v8134 = vadd.f32 %v8098, %v7974
      %v8135 = vadd.f32 %v8099, %v7977
      %v8136 = vadd.f32 %v8100, %v7982
      %v8137 = vadd.f32 %v8101, %v7985
      %v8138 = vadd.f32 %v8102, %v7990
      %v8139 = vadd.f32 %v8103, %v7993
      %v8140 = vadd.f32 %v8104, %v7998
      %v8141 = vadd.f32 %v8105, %v8001
      %v8142 = vadd.f32 %v8106, %v8006
      %v8143 = vadd.f32 %v8107, %v8009
      %v8144 = vadd.f32 %v8108, %v8014
      %v8145 = vadd.f32 %v8109, %v8017
      %v8146 = vadd.f32 %v8110, %v8022
      %v8147 = vadd.f32 %v8111, %v8025
      %v8148 = vadd.f32 %v8112, %v8030
      %v8149 = vadd.f32 %v8113, %v8033
      %v8150 = vadd.f32 %v8114, %v8038
      %v8151 = vadd.f32 %v8115, %v8041
      %v8152 = vadd.f32 %v8116, %v8046
      %v8153 = vadd.f32 %v8117, %v8049
      %v8154 = vadd.f32 %v8118, %v8054
      %v8155 = vadd.f32 %v8119, %v8057
      %v8156 = vadd.f32 %v8120, %v8062
      %v8157 = vadd.f32 %v8121, %v8065
      %v8158 = vadd.f32 %v8122, %v8070
      %v8159 = vadd.f32 %v8123, %v8073
      %v8160 = vadd.f32 %v8124, %v8078
      %v8161 = vadd.f32 %v8125, %v8081
      %v8162 = vadd.f32 %v8126, %v8086
      %v8163 = vadd.f32 %v8127, %v8089
      %8164 = vst [vmem:[#allocation3] sm:$0xff] %v8128
      %8165 = vst [vmem:[#allocation3 + $0x8] sm:$0xff] %v8129
      %8166 = vst [vmem:[#allocation3 + $0x10] sm:$0xff] %v8130
      %8167 = vst [vmem:[#allocation3 + $0x18] sm:$0xff] %v8131
      %8168 = vst [vmem:[#allocation3 + $0x20] sm:$0xff] %v8132
      %8169 = vst [vmem:[#allocation3 + $0x28] sm:$0xff] %v8133
      %8170 = vst [vmem:[#allocation3 + $0x30] sm:$0xff] %v8134
      %8171 = vst [vmem:[#allocation3 + $0x38] sm:$0xff] %v8135
      %8172 = vst [vmem:[#allocation3 + $0x40] sm:$0xff] %v8136
      %8173 = vst [vmem:[#allocation3 + $0x48] sm:$0xff] %v8137
      %8174 = vst [vmem:[#allocation3 + $0x50] sm:$0xff] %v8138
      %8175 = vst [vmem:[#allocation3 + $0x58] sm:$0xff] %v8139
      %8176 = vst [vmem:[#allocation3 + $0x60] sm:$0xff] %v8140
      %8177 = vst [vmem:[#allocation3 + $0x68] sm:$0xff] %v8141
      %8178 = vst [vmem:[#allocation3 + $0x70] sm:$0xff] %v8142
      %8179 = vst [vmem:[#allocation3 + $0x78] sm:$0xff] %v8143
      %8180 = vst [vmem:[#allocation3 + $0x80] sm:$0xff] %v8144
      %8181 = vst [vmem:[#allocation3 + $0x88] sm:$0xff] %v8145
      %8182 = vst [vmem:[#allocation3 + $0x90] sm:$0xff] %v8146
      %8183 = vst [vmem:[#allocation3 + $0x98] sm:$0xff] %v8147
      %8184 = vst [vmem:[#allocation3 + $0xa0] sm:$0xff] %v8148
      %8185 = vst [vmem:[#allocation3 + $0xa8] sm:$0xff] %v8149
      %8186 = vst [vmem:[#allocation3 + $0xb0] sm:$0xff] %v8150
      %8187 = vst [vmem:[#allocation3 + $0xb8] sm:$0xff] %v8151
      %8188 = vst [vmem:[#allocation3 + $0xc0] sm:$0xff] %v8152
      %8189 = vst [vmem:[#allocation3 + $0xc8] sm:$0xff] %v8153
      %8190 = vst [vmem:[#allocation3 + $0xd0] sm:$0xff] %v8154
      %8191 = vst [vmem:[#allocation3 + $0xd8] sm:$0xff] %v8155
      %8192 = vst [vmem:[#allocation3 + $0xe0] sm:$0xff] %v8156
      %8193 = vst [vmem:[#allocation3 + $0xe8] sm:$0xff] %v8157
      %8194 = vst [vmem:[#allocation3 + $0xf0] sm:$0xff] %v8158
      %8195 = vst [vmem:[#allocation3 + $0xf8] sm:$0xff] %v8159
      %8196 = vst [vmem:[#allocation3 + $0x100] sm:$0xff] %v8160
      %8197 = vst [vmem:[#allocation3 + $0x108] sm:$0xff] %v8161
      %8198 = vst [vmem:[#allocation3 + $0x110] sm:$0xff] %v8162
      %8199 = vst [vmem:[#allocation3 + $0x118] sm:$0xff] %v8163
      %v8200 = vld [vmem:[#allocation2 + $0x10] sm:$0x8]
      %v8201 = vld [vmem:[#allocation2 + $0x14] sm:$0xf]
      %v8202 = vld [vmem:[#allocation2 + $0x18] sm:$0xf]
      %v8203 = vld [vmem:[#allocation2 + $0x1c] sm:$0xf]
      %v8204 = vld [vmem:[#allocation2 + $0x20] sm:$0xf]
      %v8205 = vld [vmem:[#allocation2 + $0x24] sm:$0xf]
      %v8206 = vld [vmem:[#allocation2 + $0x28] sm:$0xf]
      %v8207 = vld [vmem:[#allocation2 + $0x2c] sm:$0xf]
      %v8208 = vld [vmem:[#allocation2 + $0x30] sm:$0xf]
      %v8209 = vld [vmem:[#allocation2 + $0x34] sm:$0xf]
      %v8210 = vld [vmem:[#allocation2 + $0x38] sm:$0xf]
      %v8211 = vld [vmem:[#allocation2 + $0x3c] sm:$0xf]
      %v8212 = vld [vmem:[#allocation2 + $0x40] sm:$0xf]
      %v8213 = vld [vmem:[#allocation2 + $0x44] sm:$0xf]
      %v8214 = vld [vmem:[#allocation2 + $0x48] sm:$0xf]
      %v8215 = vld [vmem:[#allocation2 + $0x4c] sm:$0xf]
      %v8216 = vld [vmem:[#allocation2 + $0x50] sm:$0xf]
      %v8217 = vld [vmem:[#allocation2 + $0x54] sm:$0xf]
      %v8218 = vld [vmem:[#allocation2 + $0x58] sm:$0xf]
      %v8219 = vld [vmem:[#allocation2 + $0x5c] sm:$0xf]
      %v8220 = vld [vmem:[#allocation2 + $0x60] sm:$0xf]
      %v8221 = vld [vmem:[#allocation2 + $0x64] sm:$0xf]
      %v8222 = vld [vmem:[#allocation2 + $0x68] sm:$0xf]
      %v8223 = vld [vmem:[#allocation2 + $0x6c] sm:$0xf]
      %v8224 = vld [vmem:[#allocation2 + $0x70] sm:$0xf]
      %v8225 = vld [vmem:[#allocation2 + $0x74] sm:$0xf]
      %v8226 = vld [vmem:[#allocation2 + $0x78] sm:$0xf]
      %v8227 = vld [vmem:[#allocation2 + $0x7c] sm:$0xf]
      %v8228 = vld [vmem:[#allocation2 + $0x80] sm:$0xf]
      %v8229 = vld [vmem:[#allocation2 + $0x84] sm:$0xf]
      %v8230 = vld [vmem:[#allocation2 + $0x88] sm:$0xf]
      %v8231 = vld [vmem:[#allocation2 + $0x8c] sm:$0xf]
      %v8232 = vld [vmem:[#allocation2 + $0x90] sm:$0xf]
      %v8233 = vld [vmem:[#allocation2 + $0x94] sm:$0xf]
      %v8234 = vld [vmem:[#allocation2 + $0x98] sm:$0xf]
      %v8235 = vld [vmem:[#allocation2 + $0x9c] sm:$0xf]
      %v8236 = vld [vmem:[#allocation2 + $0xa0] sm:$0x7]
      %s8237 = scalar_lea.vmem %s6, 512
      %v8238 = vld [vmem:[%s8237] sm:$0xf]
      %v8239 = vld [vmem:[%s8237 + $0x4] sm:$0xf]
      %v8240 = vld [vmem:[%s8237 + $0x8] sm:$0xf]
      %v8241 = vld [vmem:[%s8237 + $0xc] sm:$0xf]
      %v8242 = vld [vmem:[%s8237 + $0x10] sm:$0xf]
      %v8243 = vld [vmem:[%s8237 + $0x14] sm:$0xf]
      %v8244 = vld [vmem:[%s8237 + $0x18] sm:$0xf]
      %v8245 = vld [vmem:[%s8237 + $0x1c] sm:$0xf]
      %v8246 = vld [vmem:[%s8237 + $0x20] sm:$0xf]
      %v8247 = vld [vmem:[%s8237 + $0x24] sm:$0xf]
      %v8248 = vld [vmem:[%s8237 + $0x28] sm:$0xf]
      %v8249 = vld [vmem:[%s8237 + $0x2c] sm:$0xf]
      %v8250 = vld [vmem:[%s8237 + $0x30] sm:$0xf]
      %v8251 = vld [vmem:[%s8237 + $0x34] sm:$0xf]
      %v8252 = vld [vmem:[%s8237 + $0x38] sm:$0xf]
      %v8253 = vld [vmem:[%s8237 + $0x3c] sm:$0xf]
      %v8291 = vunpack.c.l.b16 %v8200
      %v8292 = vunpack.c.l.b16 %v8201
      %v8293 = vunpack.c.l.b16 %v8202
      %v8294 = vunpack.c.l.b16 %v8203
      %v8295 = vunpack.c.l.b16 %v8204
      %v8296 = vunpack.c.l.b16 %v8205
      %v8297 = vunpack.c.l.b16 %v8206
      %v8298 = vunpack.c.l.b16 %v8207
      %v8299 = vunpack.c.l.b16 %v8208
      %v8300 = vunpack.c.l.b16 %v8209
      %v8301 = vunpack.c.l.b16 %v8210
      %v8302 = vunpack.c.l.b16 %v8211
      %v8303 = vunpack.c.l.b16 %v8212
      %v8304 = vunpack.c.l.b16 %v8213
      %v8305 = vunpack.c.l.b16 %v8214
      %v8306 = vunpack.c.l.b16 %v8215
      %v8307 = vunpack.c.l.b16 %v8216
      %v8308 = vunpack.c.l.b16 %v8217
      %v8309 = vunpack.c.l.b16 %v8218
      %v8310 = vunpack.c.l.b16 %v8219
      %v8311 = vunpack.c.l.b16 %v8220
      %v8312 = vunpack.c.l.b16 %v8221
      %v8313 = vunpack.c.l.b16 %v8222
      %v8314 = vunpack.c.l.b16 %v8223
      %v8315 = vunpack.c.l.b16 %v8224
      %v8316 = vunpack.c.l.b16 %v8225
      %v8317 = vunpack.c.l.b16 %v8226
      %v8318 = vunpack.c.l.b16 %v8227
      %v8319 = vunpack.c.l.b16 %v8228
      %v8320 = vunpack.c.l.b16 %v8229
      %v8321 = vunpack.c.l.b16 %v8230
      %v8322 = vunpack.c.l.b16 %v8231
      %v8323 = vunpack.c.l.b16 %v8232
      %v8324 = vunpack.c.l.b16 %v8233
      %v8325 = vunpack.c.l.b16 %v8234
      %v8326 = vunpack.c.l.b16 %v8235
      %v8327 = vunpack.c.l.b16 %v8236
      %v8328 = vpack.c.b16 %v8292, %v8291
      %v8329 = vpack.c.b16 %v8294, %v8293
      %v8330 = vpack.c.b16 %v8296, %v8295
      %v8331 = vpack.c.b16 %v8298, %v8297
      %v8332 = vpack.c.b16 %v8300, %v8299
      %v8333 = vpack.c.b16 %v8302, %v8301
      %v8334 = vpack.c.b16 %v8304, %v8303
      %v8335 = vpack.c.b16 %v8306, %v8305
      %v8336 = vpack.c.b16 %v8308, %v8307
      %v8337 = vpack.c.b16 %v8310, %v8309
      %v8338 = vpack.c.b16 %v8312, %v8311
      %v8339 = vpack.c.b16 %v8314, %v8313
      %v8340 = vpack.c.b16 %v8316, %v8315
      %v8341 = vpack.c.b16 %v8318, %v8317
      %v8342 = vpack.c.b16 %v8320, %v8319
      %v8343 = vpack.c.b16 %v8322, %v8321
      %v8344 = vpack.c.b16 %v8324, %v8323
      %v8345 = vpack.c.b16 %v8326, %v8325
      %v8346 = vpack.c.b16 %v8327, %v8327
      %vm8347 = vcmask 1044480
      %v8348 = vrot.slane %v8328, 3
      %v8349 = vrot.slane %v8329, 3
      %v8350 = vsel %vm8347, %v8348, %v8349
      %v8351 = vrot.slane %v8330, 3
      %v8352 = vsel %vm8347, %v8349, %v8351
      %v8353 = vrot.slane %v8331, 3
      %v8354 = vsel %vm8347, %v8351, %v8353
      %v8355 = vrot.slane %v8332, 3
      %v8356 = vsel %vm8347, %v8353, %v8355
      %v8357 = vrot.slane %v8333, 3
      %v8358 = vsel %vm8347, %v8355, %v8357
      %v8359 = vrot.slane %v8334, 3
      %v8360 = vsel %vm8347, %v8357, %v8359
      %v8361 = vrot.slane %v8335, 3
      %v8362 = vsel %vm8347, %v8359, %v8361
      %v8363 = vrot.slane %v8336, 3
      %v8364 = vsel %vm8347, %v8361, %v8363
      %v8365 = vrot.slane %v8337, 3
      %v8366 = vsel %vm8347, %v8363, %v8365
      %v8367 = vrot.slane %v8338, 3
      %v8368 = vsel %vm8347, %v8365, %v8367
      %v8369 = vrot.slane %v8339, 3
      %v8370 = vsel %vm8347, %v8367, %v8369
      %v8371 = vrot.slane %v8340, 3
      %v8372 = vsel %vm8347, %v8369, %v8371
      %v8373 = vrot.slane %v8341, 3
      %v8374 = vsel %vm8347, %v8371, %v8373
      %v8375 = vrot.slane %v8342, 3
      %v8376 = vsel %vm8347, %v8373, %v8375
      %v8377 = vrot.slane %v8343, 3
      %v8378 = vsel %vm8347, %v8375, %v8377
      %v8379 = vrot.slane %v8344, 3
      %v8380 = vsel %vm8347, %v8377, %v8379
      %v8381 = vrot.slane %v8345, 3
      %v8382 = vsel %vm8347, %v8379, %v8381
      %v8383 = vrot.slane %v8346, 3
      %v8384 = vsel %vm8347, %v8381, %v8383
      %v8419 = vunpack.c.l.b16 %v8238
      %v8420 = vunpack.c.l.b16 %v8239
      %v8421 = vunpack.c.l.b16 %v8240
      %v8422 = vunpack.c.l.b16 %v8241
      %v8423 = vunpack.c.l.b16 %v8242
      %v8424 = vunpack.c.l.b16 %v8243
      %v8425 = vunpack.c.l.b16 %v8244
      %v8426 = vunpack.c.l.b16 %v8245
      %v8427 = vunpack.c.l.b16 %v8246
      %v8428 = vunpack.c.l.b16 %v8247
      %v8429 = vunpack.c.l.b16 %v8248
      %v8430 = vunpack.c.l.b16 %v8249
      %v8431 = vunpack.c.l.b16 %v8250
      %v8432 = vunpack.c.l.b16 %v8251
      %v8433 = vunpack.c.l.b16 %v8252
      %v8434 = vunpack.c.l.b16 %v8253
      %v8435 = vpack.c.b16 %v8420, %v8419
      %v8436 = vpack.c.b16 %v8422, %v8421
      %v8437 = vpack.c.b16 %v8424, %v8423
      %v8438 = vpack.c.b16 %v8426, %v8425
      %v8439 = vpack.c.b16 %v8428, %v8427
      %v8440 = vpack.c.b16 %v8430, %v8429
      %v8441 = vpack.c.b16 %v8432, %v8431
      %v8442 = vpack.c.b16 %v8434, %v8433
      %8451 = vmatprep.subr.bf16.mxu0 0
      %8452 = vmatpush1.bf16.msra.mxu0 %v8435
      %8453 = vmatprep.subr.bf16.mxu0 0
      %8454 = vmatpush1.bf16.msra.mxu0 %v8436
      %8455 = vmatprep.subr.bf16.mxu0 0
      %8456 = vmatpush1.bf16.msra.mxu0 %v8437
      %8457 = vmatprep.subr.bf16.mxu0 0
      %8458 = vmatpush1.bf16.msra.mxu0 %v8438
      %8459 = vmatprep.subr.bf16.mxu0 0
      %8460 = vmatpush1.bf16.msra.mxu0 %v8439
      %8461 = vmatprep.subr.bf16.mxu0 0
      %8462 = vmatpush1.bf16.msra.mxu0 %v8440
      %8463 = vmatprep.subr.bf16.mxu0 0
      %8464 = vmatpush1.bf16.msra.mxu0 %v8441
      %8465 = vmatprep.subr.bf16.mxu0 0
      %8466 = vmatpush1.bf16.msra.mxu0 %v8442
      %8467 = vmatprep.subr.bf16.mxu0 0
      %8468 = vmatpush1.bf16.msra.mxu0 0
      %8469 = vmatprep.subr.bf16.mxu0 0
      %8470 = vmatpush1.bf16.msra.mxu0 0
      %8471 = vmatprep.subr.bf16.mxu0 0
      %8472 = vmatpush1.bf16.msra.mxu0 0
      %8473 = vmatprep.subr.bf16.mxu0 0
      %8474 = vmatpush1.bf16.msra.mxu0 0
      %8475 = vmatprep.subr.bf16.mxu0 0
      %8476 = vmatpush1.bf16.msra.mxu0 0
      %8477 = vmatprep.subr.bf16.mxu0 0
      %8478 = vmatpush1.bf16.msra.mxu0 0
      %8479 = vmatprep.subr.bf16.mxu0 0
      %8480 = vmatpush1.bf16.msra.mxu0 0
      %8481 = vmatprep.subr.bf16.mxu0 0
      %8482 = vmatpush1.bf16.msra.mxu0 0
      %8483 = vmatprep.mubr.bf16.mxu0 0
      %8484 = vmatmul.mubr.bf16.gmra.mrb[0].mxu0 %v8350
      %v8485 = vpop.f32.mrb[0].mxu0
      %v8486 = vadd.f32 0.0, %v8485
      %v8487 = vpop.f32.mrb[0].mxu0
      %v8488 = vpop.f32.mrb[0].mxu0
      %v8489 = vadd.f32 0.0, %v8488
      %v8490 = vpop.f32.mrb[0].mxu0
      %8491 = vmatprep.mubr.bf16.mxu0 0
      %8492 = vmatmul.mubr.bf16.gmra.mrb[0].mxu0 %v8352
      %v8493 = vpop.f32.mrb[0].mxu0
      %v8494 = vadd.f32 0.0, %v8493
      %v8495 = vpop.f32.mrb[0].mxu0
      %v8496 = vpop.f32.mrb[0].mxu0
      %v8497 = vadd.f32 0.0, %v8496
      %v8498 = vpop.f32.mrb[0].mxu0
      %8499 = vmatprep.mubr.bf16.mxu0 0
      %8500 = vmatmul.mubr.bf16.gmra.mrb[0].mxu0 %v8354
      %v8501 = vpop.f32.mrb[0].mxu0
      %v8502 = vadd.f32 0.0, %v8501
      %v8503 = vpop.f32.mrb[0].mxu0
      %v8504 = vpop.f32.mrb[0].mxu0
      %v8505 = vadd.f32 0.0, %v8504
      %v8506 = vpop.f32.mrb[0].mxu0
      %8507 = vmatprep.mubr.bf16.mxu0 0
      %8508 = vmatmul.mubr.bf16.gmra.mrb[0].mxu0 %v8356
      %v8509 = vpop.f32.mrb[0].mxu0
      %v8510 = vadd.f32 0.0, %v8509
      %v8511 = vpop.f32.mrb[0].mxu0
      %v8512 = vpop.f32.mrb[0].mxu0
      %v8513 = vadd.f32 0.0, %v8512
      %v8514 = vpop.f32.mrb[0].mxu0
      %8515 = vmatprep.mubr.bf16.mxu0 0
      %8516 = vmatmul.mubr.bf16.gmra.mrb[0].mxu0 %v8358
      %v8517 = vpop.f32.mrb[0].mxu0
      %v8518 = vadd.f32 0.0, %v8517
      %v8519 = vpop.f32.mrb[0].mxu0
      %v8520 = vpop.f32.mrb[0].mxu0
      %v8521 = vadd.f32 0.0, %v8520
      %v8522 = vpop.f32.mrb[0].mxu0
      %8523 = vmatprep.mubr.bf16.mxu0 0
      %8524 = vmatmul.mubr.bf16.gmra.mrb[0].mxu0 %v8360
      %v8525 = vpop.f32.mrb[0].mxu0
      %v8526 = vadd.f32 0.0, %v8525
      %v8527 = vpop.f32.mrb[0].mxu0
      %v8528 = vpop.f32.mrb[0].mxu0
      %v8529 = vadd.f32 0.0, %v8528
      %v8530 = vpop.f32.mrb[0].mxu0
      %8531 = vmatprep.mubr.bf16.mxu0 0
      %8532 = vmatmul.mubr.bf16.gmra.mrb[0].mxu0 %v8362
      %v8533 = vpop.f32.mrb[0].mxu0
      %v8534 = vadd.f32 0.0, %v8533
      %v8535 = vpop.f32.mrb[0].mxu0
      %v8536 = vpop.f32.mrb[0].mxu0
      %v8537 = vadd.f32 0.0, %v8536
      %v8538 = vpop.f32.mrb[0].mxu0
      %8539 = vmatprep.mubr.bf16.mxu0 0
      %8540 = vmatmul.mubr.bf16.gmra.mrb[0].mxu0 %v8364
      %v8541 = vpop.f32.mrb[0].mxu0
      %v8542 = vadd.f32 0.0, %v8541
      %v8543 = vpop.f32.mrb[0].mxu0
      %v8544 = vpop.f32.mrb[0].mxu0
      %v8545 = vadd.f32 0.0, %v8544
      %v8546 = vpop.f32.mrb[0].mxu0
      %8547 = vmatprep.mubr.bf16.mxu0 0
      %8548 = vmatmul.mubr.bf16.gmra.mrb[0].mxu0 %v8366
      %v8549 = vpop.f32.mrb[0].mxu0
      %v8550 = vadd.f32 0.0, %v8549
      %v8551 = vpop.f32.mrb[0].mxu0
      %v8552 = vpop.f32.mrb[0].mxu0
      %v8553 = vadd.f32 0.0, %v8552
      %v8554 = vpop.f32.mrb[0].mxu0
      %8555 = vmatprep.mubr.bf16.mxu0 0
      %8556 = vmatmul.mubr.bf16.gmra.mrb[0].mxu0 %v8368
      %v8557 = vpop.f32.mrb[0].mxu0
      %v8558 = vadd.f32 0.0, %v8557
      %v8559 = vpop.f32.mrb[0].mxu0
      %v8560 = vpop.f32.mrb[0].mxu0
      %v8561 = vadd.f32 0.0, %v8560
      %v8562 = vpop.f32.mrb[0].mxu0
      %8563 = vmatprep.mubr.bf16.mxu0 0
      %8564 = vmatmul.mubr.bf16.gmra.mrb[0].mxu0 %v8370
      %v8565 = vpop.f32.mrb[0].mxu0
      %v8566 = vadd.f32 0.0, %v8565
      %v8567 = vpop.f32.mrb[0].mxu0
      %v8568 = vpop.f32.mrb[0].mxu0
      %v8569 = vadd.f32 0.0, %v8568
      %v8570 = vpop.f32.mrb[0].mxu0
      %8571 = vmatprep.mubr.bf16.mxu0 0
      %8572 = vmatmul.mubr.bf16.gmra.mrb[0].mxu0 %v8372
      %v8573 = vpop.f32.mrb[0].mxu0
      %v8574 = vadd.f32 0.0, %v8573
      %v8575 = vpop.f32.mrb[0].mxu0
      %v8576 = vpop.f32.mrb[0].mxu0
      %v8577 = vadd.f32 0.0, %v8576
      %v8578 = vpop.f32.mrb[0].mxu0
      %8579 = vmatprep.mubr.bf16.mxu0 0
      %8580 = vmatmul.mubr.bf16.gmra.mrb[0].mxu0 %v8374
      %v8581 = vpop.f32.mrb[0].mxu0
      %v8582 = vadd.f32 0.0, %v8581
      %v8583 = vpop.f32.mrb[0].mxu0
      %v8584 = vpop.f32.mrb[0].mxu0
      %v8585 = vadd.f32 0.0, %v8584
      %v8586 = vpop.f32.mrb[0].mxu0
      %8587 = vmatprep.mubr.bf16.mxu0 0
      %8588 = vmatmul.mubr.bf16.gmra.mrb[0].mxu0 %v8376
      %v8589 = vpop.f32.mrb[0].mxu0
      %v8590 = vadd.f32 0.0, %v8589
      %v8591 = vpop.f32.mrb[0].mxu0
      %v8592 = vpop.f32.mrb[0].mxu0
      %v8593 = vadd.f32 0.0, %v8592
      %v8594 = vpop.f32.mrb[0].mxu0
      %8595 = vmatprep.mubr.bf16.mxu0 0
      %8596 = vmatmul.mubr.bf16.gmra.mrb[0].mxu0 %v8378
      %v8597 = vpop.f32.mrb[0].mxu0
      %v8598 = vadd.f32 0.0, %v8597
      %v8599 = vpop.f32.mrb[0].mxu0
      %v8600 = vpop.f32.mrb[0].mxu0
      %v8601 = vadd.f32 0.0, %v8600
      %v8602 = vpop.f32.mrb[0].mxu0
      %8603 = vmatprep.mubr.bf16.mxu0 0
      %8604 = vmatmul.mubr.bf16.gmra.mrb[0].mxu0 %v8380
      %v8605 = vpop.f32.mrb[0].mxu0
      %v8606 = vadd.f32 0.0, %v8605
      %v8607 = vpop.f32.mrb[0].mxu0
      %v8608 = vpop.f32.mrb[0].mxu0
      %v8609 = vadd.f32 0.0, %v8608
      %v8610 = vpop.f32.mrb[0].mxu0
      %8611 = vmatprep.mubr.bf16.mxu0 0
      %8612 = vmatmul.mubr.bf16.gmra.mrb[0].mxu0 %v8382
      %v8613 = vpop.f32.mrb[0].mxu0
      %v8614 = vadd.f32 0.0, %v8613
      %v8615 = vpop.f32.mrb[0].mxu0
      %v8616 = vpop.f32.mrb[0].mxu0
      %v8617 = vadd.f32 0.0, %v8616
      %v8618 = vpop.f32.mrb[0].mxu0
      %8619 = vmatprep.mubr.bf16.mxu0 0
      %8620 = vmatmul.mubr.bf16.gmra.mrb[0].mxu0 %v8384
      %v8621 = vpop.f32.mrb[0].mxu0
      %v8622 = vadd.f32 0.0, %v8621
      %v8623 = vpop.f32.mrb[0].mxu0
      %v8624 = vpop.f32.mrb[0].mxu0
      %v8625 = vadd.f32 0.0, %v8624
      %v8626 = vpop.f32.mrb[0].mxu0
      %8627 = vdwg.mxu0
      %v8628 = vld [vmem:[#allocation3] sm:$0xff]
      %v8629 = vld [vmem:[#allocation3 + $0x8] sm:$0xff]
      %v8630 = vld [vmem:[#allocation3 + $0x10] sm:$0xff]
      %v8631 = vld [vmem:[#allocation3 + $0x18] sm:$0xff]
      %v8632 = vld [vmem:[#allocation3 + $0x20] sm:$0xff]
      %v8633 = vld [vmem:[#allocation3 + $0x28] sm:$0xff]
      %v8634 = vld [vmem:[#allocation3 + $0x30] sm:$0xff]
      %v8635 = vld [vmem:[#allocation3 + $0x38] sm:$0xff]
      %v8636 = vld [vmem:[#allocation3 + $0x40] sm:$0xff]
      %v8637 = vld [vmem:[#allocation3 + $0x48] sm:$0xff]
      %v8638 = vld [vmem:[#allocation3 + $0x50] sm:$0xff]
      %v8639 = vld [vmem:[#allocation3 + $0x58] sm:$0xff]
      %v8640 = vld [vmem:[#allocation3 + $0x60] sm:$0xff]
      %v8641 = vld [vmem:[#allocation3 + $0x68] sm:$0xff]
      %v8642 = vld [vmem:[#allocation3 + $0x70] sm:$0xff]
      %v8643 = vld [vmem:[#allocation3 + $0x78] sm:$0xff]
      %v8644 = vld [vmem:[#allocation3 + $0x80] sm:$0xff]
      %v8645 = vld [vmem:[#allocation3 + $0x88] sm:$0xff]
      %v8646 = vld [vmem:[#allocation3 + $0x90] sm:$0xff]
      %v8647 = vld [vmem:[#allocation3 + $0x98] sm:$0xff]
      %v8648 = vld [vmem:[#allocation3 + $0xa0] sm:$0xff]
      %v8649 = vld [vmem:[#allocation3 + $0xa8] sm:$0xff]
      %v8650 = vld [vmem:[#allocation3 + $0xb0] sm:$0xff]
      %v8651 = vld [vmem:[#allocation3 + $0xb8] sm:$0xff]
      %v8652 = vld [vmem:[#allocation3 + $0xc0] sm:$0xff]
      %v8653 = vld [vmem:[#allocation3 + $0xc8] sm:$0xff]
      %v8654 = vld [vmem:[#allocation3 + $0xd0] sm:$0xff]
      %v8655 = vld [vmem:[#allocation3 + $0xd8] sm:$0xff]
      %v8656 = vld [vmem:[#allocation3 + $0xe0] sm:$0xff]
      %v8657 = vld [vmem:[#allocation3 + $0xe8] sm:$0xff]
      %v8658 = vld [vmem:[#allocation3 + $0xf0] sm:$0xff]
      %v8659 = vld [vmem:[#allocation3 + $0xf8] sm:$0xff]
      %v8660 = vld [vmem:[#allocation3 + $0x100] sm:$0xff]
      %v8661 = vld [vmem:[#allocation3 + $0x108] sm:$0xff]
      %v8662 = vld [vmem:[#allocation3 + $0x110] sm:$0xff]
      %v8663 = vld [vmem:[#allocation3 + $0x118] sm:$0xff]
      %v8664 = vadd.f32 %v8628, %v8486
      %v8665 = vadd.f32 %v8629, %v8489
      %v8666 = vadd.f32 %v8630, %v8494
      %v8667 = vadd.f32 %v8631, %v8497
      %v8668 = vadd.f32 %v8632, %v8502
      %v8669 = vadd.f32 %v8633, %v8505
      %v8670 = vadd.f32 %v8634, %v8510
      %v8671 = vadd.f32 %v8635, %v8513
      %v8672 = vadd.f32 %v8636, %v8518
      %v8673 = vadd.f32 %v8637, %v8521
      %v8674 = vadd.f32 %v8638, %v8526
      %v8675 = vadd.f32 %v8639, %v8529
      %v8676 = vadd.f32 %v8640, %v8534
      %v8677 = vadd.f32 %v8641, %v8537
      %v8678 = vadd.f32 %v8642, %v8542
      %v8679 = vadd.f32 %v8643, %v8545
      %v8680 = vadd.f32 %v8644, %v8550
      %v8681 = vadd.f32 %v8645, %v8553
      %v8682 = vadd.f32 %v8646, %v8558
      %v8683 = vadd.f32 %v8647, %v8561
      %v8684 = vadd.f32 %v8648, %v8566
      %v8685 = vadd.f32 %v8649, %v8569
      %v8686 = vadd.f32 %v8650, %v8574
      %v8687 = vadd.f32 %v8651, %v8577
      %v8688 = vadd.f32 %v8652, %v8582
      %v8689 = vadd.f32 %v8653, %v8585
      %v8690 = vadd.f32 %v8654, %v8590
      %v8691 = vadd.f32 %v8655, %v8593
      %v8692 = vadd.f32 %v8656, %v8598
      %v8693 = vadd.f32 %v8657, %v8601
      %v8694 = vadd.f32 %v8658, %v8606
      %v8695 = vadd.f32 %v8659, %v8609
      %v8696 = vadd.f32 %v8660, %v8614
      %v8697 = vadd.f32 %v8661, %v8617
      %v8698 = vadd.f32 %v8662, %v8622
      %v8699 = vadd.f32 %v8663, %v8625
      %8700 = vst [vmem:[#allocation3] sm:$0xff] %v8664
      %8701 = vst [vmem:[#allocation3 + $0x8] sm:$0xff] %v8665
      %8702 = vst [vmem:[#allocation3 + $0x10] sm:$0xff] %v8666
      %8703 = vst [vmem:[#allocation3 + $0x18] sm:$0xff] %v8667
      %8704 = vst [vmem:[#allocation3 + $0x20] sm:$0xff] %v8668
      %8705 = vst [vmem:[#allocation3 + $0x28] sm:$0xff] %v8669
      %8706 = vst [vmem:[#allocation3 + $0x30] sm:$0xff] %v8670
      %8707 = vst [vmem:[#allocation3 + $0x38] sm:$0xff] %v8671
      %8708 = vst [vmem:[#allocation3 + $0x40] sm:$0xff] %v8672
      %8709 = vst [vmem:[#allocation3 + $0x48] sm:$0xff] %v8673
      %8710 = vst [vmem:[#allocation3 + $0x50] sm:$0xff] %v8674
      %8711 = vst [vmem:[#allocation3 + $0x58] sm:$0xff] %v8675
      %8712 = vst [vmem:[#allocation3 + $0x60] sm:$0xff] %v8676
      %8713 = vst [vmem:[#allocation3 + $0x68] sm:$0xff] %v8677
      %8714 = vst [vmem:[#allocation3 + $0x70] sm:$0xff] %v8678
      %8715 = vst [vmem:[#allocation3 + $0x78] sm:$0xff] %v8679
      %8716 = vst [vmem:[#allocation3 + $0x80] sm:$0xff] %v8680
      %8717 = vst [vmem:[#allocation3 + $0x88] sm:$0xff] %v8681
      %8718 = vst [vmem:[#allocation3 + $0x90] sm:$0xff] %v8682
      %8719 = vst [vmem:[#allocation3 + $0x98] sm:$0xff] %v8683
      %8720 = vst [vmem:[#allocation3 + $0xa0] sm:$0xff] %v8684
      %8721 = vst [vmem:[#allocation3 + $0xa8] sm:$0xff] %v8685
      %8722 = vst [vmem:[#allocation3 + $0xb0] sm:$0xff] %v8686
      %8723 = vst [vmem:[#allocation3 + $0xb8] sm:$0xff] %v8687
      %8724 = vst [vmem:[#allocation3 + $0xc0] sm:$0xff] %v8688
      %8725 = vst [vmem:[#allocation3 + $0xc8] sm:$0xff] %v8689
      %8726 = vst [vmem:[#allocation3 + $0xd0] sm:$0xff] %v8690
      %8727 = vst [vmem:[#allocation3 + $0xd8] sm:$0xff] %v8691
      %8728 = vst [vmem:[#allocation3 + $0xe0] sm:$0xff] %v8692
      %8729 = vst [vmem:[#allocation3 + $0xe8] sm:$0xff] %v8693
      %8730 = vst [vmem:[#allocation3 + $0xf0] sm:$0xff] %v8694
      %8731 = vst [vmem:[#allocation3 + $0xf8] sm:$0xff] %v8695
      %8732 = vst [vmem:[#allocation3 + $0x100] sm:$0xff] %v8696
      %8733 = vst [vmem:[#allocation3 + $0x108] sm:$0xff] %v8697
      %8734 = vst [vmem:[#allocation3 + $0x110] sm:$0xff] %v8698
      %8735 = vst [vmem:[#allocation3 + $0x118] sm:$0xff] %v8699
      %v8736 = vld [vmem:[#allocation3] sm:$0xff]
      %v8737 = vld [vmem:[#allocation3 + $0x8] sm:$0xff]
      %v8738 = vld [vmem:[#allocation3 + $0x10] sm:$0xff]
      %v8739 = vld [vmem:[#allocation3 + $0x18] sm:$0xff]
      %v8740 = vld [vmem:[#allocation3 + $0x20] sm:$0xff]
      %v8741 = vld [vmem:[#allocation3 + $0x28] sm:$0xff]
      %v8742 = vld [vmem:[#allocation3 + $0x30] sm:$0xff]
      %v8743 = vld [vmem:[#allocation3 + $0x38] sm:$0xff]
      %v8744 = vld [vmem:[#allocation3 + $0x40] sm:$0xff]
      %v8745 = vld [vmem:[#allocation3 + $0x48] sm:$0xff]
      %v8746 = vld [vmem:[#allocation3 + $0x50] sm:$0xff]
      %v8747 = vld [vmem:[#allocation3 + $0x58] sm:$0xff]
      %v8748 = vld [vmem:[#allocation3 + $0x60] sm:$0xff]
      %v8749 = vld [vmem:[#allocation3 + $0x68] sm:$0xff]
      %v8750 = vld [vmem:[#allocation3 + $0x70] sm:$0xff]
      %v8751 = vld [vmem:[#allocation3 + $0x78] sm:$0xff]
      %v8752 = vld [vmem:[#allocation3 + $0x80] sm:$0xff]
      %v8753 = vld [vmem:[#allocation3 + $0x88] sm:$0xff]
      %v8754 = vld [vmem:[#allocation3 + $0x90] sm:$0xff]
      %v8755 = vld [vmem:[#allocation3 + $0x98] sm:$0xff]
      %v8756 = vld [vmem:[#allocation3 + $0xa0] sm:$0xff]
      %v8757 = vld [vmem:[#allocation3 + $0xa8] sm:$0xff]
      %v8758 = vld [vmem:[#allocation3 + $0xb0] sm:$0xff]
      %v8759 = vld [vmem:[#allocation3 + $0xb8] sm:$0xff]
      %v8760 = vld [vmem:[#allocation3 + $0xc0] sm:$0xff]
      %v8761 = vld [vmem:[#allocation3 + $0xc8] sm:$0xff]
      %v8762 = vld [vmem:[#allocation3 + $0xd0] sm:$0xff]
      %v8763 = vld [vmem:[#allocation3 + $0xd8] sm:$0xff]
      %v8764 = vld [vmem:[#allocation3 + $0xe0] sm:$0xff]
      %v8765 = vld [vmem:[#allocation3 + $0xe8] sm:$0xff]
      %v8766 = vld [vmem:[#allocation3 + $0xf0] sm:$0xff]
      %v8767 = vld [vmem:[#allocation3 + $0xf8] sm:$0xff]
      %v8768 = vld [vmem:[#allocation3 + $0x100] sm:$0xff]
      %v8769 = vld [vmem:[#allocation3 + $0x108] sm:$0xff]
      %v8770 = vld [vmem:[#allocation3 + $0x110] sm:$0xff]
      %v8771 = vld [vmem:[#allocation3 + $0x118] sm:$0xff]
      %v8772 = vld [vmem:[%s7] sm:$0x1]
      %v8774 = vlaneseq
      %v8775 = vshrl.u32 %v8774, 7
      %v8776 = vsub.s32 0, %v8775
      %v8777 = vrot.slane %v8772, %v8776
      %v8779 = vmul.f32 %v8736, %v8777
      %v8780 = vmul.f32 %v8737, %v8777
      %v8781 = vmul.f32 %v8738, %v8777
      %v8782 = vmul.f32 %v8739, %v8777
      %v8783 = vmul.f32 %v8740, %v8777
      %v8784 = vmul.f32 %v8741, %v8777
      %v8785 = vmul.f32 %v8742, %v8777
      %v8786 = vmul.f32 %v8743, %v8777
      %v8787 = vmul.f32 %v8744, %v8777
      %v8788 = vmul.f32 %v8745, %v8777
      %v8789 = vmul.f32 %v8746, %v8777
      %v8790 = vmul.f32 %v8747, %v8777
      %v8791 = vmul.f32 %v8748, %v8777
      %v8792 = vmul.f32 %v8749, %v8777
      %v8793 = vmul.f32 %v8750, %v8777
      %v8794 = vmul.f32 %v8751, %v8777
      %v8795 = vmul.f32 %v8752, %v8777
      %v8796 = vmul.f32 %v8753, %v8777
      %v8797 = vmul.f32 %v8754, %v8777
      %v8798 = vmul.f32 %v8755, %v8777
      %v8799 = vmul.f32 %v8756, %v8777
      %v8800 = vmul.f32 %v8757, %v8777
      %v8801 = vmul.f32 %v8758, %v8777
      %v8802 = vmul.f32 %v8759, %v8777
      %v8803 = vmul.f32 %v8760, %v8777
      %v8804 = vmul.f32 %v8761, %v8777
      %v8805 = vmul.f32 %v8762, %v8777
      %v8806 = vmul.f32 %v8763, %v8777
      %v8807 = vmul.f32 %v8764, %v8777
      %v8808 = vmul.f32 %v8765, %v8777
      %v8809 = vmul.f32 %v8766, %v8777
      %v8810 = vmul.f32 %v8767, %v8777
      %v8811 = vmul.f32 %v8768, %v8777
      %v8812 = vmul.f32 %v8769, %v8777
      %v8813 = vmul.f32 %v8770, %v8777
      %v8814 = vmul.f32 %v8771, %v8777
      %v8815 = vld [vmem:[%s8] sm:$0x1]
      %v8817 = vlaneseq
      %v8818 = vshrl.u32 %v8817, 7
      %v8819 = vsub.s32 0, %v8818
      %v8820 = vrot.slane %v8815, %v8819
      %v8822 = vadd.f32 %v8779, %v8820
      %v8823 = vadd.f32 %v8780, %v8820
      %v8824 = vadd.f32 %v8781, %v8820
      %v8825 = vadd.f32 %v8782, %v8820
      %v8826 = vadd.f32 %v8783, %v8820
      %v8827 = vadd.f32 %v8784, %v8820
      %v8828 = vadd.f32 %v8785, %v8820
      %v8829 = vadd.f32 %v8786, %v8820
      %v8830 = vadd.f32 %v8787, %v8820
      %v8831 = vadd.f32 %v8788, %v8820
      %v8832 = vadd.f32 %v8789, %v8820
      %v8833 = vadd.f32 %v8790, %v8820
      %v8834 = vadd.f32 %v8791, %v8820
      %v8835 = vadd.f32 %v8792, %v8820
      %v8836 = vadd.f32 %v8793, %v8820
      %v8837 = vadd.f32 %v8794, %v8820
      %v8838 = vadd.f32 %v8795, %v8820
      %v8839 = vadd.f32 %v8796, %v8820
      %v8840 = vadd.f32 %v8797, %v8820
      %v8841 = vadd.f32 %v8798, %v8820
      %v8842 = vadd.f32 %v8799, %v8820
      %v8843 = vadd.f32 %v8800, %v8820
      %v8844 = vadd.f32 %v8801, %v8820
      %v8845 = vadd.f32 %v8802, %v8820
      %v8846 = vadd.f32 %v8803, %v8820
      %v8847 = vadd.f32 %v8804, %v8820
      %v8848 = vadd.f32 %v8805, %v8820
      %v8849 = vadd.f32 %v8806, %v8820
      %v8850 = vadd.f32 %v8807, %v8820
      %v8851 = vadd.f32 %v8808, %v8820
      %v8852 = vadd.f32 %v8809, %v8820
      %v8853 = vadd.f32 %v8810, %v8820
      %v8854 = vadd.f32 %v8811, %v8820
      %v8855 = vadd.f32 %v8812, %v8820
      %v8856 = vadd.f32 %v8813, %v8820
      %v8857 = vadd.f32 %v8814, %v8820
      %v8858 = vmax.f32 %v8822, 0.0
      %v8859 = vmax.f32 %v8823, 0.0
      %v8860 = vmax.f32 %v8824, 0.0
      %v8861 = vmax.f32 %v8825, 0.0
      %v8862 = vmax.f32 %v8826, 0.0
      %v8863 = vmax.f32 %v8827, 0.0
      %v8864 = vmax.f32 %v8828, 0.0
      %v8865 = vmax.f32 %v8829, 0.0
      %v8866 = vmax.f32 %v8830, 0.0
      %v8867 = vmax.f32 %v8831, 0.0
      %v8868 = vmax.f32 %v8832, 0.0
      %v8869 = vmax.f32 %v8833, 0.0
      %v8870 = vmax.f32 %v8834, 0.0
      %v8871 = vmax.f32 %v8835, 0.0
      %v8872 = vmax.f32 %v8836, 0.0
      %v8873 = vmax.f32 %v8837, 0.0
      %v8874 = vmax.f32 %v8838, 0.0
      %v8875 = vmax.f32 %v8839, 0.0
      %v8876 = vmax.f32 %v8840, 0.0
      %v8877 = vmax.f32 %v8841, 0.0
      %v8878 = vmax.f32 %v8842, 0.0
      %v8879 = vmax.f32 %v8843, 0.0
      %v8880 = vmax.f32 %v8844, 0.0
      %v8881 = vmax.f32 %v8845, 0.0
      %v8882 = vmax.f32 %v8846, 0.0
      %v8883 = vmax.f32 %v8847, 0.0
      %v8884 = vmax.f32 %v8848, 0.0
      %v8885 = vmax.f32 %v8849, 0.0
      %v8886 = vmax.f32 %v8850, 0.0
      %v8887 = vmax.f32 %v8851, 0.0
      %v8888 = vmax.f32 %v8852, 0.0
      %v8889 = vmax.f32 %v8853, 0.0
      %v8890 = vmax.f32 %v8854, 0.0
      %v8891 = vmax.f32 %v8855, 0.0
      %v8892 = vmax.f32 %v8856, 0.0
      %v8893 = vmax.f32 %v8857, 0.0
      %v8894 = vpack.c.bf16 %v8859, %v8858
      %v8895 = vpack.c.bf16 %v8861, %v8860
      %v8896 = vpack.c.bf16 %v8863, %v8862
      %v8897 = vpack.c.bf16 %v8865, %v8864
      %v8898 = vpack.c.bf16 %v8867, %v8866
      %v8899 = vpack.c.bf16 %v8869, %v8868
      %v8900 = vpack.c.bf16 %v8871, %v8870
      %v8901 = vpack.c.bf16 %v8873, %v8872
      %v8902 = vpack.c.bf16 %v8875, %v8874
      %v8903 = vpack.c.bf16 %v8877, %v8876
      %v8904 = vpack.c.bf16 %v8879, %v8878
      %v8905 = vpack.c.bf16 %v8881, %v8880
      %v8906 = vpack.c.bf16 %v8883, %v8882
      %v8907 = vpack.c.bf16 %v8885, %v8884
      %v8908 = vpack.c.bf16 %v8887, %v8886
      %v8909 = vpack.c.bf16 %v8889, %v8888
      %v8910 = vpack.c.bf16 %v8891, %v8890
      %v8911 = vpack.c.bf16 %v8893, %v8892
      %v8912 = vld [vmem:[%s9] sm:$0xf]
      %v8913 = vld [vmem:[%s9 + $0x4] sm:$0xf]
      %v8914 = vld [vmem:[%s9 + $0x8] sm:$0xf]
      %v8915 = vld [vmem:[%s9 + $0xc] sm:$0xf]
      %v8916 = vld [vmem:[%s9 + $0x10] sm:$0xf]
      %v8917 = vld [vmem:[%s9 + $0x14] sm:$0xf]
      %v8918 = vld [vmem:[%s9 + $0x18] sm:$0xf]
      %v8919 = vld [vmem:[%s9 + $0x1c] sm:$0xf]
      %v8920 = vld [vmem:[%s9 + $0x20] sm:$0xf]
      %v8921 = vld [vmem:[%s9 + $0x24] sm:$0xf]
      %v8922 = vld [vmem:[%s9 + $0x28] sm:$0xf]
      %v8923 = vld [vmem:[%s9 + $0x2c] sm:$0xf]
      %v8924 = vld [vmem:[%s9 + $0x30] sm:$0xf]
      %v8925 = vld [vmem:[%s9 + $0x34] sm:$0xf]
      %v8926 = vld [vmem:[%s9 + $0x38] sm:$0xf]
      %v8927 = vld [vmem:[%s9 + $0x3c] sm:$0xf]
      %v8944 = vunpack.c.l.b16 %v8912
      %v8945 = vunpack.c.l.b16 %v8913
      %v8946 = vunpack.c.l.b16 %v8914
      %v8947 = vunpack.c.l.b16 %v8915
      %v8948 = vunpack.c.l.b16 %v8916
      %v8949 = vunpack.c.l.b16 %v8917
      %v8950 = vunpack.c.l.b16 %v8918
      %v8951 = vunpack.c.l.b16 %v8919
      %v8952 = vunpack.c.l.b16 %v8920
      %v8953 = vunpack.c.l.b16 %v8921
      %v8954 = vunpack.c.l.b16 %v8922
      %v8955 = vunpack.c.l.b16 %v8923
      %v8956 = vunpack.c.l.b16 %v8924
      %v8957 = vunpack.c.l.b16 %v8925
      %v8958 = vunpack.c.l.b16 %v8926
      %v8959 = vunpack.c.l.b16 %v8927
      %v8960 = vpack.c.b16 %v8945, %v8944
      %v8961 = vpack.c.b16 %v8947, %v8946
      %v8962 = vpack.c.b16 %v8949, %v8948
      %v8963 = vpack.c.b16 %v8951, %v8950
      %v8964 = vpack.c.b16 %v8953, %v8952
      %v8965 = vpack.c.b16 %v8955, %v8954
      %v8966 = vpack.c.b16 %v8957, %v8956
      %v8967 = vpack.c.b16 %v8959, %v8958
      %8976 = vmatprep.subr.bf16.mxu0 0
      %8977 = vmatpush1.bf16.msra.mxu0 %v8960
      %8978 = vmatprep.subr.bf16.mxu0 0
      %8979 = vmatpush1.bf16.msra.mxu0 %v8961
      %8980 = vmatprep.subr.bf16.mxu0 0
      %8981 = vmatpush1.bf16.msra.mxu0 %v8962
      %8982 = vmatprep.subr.bf16.mxu0 0
      %8983 = vmatpush1.bf16.msra.mxu0 %v8963
      %8984 = vmatprep.subr.bf16.mxu0 0
      %8985 = vmatpush1.bf16.msra.mxu0 %v8964
      %8986 = vmatprep.subr.bf16.mxu0 0
      %8987 = vmatpush1.bf16.msra.mxu0 %v8965
      %8988 = vmatprep.subr.bf16.mxu0 0
      %8989 = vmatpush1.bf16.msra.mxu0 %v8966
      %8990 = vmatprep.subr.bf16.mxu0 0
      %8991 = vmatpush1.bf16.msra.mxu0 %v8967
      %8992 = vmatprep.subr.bf16.mxu0 0
      %8993 = vmatpush1.bf16.msra.mxu0 0
      %8994 = vmatprep.subr.bf16.mxu0 0
      %8995 = vmatpush1.bf16.msra.mxu0 0
      %8996 = vmatprep.subr.bf16.mxu0 0
      %8997 = vmatpush1.bf16.msra.mxu0 0
      %8998 = vmatprep.subr.bf16.mxu0 0
      %8999 = vmatpush1.bf16.msra.mxu0 0
      %9000 = vmatprep.subr.bf16.mxu0 0
      %9001 = vmatpush1.bf16.msra.mxu0 0
      %9002 = vmatprep.subr.bf16.mxu0 0
      %9003 = vmatpush1.bf16.msra.mxu0 0
      %9004 = vmatprep.subr.bf16.mxu0 0
      %9005 = vmatpush1.bf16.msra.mxu0 0
      %9006 = vmatprep.subr.bf16.mxu0 0
      %9007 = vmatpush1.bf16.msra.mxu0 0
      %9008 = vmatprep.mubr.bf16.mxu0 0
      %9009 = vmatmul.mubr.bf16.gmra.mrb[0].mxu0 %v8894
      %v9010 = vpop.f32.mrb[0].mxu0
      %v9011 = vadd.f32 0.0, %v9010
      %v9012 = vpop.f32.mrb[0].mxu0
      %v9013 = vpop.f32.mrb[0].mxu0
      %v9014 = vadd.f32 0.0, %v9013
      %v9015 = vpop.f32.mrb[0].mxu0
      %9016 = vmatprep.mubr.bf16.mxu0 0
      %9017 = vmatmul.mubr.bf16.gmra.mrb[0].mxu0 %v8895
      %v9018 = vpop.f32.mrb[0].mxu0
      %v9019 = vadd.f32 0.0, %v9018
      %v9020 = vpop.f32.mrb[0].mxu0
      %v9021 = vpop.f32.mrb[0].mxu0
      %v9022 = vadd.f32 0.0, %v9021
      %v9023 = vpop.f32.mrb[0].mxu0
      %9024 = vmatprep.mubr.bf16.mxu0 0
      %9025 = vmatmul.mubr.bf16.gmra.mrb[0].mxu0 %v8896
      %v9026 = vpop.f32.mrb[0].mxu0
      %v9027 = vadd.f32 0.0, %v9026
      %v9028 = vpop.f32.mrb[0].mxu0
      %v9029 = vpop.f32.mrb[0].mxu0
      %v9030 = vadd.f32 0.0, %v9029
      %v9031 = vpop.f32.mrb[0].mxu0
      %9032 = vmatprep.mubr.bf16.mxu0 0
      %9033 = vmatmul.mubr.bf16.gmra.mrb[0].mxu0 %v8897
      %v9034 = vpop.f32.mrb[0].mxu0
      %v9035 = vadd.f32 0.0, %v9034
      %v9036 = vpop.f32.mrb[0].mxu0
      %v9037 = vpop.f32.mrb[0].mxu0
      %v9038 = vadd.f32 0.0, %v9037
      %v9039 = vpop.f32.mrb[0].mxu0
      %9040 = vmatprep.mubr.bf16.mxu0 0
      %9041 = vmatmul.mubr.bf16.gmra.mrb[0].mxu0 %v8898
      %v9042 = vpop.f32.mrb[0].mxu0
      %v9043 = vadd.f32 0.0, %v9042
      %v9044 = vpop.f32.mrb[0].mxu0
      %v9045 = vpop.f32.mrb[0].mxu0
      %v9046 = vadd.f32 0.0, %v9045
      %v9047 = vpop.f32.mrb[0].mxu0
      %9048 = vmatprep.mubr.bf16.mxu0 0
      %9049 = vmatmul.mubr.bf16.gmra.mrb[0].mxu0 %v8899
      %v9050 = vpop.f32.mrb[0].mxu0
      %v9051 = vadd.f32 0.0, %v9050
      %v9052 = vpop.f32.mrb[0].mxu0
      %v9053 = vpop.f32.mrb[0].mxu0
      %v9054 = vadd.f32 0.0, %v9053
      %v9055 = vpop.f32.mrb[0].mxu0
      %9056 = vmatprep.mubr.bf16.mxu0 0
      %9057 = vmatmul.mubr.bf16.gmra.mrb[0].mxu0 %v8900
      %v9058 = vpop.f32.mrb[0].mxu0
      %v9059 = vadd.f32 0.0, %v9058
      %v9060 = vpop.f32.mrb[0].mxu0
      %v9061 = vpop.f32.mrb[0].mxu0
      %v9062 = vadd.f32 0.0, %v9061
      %v9063 = vpop.f32.mrb[0].mxu0
      %9064 = vmatprep.mubr.bf16.mxu0 0
      %9065 = vmatmul.mubr.bf16.gmra.mrb[0].mxu0 %v8901
      %v9066 = vpop.f32.mrb[0].mxu0
      %v9067 = vadd.f32 0.0, %v9066
      %v9068 = vpop.f32.mrb[0].mxu0
      %v9069 = vpop.f32.mrb[0].mxu0
      %v9070 = vadd.f32 0.0, %v9069
      %v9071 = vpop.f32.mrb[0].mxu0
      %9072 = vmatprep.mubr.bf16.mxu0 0
      %9073 = vmatmul.mubr.bf16.gmra.mrb[0].mxu0 %v8902
      %v9074 = vpop.f32.mrb[0].mxu0
      %v9075 = vadd.f32 0.0, %v9074
      %v9076 = vpop.f32.mrb[0].mxu0
      %v9077 = vpop.f32.mrb[0].mxu0
      %v9078 = vadd.f32 0.0, %v9077
      %v9079 = vpop.f32.mrb[0].mxu0
      %9080 = vmatprep.mubr.bf16.mxu0 0
      %9081 = vmatmul.mubr.bf16.gmra.mrb[0].mxu0 %v8903
      %v9082 = vpop.f32.mrb[0].mxu0
      %v9083 = vadd.f32 0.0, %v9082
      %v9084 = vpop.f32.mrb[0].mxu0
      %v9085 = vpop.f32.mrb[0].mxu0
      %v9086 = vadd.f32 0.0, %v9085
      %v9087 = vpop.f32.mrb[0].mxu0
      %9088 = vmatprep.mubr.bf16.mxu0 0
      %9089 = vmatmul.mubr.bf16.gmra.mrb[0].mxu0 %v8904
      %v9090 = vpop.f32.mrb[0].mxu0
      %v9091 = vadd.f32 0.0, %v9090
      %v9092 = vpop.f32.mrb[0].mxu0
      %v9093 = vpop.f32.mrb[0].mxu0
      %v9094 = vadd.f32 0.0, %v9093
      %v9095 = vpop.f32.mrb[0].mxu0
      %9096 = vmatprep.mubr.bf16.mxu0 0
      %9097 = vmatmul.mubr.bf16.gmra.mrb[0].mxu0 %v8905
      %v9098 = vpop.f32.mrb[0].mxu0
      %v9099 = vadd.f32 0.0, %v9098
      %v9100 = vpop.f32.mrb[0].mxu0
      %v9101 = vpop.f32.mrb[0].mxu0
      %v9102 = vadd.f32 0.0, %v9101
      %v9103 = vpop.f32.mrb[0].mxu0
      %9104 = vmatprep.mubr.bf16.mxu0 0
      %9105 = vmatmul.mubr.bf16.gmra.mrb[0].mxu0 %v8906
      %v9106 = vpop.f32.mrb[0].mxu0
      %v9107 = vadd.f32 0.0, %v9106
      %v9108 = vpop.f32.mrb[0].mxu0
      %v9109 = vpop.f32.mrb[0].mxu0
      %v9110 = vadd.f32 0.0, %v9109
      %v9111 = vpop.f32.mrb[0].mxu0
      %9112 = vmatprep.mubr.bf16.mxu0 0
      %9113 = vmatmul.mubr.bf16.gmra.mrb[0].mxu0 %v8907
      %v9114 = vpop.f32.mrb[0].mxu0
      %v9115 = vadd.f32 0.0, %v9114
      %v9116 = vpop.f32.mrb[0].mxu0
      %v9117 = vpop.f32.mrb[0].mxu0
      %v9118 = vadd.f32 0.0, %v9117
      %v9119 = vpop.f32.mrb[0].mxu0
      %9120 = vmatprep.mubr.bf16.mxu0 0
      %9121 = vmatmul.mubr.bf16.gmra.mrb[0].mxu0 %v8908
      %v9122 = vpop.f32.mrb[0].mxu0
      %v9123 = vadd.f32 0.0, %v9122
      %v9124 = vpop.f32.mrb[0].mxu0
      %v9125 = vpop.f32.mrb[0].mxu0
      %v9126 = vadd.f32 0.0, %v9125
      %v9127 = vpop.f32.mrb[0].mxu0
      %9128 = vmatprep.mubr.bf16.mxu0 0
      %9129 = vmatmul.mubr.bf16.gmra.mrb[0].mxu0 %v8909
      %v9130 = vpop.f32.mrb[0].mxu0
      %v9131 = vadd.f32 0.0, %v9130
      %v9132 = vpop.f32.mrb[0].mxu0
      %v9133 = vpop.f32.mrb[0].mxu0
      %v9134 = vadd.f32 0.0, %v9133
      %v9135 = vpop.f32.mrb[0].mxu0
      %9136 = vmatprep.mubr.bf16.mxu0 0
      %9137 = vmatmul.mubr.bf16.gmra.mrb[0].mxu0 %v8910
      %v9138 = vpop.f32.mrb[0].mxu0
      %v9139 = vadd.f32 0.0, %v9138
      %v9140 = vpop.f32.mrb[0].mxu0
      %v9141 = vpop.f32.mrb[0].mxu0
      %v9142 = vadd.f32 0.0, %v9141
      %v9143 = vpop.f32.mrb[0].mxu0
      %9144 = vmatprep.mubr.bf16.mxu0 0
      %9145 = vmatmul.mubr.bf16.gmra.mrb[0].mxu0 %v8911
      %v9146 = vpop.f32.mrb[0].mxu0
      %v9147 = vadd.f32 0.0, %v9146
      %v9148 = vpop.f32.mrb[0].mxu0
      %v9149 = vpop.f32.mrb[0].mxu0
      %v9150 = vadd.f32 0.0, %v9149
      %v9151 = vpop.f32.mrb[0].mxu0
      %9152 = vdwg.mxu0
      %v9153 = vld [vmem:[%s10] sm:$0x1]
      %v9155 = vlaneseq
      %v9156 = vshrl.u32 %v9155, 7
      %v9157 = vsub.s32 0, %v9156
      %v9158 = vrot.slane %v9153, %v9157
      %v9160 = vmul.f32 %v9011, %v9158
      %v9161 = vmul.f32 %v9014, %v9158
      %v9162 = vmul.f32 %v9019, %v9158
      %v9163 = vmul.f32 %v9022, %v9158
      %v9164 = vmul.f32 %v9027, %v9158
      %v9165 = vmul.f32 %v9030, %v9158
      %v9166 = vmul.f32 %v9035, %v9158
      %v9167 = vmul.f32 %v9038, %v9158
      %v9168 = vmul.f32 %v9043, %v9158
      %v9169 = vmul.f32 %v9046, %v9158
      %v9170 = vmul.f32 %v9051, %v9158
      %v9171 = vmul.f32 %v9054, %v9158
      %v9172 = vmul.f32 %v9059, %v9158
      %v9173 = vmul.f32 %v9062, %v9158
      %v9174 = vmul.f32 %v9067, %v9158
      %v9175 = vmul.f32 %v9070, %v9158
      %v9176 = vmul.f32 %v9075, %v9158
      %v9177 = vmul.f32 %v9078, %v9158
      %v9178 = vmul.f32 %v9083, %v9158
      %v9179 = vmul.f32 %v9086, %v9158
      %v9180 = vmul.f32 %v9091, %v9158
      %v9181 = vmul.f32 %v9094, %v9158
      %v9182 = vmul.f32 %v9099, %v9158
      %v9183 = vmul.f32 %v9102, %v9158
      %v9184 = vmul.f32 %v9107, %v9158
      %v9185 = vmul.f32 %v9110, %v9158
      %v9186 = vmul.f32 %v9115, %v9158
      %v9187 = vmul.f32 %v9118, %v9158
      %v9188 = vmul.f32 %v9123, %v9158
      %v9189 = vmul.f32 %v9126, %v9158
      %v9190 = vmul.f32 %v9131, %v9158
      %v9191 = vmul.f32 %v9134, %v9158
      %v9192 = vmul.f32 %v9139, %v9158
      %v9193 = vmul.f32 %v9142, %v9158
      %v9194 = vmul.f32 %v9147, %v9158
      %v9195 = vmul.f32 %v9150, %v9158
      %v9196 = vld [vmem:[%s11] sm:$0x1]
      %v9198 = vlaneseq
      %v9199 = vshrl.u32 %v9198, 7
      %v9200 = vsub.s32 0, %v9199
      %v9201 = vrot.slane %v9196, %v9200
      %v9203 = vadd.f32 %v9160, %v9201
      %v9204 = vadd.f32 %v9161, %v9201
      %v9205 = vadd.f32 %v9162, %v9201
      %v9206 = vadd.f32 %v9163, %v9201
      %v9207 = vadd.f32 %v9164, %v9201
      %v9208 = vadd.f32 %v9165, %v9201
      %v9209 = vadd.f32 %v9166, %v9201
      %v9210 = vadd.f32 %v9167, %v9201
      %v9211 = vadd.f32 %v9168, %v9201
      %v9212 = vadd.f32 %v9169, %v9201
      %v9213 = vadd.f32 %v9170, %v9201
      %v9214 = vadd.f32 %v9171, %v9201
      %v9215 = vadd.f32 %v9172, %v9201
      %v9216 = vadd.f32 %v9173, %v9201
      %v9217 = vadd.f32 %v9174, %v9201
      %v9218 = vadd.f32 %v9175, %v9201
      %v9219 = vadd.f32 %v9176, %v9201
      %v9220 = vadd.f32 %v9177, %v9201
      %v9221 = vadd.f32 %v9178, %v9201
      %v9222 = vadd.f32 %v9179, %v9201
      %v9223 = vadd.f32 %v9180, %v9201
      %v9224 = vadd.f32 %v9181, %v9201
      %v9225 = vadd.f32 %v9182, %v9201
      %v9226 = vadd.f32 %v9183, %v9201
      %v9227 = vadd.f32 %v9184, %v9201
      %v9228 = vadd.f32 %v9185, %v9201
      %v9229 = vadd.f32 %v9186, %v9201
      %v9230 = vadd.f32 %v9187, %v9201
      %v9231 = vadd.f32 %v9188, %v9201
      %v9232 = vadd.f32 %v9189, %v9201
      %v9233 = vadd.f32 %v9190, %v9201
      %v9234 = vadd.f32 %v9191, %v9201
      %v9235 = vadd.f32 %v9192, %v9201
      %v9236 = vadd.f32 %v9193, %v9201
      %v9237 = vadd.f32 %v9194, %v9201
      %v9238 = vadd.f32 %v9195, %v9201
      %v9275 = vcombine.high %v9203, %v9203
      %v9277 = vunpack.c.l.s4 1983009808
      %v9278 = vunpack.c.0.s8 %v9277
      %v9279 = vlaneseq
      %v9280 = vshrl.u32 %v9279, 7
      %v9281 = vsub.s32 %v9278, %v9280
      %v9282 = vrot.slane %v9203, %v9281
      %v9284 = vunpack.c.l.s4 1983009808
      %v9285 = vunpack.c.0.s8 %v9284
      %v9286 = vlaneseq
      %v9287 = vshrl.u32 %v9286, 7
      %v9288 = vsub.s32 %v9285, %v9287
      %v9289 = vrot.slane %v9275, %v9288
      %v9290 = vcombine.high %v9282, %v9282
      %v9291 = vcombine.high %v9289, %v9289
      %v9292 = vcombine.high %v9204, %v9204
      %v9294 = vunpack.c.l.s4 1983009808
      %v9295 = vunpack.c.0.s8 %v9294
      %v9296 = vlaneseq
      %v9297 = vshrl.u32 %v9296, 7
      %v9298 = vsub.s32 %v9295, %v9297
      %v9299 = vrot.slane %v9204, %v9298
      %v9301 = vunpack.c.l.s4 1983009808
      %v9302 = vunpack.c.0.s8 %v9301
      %v9303 = vlaneseq
      %v9304 = vshrl.u32 %v9303, 7
      %v9305 = vsub.s32 %v9302, %v9304
      %v9306 = vrot.slane %v9292, %v9305
      %v9307 = vcombine.high %v9299, %v9299
      %v9308 = vcombine.high %v9306, %v9306
      %v9309 = vcombine.high %v9205, %v9205
      %v9311 = vunpack.c.l.s4 1983009808
      %v9312 = vunpack.c.0.s8 %v9311
      %v9313 = vlaneseq
      %v9314 = vshrl.u32 %v9313, 7
      %v9315 = vsub.s32 %v9312, %v9314
      %v9316 = vrot.slane %v9205, %v9315
      %v9318 = vunpack.c.l.s4 1983009808
      %v9319 = vunpack.c.0.s8 %v9318
      %v9320 = vlaneseq
      %v9321 = vshrl.u32 %v9320, 7
      %v9322 = vsub.s32 %v9319, %v9321
      %v9323 = vrot.slane %v9309, %v9322
      %v9324 = vcombine.high %v9316, %v9316
      %v9325 = vcombine.high %v9323, %v9323
      %v9326 = vcombine.high %v9206, %v9206
      %v9328 = vunpack.c.l.s4 1983009808
      %v9329 = vunpack.c.0.s8 %v9328
      %v9330 = vlaneseq
      %v9331 = vshrl.u32 %v9330, 7
      %v9332 = vsub.s32 %v9329, %v9331
      %v9333 = vrot.slane %v9206, %v9332
      %v9335 = vunpack.c.l.s4 1983009808
      %v9336 = vunpack.c.0.s8 %v9335
      %v9337 = vlaneseq
      %v9338 = vshrl.u32 %v9337, 7
      %v9339 = vsub.s32 %v9336, %v9338
      %v9340 = vrot.slane %v9326, %v9339
      %v9341 = vcombine.high %v9333, %v9333
      %v9342 = vcombine.high %v9340, %v9340
      %v9343 = vcombine.high %v9207, %v9207
      %v9345 = vunpack.c.l.s4 1983009808
      %v9346 = vunpack.c.0.s8 %v9345
      %v9347 = vlaneseq
      %v9348 = vshrl.u32 %v9347, 7
      %v9349 = vsub.s32 %v9346, %v9348
      %v9350 = vrot.slane %v9207, %v9349
      %v9352 = vunpack.c.l.s4 1983009808
      %v9353 = vunpack.c.0.s8 %v9352
      %v9354 = vlaneseq
      %v9355 = vshrl.u32 %v9354, 7
      %v9356 = vsub.s32 %v9353, %v9355
      %v9357 = vrot.slane %v9343, %v9356
      %v9358 = vcombine.high %v9357, %v9357
      %v9359 = vcombine.high %v9208, %v9208
      %v9361 = vunpack.c.l.s4 1983009808
      %v9362 = vunpack.c.0.s8 %v9361
      %v9363 = vlaneseq
      %v9364 = vshrl.u32 %v9363, 7
      %v9365 = vsub.s32 %v9362, %v9364
      %v9366 = vrot.slane %v9208, %v9365
      %v9368 = vunpack.c.l.s4 1983009808
      %v9369 = vunpack.c.0.s8 %v9368
      %v9370 = vlaneseq
      %v9371 = vshrl.u32 %v9370, 7
      %v9372 = vsub.s32 %v9369, %v9371
      %v9373 = vrot.slane %v9359, %v9372
      %v9374 = vcombine.high %v9366, %v9366
      %v9375 = vcombine.high %v9373, %v9373
      %v9376 = vcombine.high %v9209, %v9209
      %v9378 = vunpack.c.l.s4 1983009808
      %v9379 = vunpack.c.0.s8 %v9378
      %v9380 = vlaneseq
      %v9381 = vshrl.u32 %v9380, 7
      %v9382 = vsub.s32 %v9379, %v9381
      %v9383 = vrot.slane %v9209, %v9382
      %v9385 = vunpack.c.l.s4 1983009808
      %v9386 = vunpack.c.0.s8 %v9385
      %v9387 = vlaneseq
      %v9388 = vshrl.u32 %v9387, 7
      %v9389 = vsub.s32 %v9386, %v9388
      %v9390 = vrot.slane %v9376, %v9389
      %v9391 = vcombine.high %v9383, %v9383
      %v9392 = vcombine.high %v9390, %v9390
      %v9393 = vcombine.high %v9210, %v9210
      %v9395 = vunpack.c.l.s4 1983009808
      %v9396 = vunpack.c.0.s8 %v9395
      %v9397 = vlaneseq
      %v9398 = vshrl.u32 %v9397, 7
      %v9399 = vsub.s32 %v9396, %v9398
      %v9400 = vrot.slane %v9210, %v9399
      %v9402 = vunpack.c.l.s4 1983009808
      %v9403 = vunpack.c.0.s8 %v9402
      %v9404 = vlaneseq
      %v9405 = vshrl.u32 %v9404, 7
      %v9406 = vsub.s32 %v9403, %v9405
      %v9407 = vrot.slane %v9393, %v9406
      %v9408 = vcombine.high %v9400, %v9400
      %v9409 = vcombine.high %v9407, %v9407
      %v9410 = vcombine.high %v9211, %v9211
      %v9412 = vunpack.c.l.s4 1983009808
      %v9413 = vunpack.c.0.s8 %v9412
      %v9414 = vlaneseq
      %v9415 = vshrl.u32 %v9414, 7
      %v9416 = vsub.s32 %v9413, %v9415
      %v9417 = vrot.slane %v9211, %v9416
      %v9419 = vunpack.c.l.s4 1983009808
      %v9420 = vunpack.c.0.s8 %v9419
      %v9421 = vlaneseq
      %v9422 = vshrl.u32 %v9421, 7
      %v9423 = vsub.s32 %v9420, %v9422
      %v9424 = vrot.slane %v9410, %v9423
      %v9425 = vcombine.high %v9417, %v9417
      %v9426 = vcombine.high %v9212, %v9212
      %v9428 = vunpack.c.l.s4 1983009808
      %v9429 = vunpack.c.0.s8 %v9428
      %v9430 = vlaneseq
      %v9431 = vshrl.u32 %v9430, 7
      %v9432 = vsub.s32 %v9429, %v9431
      %v9433 = vrot.slane %v9212, %v9432
      %v9435 = vunpack.c.l.s4 1983009808
      %v9436 = vunpack.c.0.s8 %v9435
      %v9437 = vlaneseq
      %v9438 = vshrl.u32 %v9437, 7
      %v9439 = vsub.s32 %v9436, %v9438
      %v9440 = vrot.slane %v9426, %v9439
      %v9441 = vcombine.high %v9433, %v9433
      %v9442 = vcombine.high %v9440, %v9440
      %v9443 = vcombine.high %v9213, %v9213
      %v9445 = vunpack.c.l.s4 1983009808
      %v9446 = vunpack.c.0.s8 %v9445
      %v9447 = vlaneseq
      %v9448 = vshrl.u32 %v9447, 7
      %v9449 = vsub.s32 %v9446, %v9448
      %v9450 = vrot.slane %v9213, %v9449
      %v9452 = vunpack.c.l.s4 1983009808
      %v9453 = vunpack.c.0.s8 %v9452
      %v9454 = vlaneseq
      %v9455 = vshrl.u32 %v9454, 7
      %v9456 = vsub.s32 %v9453, %v9455
      %v9457 = vrot.slane %v9443, %v9456
      %v9458 = vcombine.high %v9450, %v9450
      %v9459 = vcombine.high %v9457, %v9457
      %v9460 = vcombine.high %v9214, %v9214
      %v9462 = vunpack.c.l.s4 1983009808
      %v9463 = vunpack.c.0.s8 %v9462
      %v9464 = vlaneseq
      %v9465 = vshrl.u32 %v9464, 7
      %v9466 = vsub.s32 %v9463, %v9465
      %v9467 = vrot.slane %v9214, %v9466
      %v9469 = vunpack.c.l.s4 1983009808
      %v9470 = vunpack.c.0.s8 %v9469
      %v9471 = vlaneseq
      %v9472 = vshrl.u32 %v9471, 7
      %v9473 = vsub.s32 %v9470, %v9472
      %v9474 = vrot.slane %v9460, %v9473
      %v9475 = vcombine.high %v9467, %v9467
      %v9476 = vcombine.high %v9474, %v9474
      %v9477 = vcombine.high %v9215, %v9215
      %v9479 = vunpack.c.l.s4 1983009808
      %v9480 = vunpack.c.0.s8 %v9479
      %v9481 = vlaneseq
      %v9482 = vshrl.u32 %v9481, 7
      %v9483 = vsub.s32 %v9480, %v9482
      %v9484 = vrot.slane %v9215, %v9483
      %v9486 = vunpack.c.l.s4 1983009808
      %v9487 = vunpack.c.0.s8 %v9486
      %v9488 = vlaneseq
      %v9489 = vshrl.u32 %v9488, 7
      %v9490 = vsub.s32 %v9487, %v9489
      %v9491 = vrot.slane %v9477, %v9490
      %v9492 = vcombine.high %v9484, %v9484
      %v9493 = vcombine.high %v9491, %v9491
      %v9494 = vcombine.high %v9216, %v9216
      %v9496 = vunpack.c.l.s4 1983009808
      %v9497 = vunpack.c.0.s8 %v9496
      %v9498 = vlaneseq
      %v9499 = vshrl.u32 %v9498, 7
      %v9500 = vsub.s32 %v9497, %v9499
      %v9501 = vrot.slane %v9216, %v9500
      %v9503 = vunpack.c.l.s4 1983009808
      %v9504 = vunpack.c.0.s8 %v9503
      %v9505 = vlaneseq
      %v9506 = vshrl.u32 %v9505, 7
      %v9507 = vsub.s32 %v9504, %v9506
      %v9508 = vrot.slane %v9494, %v9507
      %v9509 = vcombine.high %v9508, %v9508
      %v9510 = vcombine.high %v9217, %v9217
      %v9512 = vunpack.c.l.s4 1983009808
      %v9513 = vunpack.c.0.s8 %v9512
      %v9514 = vlaneseq
      %v9515 = vshrl.u32 %v9514, 7
      %v9516 = vsub.s32 %v9513, %v9515
      %v9517 = vrot.slane %v9217, %v9516
      %v9519 = vunpack.c.l.s4 1983009808
      %v9520 = vunpack.c.0.s8 %v9519
      %v9521 = vlaneseq
      %v9522 = vshrl.u32 %v9521, 7
      %v9523 = vsub.s32 %v9520, %v9522
      %v9524 = vrot.slane %v9510, %v9523
      %v9525 = vcombine.high %v9517, %v9517
      %v9526 = vcombine.high %v9524, %v9524
      %v9527 = vcombine.high %v9218, %v9218
      %v9529 = vunpack.c.l.s4 1983009808
      %v9530 = vunpack.c.0.s8 %v9529
      %v9531 = vlaneseq
      %v9532 = vshrl.u32 %v9531, 7
      %v9533 = vsub.s32 %v9530, %v9532
      %v9534 = vrot.slane %v9218, %v9533
      %v9536 = vunpack.c.l.s4 1983009808
      %v9537 = vunpack.c.0.s8 %v9536
      %v9538 = vlaneseq
      %v9539 = vshrl.u32 %v9538, 7
      %v9540 = vsub.s32 %v9537, %v9539
      %v9541 = vrot.slane %v9527, %v9540
      %v9542 = vcombine.high %v9534, %v9534
      %v9543 = vcombine.high %v9541, %v9541
      %v9544 = vcombine.high %v9219, %v9219
      %v9546 = vunpack.c.l.s4 1983009808
      %v9547 = vunpack.c.0.s8 %v9546
      %v9548 = vlaneseq
      %v9549 = vshrl.u32 %v9548, 7
      %v9550 = vsub.s32 %v9547, %v9549
      %v9551 = vrot.slane %v9219, %v9550
      %v9553 = vunpack.c.l.s4 1983009808
      %v9554 = vunpack.c.0.s8 %v9553
      %v9555 = vlaneseq
      %v9556 = vshrl.u32 %v9555, 7
      %v9557 = vsub.s32 %v9554, %v9556
      %v9558 = vrot.slane %v9544, %v9557
      %v9559 = vcombine.high %v9551, %v9551
      %v9560 = vcombine.high %v9558, %v9558
      %v9561 = vcombine.high %v9220, %v9220
      %v9563 = vunpack.c.l.s4 1983009808
      %v9564 = vunpack.c.0.s8 %v9563
      %v9565 = vlaneseq
      %v9566 = vshrl.u32 %v9565, 7
      %v9567 = vsub.s32 %v9564, %v9566
      %v9568 = vrot.slane %v9220, %v9567
      %v9570 = vunpack.c.l.s4 1983009808
      %v9571 = vunpack.c.0.s8 %v9570
      %v9572 = vlaneseq
      %v9573 = vshrl.u32 %v9572, 7
      %v9574 = vsub.s32 %v9571, %v9573
      %v9575 = vrot.slane %v9561, %v9574
      %v9576 = vcombine.high %v9568, %v9568
      %v9577 = vcombine.high %v9221, %v9221
      %v9579 = vunpack.c.l.s4 1983009808
      %v9580 = vunpack.c.0.s8 %v9579
      %v9581 = vlaneseq
      %v9582 = vshrl.u32 %v9581, 7
      %v9583 = vsub.s32 %v9580, %v9582
      %v9584 = vrot.slane %v9221, %v9583
      %v9586 = vunpack.c.l.s4 1983009808
      %v9587 = vunpack.c.0.s8 %v9586
      %v9588 = vlaneseq
      %v9589 = vshrl.u32 %v9588, 7
      %v9590 = vsub.s32 %v9587, %v9589
      %v9591 = vrot.slane %v9577, %v9590
      %v9592 = vcombine.high %v9584, %v9584
      %v9593 = vcombine.high %v9591, %v9591
      %v9594 = vcombine.high %v9222, %v9222
      %v9596 = vunpack.c.l.s4 1983009808
      %v9597 = vunpack.c.0.s8 %v9596
      %v9598 = vlaneseq
      %v9599 = vshrl.u32 %v9598, 7
      %v9600 = vsub.s32 %v9597, %v9599
      %v9601 = vrot.slane %v9222, %v9600
      %v9603 = vunpack.c.l.s4 1983009808
      %v9604 = vunpack.c.0.s8 %v9603
      %v9605 = vlaneseq
      %v9606 = vshrl.u32 %v9605, 7
      %v9607 = vsub.s32 %v9604, %v9606
      %v9608 = vrot.slane %v9594, %v9607
      %v9609 = vcombine.high %v9601, %v9601
      %v9610 = vcombine.high %v9608, %v9608
      %v9611 = vcombine.high %v9223, %v9223
      %v9613 = vunpack.c.l.s4 1983009808
      %v9614 = vunpack.c.0.s8 %v9613
      %v9615 = vlaneseq
      %v9616 = vshrl.u32 %v9615, 7
      %v9617 = vsub.s32 %v9614, %v9616
      %v9618 = vrot.slane %v9223, %v9617
      %v9620 = vunpack.c.l.s4 1983009808
      %v9621 = vunpack.c.0.s8 %v9620
      %v9622 = vlaneseq
      %v9623 = vshrl.u32 %v9622, 7
      %v9624 = vsub.s32 %v9621, %v9623
      %v9625 = vrot.slane %v9611, %v9624
      %v9626 = vcombine.high %v9618, %v9618
      %v9627 = vcombine.high %v9625, %v9625
      %v9628 = vcombine.high %v9224, %v9224
      %v9630 = vunpack.c.l.s4 1983009808
      %v9631 = vunpack.c.0.s8 %v9630
      %v9632 = vlaneseq
      %v9633 = vshrl.u32 %v9632, 7
      %v9634 = vsub.s32 %v9631, %v9633
      %v9635 = vrot.slane %v9224, %v9634
      %v9637 = vunpack.c.l.s4 1983009808
      %v9638 = vunpack.c.0.s8 %v9637
      %v9639 = vlaneseq
      %v9640 = vshrl.u32 %v9639, 7
      %v9641 = vsub.s32 %v9638, %v9640
      %v9642 = vrot.slane %v9628, %v9641
      %v9643 = vcombine.high %v9635, %v9635
      %v9644 = vcombine.high %v9642, %v9642
      %v9645 = vcombine.high %v9225, %v9225
      %v9647 = vunpack.c.l.s4 1983009808
      %v9648 = vunpack.c.0.s8 %v9647
      %v9649 = vlaneseq
      %v9650 = vshrl.u32 %v9649, 7
      %v9651 = vsub.s32 %v9648, %v9650
      %v9652 = vrot.slane %v9225, %v9651
      %v9654 = vunpack.c.l.s4 1983009808
      %v9655 = vunpack.c.0.s8 %v9654
      %v9656 = vlaneseq
      %v9657 = vshrl.u32 %v9656, 7
      %v9658 = vsub.s32 %v9655, %v9657
      %v9659 = vrot.slane %v9645, %v9658
      %v9660 = vcombine.high %v9659, %v9659
      %v9661 = vcombine.high %v9226, %v9226
      %v9663 = vunpack.c.l.s4 1983009808
      %v9664 = vunpack.c.0.s8 %v9663
      %v9665 = vlaneseq
      %v9666 = vshrl.u32 %v9665, 7
      %v9667 = vsub.s32 %v9664, %v9666
      %v9668 = vrot.slane %v9226, %v9667
      %v9670 = vunpack.c.l.s4 1983009808
      %v9671 = vunpack.c.0.s8 %v9670
      %v9672 = vlaneseq
      %v9673 = vshrl.u32 %v9672, 7
      %v9674 = vsub.s32 %v9671, %v9673
      %v9675 = vrot.slane %v9661, %v9674
      %v9676 = vcombine.high %v9668, %v9668
      %v9677 = vcombine.high %v9675, %v9675
      %v9678 = vcombine.high %v9227, %v9227
      %v9680 = vunpack.c.l.s4 1983009808
      %v9681 = vunpack.c.0.s8 %v9680
      %v9682 = vlaneseq
      %v9683 = vshrl.u32 %v9682, 7
      %v9684 = vsub.s32 %v9681, %v9683
      %v9685 = vrot.slane %v9227, %v9684
      %v9687 = vunpack.c.l.s4 1983009808
      %v9688 = vunpack.c.0.s8 %v9687
      %v9689 = vlaneseq
      %v9690 = vshrl.u32 %v9689, 7
      %v9691 = vsub.s32 %v9688, %v9690
      %v9692 = vrot.slane %v9678, %v9691
      %v9693 = vcombine.high %v9685, %v9685
      %v9694 = vcombine.high %v9692, %v9692
      %v9695 = vcombine.high %v9228, %v9228
      %v9697 = vunpack.c.l.s4 1983009808
      %v9698 = vunpack.c.0.s8 %v9697
      %v9699 = vlaneseq
      %v9700 = vshrl.u32 %v9699, 7
      %v9701 = vsub.s32 %v9698, %v9700
      %v9702 = vrot.slane %v9228, %v9701
      %v9704 = vunpack.c.l.s4 1983009808
      %v9705 = vunpack.c.0.s8 %v9704
      %v9706 = vlaneseq
      %v9707 = vshrl.u32 %v9706, 7
      %v9708 = vsub.s32 %v9705, %v9707
      %v9709 = vrot.slane %v9695, %v9708
      %v9710 = vcombine.high %v9702, %v9702
      %v9711 = vcombine.high %v9709, %v9709
      %v9712 = vcombine.high %v9229, %v9229
      %v9714 = vunpack.c.l.s4 1983009808
      %v9715 = vunpack.c.0.s8 %v9714
      %v9716 = vlaneseq
      %v9717 = vshrl.u32 %v9716, 7
      %v9718 = vsub.s32 %v9715, %v9717
      %v9719 = vrot.slane %v9229, %v9718
      %v9721 = vunpack.c.l.s4 1983009808
      %v9722 = vunpack.c.0.s8 %v9721
      %v9723 = vlaneseq
      %v9724 = vshrl.u32 %v9723, 7
      %v9725 = vsub.s32 %v9722, %v9724
      %v9726 = vrot.slane %v9712, %v9725
      %v9727 = vcombine.high %v9719, %v9719
      %v9728 = vcombine.high %v9230, %v9230
      %v9730 = vunpack.c.l.s4 1983009808
      %v9731 = vunpack.c.0.s8 %v9730
      %v9732 = vlaneseq
      %v9733 = vshrl.u32 %v9732, 7
      %v9734 = vsub.s32 %v9731, %v9733
      %v9735 = vrot.slane %v9230, %v9734
      %v9737 = vunpack.c.l.s4 1983009808
      %v9738 = vunpack.c.0.s8 %v9737
      %v9739 = vlaneseq
      %v9740 = vshrl.u32 %v9739, 7
      %v9741 = vsub.s32 %v9738, %v9740
      %v9742 = vrot.slane %v9728, %v9741
      %v9743 = vcombine.high %v9735, %v9735
      %v9744 = vcombine.high %v9742, %v9742
      %v9745 = vcombine.high %v9231, %v9231
      %v9747 = vunpack.c.l.s4 1983009808
      %v9748 = vunpack.c.0.s8 %v9747
      %v9749 = vlaneseq
      %v9750 = vshrl.u32 %v9749, 7
      %v9751 = vsub.s32 %v9748, %v9750
      %v9752 = vrot.slane %v9231, %v9751
      %v9754 = vunpack.c.l.s4 1983009808
      %v9755 = vunpack.c.0.s8 %v9754
      %v9756 = vlaneseq
      %v9757 = vshrl.u32 %v9756, 7
      %v9758 = vsub.s32 %v9755, %v9757
      %v9759 = vrot.slane %v9745, %v9758
      %v9760 = vcombine.high %v9752, %v9752
      %v9761 = vcombine.high %v9759, %v9759
      %v9762 = vcombine.high %v9232, %v9232
      %v9764 = vunpack.c.l.s4 1983009808
      %v9765 = vunpack.c.0.s8 %v9764
      %v9766 = vlaneseq
      %v9767 = vshrl.u32 %v9766, 7
      %v9768 = vsub.s32 %v9765, %v9767
      %v9769 = vrot.slane %v9232, %v9768
      %v9771 = vunpack.c.l.s4 1983009808
      %v9772 = vunpack.c.0.s8 %v9771
      %v9773 = vlaneseq
      %v9774 = vshrl.u32 %v9773, 7
      %v9775 = vsub.s32 %v9772, %v9774
      %v9776 = vrot.slane %v9762, %v9775
      %v9777 = vcombine.high %v9769, %v9769
      %v9778 = vcombine.high %v9776, %v9776
      %v9779 = vcombine.high %v9233, %v9233
      %v9781 = vunpack.c.l.s4 1983009808
      %v9782 = vunpack.c.0.s8 %v9781
      %v9783 = vlaneseq
      %v9784 = vshrl.u32 %v9783, 7
      %v9785 = vsub.s32 %v9782, %v9784
      %v9786 = vrot.slane %v9233, %v9785
      %v9788 = vunpack.c.l.s4 1983009808
      %v9789 = vunpack.c.0.s8 %v9788
      %v9790 = vlaneseq
      %v9791 = vshrl.u32 %v9790, 7
      %v9792 = vsub.s32 %v9789, %v9791
      %v9793 = vrot.slane %v9779, %v9792
      %v9794 = vcombine.high %v9786, %v9786
      %v9795 = vcombine.high %v9793, %v9793
      %v9796 = vcombine.high %v9234, %v9234
      %v9798 = vunpack.c.l.s4 1983009808
      %v9799 = vunpack.c.0.s8 %v9798
      %v9800 = vlaneseq
      %v9801 = vshrl.u32 %v9800, 7
      %v9802 = vsub.s32 %v9799, %v9801
      %v9803 = vrot.slane %v9234, %v9802
      %v9805 = vunpack.c.l.s4 1983009808
      %v9806 = vunpack.c.0.s8 %v9805
      %v9807 = vlaneseq
      %v9808 = vshrl.u32 %v9807, 7
      %v9809 = vsub.s32 %v9806, %v9808
      %v9810 = vrot.slane %v9796, %v9809
      %v9811 = vcombine.high %v9810, %v9810
      %v9812 = vcombine.high %v9235, %v9235
      %v9814 = vunpack.c.l.s4 1983009808
      %v9815 = vunpack.c.0.s8 %v9814
      %v9816 = vlaneseq
      %v9817 = vshrl.u32 %v9816, 7
      %v9818 = vsub.s32 %v9815, %v9817
      %v9819 = vrot.slane %v9235, %v9818
      %v9821 = vunpack.c.l.s4 1983009808
      %v9822 = vunpack.c.0.s8 %v9821
      %v9823 = vlaneseq
      %v9824 = vshrl.u32 %v9823, 7
      %v9825 = vsub.s32 %v9822, %v9824
      %v9826 = vrot.slane %v9812, %v9825
      %v9827 = vcombine.high %v9819, %v9819
      %v9828 = vcombine.high %v9826, %v9826
      %v9829 = vcombine.high %v9236, %v9236
      %v9831 = vunpack.c.l.s4 1983009808
      %v9832 = vunpack.c.0.s8 %v9831
      %v9833 = vlaneseq
      %v9834 = vshrl.u32 %v9833, 7
      %v9835 = vsub.s32 %v9832, %v9834
      %v9836 = vrot.slane %v9236, %v9835
      %v9838 = vunpack.c.l.s4 1983009808
      %v9839 = vunpack.c.0.s8 %v9838
      %v9840 = vlaneseq
      %v9841 = vshrl.u32 %v9840, 7
      %v9842 = vsub.s32 %v9839, %v9841
      %v9843 = vrot.slane %v9829, %v9842
      %v9844 = vcombine.high %v9836, %v9836
      %v9845 = vcombine.high %v9843, %v9843
      %v9846 = vcombine.high %v9237, %v9237
      %v9848 = vunpack.c.l.s4 1983009808
      %v9849 = vunpack.c.0.s8 %v9848
      %v9850 = vlaneseq
      %v9851 = vshrl.u32 %v9850, 7
      %v9852 = vsub.s32 %v9849, %v9851
      %v9853 = vrot.slane %v9237, %v9852
      %v9855 = vunpack.c.l.s4 1983009808
      %v9856 = vunpack.c.0.s8 %v9855
      %v9857 = vlaneseq
      %v9858 = vshrl.u32 %v9857, 7
      %v9859 = vsub.s32 %v9856, %v9858
      %v9860 = vrot.slane %v9846, %v9859
      %v9861 = vcombine.high %v9853, %v9853
      %v9862 = vcombine.high %v9860, %v9860
      %v9863 = vcombine.high %v9238, %v9238
      %v9865 = vunpack.c.l.s4 1983009808
      %v9866 = vunpack.c.0.s8 %v9865
      %v9867 = vlaneseq
      %v9868 = vshrl.u32 %v9867, 7
      %v9869 = vsub.s32 %v9866, %v9868
      %v9870 = vrot.slane %v9238, %v9869
      %v9872 = vunpack.c.l.s4 1983009808
      %v9873 = vunpack.c.0.s8 %v9872
      %v9874 = vlaneseq
      %v9875 = vshrl.u32 %v9874, 7
      %v9876 = vsub.s32 %v9873, %v9875
      %v9877 = vrot.slane %v9863, %v9876
      %v9878 = vcombine.high %v9870, %v9870
      %v10007 = vld [vmem:[%s12] sm:$0xf]
      %v10008 = vld [vmem:[%s12 + $0x4] sm:$0xf]
      %v10009 = vld [vmem:[%s12 + $0x8] sm:$0xf]
      %v10010 = vld [vmem:[%s12 + $0xc] sm:$0xf]
      %v10011 = vld [vmem:[%s12 + $0x10] sm:$0xf]
      %v10012 = vld [vmem:[%s12 + $0x14] sm:$0xf]
      %v10013 = vld [vmem:[%s12 + $0x18] sm:$0xf]
      %v10014 = vld [vmem:[%s12 + $0x1c] sm:$0xf]
      %v10015 = vld [vmem:[%s12 + $0x20] sm:$0xf]
      %v10016 = vld [vmem:[%s12 + $0x24] sm:$0xf]
      %v10017 = vld [vmem:[%s12 + $0x28] sm:$0xf]
      %v10018 = vld [vmem:[%s12 + $0x2c] sm:$0xf]
      %v10019 = vld [vmem:[%s12 + $0x30] sm:$0xf]
      %v10020 = vld [vmem:[%s12 + $0x34] sm:$0xf]
      %v10021 = vld [vmem:[%s12 + $0x38] sm:$0xf]
      %v10022 = vld [vmem:[%s12 + $0x3c] sm:$0xf]
      %v10039 = vunpack.c.l.b16 %v10007
      %v10040 = vunpack.c.l.b16 %v10008
      %v10041 = vunpack.c.l.b16 %v10009
      %v10042 = vunpack.c.l.b16 %v10010
      %v10043 = vunpack.c.l.b16 %v10011
      %v10044 = vunpack.c.l.b16 %v10012
      %v10045 = vunpack.c.l.b16 %v10013
      %v10046 = vunpack.c.l.b16 %v10014
      %v10047 = vunpack.c.l.b16 %v10015
      %v10048 = vunpack.c.l.b16 %v10016
      %v10049 = vunpack.c.l.b16 %v10017
      %v10050 = vunpack.c.l.b16 %v10018
      %v10051 = vunpack.c.l.b16 %v10019
      %v10052 = vunpack.c.l.b16 %v10020
      %v10053 = vunpack.c.l.b16 %v10021
      %v10054 = vunpack.c.l.b16 %v10022
      %v10055 = vpack.c.b16 %v10040, %v10039
      %v10056 = vpack.c.b16 %v10042, %v10041
      %v10057 = vpack.c.b16 %v10044, %v10043
      %v10058 = vpack.c.b16 %v10046, %v10045
      %v10059 = vpack.c.b16 %v10048, %v10047
      %v10060 = vpack.c.b16 %v10050, %v10049
      %v10061 = vpack.c.b16 %v10052, %v10051
      %v10062 = vpack.c.b16 %v10054, %v10053
      %10071 = vmatprep.subr.bf16.mxu0 0
      %10072 = vmatpush1.bf16.msra.mxu0 %v10055
      %10073 = vmatprep.subr.bf16.mxu0 0
      %10074 = vmatpush1.bf16.msra.mxu0 %v10056
      %10075 = vmatprep.subr.bf16.mxu0 0
      %10076 = vmatpush1.bf16.msra.mxu0 %v10057
      %10077 = vmatprep.subr.bf16.mxu0 0
      %10078 = vmatpush1.bf16.msra.mxu0 %v10058
      %10079 = vmatprep.subr.bf16.mxu0 0
      %10080 = vmatpush1.bf16.msra.mxu0 %v10059
      %10081 = vmatprep.subr.bf16.mxu0 0
      %10082 = vmatpush1.bf16.msra.mxu0 %v10060
      %10083 = vmatprep.subr.bf16.mxu0 0
      %10084 = vmatpush1.bf16.msra.mxu0 %v10061
      %10085 = vmatprep.subr.bf16.mxu0 0
      %10086 = vmatpush1.bf16.msra.mxu0 %v10062
      %10087 = vmatprep.subr.bf16.mxu0 0
      %10088 = vmatpush1.bf16.msra.mxu0 0
      %10089 = vmatprep.subr.bf16.mxu0 0
      %10090 = vmatpush1.bf16.msra.mxu0 0
      %10091 = vmatprep.subr.bf16.mxu0 0
      %10092 = vmatpush1.bf16.msra.mxu0 0
      %10093 = vmatprep.subr.bf16.mxu0 0
      %10094 = vmatpush1.bf16.msra.mxu0 0
      %10095 = vmatprep.subr.bf16.mxu0 0
      %10096 = vmatpush1.bf16.msra.mxu0 0
      %10097 = vmatprep.subr.bf16.mxu0 0
      %10098 = vmatpush1.bf16.msra.mxu0 0
      %10099 = vmatprep.subr.bf16.mxu0 0
      %10100 = vmatpush1.bf16.msra.mxu0 0
      %10101 = vmatprep.subr.bf16.mxu0 0
      %10102 = vmatpush1.bf16.msra.mxu0 0
      %10103 = vmatprep.mubr.bf16.mxu0 0
      %10104 = vmatmul.mubr.bf16.gmra.mrb[0].mxu0 %v776
      %v10105 = vpop.f32.mrb[0].mxu0
      %v10106 = vadd.f32 0.0, %v10105
      %v10107 = vpop.f32.mrb[0].mxu0
      %v10108 = vpop.f32.mrb[0].mxu0
      %v10109 = vadd.f32 0.0, %v10108
      %v10110 = vpop.f32.mrb[0].mxu0
      %10111 = vmatprep.mubr.bf16.mxu0 0
      %10112 = vmatmul.mubr.bf16.gmra.mrb[0].mxu0 %v777
      %v10113 = vpop.f32.mrb[0].mxu0
      %v10114 = vadd.f32 0.0, %v10113
      %v10115 = vpop.f32.mrb[0].mxu0
      %v10116 = vpop.f32.mrb[0].mxu0
      %v10117 = vadd.f32 0.0, %v10116
      %v10118 = vpop.f32.mrb[0].mxu0
      %10119 = vmatprep.mubr.bf16.mxu0 0
      %10120 = vmatmul.mubr.bf16.gmra.mrb[0].mxu0 %v778
      %v10121 = vpop.f32.mrb[0].mxu0
      %v10122 = vadd.f32 0.0, %v10121
      %v10123 = vpop.f32.mrb[0].mxu0
      %v10124 = vpop.f32.mrb[0].mxu0
      %v10125 = vadd.f32 0.0, %v10124
      %v10126 = vpop.f32.mrb[0].mxu0
      %10127 = vmatprep.mubr.bf16.mxu0 0
      %10128 = vmatmul.mubr.bf16.gmra.mrb[0].mxu0 %v779
      %v10129 = vpop.f32.mrb[0].mxu0
      %v10130 = vadd.f32 0.0, %v10129
      %v10131 = vpop.f32.mrb[0].mxu0
      %v10132 = vpop.f32.mrb[0].mxu0
      %v10133 = vadd.f32 0.0, %v10132
      %v10134 = vpop.f32.mrb[0].mxu0
      %10135 = vmatprep.mubr.bf16.mxu0 0
      %10136 = vmatmul.mubr.bf16.gmra.mrb[0].mxu0 %v780
      %v10137 = vpop.f32.mrb[0].mxu0
      %v10138 = vadd.f32 0.0, %v10137
      %v10139 = vpop.f32.mrb[0].mxu0
      %v10140 = vpop.f32.mrb[0].mxu0
      %v10141 = vadd.f32 0.0, %v10140
      %v10142 = vpop.f32.mrb[0].mxu0
      %10143 = vmatprep.mubr.bf16.mxu0 0
      %10144 = vmatmul.mubr.bf16.gmra.mrb[0].mxu0 %v781
      %v10145 = vpop.f32.mrb[0].mxu0
      %v10146 = vadd.f32 0.0, %v10145
      %v10147 = vpop.f32.mrb[0].mxu0
      %v10148 = vpop.f32.mrb[0].mxu0
      %v10149 = vadd.f32 0.0, %v10148
      %v10150 = vpop.f32.mrb[0].mxu0
      %10151 = vmatprep.mubr.bf16.mxu0 0
      %10152 = vmatmul.mubr.bf16.gmra.mrb[0].mxu0 %v782
      %v10153 = vpop.f32.mrb[0].mxu0
      %v10154 = vadd.f32 0.0, %v10153
      %v10155 = vpop.f32.mrb[0].mxu0
      %v10156 = vpop.f32.mrb[0].mxu0
      %v10157 = vadd.f32 0.0, %v10156
      %v10158 = vpop.f32.mrb[0].mxu0
      %10159 = vmatprep.mubr.bf16.mxu0 0
      %10160 = vmatmul.mubr.bf16.gmra.mrb[0].mxu0 %v783
      %v10161 = vpop.f32.mrb[0].mxu0
      %v10162 = vadd.f32 0.0, %v10161
      %v10163 = vpop.f32.mrb[0].mxu0
      %v10164 = vpop.f32.mrb[0].mxu0
      %v10165 = vadd.f32 0.0, %v10164
      %v10166 = vpop.f32.mrb[0].mxu0
      %10167 = vmatprep.mubr.bf16.mxu0 0
      %10168 = vmatmul.mubr.bf16.gmra.mrb[0].mxu0 %v784
      %v10169 = vpop.f32.mrb[0].mxu0
      %v10170 = vadd.f32 0.0, %v10169
      %v10171 = vpop.f32.mrb[0].mxu0
      %v10172 = vpop.f32.mrb[0].mxu0
      %v10173 = vadd.f32 0.0, %v10172
      %v10174 = vpop.f32.mrb[0].mxu0
      %10175 = vmatprep.mubr.bf16.mxu0 0
      %10176 = vmatmul.mubr.bf16.gmra.mrb[0].mxu0 %v785
      %v10177 = vpop.f32.mrb[0].mxu0
      %v10178 = vadd.f32 0.0, %v10177
      %v10179 = vpop.f32.mrb[0].mxu0
      %v10180 = vpop.f32.mrb[0].mxu0
      %v10181 = vadd.f32 0.0, %v10180
      %v10182 = vpop.f32.mrb[0].mxu0
      %10183 = vmatprep.mubr.bf16.mxu0 0
      %10184 = vmatmul.mubr.bf16.gmra.mrb[0].mxu0 %v786
      %v10185 = vpop.f32.mrb[0].mxu0
      %v10186 = vadd.f32 0.0, %v10185
      %v10187 = vpop.f32.mrb[0].mxu0
      %v10188 = vpop.f32.mrb[0].mxu0
      %v10189 = vadd.f32 0.0, %v10188
      %v10190 = vpop.f32.mrb[0].mxu0
      %10191 = vmatprep.mubr.bf16.mxu0 0
      %10192 = vmatmul.mubr.bf16.gmra.mrb[0].mxu0 %v787
      %v10193 = vpop.f32.mrb[0].mxu0
      %v10194 = vadd.f32 0.0, %v10193
      %v10195 = vpop.f32.mrb[0].mxu0
      %v10196 = vpop.f32.mrb[0].mxu0
      %v10197 = vadd.f32 0.0, %v10196
      %v10198 = vpop.f32.mrb[0].mxu0
      %10199 = vmatprep.mubr.bf16.mxu0 0
      %10200 = vmatmul.mubr.bf16.gmra.mrb[0].mxu0 %v788
      %v10201 = vpop.f32.mrb[0].mxu0
      %v10202 = vadd.f32 0.0, %v10201
      %v10203 = vpop.f32.mrb[0].mxu0
      %v10204 = vpop.f32.mrb[0].mxu0
      %v10205 = vadd.f32 0.0, %v10204
      %v10206 = vpop.f32.mrb[0].mxu0
      %10207 = vmatprep.mubr.bf16.mxu0 0
      %10208 = vmatmul.mubr.bf16.gmra.mrb[0].mxu0 %v789
      %v10209 = vpop.f32.mrb[0].mxu0
      %v10210 = vadd.f32 0.0, %v10209
      %v10211 = vpop.f32.mrb[0].mxu0
      %v10212 = vpop.f32.mrb[0].mxu0
      %v10213 = vadd.f32 0.0, %v10212
      %v10214 = vpop.f32.mrb[0].mxu0
      %10215 = vmatprep.mubr.bf16.mxu0 0
      %10216 = vmatmul.mubr.bf16.gmra.mrb[0].mxu0 %v790
      %v10217 = vpop.f32.mrb[0].mxu0
      %v10218 = vadd.f32 0.0, %v10217
      %v10219 = vpop.f32.mrb[0].mxu0
      %v10220 = vpop.f32.mrb[0].mxu0
      %v10221 = vadd.f32 0.0, %v10220
      %v10222 = vpop.f32.mrb[0].mxu0
      %10223 = vmatprep.mubr.bf16.mxu0 0
      %10224 = vmatmul.mubr.bf16.gmra.mrb[0].mxu0 %v791
      %v10225 = vpop.f32.mrb[0].mxu0
      %v10226 = vadd.f32 0.0, %v10225
      %v10227 = vpop.f32.mrb[0].mxu0
      %v10228 = vpop.f32.mrb[0].mxu0
      %v10229 = vadd.f32 0.0, %v10228
      %v10230 = vpop.f32.mrb[0].mxu0
      %10231 = vdwg.mxu0
      %v10232 = vld [vmem:[%s13] sm:$0x1]
      %v10234 = vlaneseq
      %v10235 = vshrl.u32 %v10234, 7
      %v10236 = vsub.s32 0, %v10235
      %v10237 = vrot.slane %v10232, %v10236
      %v10239 = vmul.f32 %v10106, %v10237
      %v10240 = vmul.f32 %v10109, %v10237
      %v10241 = vmul.f32 %v10114, %v10237
      %v10242 = vmul.f32 %v10117, %v10237
      %v10243 = vmul.f32 %v10122, %v10237
      %v10244 = vmul.f32 %v10125, %v10237
      %v10245 = vmul.f32 %v10130, %v10237
      %v10246 = vmul.f32 %v10133, %v10237
      %v10247 = vmul.f32 %v10138, %v10237
      %v10248 = vmul.f32 %v10141, %v10237
      %v10249 = vmul.f32 %v10146, %v10237
      %v10250 = vmul.f32 %v10149, %v10237
      %v10251 = vmul.f32 %v10154, %v10237
      %v10252 = vmul.f32 %v10157, %v10237
      %v10253 = vmul.f32 %v10162, %v10237
      %v10254 = vmul.f32 %v10165, %v10237
      %v10255 = vmul.f32 %v10170, %v10237
      %v10256 = vmul.f32 %v10173, %v10237
      %v10257 = vmul.f32 %v10178, %v10237
      %v10258 = vmul.f32 %v10181, %v10237
      %v10259 = vmul.f32 %v10186, %v10237
      %v10260 = vmul.f32 %v10189, %v10237
      %v10261 = vmul.f32 %v10194, %v10237
      %v10262 = vmul.f32 %v10197, %v10237
      %v10263 = vmul.f32 %v10202, %v10237
      %v10264 = vmul.f32 %v10205, %v10237
      %v10265 = vmul.f32 %v10210, %v10237
      %v10266 = vmul.f32 %v10213, %v10237
      %v10267 = vmul.f32 %v10218, %v10237
      %v10268 = vmul.f32 %v10221, %v10237
      %v10269 = vmul.f32 %v10226, %v10237
      %v10270 = vmul.f32 %v10229, %v10237
      %v10271 = vld [vmem:[%s14] sm:$0x1]
      %v10273 = vlaneseq
      %v10274 = vshrl.u32 %v10273, 7
      %v10275 = vsub.s32 0, %v10274
      %v10276 = vrot.slane %v10271, %v10275
      %v10278 = vadd.f32 %v10239, %v10276
      %v10279 = vadd.f32 %v10240, %v10276
      %v10280 = vadd.f32 %v10241, %v10276
      %v10281 = vadd.f32 %v10242, %v10276
      %v10282 = vadd.f32 %v10243, %v10276
      %v10283 = vadd.f32 %v10244, %v10276
      %v10284 = vadd.f32 %v10245, %v10276
      %v10285 = vadd.f32 %v10246, %v10276
      %v10286 = vadd.f32 %v10247, %v10276
      %v10287 = vadd.f32 %v10248, %v10276
      %v10288 = vadd.f32 %v10249, %v10276
      %v10289 = vadd.f32 %v10250, %v10276
      %v10290 = vadd.f32 %v10251, %v10276
      %v10291 = vadd.f32 %v10252, %v10276
      %v10292 = vadd.f32 %v10253, %v10276
      %v10293 = vadd.f32 %v10254, %v10276
      %v10294 = vadd.f32 %v10255, %v10276
      %v10295 = vadd.f32 %v10256, %v10276
      %v10296 = vadd.f32 %v10257, %v10276
      %v10297 = vadd.f32 %v10258, %v10276
      %v10298 = vadd.f32 %v10259, %v10276
      %v10299 = vadd.f32 %v10260, %v10276
      %v10300 = vadd.f32 %v10261, %v10276
      %v10301 = vadd.f32 %v10262, %v10276
      %v10302 = vadd.f32 %v10263, %v10276
      %v10303 = vadd.f32 %v10264, %v10276
      %v10304 = vadd.f32 %v10265, %v10276
      %v10305 = vadd.f32 %v10266, %v10276
      %v10306 = vadd.f32 %v10267, %v10276
      %v10307 = vadd.f32 %v10268, %v10276
      %v10308 = vadd.f32 %v10269, %v10276
      %v10309 = vadd.f32 %v10270, %v10276
      %v10342 = vcombine.high %v10278, %v10278
      %v10344 = vunpack.c.l.s4 1983009808
      %v10345 = vunpack.c.0.s8 %v10344
      %v10346 = vlaneseq
      %v10347 = vshrl.u32 %v10346, 7
      %v10348 = vsub.s32 %v10345, %v10347
      %v10349 = vrot.slane %v10278, %v10348
      %v10351 = vunpack.c.l.s4 1983009808
      %v10352 = vunpack.c.0.s8 %v10351
      %v10353 = vlaneseq
      %v10354 = vshrl.u32 %v10353, 7
      %v10355 = vsub.s32 %v10352, %v10354
      %v10356 = vrot.slane %v10342, %v10355
      %v10357 = vcombine.high %v10349, %v10349
      %v10358 = vcombine.high %v10356, %v10356
      %v10359 = vcombine.high %v10279, %v10279
      %v10361 = vunpack.c.l.s4 1983009808
      %v10362 = vunpack.c.0.s8 %v10361
      %v10363 = vlaneseq
      %v10364 = vshrl.u32 %v10363, 7
      %v10365 = vsub.s32 %v10362, %v10364
      %v10366 = vrot.slane %v10279, %v10365
      %v10368 = vunpack.c.l.s4 1983009808
      %v10369 = vunpack.c.0.s8 %v10368
      %v10370 = vlaneseq
      %v10371 = vshrl.u32 %v10370, 7
      %v10372 = vsub.s32 %v10369, %v10371
      %v10373 = vrot.slane %v10359, %v10372
      %v10374 = vcombine.high %v10366, %v10366
      %v10375 = vcombine.high %v10373, %v10373
      %v10376 = vcombine.high %v10280, %v10280
      %v10378 = vunpack.c.l.s4 1983009808
      %v10379 = vunpack.c.0.s8 %v10378
      %v10380 = vlaneseq
      %v10381 = vshrl.u32 %v10380, 7
      %v10382 = vsub.s32 %v10379, %v10381
      %v10383 = vrot.slane %v10280, %v10382
      %v10385 = vunpack.c.l.s4 1983009808
      %v10386 = vunpack.c.0.s8 %v10385
      %v10387 = vlaneseq
      %v10388 = vshrl.u32 %v10387, 7
      %v10389 = vsub.s32 %v10386, %v10388
      %v10390 = vrot.slane %v10376, %v10389
      %v10391 = vcombine.high %v10383, %v10383
      %v10392 = vcombine.high %v10390, %v10390
      %v10393 = vcombine.high %v10281, %v10281
      %v10395 = vunpack.c.l.s4 1983009808
      %v10396 = vunpack.c.0.s8 %v10395
      %v10397 = vlaneseq
      %v10398 = vshrl.u32 %v10397, 7
      %v10399 = vsub.s32 %v10396, %v10398
      %v10400 = vrot.slane %v10281, %v10399
      %v10402 = vunpack.c.l.s4 1983009808
      %v10403 = vunpack.c.0.s8 %v10402
      %v10404 = vlaneseq
      %v10405 = vshrl.u32 %v10404, 7
      %v10406 = vsub.s32 %v10403, %v10405
      %v10407 = vrot.slane %v10393, %v10406
      %v10408 = vcombine.high %v10400, %v10400
      %v10409 = vcombine.high %v10407, %v10407
      %v10410 = vcombine.high %v10282, %v10282
      %v10412 = vunpack.c.l.s4 1983009808
      %v10413 = vunpack.c.0.s8 %v10412
      %v10414 = vlaneseq
      %v10415 = vshrl.u32 %v10414, 7
      %v10416 = vsub.s32 %v10413, %v10415
      %v10417 = vrot.slane %v10282, %v10416
      %v10419 = vunpack.c.l.s4 1983009808
      %v10420 = vunpack.c.0.s8 %v10419
      %v10421 = vlaneseq
      %v10422 = vshrl.u32 %v10421, 7
      %v10423 = vsub.s32 %v10420, %v10422
      %v10424 = vrot.slane %v10410, %v10423
      %v10425 = vcombine.high %v10417, %v10417
      %v10426 = vcombine.high %v10424, %v10424
      %v10427 = vcombine.high %v10283, %v10283
      %v10429 = vunpack.c.l.s4 1983009808
      %v10430 = vunpack.c.0.s8 %v10429
      %v10431 = vlaneseq
      %v10432 = vshrl.u32 %v10431, 7
      %v10433 = vsub.s32 %v10430, %v10432
      %v10434 = vrot.slane %v10283, %v10433
      %v10436 = vunpack.c.l.s4 1983009808
      %v10437 = vunpack.c.0.s8 %v10436
      %v10438 = vlaneseq
      %v10439 = vshrl.u32 %v10438, 7
      %v10440 = vsub.s32 %v10437, %v10439
      %v10441 = vrot.slane %v10427, %v10440
      %v10442 = vcombine.high %v10434, %v10434
      %v10443 = vcombine.high %v10441, %v10441
      %v10444 = vcombine.high %v10284, %v10284
      %v10446 = vunpack.c.l.s4 1983009808
      %v10447 = vunpack.c.0.s8 %v10446
      %v10448 = vlaneseq
      %v10449 = vshrl.u32 %v10448, 7
      %v10450 = vsub.s32 %v10447, %v10449
      %v10451 = vrot.slane %v10284, %v10450
      %v10453 = vunpack.c.l.s4 1983009808
      %v10454 = vunpack.c.0.s8 %v10453
      %v10455 = vlaneseq
      %v10456 = vshrl.u32 %v10455, 7
      %v10457 = vsub.s32 %v10454, %v10456
      %v10458 = vrot.slane %v10444, %v10457
      %v10459 = vcombine.high %v10451, %v10451
      %v10460 = vcombine.high %v10458, %v10458
      %v10461 = vcombine.high %v10285, %v10285
      %v10463 = vunpack.c.l.s4 1983009808
      %v10464 = vunpack.c.0.s8 %v10463
      %v10465 = vlaneseq
      %v10466 = vshrl.u32 %v10465, 7
      %v10467 = vsub.s32 %v10464, %v10466
      %v10468 = vrot.slane %v10285, %v10467
      %v10470 = vunpack.c.l.s4 1983009808
      %v10471 = vunpack.c.0.s8 %v10470
      %v10472 = vlaneseq
      %v10473 = vshrl.u32 %v10472, 7
      %v10474 = vsub.s32 %v10471, %v10473
      %v10475 = vrot.slane %v10461, %v10474
      %v10476 = vcombine.high %v10468, %v10468
      %v10477 = vcombine.high %v10475, %v10475
      %v10478 = vcombine.high %v10286, %v10286
      %v10480 = vunpack.c.l.s4 1983009808
      %v10481 = vunpack.c.0.s8 %v10480
      %v10482 = vlaneseq
      %v10483 = vshrl.u32 %v10482, 7
      %v10484 = vsub.s32 %v10481, %v10483
      %v10485 = vrot.slane %v10286, %v10484
      %v10487 = vunpack.c.l.s4 1983009808
      %v10488 = vunpack.c.0.s8 %v10487
      %v10489 = vlaneseq
      %v10490 = vshrl.u32 %v10489, 7
      %v10491 = vsub.s32 %v10488, %v10490
      %v10492 = vrot.slane %v10478, %v10491
      %v10493 = vcombine.high %v10485, %v10485
      %v10494 = vcombine.high %v10492, %v10492
      %v10495 = vcombine.high %v10287, %v10287
      %v10497 = vunpack.c.l.s4 1983009808
      %v10498 = vunpack.c.0.s8 %v10497
      %v10499 = vlaneseq
      %v10500 = vshrl.u32 %v10499, 7
      %v10501 = vsub.s32 %v10498, %v10500
      %v10502 = vrot.slane %v10287, %v10501
      %v10504 = vunpack.c.l.s4 1983009808
      %v10505 = vunpack.c.0.s8 %v10504
      %v10506 = vlaneseq
      %v10507 = vshrl.u32 %v10506, 7
      %v10508 = vsub.s32 %v10505, %v10507
      %v10509 = vrot.slane %v10495, %v10508
      %v10510 = vcombine.high %v10502, %v10502
      %v10511 = vcombine.high %v10509, %v10509
      %v10512 = vcombine.high %v10288, %v10288
      %v10514 = vunpack.c.l.s4 1983009808
      %v10515 = vunpack.c.0.s8 %v10514
      %v10516 = vlaneseq
      %v10517 = vshrl.u32 %v10516, 7
      %v10518 = vsub.s32 %v10515, %v10517
      %v10519 = vrot.slane %v10288, %v10518
      %v10521 = vunpack.c.l.s4 1983009808
      %v10522 = vunpack.c.0.s8 %v10521
      %v10523 = vlaneseq
      %v10524 = vshrl.u32 %v10523, 7
      %v10525 = vsub.s32 %v10522, %v10524
      %v10526 = vrot.slane %v10512, %v10525
      %v10527 = vcombine.high %v10519, %v10519
      %v10528 = vcombine.high %v10526, %v10526
      %v10529 = vcombine.high %v10289, %v10289
      %v10531 = vunpack.c.l.s4 1983009808
      %v10532 = vunpack.c.0.s8 %v10531
      %v10533 = vlaneseq
      %v10534 = vshrl.u32 %v10533, 7
      %v10535 = vsub.s32 %v10532, %v10534
      %v10536 = vrot.slane %v10289, %v10535
      %v10538 = vunpack.c.l.s4 1983009808
      %v10539 = vunpack.c.0.s8 %v10538
      %v10540 = vlaneseq
      %v10541 = vshrl.u32 %v10540, 7
      %v10542 = vsub.s32 %v10539, %v10541
      %v10543 = vrot.slane %v10529, %v10542
      %v10544 = vcombine.high %v10536, %v10536
      %v10545 = vcombine.high %v10543, %v10543
      %v10546 = vcombine.high %v10290, %v10290
      %v10548 = vunpack.c.l.s4 1983009808
      %v10549 = vunpack.c.0.s8 %v10548
      %v10550 = vlaneseq
      %v10551 = vshrl.u32 %v10550, 7
      %v10552 = vsub.s32 %v10549, %v10551
      %v10553 = vrot.slane %v10290, %v10552
      %v10555 = vunpack.c.l.s4 1983009808
      %v10556 = vunpack.c.0.s8 %v10555
      %v10557 = vlaneseq
      %v10558 = vshrl.u32 %v10557, 7
      %v10559 = vsub.s32 %v10556, %v10558
      %v10560 = vrot.slane %v10546, %v10559
      %v10561 = vcombine.high %v10553, %v10553
      %v10562 = vcombine.high %v10560, %v10560
      %v10563 = vcombine.high %v10291, %v10291
      %v10565 = vunpack.c.l.s4 1983009808
      %v10566 = vunpack.c.0.s8 %v10565
      %v10567 = vlaneseq
      %v10568 = vshrl.u32 %v10567, 7
      %v10569 = vsub.s32 %v10566, %v10568
      %v10570 = vrot.slane %v10291, %v10569
      %v10572 = vunpack.c.l.s4 1983009808
      %v10573 = vunpack.c.0.s8 %v10572
      %v10574 = vlaneseq
      %v10575 = vshrl.u32 %v10574, 7
      %v10576 = vsub.s32 %v10573, %v10575
      %v10577 = vrot.slane %v10563, %v10576
      %v10578 = vcombine.high %v10570, %v10570
      %v10579 = vcombine.high %v10577, %v10577
      %v10580 = vcombine.high %v10292, %v10292
      %v10582 = vunpack.c.l.s4 1983009808
      %v10583 = vunpack.c.0.s8 %v10582
      %v10584 = vlaneseq
      %v10585 = vshrl.u32 %v10584, 7
      %v10586 = vsub.s32 %v10583, %v10585
      %v10587 = vrot.slane %v10292, %v10586
      %v10589 = vunpack.c.l.s4 1983009808
      %v10590 = vunpack.c.0.s8 %v10589
      %v10591 = vlaneseq
      %v10592 = vshrl.u32 %v10591, 7
      %v10593 = vsub.s32 %v10590, %v10592
      %v10594 = vrot.slane %v10580, %v10593
      %v10595 = vcombine.high %v10587, %v10587
      %v10596 = vcombine.high %v10594, %v10594
      %v10597 = vcombine.high %v10293, %v10293
      %v10599 = vunpack.c.l.s4 1983009808
      %v10600 = vunpack.c.0.s8 %v10599
      %v10601 = vlaneseq
      %v10602 = vshrl.u32 %v10601, 7
      %v10603 = vsub.s32 %v10600, %v10602
      %v10604 = vrot.slane %v10293, %v10603
      %v10606 = vunpack.c.l.s4 1983009808
      %v10607 = vunpack.c.0.s8 %v10606
      %v10608 = vlaneseq
      %v10609 = vshrl.u32 %v10608, 7
      %v10610 = vsub.s32 %v10607, %v10609
      %v10611 = vrot.slane %v10597, %v10610
      %v10612 = vcombine.high %v10604, %v10604
      %v10613 = vcombine.high %v10611, %v10611
      %v10614 = vcombine.high %v10294, %v10294
      %v10616 = vunpack.c.l.s4 1983009808
      %v10617 = vunpack.c.0.s8 %v10616
      %v10618 = vlaneseq
      %v10619 = vshrl.u32 %v10618, 7
      %v10620 = vsub.s32 %v10617, %v10619
      %v10621 = vrot.slane %v10294, %v10620
      %v10623 = vunpack.c.l.s4 1983009808
      %v10624 = vunpack.c.0.s8 %v10623
      %v10625 = vlaneseq
      %v10626 = vshrl.u32 %v10625, 7
      %v10627 = vsub.s32 %v10624, %v10626
      %v10628 = vrot.slane %v10614, %v10627
      %v10629 = vcombine.high %v10621, %v10621
      %v10630 = vcombine.high %v10628, %v10628
      %v10631 = vcombine.high %v10295, %v10295
      %v10633 = vunpack.c.l.s4 1983009808
      %v10634 = vunpack.c.0.s8 %v10633
      %v10635 = vlaneseq
      %v10636 = vshrl.u32 %v10635, 7
      %v10637 = vsub.s32 %v10634, %v10636
      %v10638 = vrot.slane %v10295, %v10637
      %v10640 = vunpack.c.l.s4 1983009808
      %v10641 = vunpack.c.0.s8 %v10640
      %v10642 = vlaneseq
      %v10643 = vshrl.u32 %v10642, 7
      %v10644 = vsub.s32 %v10641, %v10643
      %v10645 = vrot.slane %v10631, %v10644
      %v10646 = vcombine.high %v10638, %v10638
      %v10647 = vcombine.high %v10645, %v10645
      %v10648 = vcombine.high %v10296, %v10296
      %v10650 = vunpack.c.l.s4 1983009808
      %v10651 = vunpack.c.0.s8 %v10650
      %v10652 = vlaneseq
      %v10653 = vshrl.u32 %v10652, 7
      %v10654 = vsub.s32 %v10651, %v10653
      %v10655 = vrot.slane %v10296, %v10654
      %v10657 = vunpack.c.l.s4 1983009808
      %v10658 = vunpack.c.0.s8 %v10657
      %v10659 = vlaneseq
      %v10660 = vshrl.u32 %v10659, 7
      %v10661 = vsub.s32 %v10658, %v10660
      %v10662 = vrot.slane %v10648, %v10661
      %v10663 = vcombine.high %v10655, %v10655
      %v10664 = vcombine.high %v10662, %v10662
      %v10665 = vcombine.high %v10297, %v10297
      %v10667 = vunpack.c.l.s4 1983009808
      %v10668 = vunpack.c.0.s8 %v10667
      %v10669 = vlaneseq
      %v10670 = vshrl.u32 %v10669, 7
      %v10671 = vsub.s32 %v10668, %v10670
      %v10672 = vrot.slane %v10297, %v10671
      %v10674 = vunpack.c.l.s4 1983009808
      %v10675 = vunpack.c.0.s8 %v10674
      %v10676 = vlaneseq
      %v10677 = vshrl.u32 %v10676, 7
      %v10678 = vsub.s32 %v10675, %v10677
      %v10679 = vrot.slane %v10665, %v10678
      %v10680 = vcombine.high %v10672, %v10672
      %v10681 = vcombine.high %v10679, %v10679
      %v10682 = vcombine.high %v10298, %v10298
      %v10684 = vunpack.c.l.s4 1983009808
      %v10685 = vunpack.c.0.s8 %v10684
      %v10686 = vlaneseq
      %v10687 = vshrl.u32 %v10686, 7
      %v10688 = vsub.s32 %v10685, %v10687
      %v10689 = vrot.slane %v10298, %v10688
      %v10691 = vunpack.c.l.s4 1983009808
      %v10692 = vunpack.c.0.s8 %v10691
      %v10693 = vlaneseq
      %v10694 = vshrl.u32 %v10693, 7
      %v10695 = vsub.s32 %v10692, %v10694
      %v10696 = vrot.slane %v10682, %v10695
      %v10697 = vcombine.high %v10689, %v10689
      %v10698 = vcombine.high %v10696, %v10696
      %v10699 = vcombine.high %v10299, %v10299
      %v10701 = vunpack.c.l.s4 1983009808
      %v10702 = vunpack.c.0.s8 %v10701
      %v10703 = vlaneseq
      %v10704 = vshrl.u32 %v10703, 7
      %v10705 = vsub.s32 %v10702, %v10704
      %v10706 = vrot.slane %v10299, %v10705
      %v10708 = vunpack.c.l.s4 1983009808
      %v10709 = vunpack.c.0.s8 %v10708
      %v10710 = vlaneseq
      %v10711 = vshrl.u32 %v10710, 7
      %v10712 = vsub.s32 %v10709, %v10711
      %v10713 = vrot.slane %v10699, %v10712
      %v10714 = vcombine.high %v10706, %v10706
      %v10715 = vcombine.high %v10713, %v10713
      %v10716 = vcombine.high %v10300, %v10300
      %v10718 = vunpack.c.l.s4 1983009808
      %v10719 = vunpack.c.0.s8 %v10718
      %v10720 = vlaneseq
      %v10721 = vshrl.u32 %v10720, 7
      %v10722 = vsub.s32 %v10719, %v10721
      %v10723 = vrot.slane %v10300, %v10722
      %v10725 = vunpack.c.l.s4 1983009808
      %v10726 = vunpack.c.0.s8 %v10725
      %v10727 = vlaneseq
      %v10728 = vshrl.u32 %v10727, 7
      %v10729 = vsub.s32 %v10726, %v10728
      %v10730 = vrot.slane %v10716, %v10729
      %v10731 = vcombine.high %v10723, %v10723
      %v10732 = vcombine.high %v10730, %v10730
      %v10733 = vcombine.high %v10301, %v10301
      %v10735 = vunpack.c.l.s4 1983009808
      %v10736 = vunpack.c.0.s8 %v10735
      %v10737 = vlaneseq
      %v10738 = vshrl.u32 %v10737, 7
      %v10739 = vsub.s32 %v10736, %v10738
      %v10740 = vrot.slane %v10301, %v10739
      %v10742 = vunpack.c.l.s4 1983009808
      %v10743 = vunpack.c.0.s8 %v10742
      %v10744 = vlaneseq
      %v10745 = vshrl.u32 %v10744, 7
      %v10746 = vsub.s32 %v10743, %v10745
      %v10747 = vrot.slane %v10733, %v10746
      %v10748 = vcombine.high %v10740, %v10740
      %v10749 = vcombine.high %v10747, %v10747
      %v10750 = vcombine.high %v10302, %v10302
      %v10752 = vunpack.c.l.s4 1983009808
      %v10753 = vunpack.c.0.s8 %v10752
      %v10754 = vlaneseq
      %v10755 = vshrl.u32 %v10754, 7
      %v10756 = vsub.s32 %v10753, %v10755
      %v10757 = vrot.slane %v10302, %v10756
      %v10759 = vunpack.c.l.s4 1983009808
      %v10760 = vunpack.c.0.s8 %v10759
      %v10761 = vlaneseq
      %v10762 = vshrl.u32 %v10761, 7
      %v10763 = vsub.s32 %v10760, %v10762
      %v10764 = vrot.slane %v10750, %v10763
      %v10765 = vcombine.high %v10757, %v10757
      %v10766 = vcombine.high %v10764, %v10764
      %v10767 = vcombine.high %v10303, %v10303
      %v10769 = vunpack.c.l.s4 1983009808
      %v10770 = vunpack.c.0.s8 %v10769
      %v10771 = vlaneseq
      %v10772 = vshrl.u32 %v10771, 7
      %v10773 = vsub.s32 %v10770, %v10772
      %v10774 = vrot.slane %v10303, %v10773
      %v10776 = vunpack.c.l.s4 1983009808
      %v10777 = vunpack.c.0.s8 %v10776
      %v10778 = vlaneseq
      %v10779 = vshrl.u32 %v10778, 7
      %v10780 = vsub.s32 %v10777, %v10779
      %v10781 = vrot.slane %v10767, %v10780
      %v10782 = vcombine.high %v10774, %v10774
      %v10783 = vcombine.high %v10781, %v10781
      %v10784 = vcombine.high %v10304, %v10304
      %v10786 = vunpack.c.l.s4 1983009808
      %v10787 = vunpack.c.0.s8 %v10786
      %v10788 = vlaneseq
      %v10789 = vshrl.u32 %v10788, 7
      %v10790 = vsub.s32 %v10787, %v10789
      %v10791 = vrot.slane %v10304, %v10790
      %v10793 = vunpack.c.l.s4 1983009808
      %v10794 = vunpack.c.0.s8 %v10793
      %v10795 = vlaneseq
      %v10796 = vshrl.u32 %v10795, 7
      %v10797 = vsub.s32 %v10794, %v10796
      %v10798 = vrot.slane %v10784, %v10797
      %v10799 = vcombine.high %v10791, %v10791
      %v10800 = vcombine.high %v10798, %v10798
      %v10801 = vcombine.high %v10305, %v10305
      %v10803 = vunpack.c.l.s4 1983009808
      %v10804 = vunpack.c.0.s8 %v10803
      %v10805 = vlaneseq
      %v10806 = vshrl.u32 %v10805, 7
      %v10807 = vsub.s32 %v10804, %v10806
      %v10808 = vrot.slane %v10305, %v10807
      %v10810 = vunpack.c.l.s4 1983009808
      %v10811 = vunpack.c.0.s8 %v10810
      %v10812 = vlaneseq
      %v10813 = vshrl.u32 %v10812, 7
      %v10814 = vsub.s32 %v10811, %v10813
      %v10815 = vrot.slane %v10801, %v10814
      %v10816 = vcombine.high %v10808, %v10808
      %v10817 = vcombine.high %v10815, %v10815
      %v10818 = vcombine.high %v10306, %v10306
      %v10820 = vunpack.c.l.s4 1983009808
      %v10821 = vunpack.c.0.s8 %v10820
      %v10822 = vlaneseq
      %v10823 = vshrl.u32 %v10822, 7
      %v10824 = vsub.s32 %v10821, %v10823
      %v10825 = vrot.slane %v10306, %v10824
      %v10827 = vunpack.c.l.s4 1983009808
      %v10828 = vunpack.c.0.s8 %v10827
      %v10829 = vlaneseq
      %v10830 = vshrl.u32 %v10829, 7
      %v10831 = vsub.s32 %v10828, %v10830
      %v10832 = vrot.slane %v10818, %v10831
      %v10833 = vcombine.high %v10825, %v10825
      %v10834 = vcombine.high %v10832, %v10832
      %v10835 = vcombine.high %v10307, %v10307
      %v10837 = vunpack.c.l.s4 1983009808
      %v10838 = vunpack.c.0.s8 %v10837
      %v10839 = vlaneseq
      %v10840 = vshrl.u32 %v10839, 7
      %v10841 = vsub.s32 %v10838, %v10840
      %v10842 = vrot.slane %v10307, %v10841
      %v10844 = vunpack.c.l.s4 1983009808
      %v10845 = vunpack.c.0.s8 %v10844
      %v10846 = vlaneseq
      %v10847 = vshrl.u32 %v10846, 7
      %v10848 = vsub.s32 %v10845, %v10847
      %v10849 = vrot.slane %v10835, %v10848
      %v10850 = vcombine.high %v10842, %v10842
      %v10851 = vcombine.high %v10849, %v10849
      %v10852 = vcombine.high %v10308, %v10308
      %v10854 = vunpack.c.l.s4 1983009808
      %v10855 = vunpack.c.0.s8 %v10854
      %v10856 = vlaneseq
      %v10857 = vshrl.u32 %v10856, 7
      %v10858 = vsub.s32 %v10855, %v10857
      %v10859 = vrot.slane %v10308, %v10858
      %v10861 = vunpack.c.l.s4 1983009808
      %v10862 = vunpack.c.0.s8 %v10861
      %v10863 = vlaneseq
      %v10864 = vshrl.u32 %v10863, 7
      %v10865 = vsub.s32 %v10862, %v10864
      %v10866 = vrot.slane %v10852, %v10865
      %v10867 = vcombine.high %v10859, %v10859
      %v10868 = vcombine.high %v10866, %v10866
      %v10869 = vcombine.high %v10309, %v10309
      %v10871 = vunpack.c.l.s4 1983009808
      %v10872 = vunpack.c.0.s8 %v10871
      %v10873 = vlaneseq
      %v10874 = vshrl.u32 %v10873, 7
      %v10875 = vsub.s32 %v10872, %v10874
      %v10876 = vrot.slane %v10309, %v10875
      %v10878 = vunpack.c.l.s4 1983009808
      %v10879 = vunpack.c.0.s8 %v10878
      %v10880 = vlaneseq
      %v10881 = vshrl.u32 %v10880, 7
      %v10882 = vsub.s32 %v10879, %v10881
      %v10883 = vrot.slane %v10869, %v10882
      %v10884 = vcombine.high %v10876, %v10876
      %v10885 = vcombine.high %v10883, %v10883
      %v11014 = vadd.f32 %v9282, %v10349
      %v11015 = vadd.f32 %v9290, %v10357
      %v11016 = vadd.f32 %v9289, %v10356
      %v11017 = vadd.f32 %v9291, %v10358
      %v11018 = vadd.f32 %v9299, %v10366
      %v11019 = vadd.f32 %v9307, %v10374
      %v11020 = vadd.f32 %v9306, %v10373
      %v11021 = vadd.f32 %v9308, %v10375
      %v11022 = vadd.f32 %v9324, %v10383
      %v11023 = vadd.f32 %v9323, %v10391
      %v11024 = vadd.f32 %v9325, %v10390
      %v11025 = vadd.f32 %v9333, %v10392
      %v11026 = vadd.f32 %v9341, %v10400
      %v11027 = vadd.f32 %v9340, %v10408
      %v11028 = vadd.f32 %v9342, %v10407
      %v11029 = vadd.f32 %v9350, %v10409
      %v11030 = vadd.f32 %v9357, %v10417
      %v11031 = vadd.f32 %v9358, %v10425
      %v11032 = vadd.f32 %v9366, %v10424
      %v11033 = vadd.f32 %v9374, %v10426
      %v11034 = vadd.f32 %v9373, %v10434
      %v11035 = vadd.f32 %v9375, %v10442
      %v11036 = vadd.f32 %v9383, %v10441
      %v11037 = vadd.f32 %v9391, %v10443
      %v11038 = vadd.f32 %v9392, %v10451
      %v11039 = vadd.f32 %v9400, %v10459
      %v11040 = vadd.f32 %v9408, %v10458
      %v11041 = vadd.f32 %v9407, %v10460
      %v11042 = vadd.f32 %v9409, %v10468
      %v11043 = vadd.f32 %v9417, %v10476
      %v11044 = vadd.f32 %v9425, %v10475
      %v11045 = vadd.f32 %v9424, %v10477
      %v11046 = vadd.f32 %v9433, %v10485
      %v11047 = vadd.f32 %v9441, %v10493
      %v11048 = vadd.f32 %v9440, %v10492
      %v11049 = vadd.f32 %v9442, %v10494
      %v11050 = vadd.f32 %v9450, %v10502
      %v11051 = vadd.f32 %v9458, %v10510
      %v11052 = vadd.f32 %v9457, %v10509
      %v11053 = vadd.f32 %v9459, %v10511
      %v11054 = vadd.f32 %v9475, %v10519
      %v11055 = vadd.f32 %v9474, %v10527
      %v11056 = vadd.f32 %v9476, %v10526
      %v11057 = vadd.f32 %v9484, %v10528
      %v11058 = vadd.f32 %v9492, %v10536
      %v11059 = vadd.f32 %v9491, %v10544
      %v11060 = vadd.f32 %v9493, %v10543
      %v11061 = vadd.f32 %v9501, %v10545
      %v11062 = vadd.f32 %v9508, %v10553
      %v11063 = vadd.f32 %v9509, %v10561
      %v11064 = vadd.f32 %v9517, %v10560
      %v11065 = vadd.f32 %v9525, %v10562
      %v11066 = vadd.f32 %v9524, %v10570
      %v11067 = vadd.f32 %v9526, %v10578
      %v11068 = vadd.f32 %v9534, %v10577
      %v11069 = vadd.f32 %v9542, %v10579
      %v11070 = vadd.f32 %v9543, %v10587
      %v11071 = vadd.f32 %v9551, %v10595
      %v11072 = vadd.f32 %v9559, %v10594
      %v11073 = vadd.f32 %v9558, %v10596
      %v11074 = vadd.f32 %v9560, %v10604
      %v11075 = vadd.f32 %v9568, %v10612
      %v11076 = vadd.f32 %v9576, %v10611
      %v11077 = vadd.f32 %v9575, %v10613
      %v11078 = vadd.f32 %v9584, %v10621
      %v11079 = vadd.f32 %v9592, %v10629
      %v11080 = vadd.f32 %v9591, %v10628
      %v11081 = vadd.f32 %v9593, %v10630
      %v11082 = vadd.f32 %v9601, %v10638
      %v11083 = vadd.f32 %v9609, %v10646
      %v11084 = vadd.f32 %v9608, %v10645
      %v11085 = vadd.f32 %v9610, %v10647
      %v11086 = vadd.f32 %v9626, %v10655
      %v11087 = vadd.f32 %v9625, %v10663
      %v11088 = vadd.f32 %v9627, %v10662
      %v11089 = vadd.f32 %v9635, %v10664
      %v11090 = vadd.f32 %v9643, %v10672
      %v11091 = vadd.f32 %v9642, %v10680
      %v11092 = vadd.f32 %v9644, %v10679
      %v11093 = vadd.f32 %v9652, %v10681
      %v11094 = vadd.f32 %v9659, %v10689
      %v11095 = vadd.f32 %v9660, %v10697
      %v11096 = vadd.f32 %v9668, %v10696
      %v11097 = vadd.f32 %v9676, %v10698
      %v11098 = vadd.f32 %v9675, %v10706
      %v11099 = vadd.f32 %v9677, %v10714
      %v11100 = vadd.f32 %v9685, %v10713
      %v11101 = vadd.f32 %v9693, %v10715
      %v11102 = vadd.f32 %v9694, %v10723
      %v11103 = vadd.f32 %v9702, %v10731
      %v11104 = vadd.f32 %v9710, %v10730
      %v11105 = vadd.f32 %v9709, %v10732
      %v11106 = vadd.f32 %v9711, %v10740
      %v11107 = vadd.f32 %v9719, %v10748
      %v11108 = vadd.f32 %v9727, %v10747
      %v11109 = vadd.f32 %v9726, %v10749
      %v11110 = vadd.f32 %v9735, %v10757
      %v11111 = vadd.f32 %v9743, %v10765
      %v11112 = vadd.f32 %v9742, %v10764
      %v11113 = vadd.f32 %v9744, %v10766
      %v11114 = vadd.f32 %v9752, %v10774
      %v11115 = vadd.f32 %v9760, %v10782
      %v11116 = vadd.f32 %v9759, %v10781
      %v11117 = vadd.f32 %v9761, %v10783
      %v11118 = vadd.f32 %v9777, %v10791
      %v11119 = vadd.f32 %v9776, %v10799
      %v11120 = vadd.f32 %v9778, %v10798
      %v11121 = vadd.f32 %v9786, %v10800
      %v11122 = vadd.f32 %v9794, %v10808
      %v11123 = vadd.f32 %v9793, %v10816
      %v11124 = vadd.f32 %v9795, %v10815
      %v11125 = vadd.f32 %v9803, %v10817
      %v11126 = vadd.f32 %v9810, %v10825
      %v11127 = vadd.f32 %v9811, %v10833
      %v11128 = vadd.f32 %v9819, %v10832
      %v11129 = vadd.f32 %v9827, %v10834
      %v11130 = vadd.f32 %v9826, %v10842
      %v11131 = vadd.f32 %v9828, %v10850
      %v11132 = vadd.f32 %v9836, %v10849
      %v11133 = vadd.f32 %v9844, %v10851
      %v11134 = vadd.f32 %v9845, %v10859
      %v11135 = vadd.f32 %v9853, %v10867
      %v11136 = vadd.f32 %v9861, %v10866
      %v11137 = vadd.f32 %v9860, %v10868
      %v11138 = vadd.f32 %v9862, %v10876
      %v11139 = vadd.f32 %v9870, %v10884
      %v11140 = vadd.f32 %v9878, %v10883
      %v11141 = vadd.f32 %v9877, %v10885
      %v11142 = vmax.f32 %v11014, 0.0
      %v11143 = vmax.f32 %v11015, 0.0
      %v11144 = vmax.f32 %v11016, 0.0
      %v11145 = vmax.f32 %v11017, 0.0
      %v11146 = vmax.f32 %v11018, 0.0
      %v11147 = vmax.f32 %v11019, 0.0
      %v11148 = vmax.f32 %v11020, 0.0
      %v11149 = vmax.f32 %v11021, 0.0
      %v11150 = vmax.f32 %v11022, 0.0
      %v11151 = vmax.f32 %v11023, 0.0
      %v11152 = vmax.f32 %v11024, 0.0
      %v11153 = vmax.f32 %v11025, 0.0
      %v11154 = vmax.f32 %v11026, 0.0
      %v11155 = vmax.f32 %v11027, 0.0
      %v11156 = vmax.f32 %v11028, 0.0
      %v11157 = vmax.f32 %v11029, 0.0
      %v11158 = vmax.f32 %v11030, 0.0
      %v11159 = vmax.f32 %v11031, 0.0
      %v11160 = vmax.f32 %v11032, 0.0
      %v11161 = vmax.f32 %v11033, 0.0
      %v11162 = vmax.f32 %v11034, 0.0
      %v11163 = vmax.f32 %v11035, 0.0
      %v11164 = vmax.f32 %v11036, 0.0
      %v11165 = vmax.f32 %v11037, 0.0
      %v11166 = vmax.f32 %v11038, 0.0
      %v11167 = vmax.f32 %v11039, 0.0
      %v11168 = vmax.f32 %v11040, 0.0
      %v11169 = vmax.f32 %v11041, 0.0
      %v11170 = vmax.f32 %v11042, 0.0
      %v11171 = vmax.f32 %v11043, 0.0
      %v11172 = vmax.f32 %v11044, 0.0
      %v11173 = vmax.f32 %v11045, 0.0
      %v11174 = vmax.f32 %v11046, 0.0
      %v11175 = vmax.f32 %v11047, 0.0
      %v11176 = vmax.f32 %v11048, 0.0
      %v11177 = vmax.f32 %v11049, 0.0
      %v11178 = vmax.f32 %v11050, 0.0
      %v11179 = vmax.f32 %v11051, 0.0
      %v11180 = vmax.f32 %v11052, 0.0
      %v11181 = vmax.f32 %v11053, 0.0
      %v11182 = vmax.f32 %v11054, 0.0
      %v11183 = vmax.f32 %v11055, 0.0
      %v11184 = vmax.f32 %v11056, 0.0
      %v11185 = vmax.f32 %v11057, 0.0
      %v11186 = vmax.f32 %v11058, 0.0
      %v11187 = vmax.f32 %v11059, 0.0
      %v11188 = vmax.f32 %v11060, 0.0
      %v11189 = vmax.f32 %v11061, 0.0
      %v11190 = vmax.f32 %v11062, 0.0
      %v11191 = vmax.f32 %v11063, 0.0
      %v11192 = vmax.f32 %v11064, 0.0
      %v11193 = vmax.f32 %v11065, 0.0
      %v11194 = vmax.f32 %v11066, 0.0
      %v11195 = vmax.f32 %v11067, 0.0
      %v11196 = vmax.f32 %v11068, 0.0
      %v11197 = vmax.f32 %v11069, 0.0
      %v11198 = vmax.f32 %v11070, 0.0
      %v11199 = vmax.f32 %v11071, 0.0
      %v11200 = vmax.f32 %v11072, 0.0
      %v11201 = vmax.f32 %v11073, 0.0
      %v11202 = vmax.f32 %v11074, 0.0
      %v11203 = vmax.f32 %v11075, 0.0
      %v11204 = vmax.f32 %v11076, 0.0
      %v11205 = vmax.f32 %v11077, 0.0
      %v11206 = vmax.f32 %v11078, 0.0
      %v11207 = vmax.f32 %v11079, 0.0
      %v11208 = vmax.f32 %v11080, 0.0
      %v11209 = vmax.f32 %v11081, 0.0
      %v11210 = vmax.f32 %v11082, 0.0
      %v11211 = vmax.f32 %v11083, 0.0
      %v11212 = vmax.f32 %v11084, 0.0
      %v11213 = vmax.f32 %v11085, 0.0
      %v11214 = vmax.f32 %v11086, 0.0
      %v11215 = vmax.f32 %v11087, 0.0
      %v11216 = vmax.f32 %v11088, 0.0
      %v11217 = vmax.f32 %v11089, 0.0
      %v11218 = vmax.f32 %v11090, 0.0
      %v11219 = vmax.f32 %v11091, 0.0
      %v11220 = vmax.f32 %v11092, 0.0
      %v11221 = vmax.f32 %v11093, 0.0
      %v11222 = vmax.f32 %v11094, 0.0
      %v11223 = vmax.f32 %v11095, 0.0
      %v11224 = vmax.f32 %v11096, 0.0
      %v11225 = vmax.f32 %v11097, 0.0
      %v11226 = vmax.f32 %v11098, 0.0
      %v11227 = vmax.f32 %v11099, 0.0
      %v11228 = vmax.f32 %v11100, 0.0
      %v11229 = vmax.f32 %v11101, 0.0
      %v11230 = vmax.f32 %v11102, 0.0
      %v11231 = vmax.f32 %v11103, 0.0
      %v11232 = vmax.f32 %v11104, 0.0
      %v11233 = vmax.f32 %v11105, 0.0
      %v11234 = vmax.f32 %v11106, 0.0
      %v11235 = vmax.f32 %v11107, 0.0
      %v11236 = vmax.f32 %v11108, 0.0
      %v11237 = vmax.f32 %v11109, 0.0
      %v11238 = vmax.f32 %v11110, 0.0
      %v11239 = vmax.f32 %v11111, 0.0
      %v11240 = vmax.f32 %v11112, 0.0
      %v11241 = vmax.f32 %v11113, 0.0
      %v11242 = vmax.f32 %v11114, 0.0
      %v11243 = vmax.f32 %v11115, 0.0
      %v11244 = vmax.f32 %v11116, 0.0
      %v11245 = vmax.f32 %v11117, 0.0
      %v11246 = vmax.f32 %v11118, 0.0
      %v11247 = vmax.f32 %v11119, 0.0
      %v11248 = vmax.f32 %v11120, 0.0
      %v11249 = vmax.f32 %v11121, 0.0
      %v11250 = vmax.f32 %v11122, 0.0
      %v11251 = vmax.f32 %v11123, 0.0
      %v11252 = vmax.f32 %v11124, 0.0
      %v11253 = vmax.f32 %v11125, 0.0
      %v11254 = vmax.f32 %v11126, 0.0
      %v11255 = vmax.f32 %v11127, 0.0
      %v11256 = vmax.f32 %v11128, 0.0
      %v11257 = vmax.f32 %v11129, 0.0
      %v11258 = vmax.f32 %v11130, 0.0
      %v11259 = vmax.f32 %v11131, 0.0
      %v11260 = vmax.f32 %v11132, 0.0
      %v11261 = vmax.f32 %v11133, 0.0
      %v11262 = vmax.f32 %v11134, 0.0
      %v11263 = vmax.f32 %v11135, 0.0
      %v11264 = vmax.f32 %v11136, 0.0
      %v11265 = vmax.f32 %v11137, 0.0
      %v11266 = vmax.f32 %v11138, 0.0
      %v11267 = vmax.f32 %v11139, 0.0
      %v11268 = vmax.f32 %v11140, 0.0
      %v11269 = vmax.f32 %v11141, 0.0
      %v11398 = vcombine.low %v11142, %v11143
      %v11399 = vcombine.low %v11144, %v11145
      %v11401 = vunpack.c.l.s4 1983009808
      %v11402 = vunpack.c.0.s8 %v11401
      %v11403 = vlaneseq
      %v11404 = vshrl.u32 %v11403, 7
      %v11405 = vsub.s32 %v11402, %v11404
      %v11406 = vrot.slane %v11398, %v11405
      %v11408 = vunpack.c.l.s4 1983009808
      %v11409 = vunpack.c.0.s8 %v11408
      %v11410 = vlaneseq
      %v11411 = vshrl.u32 %v11410, 7
      %v11412 = vsub.s32 %v11409, %v11411
      %v11413 = vrot.slane %v11399, %v11412
      %v11414 = vcombine.low %v11406, %v11413
      %v11415 = vcombine.low %v11146, %v11147
      %v11416 = vcombine.low %v11148, %v11149
      %v11418 = vunpack.c.l.s4 1983009808
      %v11419 = vunpack.c.0.s8 %v11418
      %v11420 = vlaneseq
      %v11421 = vshrl.u32 %v11420, 7
      %v11422 = vsub.s32 %v11419, %v11421
      %v11423 = vrot.slane %v11415, %v11422
      %v11425 = vunpack.c.l.s4 1983009808
      %v11426 = vunpack.c.0.s8 %v11425
      %v11427 = vlaneseq
      %v11428 = vshrl.u32 %v11427, 7
      %v11429 = vsub.s32 %v11426, %v11428
      %v11430 = vrot.slane %v11416, %v11429
      %v11431 = vcombine.low %v11423, %v11430
      %v11432 = vcombine.low %v11150, %v11151
      %v11433 = vcombine.low %v11152, %v11153
      %v11435 = vunpack.c.l.s4 1983009808
      %v11436 = vunpack.c.0.s8 %v11435
      %v11437 = vlaneseq
      %v11438 = vshrl.u32 %v11437, 7
      %v11439 = vsub.s32 %v11436, %v11438
      %v11440 = vrot.slane %v11432, %v11439
      %v11442 = vunpack.c.l.s4 1983009808
      %v11443 = vunpack.c.0.s8 %v11442
      %v11444 = vlaneseq
      %v11445 = vshrl.u32 %v11444, 7
      %v11446 = vsub.s32 %v11443, %v11445
      %v11447 = vrot.slane %v11433, %v11446
      %v11448 = vcombine.low %v11440, %v11447
      %v11449 = vcombine.low %v11154, %v11155
      %v11450 = vcombine.low %v11156, %v11157
      %v11452 = vunpack.c.l.s4 1983009808
      %v11453 = vunpack.c.0.s8 %v11452
      %v11454 = vlaneseq
      %v11455 = vshrl.u32 %v11454, 7
      %v11456 = vsub.s32 %v11453, %v11455
      %v11457 = vrot.slane %v11449, %v11456
      %v11459 = vunpack.c.l.s4 1983009808
      %v11460 = vunpack.c.0.s8 %v11459
      %v11461 = vlaneseq
      %v11462 = vshrl.u32 %v11461, 7
      %v11463 = vsub.s32 %v11460, %v11462
      %v11464 = vrot.slane %v11450, %v11463
      %v11465 = vcombine.low %v11457, %v11464
      %v11466 = vcombine.low %v11158, %v11159
      %v11467 = vcombine.low %v11160, %v11161
      %v11469 = vunpack.c.l.s4 1983009808
      %v11470 = vunpack.c.0.s8 %v11469
      %v11471 = vlaneseq
      %v11472 = vshrl.u32 %v11471, 7
      %v11473 = vsub.s32 %v11470, %v11472
      %v11474 = vrot.slane %v11466, %v11473
      %v11476 = vunpack.c.l.s4 1983009808
      %v11477 = vunpack.c.0.s8 %v11476
      %v11478 = vlaneseq
      %v11479 = vshrl.u32 %v11478, 7
      %v11480 = vsub.s32 %v11477, %v11479
      %v11481 = vrot.slane %v11467, %v11480
      %v11482 = vcombine.low %v11474, %v11481
      %v11483 = vcombine.low %v11162, %v11163
      %v11484 = vcombine.low %v11164, %v11165
      %v11486 = vunpack.c.l.s4 1983009808
      %v11487 = vunpack.c.0.s8 %v11486
      %v11488 = vlaneseq
      %v11489 = vshrl.u32 %v11488, 7
      %v11490 = vsub.s32 %v11487, %v11489
      %v11491 = vrot.slane %v11483, %v11490
      %v11493 = vunpack.c.l.s4 1983009808
      %v11494 = vunpack.c.0.s8 %v11493
      %v11495 = vlaneseq
      %v11496 = vshrl.u32 %v11495, 7
      %v11497 = vsub.s32 %v11494, %v11496
      %v11498 = vrot.slane %v11484, %v11497
      %v11499 = vcombine.low %v11491, %v11498
      %v11500 = vcombine.low %v11166, %v11167
      %v11501 = vcombine.low %v11168, %v11169
      %v11503 = vunpack.c.l.s4 1983009808
      %v11504 = vunpack.c.0.s8 %v11503
      %v11505 = vlaneseq
      %v11506 = vshrl.u32 %v11505, 7
      %v11507 = vsub.s32 %v11504, %v11506
      %v11508 = vrot.slane %v11500, %v11507
      %v11510 = vunpack.c.l.s4 1983009808
      %v11511 = vunpack.c.0.s8 %v11510
      %v11512 = vlaneseq
      %v11513 = vshrl.u32 %v11512, 7
      %v11514 = vsub.s32 %v11511, %v11513
      %v11515 = vrot.slane %v11501, %v11514
      %v11516 = vcombine.low %v11508, %v11515
      %v11517 = vcombine.low %v11170, %v11171
      %v11518 = vcombine.low %v11172, %v11173
      %v11520 = vunpack.c.l.s4 1983009808
      %v11521 = vunpack.c.0.s8 %v11520
      %v11522 = vlaneseq
      %v11523 = vshrl.u32 %v11522, 7
      %v11524 = vsub.s32 %v11521, %v11523
      %v11525 = vrot.slane %v11517, %v11524
      %v11527 = vunpack.c.l.s4 1983009808
      %v11528 = vunpack.c.0.s8 %v11527
      %v11529 = vlaneseq
      %v11530 = vshrl.u32 %v11529, 7
      %v11531 = vsub.s32 %v11528, %v11530
      %v11532 = vrot.slane %v11518, %v11531
      %v11533 = vcombine.low %v11525, %v11532
      %v11534 = vcombine.low %v11174, %v11175
      %v11535 = vcombine.low %v11176, %v11177
      %v11537 = vunpack.c.l.s4 1983009808
      %v11538 = vunpack.c.0.s8 %v11537
      %v11539 = vlaneseq
      %v11540 = vshrl.u32 %v11539, 7
      %v11541 = vsub.s32 %v11538, %v11540
      %v11542 = vrot.slane %v11534, %v11541
      %v11544 = vunpack.c.l.s4 1983009808
      %v11545 = vunpack.c.0.s8 %v11544
      %v11546 = vlaneseq
      %v11547 = vshrl.u32 %v11546, 7
      %v11548 = vsub.s32 %v11545, %v11547
      %v11549 = vrot.slane %v11535, %v11548
      %v11550 = vcombine.low %v11542, %v11549
      %v11551 = vcombine.low %v11178, %v11179
      %v11552 = vcombine.low %v11180, %v11181
      %v11554 = vunpack.c.l.s4 1983009808
      %v11555 = vunpack.c.0.s8 %v11554
      %v11556 = vlaneseq
      %v11557 = vshrl.u32 %v11556, 7
      %v11558 = vsub.s32 %v11555, %v11557
      %v11559 = vrot.slane %v11551, %v11558
      %v11561 = vunpack.c.l.s4 1983009808
      %v11562 = vunpack.c.0.s8 %v11561
      %v11563 = vlaneseq
      %v11564 = vshrl.u32 %v11563, 7
      %v11565 = vsub.s32 %v11562, %v11564
      %v11566 = vrot.slane %v11552, %v11565
      %v11567 = vcombine.low %v11559, %v11566
      %v11568 = vcombine.low %v11182, %v11183
      %v11569 = vcombine.low %v11184, %v11185
      %v11571 = vunpack.c.l.s4 1983009808
      %v11572 = vunpack.c.0.s8 %v11571
      %v11573 = vlaneseq
      %v11574 = vshrl.u32 %v11573, 7
      %v11575 = vsub.s32 %v11572, %v11574
      %v11576 = vrot.slane %v11568, %v11575
      %v11578 = vunpack.c.l.s4 1983009808
      %v11579 = vunpack.c.0.s8 %v11578
      %v11580 = vlaneseq
      %v11581 = vshrl.u32 %v11580, 7
      %v11582 = vsub.s32 %v11579, %v11581
      %v11583 = vrot.slane %v11569, %v11582
      %v11584 = vcombine.low %v11576, %v11583
      %v11585 = vcombine.low %v11186, %v11187
      %v11586 = vcombine.low %v11188, %v11189
      %v11588 = vunpack.c.l.s4 1983009808
      %v11589 = vunpack.c.0.s8 %v11588
      %v11590 = vlaneseq
      %v11591 = vshrl.u32 %v11590, 7
      %v11592 = vsub.s32 %v11589, %v11591
      %v11593 = vrot.slane %v11585, %v11592
      %v11595 = vunpack.c.l.s4 1983009808
      %v11596 = vunpack.c.0.s8 %v11595
      %v11597 = vlaneseq
      %v11598 = vshrl.u32 %v11597, 7
      %v11599 = vsub.s32 %v11596, %v11598
      %v11600 = vrot.slane %v11586, %v11599
      %v11601 = vcombine.low %v11593, %v11600
      %v11602 = vcombine.low %v11190, %v11191
      %v11603 = vcombine.low %v11192, %v11193
      %v11605 = vunpack.c.l.s4 1983009808
      %v11606 = vunpack.c.0.s8 %v11605
      %v11607 = vlaneseq
      %v11608 = vshrl.u32 %v11607, 7
      %v11609 = vsub.s32 %v11606, %v11608
      %v11610 = vrot.slane %v11602, %v11609
      %v11612 = vunpack.c.l.s4 1983009808
      %v11613 = vunpack.c.0.s8 %v11612
      %v11614 = vlaneseq
      %v11615 = vshrl.u32 %v11614, 7
      %v11616 = vsub.s32 %v11613, %v11615
      %v11617 = vrot.slane %v11603, %v11616
      %v11618 = vcombine.low %v11610, %v11617
      %v11619 = vcombine.low %v11194, %v11195
      %v11620 = vcombine.low %v11196, %v11197
      %v11622 = vunpack.c.l.s4 1983009808
      %v11623 = vunpack.c.0.s8 %v11622
      %v11624 = vlaneseq
      %v11625 = vshrl.u32 %v11624, 7
      %v11626 = vsub.s32 %v11623, %v11625
      %v11627 = vrot.slane %v11619, %v11626
      %v11629 = vunpack.c.l.s4 1983009808
      %v11630 = vunpack.c.0.s8 %v11629
      %v11631 = vlaneseq
      %v11632 = vshrl.u32 %v11631, 7
      %v11633 = vsub.s32 %v11630, %v11632
      %v11634 = vrot.slane %v11620, %v11633
      %v11635 = vcombine.low %v11627, %v11634
      %v11636 = vcombine.low %v11198, %v11199
      %v11637 = vcombine.low %v11200, %v11201
      %v11639 = vunpack.c.l.s4 1983009808
      %v11640 = vunpack.c.0.s8 %v11639
      %v11641 = vlaneseq
      %v11642 = vshrl.u32 %v11641, 7
      %v11643 = vsub.s32 %v11640, %v11642
      %v11644 = vrot.slane %v11636, %v11643
      %v11646 = vunpack.c.l.s4 1983009808
      %v11647 = vunpack.c.0.s8 %v11646
      %v11648 = vlaneseq
      %v11649 = vshrl.u32 %v11648, 7
      %v11650 = vsub.s32 %v11647, %v11649
      %v11651 = vrot.slane %v11637, %v11650
      %v11652 = vcombine.low %v11644, %v11651
      %v11653 = vcombine.low %v11202, %v11203
      %v11654 = vcombine.low %v11204, %v11205
      %v11656 = vunpack.c.l.s4 1983009808
      %v11657 = vunpack.c.0.s8 %v11656
      %v11658 = vlaneseq
      %v11659 = vshrl.u32 %v11658, 7
      %v11660 = vsub.s32 %v11657, %v11659
      %v11661 = vrot.slane %v11653, %v11660
      %v11663 = vunpack.c.l.s4 1983009808
      %v11664 = vunpack.c.0.s8 %v11663
      %v11665 = vlaneseq
      %v11666 = vshrl.u32 %v11665, 7
      %v11667 = vsub.s32 %v11664, %v11666
      %v11668 = vrot.slane %v11654, %v11667
      %v11669 = vcombine.low %v11661, %v11668
      %v11670 = vcombine.low %v11206, %v11207
      %v11671 = vcombine.low %v11208, %v11209
      %v11673 = vunpack.c.l.s4 1983009808
      %v11674 = vunpack.c.0.s8 %v11673
      %v11675 = vlaneseq
      %v11676 = vshrl.u32 %v11675, 7
      %v11677 = vsub.s32 %v11674, %v11676
      %v11678 = vrot.slane %v11670, %v11677
      %v11680 = vunpack.c.l.s4 1983009808
      %v11681 = vunpack.c.0.s8 %v11680
      %v11682 = vlaneseq
      %v11683 = vshrl.u32 %v11682, 7
      %v11684 = vsub.s32 %v11681, %v11683
      %v11685 = vrot.slane %v11671, %v11684
      %v11686 = vcombine.low %v11678, %v11685
      %v11687 = vcombine.low %v11210, %v11211
      %v11688 = vcombine.low %v11212, %v11213
      %v11690 = vunpack.c.l.s4 1983009808
      %v11691 = vunpack.c.0.s8 %v11690
      %v11692 = vlaneseq
      %v11693 = vshrl.u32 %v11692, 7
      %v11694 = vsub.s32 %v11691, %v11693
      %v11695 = vrot.slane %v11687, %v11694
      %v11697 = vunpack.c.l.s4 1983009808
      %v11698 = vunpack.c.0.s8 %v11697
      %v11699 = vlaneseq
      %v11700 = vshrl.u32 %v11699, 7
      %v11701 = vsub.s32 %v11698, %v11700
      %v11702 = vrot.slane %v11688, %v11701
      %v11703 = vcombine.low %v11695, %v11702
      %v11704 = vcombine.low %v11214, %v11215
      %v11705 = vcombine.low %v11216, %v11217
      %v11707 = vunpack.c.l.s4 1983009808
      %v11708 = vunpack.c.0.s8 %v11707
      %v11709 = vlaneseq
      %v11710 = vshrl.u32 %v11709, 7
      %v11711 = vsub.s32 %v11708, %v11710
      %v11712 = vrot.slane %v11704, %v11711
      %v11714 = vunpack.c.l.s4 1983009808
      %v11715 = vunpack.c.0.s8 %v11714
      %v11716 = vlaneseq
      %v11717 = vshrl.u32 %v11716, 7
      %v11718 = vsub.s32 %v11715, %v11717
      %v11719 = vrot.slane %v11705, %v11718
      %v11720 = vcombine.low %v11712, %v11719
      %v11721 = vcombine.low %v11218, %v11219
      %v11722 = vcombine.low %v11220, %v11221
      %v11724 = vunpack.c.l.s4 1983009808
      %v11725 = vunpack.c.0.s8 %v11724
      %v11726 = vlaneseq
      %v11727 = vshrl.u32 %v11726, 7
      %v11728 = vsub.s32 %v11725, %v11727
      %v11729 = vrot.slane %v11721, %v11728
      %v11731 = vunpack.c.l.s4 1983009808
      %v11732 = vunpack.c.0.s8 %v11731
      %v11733 = vlaneseq
      %v11734 = vshrl.u32 %v11733, 7
      %v11735 = vsub.s32 %v11732, %v11734
      %v11736 = vrot.slane %v11722, %v11735
      %v11737 = vcombine.low %v11729, %v11736
      %v11738 = vcombine.low %v11222, %v11223
      %v11739 = vcombine.low %v11224, %v11225
      %v11741 = vunpack.c.l.s4 1983009808
      %v11742 = vunpack.c.0.s8 %v11741
      %v11743 = vlaneseq
      %v11744 = vshrl.u32 %v11743, 7
      %v11745 = vsub.s32 %v11742, %v11744
      %v11746 = vrot.slane %v11738, %v11745
      %v11748 = vunpack.c.l.s4 1983009808
      %v11749 = vunpack.c.0.s8 %v11748
      %v11750 = vlaneseq
      %v11751 = vshrl.u32 %v11750, 7
      %v11752 = vsub.s32 %v11749, %v11751
      %v11753 = vrot.slane %v11739, %v11752
      %v11754 = vcombine.low %v11746, %v11753
      %v11755 = vcombine.low %v11226, %v11227
      %v11756 = vcombine.low %v11228, %v11229
      %v11758 = vunpack.c.l.s4 1983009808
      %v11759 = vunpack.c.0.s8 %v11758
      %v11760 = vlaneseq
      %v11761 = vshrl.u32 %v11760, 7
      %v11762 = vsub.s32 %v11759, %v11761
      %v11763 = vrot.slane %v11755, %v11762
      %v11765 = vunpack.c.l.s4 1983009808
      %v11766 = vunpack.c.0.s8 %v11765
      %v11767 = vlaneseq
      %v11768 = vshrl.u32 %v11767, 7
      %v11769 = vsub.s32 %v11766, %v11768
      %v11770 = vrot.slane %v11756, %v11769
      %v11771 = vcombine.low %v11763, %v11770
      %v11772 = vcombine.low %v11230, %v11231
      %v11773 = vcombine.low %v11232, %v11233
      %v11775 = vunpack.c.l.s4 1983009808
      %v11776 = vunpack.c.0.s8 %v11775
      %v11777 = vlaneseq
      %v11778 = vshrl.u32 %v11777, 7
      %v11779 = vsub.s32 %v11776, %v11778
      %v11780 = vrot.slane %v11772, %v11779
      %v11782 = vunpack.c.l.s4 1983009808
      %v11783 = vunpack.c.0.s8 %v11782
      %v11784 = vlaneseq
      %v11785 = vshrl.u32 %v11784, 7
      %v11786 = vsub.s32 %v11783, %v11785
      %v11787 = vrot.slane %v11773, %v11786
      %v11788 = vcombine.low %v11780, %v11787
      %v11789 = vcombine.low %v11234, %v11235
      %v11790 = vcombine.low %v11236, %v11237
      %v11792 = vunpack.c.l.s4 1983009808
      %v11793 = vunpack.c.0.s8 %v11792
      %v11794 = vlaneseq
      %v11795 = vshrl.u32 %v11794, 7
      %v11796 = vsub.s32 %v11793, %v11795
      %v11797 = vrot.slane %v11789, %v11796
      %v11799 = vunpack.c.l.s4 1983009808
      %v11800 = vunpack.c.0.s8 %v11799
      %v11801 = vlaneseq
      %v11802 = vshrl.u32 %v11801, 7
      %v11803 = vsub.s32 %v11800, %v11802
      %v11804 = vrot.slane %v11790, %v11803
      %v11805 = vcombine.low %v11797, %v11804
      %v11806 = vcombine.low %v11238, %v11239
      %v11807 = vcombine.low %v11240, %v11241
      %v11809 = vunpack.c.l.s4 1983009808
      %v11810 = vunpack.c.0.s8 %v11809
      %v11811 = vlaneseq
      %v11812 = vshrl.u32 %v11811, 7
      %v11813 = vsub.s32 %v11810, %v11812
      %v11814 = vrot.slane %v11806, %v11813
      %v11816 = vunpack.c.l.s4 1983009808
      %v11817 = vunpack.c.0.s8 %v11816
      %v11818 = vlaneseq
      %v11819 = vshrl.u32 %v11818, 7
      %v11820 = vsub.s32 %v11817, %v11819
      %v11821 = vrot.slane %v11807, %v11820
      %v11822 = vcombine.low %v11814, %v11821
      %v11823 = vcombine.low %v11242, %v11243
      %v11824 = vcombine.low %v11244, %v11245
      %v11826 = vunpack.c.l.s4 1983009808
      %v11827 = vunpack.c.0.s8 %v11826
      %v11828 = vlaneseq
      %v11829 = vshrl.u32 %v11828, 7
      %v11830 = vsub.s32 %v11827, %v11829
      %v11831 = vrot.slane %v11823, %v11830
      %v11833 = vunpack.c.l.s4 1983009808
      %v11834 = vunpack.c.0.s8 %v11833
      %v11835 = vlaneseq
      %v11836 = vshrl.u32 %v11835, 7
      %v11837 = vsub.s32 %v11834, %v11836
      %v11838 = vrot.slane %v11824, %v11837
      %v11839 = vcombine.low %v11831, %v11838
      %v11840 = vcombine.low %v11246, %v11247
      %v11841 = vcombine.low %v11248, %v11249
      %v11843 = vunpack.c.l.s4 1983009808
      %v11844 = vunpack.c.0.s8 %v11843
      %v11845 = vlaneseq
      %v11846 = vshrl.u32 %v11845, 7
      %v11847 = vsub.s32 %v11844, %v11846
      %v11848 = vrot.slane %v11840, %v11847
      %v11850 = vunpack.c.l.s4 1983009808
      %v11851 = vunpack.c.0.s8 %v11850
      %v11852 = vlaneseq
      %v11853 = vshrl.u32 %v11852, 7
      %v11854 = vsub.s32 %v11851, %v11853
      %v11855 = vrot.slane %v11841, %v11854
      %v11856 = vcombine.low %v11848, %v11855
      %v11857 = vcombine.low %v11250, %v11251
      %v11858 = vcombine.low %v11252, %v11253
      %v11860 = vunpack.c.l.s4 1983009808
      %v11861 = vunpack.c.0.s8 %v11860
      %v11862 = vlaneseq
      %v11863 = vshrl.u32 %v11862, 7
      %v11864 = vsub.s32 %v11861, %v11863
      %v11865 = vrot.slane %v11857, %v11864
      %v11867 = vunpack.c.l.s4 1983009808
      %v11868 = vunpack.c.0.s8 %v11867
      %v11869 = vlaneseq
      %v11870 = vshrl.u32 %v11869, 7
      %v11871 = vsub.s32 %v11868, %v11870
      %v11872 = vrot.slane %v11858, %v11871
      %v11873 = vcombine.low %v11865, %v11872
      %v11874 = vcombine.low %v11254, %v11255
      %v11875 = vcombine.low %v11256, %v11257
      %v11877 = vunpack.c.l.s4 1983009808
      %v11878 = vunpack.c.0.s8 %v11877
      %v11879 = vlaneseq
      %v11880 = vshrl.u32 %v11879, 7
      %v11881 = vsub.s32 %v11878, %v11880
      %v11882 = vrot.slane %v11874, %v11881
      %v11884 = vunpack.c.l.s4 1983009808
      %v11885 = vunpack.c.0.s8 %v11884
      %v11886 = vlaneseq
      %v11887 = vshrl.u32 %v11886, 7
      %v11888 = vsub.s32 %v11885, %v11887
      %v11889 = vrot.slane %v11875, %v11888
      %v11890 = vcombine.low %v11882, %v11889
      %v11891 = vcombine.low %v11258, %v11259
      %v11892 = vcombine.low %v11260, %v11261
      %v11894 = vunpack.c.l.s4 1983009808
      %v11895 = vunpack.c.0.s8 %v11894
      %v11896 = vlaneseq
      %v11897 = vshrl.u32 %v11896, 7
      %v11898 = vsub.s32 %v11895, %v11897
      %v11899 = vrot.slane %v11891, %v11898
      %v11901 = vunpack.c.l.s4 1983009808
      %v11902 = vunpack.c.0.s8 %v11901
      %v11903 = vlaneseq
      %v11904 = vshrl.u32 %v11903, 7
      %v11905 = vsub.s32 %v11902, %v11904
      %v11906 = vrot.slane %v11892, %v11905
      %v11907 = vcombine.low %v11899, %v11906
      %v11908 = vcombine.low %v11262, %v11263
      %v11909 = vcombine.low %v11264, %v11265
      %v11911 = vunpack.c.l.s4 1983009808
      %v11912 = vunpack.c.0.s8 %v11911
      %v11913 = vlaneseq
      %v11914 = vshrl.u32 %v11913, 7
      %v11915 = vsub.s32 %v11912, %v11914
      %v11916 = vrot.slane %v11908, %v11915
      %v11918 = vunpack.c.l.s4 1983009808
      %v11919 = vunpack.c.0.s8 %v11918
      %v11920 = vlaneseq
      %v11921 = vshrl.u32 %v11920, 7
      %v11922 = vsub.s32 %v11919, %v11921
      %v11923 = vrot.slane %v11909, %v11922
      %v11924 = vcombine.low %v11916, %v11923
      %v11925 = vcombine.low %v11266, %v11267
      %v11926 = vcombine.low %v11268, %v11269
      %v11928 = vunpack.c.l.s4 1983009808
      %v11929 = vunpack.c.0.s8 %v11928
      %v11930 = vlaneseq
      %v11931 = vshrl.u32 %v11930, 7
      %v11932 = vsub.s32 %v11929, %v11931
      %v11933 = vrot.slane %v11925, %v11932
      %v11935 = vunpack.c.l.s4 1983009808
      %v11936 = vunpack.c.0.s8 %v11935
      %v11937 = vlaneseq
      %v11938 = vshrl.u32 %v11937, 7
      %v11939 = vsub.s32 %v11936, %v11938
      %v11940 = vrot.slane %v11926, %v11939
      %v11941 = vcombine.low %v11933, %v11940
      %v11974 = vpack.c.bf16 %v11431, %v11414
      %v11975 = vpack.c.bf16 %v11465, %v11448
      %v11976 = vpack.c.bf16 %v11499, %v11482
      %v11977 = vpack.c.bf16 %v11533, %v11516
      %v11978 = vpack.c.bf16 %v11567, %v11550
      %v11979 = vpack.c.bf16 %v11601, %v11584
      %v11980 = vpack.c.bf16 %v11635, %v11618
      %v11981 = vpack.c.bf16 %v11669, %v11652
      %v11982 = vpack.c.bf16 %v11703, %v11686
      %v11983 = vpack.c.bf16 %v11737, %v11720
      %v11984 = vpack.c.bf16 %v11771, %v11754
      %v11985 = vpack.c.bf16 %v11805, %v11788
      %v11986 = vpack.c.bf16 %v11839, %v11822
      %v11987 = vpack.c.bf16 %v11873, %v11856
      %v11988 = vpack.c.bf16 %v11907, %v11890
      %v11989 = vpack.c.bf16 %v11941, %v11924
      %v12006 = vunpack.c.l.b16 %v11974
      %v12007 = vunpack.c.h.b16 %v11974
      %v12008 = vunpack.c.l.b16 %v11975
      %v12009 = vunpack.c.h.b16 %v11975
      %v12010 = vunpack.c.l.b16 %v11976
      %v12011 = vunpack.c.h.b16 %v11976
      %v12012 = vunpack.c.l.b16 %v11977
      %v12013 = vunpack.c.h.b16 %v11977
      %v12014 = vunpack.c.l.b16 %v11978
      %v12015 = vunpack.c.h.b16 %v11978
      %v12016 = vunpack.c.l.b16 %v11979
      %v12017 = vunpack.c.h.b16 %v11979
      %v12018 = vunpack.c.l.b16 %v11980
      %v12019 = vunpack.c.h.b16 %v11980
      %v12020 = vunpack.c.l.b16 %v11981
      %v12021 = vunpack.c.h.b16 %v11981
      %v12022 = vunpack.c.l.b16 %v11982
      %v12023 = vunpack.c.h.b16 %v11982
      %v12024 = vunpack.c.l.b16 %v11983
      %v12025 = vunpack.c.h.b16 %v11983
      %v12026 = vunpack.c.l.b16 %v11984
      %v12027 = vunpack.c.h.b16 %v11984
      %v12028 = vunpack.c.l.b16 %v11985
      %v12029 = vunpack.c.h.b16 %v11985
      %v12030 = vunpack.c.l.b16 %v11986
      %v12031 = vunpack.c.h.b16 %v11986
      %v12032 = vunpack.c.l.b16 %v11987
      %v12033 = vunpack.c.h.b16 %v11987
      %v12034 = vunpack.c.l.b16 %v11988
      %v12035 = vunpack.c.h.b16 %v11988
      %v12036 = vunpack.c.l.b16 %v11989
      %v12037 = vunpack.c.h.b16 %v11989
      %v12038 = vpack.c.b16 %v12006, %v12006
      %v12039 = vpack.c.b16 %v12007, %v12007
      %v12040 = vpack.c.b16 %v12008, %v12008
      %v12041 = vpack.c.b16 %v12009, %v12009
      %v12042 = vpack.c.b16 %v12010, %v12010
      %v12043 = vpack.c.b16 %v12011, %v12011
      %v12044 = vpack.c.b16 %v12012, %v12012
      %v12045 = vpack.c.b16 %v12013, %v12013
      %v12046 = vpack.c.b16 %v12014, %v12014
      %v12047 = vpack.c.b16 %v12015, %v12015
      %v12048 = vpack.c.b16 %v12016, %v12016
      %v12049 = vpack.c.b16 %v12017, %v12017
      %v12050 = vpack.c.b16 %v12018, %v12018
      %v12051 = vpack.c.b16 %v12019, %v12019
      %v12052 = vpack.c.b16 %v12020, %v12020
      %v12053 = vpack.c.b16 %v12021, %v12021
      %v12054 = vpack.c.b16 %v12022, %v12022
      %v12055 = vpack.c.b16 %v12023, %v12023
      %v12056 = vpack.c.b16 %v12024, %v12024
      %v12057 = vpack.c.b16 %v12025, %v12025
      %v12058 = vpack.c.b16 %v12026, %v12026
      %v12059 = vpack.c.b16 %v12027, %v12027
      %v12060 = vpack.c.b16 %v12028, %v12028
      %v12061 = vpack.c.b16 %v12029, %v12029
      %v12062 = vpack.c.b16 %v12030, %v12030
      %v12063 = vpack.c.b16 %v12031, %v12031
      %v12064 = vpack.c.b16 %v12032, %v12032
      %v12065 = vpack.c.b16 %v12033, %v12033
      %v12066 = vpack.c.b16 %v12034, %v12034
      %v12067 = vpack.c.b16 %v12035, %v12035
      %v12068 = vpack.c.b16 %v12036, %v12036
      %v12069 = vpack.c.b16 %v12037, %v12037
      %12102 = vst [vmem:[%s661] sm:$0xf] %v12038
      %12103 = vst [vmem:[%s661 + $0x4] sm:$0xf] %v12039
      %12104 = vst [vmem:[%s661 + $0x8] sm:$0xf] %v12040
      %12105 = vst [vmem:[%s661 + $0xc] sm:$0xf] %v12041
      %12106 = vst [vmem:[%s661 + $0x10] sm:$0xf] %v12042
      %12107 = vst [vmem:[%s661 + $0x14] sm:$0xf] %v12043
      %12108 = vst [vmem:[%s661 + $0x18] sm:$0xf] %v12044
      %12109 = vst [vmem:[%s661 + $0x1c] sm:$0xf] %v12045
      %12110 = vst [vmem:[%s661 + $0x20] sm:$0xf] %v12046
      %12111 = vst [vmem:[%s661 + $0x24] sm:$0xf] %v12047
      %12112 = vst [vmem:[%s661 + $0x28] sm:$0xf] %v12048
      %12113 = vst [vmem:[%s661 + $0x2c] sm:$0xf] %v12049
      %12114 = vst [vmem:[%s661 + $0x30] sm:$0xf] %v12050
      %12115 = vst [vmem:[%s661 + $0x34] sm:$0xf] %v12051
      %12116 = vst [vmem:[%s661 + $0x38] sm:$0xf] %v12052
      %12117 = vst [vmem:[%s661 + $0x3c] sm:$0xf] %v12053
      %12118 = vst [vmem:[%s661 + $0x40] sm:$0xf] %v12054
      %12119 = vst [vmem:[%s661 + $0x44] sm:$0xf] %v12055
      %12120 = vst [vmem:[%s661 + $0x48] sm:$0xf] %v12056
      %12121 = vst [vmem:[%s661 + $0x4c] sm:$0xf] %v12057
      %12122 = vst [vmem:[%s661 + $0x50] sm:$0xf] %v12058
      %12123 = vst [vmem:[%s661 + $0x54] sm:$0xf] %v12059
      %12124 = vst [vmem:[%s661 + $0x58] sm:$0xf] %v12060
      %12125 = vst [vmem:[%s661 + $0x5c] sm:$0xf] %v12061
      %12126 = vst [vmem:[%s661 + $0x60] sm:$0xf] %v12062
      %12127 = vst [vmem:[%s661 + $0x64] sm:$0xf] %v12063
      %12128 = vst [vmem:[%s661 + $0x68] sm:$0xf] %v12064
      %12129 = vst [vmem:[%s661 + $0x6c] sm:$0xf] %v12065
      %12130 = vst [vmem:[%s661 + $0x70] sm:$0xf] %v12066
      %12131 = vst [vmem:[%s661 + $0x74] sm:$0xf] %v12067
      %12132 = vst [vmem:[%s661 + $0x78] sm:$0xf] %v12068
      %12133 = vst [vmem:[%s661 + $0x7c] sm:$0xf] %v12069
      %s12134 = smul.u32 16, %s31
      %p12135 = scmp.lt.s32.totalorder %s30, 1
      %s12136 = scalar_select %p12135, %s30, 1
      %p12137 = scmp.lt.s32.totalorder %s12134, 15
      %s12138 = scalar_select %p12137, %s12134, 15
      %s12139 = smul.addr %s12138, 2
      %s12140 = smul.addr %s12136, 32
      %s12141 = sadd.s32 %s12139, %s12140
      %s12142 = smul.addr %s12141, 4
      %s12143 = scalar_lea.vmem %s15, %s12142
      // Predicated region
      $region81: #{_lambda_.1} parent=79 // pred_check
        %p12144 = pneg %p410
      $region82: #{_lambda_.1} parent=79 // pred_check_branch
        %12146 = sbr.rel (%p12144) target = $region84
      $region83: #{_lambda_.1} parent=79 // pred_region
        %s12147 = smul.u32 16, %s31
      $region84: #{_lambda_.1} parent=79 // pred_fallthru
        _
    $region80: #{_lambda_.1} parent=5 // pred_fallthru
      _
    %p12148 = scmp.le.s32.totalorder 2, %s21
    // Predicated region
    $region85: #{_lambda_.1} parent=5 // pred_check
      %p12149 = pneg %p12148
    $region86: #{_lambda_.1} parent=5 // pred_check_branch
      %12151 = sbr.rel (%p12149) target = $region88
    $region87: #{_lambda_.1} parent=5 // pred_region
      %s12152 = ssub.s32 %s21, 2
      // Predicated region
      $region89: #{_lambda_.1} parent=87 // pred_check
        %p12153 = pneg %p416
      $region90: #{_lambda_.1} parent=87 // pred_check_branch
        %12155 = sbr.rel (%p12153) target = $region92
      $region91: #{_lambda_.1} parent=87 // pred_region
        %s12156 = smul.u32 16, %s33
        %p12157 = scmp.lt.s32.totalorder %s32, 1
        %s12158 = scalar_select %p12157, %s32, 1
        %p12159 = scmp.lt.s32.totalorder %s12156, 15
        %s12160 = scalar_select %p12159, %s12156, 15
        %s12161 = smul.addr %s12160, 2
        %s12162 = smul.addr %s12158, 32
        %s12163 = sadd.s32 %s12161, %s12162
        %s12164 = smul.addr %s12163, 4
        %s12165 = scalar_lea.vmem %s15, %s12164
      $region92: #{_lambda_.1} parent=87 // pred_fallthru
        _
    $region88: #{_lambda_.1} parent=5 // pred_fallthru
      _
  $region6: #{_lambda_.1} parent=0 // loop_footer
    %s25 = sadd.s32 1, %s21
  $region7: #{_lambda_.1} parent=0 // loop_footer_branch
    %20 = sbr.rel target = $region3
  $region8: #{_lambda_.1} parent=0 // loop_exit
    _

</llo_original>
